<compile_context>
chip_gen: v7x
topology: tpu7x:2x2x1
jax: 0.10.0
libtpu: 0.0.40
codegen_flags: <defaults>
</compile_context>

<pallas_src>
import functools

import numpy as np
import jax
import jax.numpy as jnp
from jax import lax
from jax.experimental import pallas as pl
from jax.experimental.pallas import tpu as pltpu

BN_EPS = 1e-5
LRELU_SLOPE = 0.01                      # nn.LeakyReLU default
VMEM_LIMIT_BYTES = 32 * 1024 * 1024     # raise v5e's 16 MiB scoped default


def _cparams():
    return pltpu.CompilerParams(dimension_semantics=("parallel",),
                                vmem_limit_bytes=VMEM_LIMIT_BYTES)


# ------------------------------- kernels ----------------------------------- #

def _matmul_kernel(z_ref, w_ref, y_ref):
    """Layer 0: whole-batch (N, Cin) @ (Cin, K*K*Cout) on the MXU."""
    y_ref[...] = jnp.dot(z_ref[...], w_ref[...],
                         preferred_element_type=jnp.float32)


def _convt_stats_kernel(x_ref, w_ref, mask_ref, y_ref, s_ref, p_ref,
                        *, K, Wp, lrows, cin, bsz):
    """Fused im2col transposed-conv + per-block BN partial statistics.

    x_ref   : (bsz, slab_rows, Cin) bf16  row-flattened dilated+padded input
    w_ref   : (K*K*Cin, Cout)       bf16  flipped taps, tap-major / Cin-minor
    mask_ref: (lrows, 1)            f32   1.0 for valid columns
    y_ref   : (bsz, lrows, Cout)    bf16  untrimmed conv output (not masked)
    s_ref   : (1, 2, Cout)          f32   [sum, sum_sq] over valid outputs
    p_ref   : (lrows, K*K*Cin)      bf16  VMEM im2col scratch (never HBM)
    """
    cout = w_ref.shape[1]
    m = mask_ref[...]
    s0 = jnp.zeros((1, cout), jnp.float32)
    s1 = jnp.zeros((1, cout), jnp.float32)
    for b in range(bsz):
        # gather the K*K in-bounds shifted slices into one im2col patch
        for kh in range(K):
            for kw in range(K):
                t = kh * K + kw
                off = kh * Wp + kw
                p_ref[:, t * cin:(t + 1) * cin] = x_ref[b, off:off + lrows, :]
        # one big bf16 MXU matmul with f32 accumulation
        acc = jnp.dot(p_ref[...], w_ref[...],
                      preferred_element_type=jnp.float32)       # (lrows, Cout)
        y_ref[b] = acc.astype(y_ref.dtype)
        # mask only the statistics; garbage columns are trimmed in pass 2
        s0 = s0 + jnp.sum(acc * m, axis=0, keepdims=True)
        s1 = s1 + jnp.sum(acc * acc * m, axis=0, keepdims=True)
    s_ref[0, 0:1, :] = s0
    s_ref[0, 1:2, :] = s1


def _bn_lrelu_kernel(y_ref, scale_ref, shift_ref, o_ref, *, OW):
    """Folded BN affine + LeakyReLU with the garbage-column trim fused in."""
    v = y_ref[...]                                  # (B, H, Wp, C)
    v = v[:, :, :OW, :].astype(jnp.float32)         # trim before compute
    v = v * scale_ref[...] + shift_ref[...]
    o_ref[...] = jnp.where(v >= 0.0, v, LRELU_SLOPE * v).astype(o_ref.dtype)


def _convt_cout1_kernel(x_ref, w_ref, o_ref, *, K, Wp, lrows):
    """Final ConvTranspose2d (Cout=1) on the VPU with a lane-dense output.

    x_ref : (1, Cin, slab_len) bf16  channel-major, spatial on lanes
    w_ref : (K*K, Cin, 1)      f32   flipped taps (resident)
    o_ref : (1, 1, lrows)      f32   lane-dense output row
    """
    cin = x_ref.shape[1]
    xf = x_ref[0].astype(jnp.float32)               # cast ONCE, whole slab
    acc = jnp.zeros((cin, lrows), jnp.float32)
    for kh in range(K):
        for kw in range(K):
            off = kh * Wp + kw
            acc = acc + xf[:, off:off + lrows] * w_ref[kh * K + kw]
    o_ref[0] = jnp.sum(acc, axis=0, keepdims=True)  # (1, lrows)


# --------------------------- layer-level wrappers --------------------------- #

def _pick_block_b(n, per_sample_bytes, fixed_bytes, budget=4 << 20):
    """Largest divisor of n whose (double-buffered) block fits `budget`
    while keeping >= 2 grid steps (megacore / pipelining)."""
    best = 1
    for d in range(1, n + 1):
        if n % d:
            continue
        fits = fixed_bytes + 2 * d * per_sample_bytes <= budget
        keeps_grid = (n // d) >= 2 or n == 1
        if fits and keeps_grid:
            best = d
    return best


def _finalize_bn(total, count, gamma, beta):
    """(Cout,)-sized train-mode BN finalization in XLA."""
    mean = total[0] / count
    var = jnp.maximum(total[1] / count - mean * mean, 0.0)     # biased
    scale = gamma * lax.rsqrt(var + BN_EPS)
    shift = beta - mean * scale
    return scale, shift


def _bn_lrelu_pass(y4, scale, shift, ow, block_b):
    """BN affine + LeakyReLU: (N, H, Wp, C) -> (N, H, OW, C) bf16."""
    N, H, Wp, C = y4.shape
    return pl.pallas_call(
        functools.partial(_bn_lrelu_kernel, OW=ow),
        out_shape=jax.ShapeDtypeStruct((N, H, ow, C), jnp.bfloat16),
        grid=(N // block_b,),
        in_specs=[pl.BlockSpec((block_b, H, Wp, C), lambda n: (n, 0, 0, 0)),
                  pl.BlockSpec((1, 1, 1, C), lambda n: (0, 0, 0, 0)),
                  pl.BlockSpec((1, 1, 1, C), lambda n: (0, 0, 0, 0))],
        out_specs=pl.BlockSpec((block_b, H, ow, C), lambda n: (n, 0, 0, 0)),
        compiler_params=_cparams(),
    )(y4, scale.reshape(1, 1, 1, C), shift.reshape(1, 1, 1, C))


def first_layer(z, layer):
    """Layer 0: ConvTranspose2d on a 1x1 input == z @ W, then BN + LeakyReLU."""
    N, cin = z.shape
    K = layer["K"]
    kk = K * K
    cout = layer["gamma"].shape[0]

    y = pl.pallas_call(
        _matmul_kernel,
        out_shape=jax.ShapeDtypeStruct((N, kk * cout), jnp.float32),
        grid=(1,),
        in_specs=[pl.BlockSpec((N, cin), lambda i: (0, 0)),
                  pl.BlockSpec((cin, kk * cout), lambda i: (0, 0))],
        out_specs=pl.BlockSpec((N, kk * cout), lambda i: (0, 0)),
        compiler_params=_cparams(),
    )(z, layer["wmat0"])

    y3 = y.reshape(N, kk, cout)                     # NHWC-flat, free reshape
    count = N * kk
    total = jnp.stack([jnp.sum(y3, axis=(0, 1)), jnp.sum(y3 * y3, axis=(0, 1))])
    scale, shift = _finalize_bn(total, count, layer["gamma"], layer["beta"])
    b = _pick_block_b(N, kk * cout * 4, 0)
    return _bn_lrelu_pass(y3.reshape(N, K, K, cout), scale, shift, K, b)


def conv_bn_lrelu_layer(x, layer):
    """ConvTranspose2d + BatchNorm(train) + LeakyReLU.  NHWC bf16 in/out."""
    K, stride, padding = layer["K"], layer["stride"], layer["padding"]
    pad = K - 1 - padding
    N, H, W, cin = x.shape
    cout = layer["gamma"].shape[0]

    # dilate + edge-pad + ONE extra zero row so every tap slice is in bounds
    zero = jnp.asarray(0, x.dtype)
    xp = lax.pad(x, zero, [(0, 0, 0),
                           (pad, pad + 1, stride - 1),
                           (pad, pad, stride - 1),
                           (0, 0, 0)])              # (N, Hp+1, Wp, Cin)
    Hp, Wp = xp.shape[1] - 1, xp.shape[2]
    OH, OW = Hp - K + 1, Wp - K + 1
    lrows = OH * Wp
    slab = (Hp + 1) * Wp
    xf = xp.reshape(N, slab, cin)                   # contiguous, free
    mask = jnp.asarray(
        ((np.arange(lrows) % Wp) < OW).astype(np.float32).reshape(lrows, 1))

    per_sample = (slab * cin + lrows * cout) * 2                    # bf16 x + y
    fixed = lrows * K * K * cin * 2 + K * K * cin * cout * 2        # scratch + W
    B = _pick_block_b(N, per_sample, fixed)
    grid = (N // B,)

    # pass 1: fused-im2col conv + per-block masked channel sums / sums-of-sq
    y, stats = pl.pallas_call(
        functools.partial(_convt_stats_kernel, K=K, Wp=Wp, lrows=lrows,
                          cin=cin, bsz=B),
        out_shape=(jax.ShapeDtypeStruct((N, lrows, cout), jnp.bfloat16),
                   jax.ShapeDtypeStruct((N // B, 2, cout), jnp.float32)),
        grid=grid,
        in_specs=[pl.BlockSpec((B, slab, cin), lambda n: (n, 0, 0)),
                  pl.BlockSpec((K * K * cin, cout), lambda n: (0, 0)),
                  pl.BlockSpec((lrows, 1), lambda n: (0, 0))],
        out_specs=(pl.BlockSpec((B, lrows, cout), lambda n: (n, 0, 0)),
                   pl.BlockSpec((1, 2, cout), lambda n: (n, 0, 0))),
        scratch_shapes=[pltpu.VMEM((lrows, K * K * cin), jnp.bfloat16)],
        compiler_params=_cparams(),
    )(xf, layer["wmat"], mask)

    # finalize batch statistics: tiny (Cout,)-sized math in XLA
    count = N * OH * OW
    total = jnp.sum(stats, axis=0)                  # (2, Cout)
    scale, shift = _finalize_bn(total, count, layer["gamma"], layer["beta"])

    # pass 2: affine + LeakyReLU with the column trim fused into the kernel
    y4 = y.reshape(N, OH, Wp, cout)                 # free, contiguous split
    return _bn_lrelu_pass(y4, scale, shift, OW, B)  # (N, OH, OW, Cout) bf16


def conv_final_layer(x, layer):
    """Final ConvTranspose2d (Cout=1, no BN/act).  NHWC in -> NCHW f32 out."""
    K, stride, padding = layer["K"], layer["stride"], layer["padding"]
    pad = K - 1 - padding
    xc = jnp.transpose(x, (0, 3, 1, 2))             # small tensor
    zero = jnp.asarray(0, xc.dtype)
    xp = lax.pad(xc, zero, [(0, 0, 0), (0, 0, 0),
                            (pad, pad + 1, stride - 1),
                            (pad, pad, stride - 1)])
    N, cin, Hp1, Wp = xp.shape
    Hp = Hp1 - 1
    OH, OW = Hp - K + 1, Wp - K + 1
    lrows = OH * Wp
    slab = Hp1 * Wp
    xf = xp.reshape(N, cin, slab)

    y = pl.pallas_call(
        functools.partial(_convt_cout1_kernel, K=K, Wp=Wp, lrows=lrows),
        out_shape=jax.ShapeDtypeStruct((N, 1, lrows), jnp.float32),
        grid=(N,),
        in_specs=[pl.BlockSpec((1, cin, slab), lambda n: (n, 0, 0)),
                  pl.BlockSpec((K * K, cin, 1), lambda n: (0, 0, 0))],
        out_specs=pl.BlockSpec((1, 1, lrows), lambda n: (n, 0, 0)),
        compiler_params=_cparams(),
    )(xf, layer["wmat"])

    return y.reshape(N, 1, OH, Wp)[:, :, :, :OW]    # NCHW, Cout == 1


# ----------------------------- full generator ------------------------------ #

def _pack_taps(w, dtype):
    """PyTorch ConvTranspose2d weight (Cin,Cout,K,K) -> (K*K, Cin, Cout),
    spatially flipped, tap index = kh*K + kw.  Done once at init."""
    cin, cout, K, _ = w.shape
    wf = jnp.flip(w, axis=(2, 3)).transpose(2, 3, 0, 1)   # (K, K, Cin, Cout)
    return wf.reshape(K * K, cin, cout).astype(dtype)


def init_conv_generator(key, nin, units=32, depth=3):
    """Deterministic synthetic parameters with the exact shapes of __init__."""
    ngf = units
    scale = 2 ** depth
    layers = []

    def convt(k, cin, cout, K, stride, padding, bn, first=False):
        w = jax.random.normal(k, (cin, cout, K, K), jnp.float32) * 0.05
        layer = dict(K=K, stride=stride, padding=padding, bn=bn, w=w)
        if first:
            # 1x1 input: out[n,i,j,co] = sum_ci z[n,ci] * w[ci,co,i,j]
            layer["wmat0"] = (w.transpose(0, 2, 3, 1)
                               .reshape(cin, K * K * cout).astype(jnp.float32))
        elif bn:
            # tap-major / Cin-minor to match the in-kernel im2col layout
            layer["wmat"] = _pack_taps(w, jnp.bfloat16).reshape(K * K * cin, cout)
        else:
            layer["wmat"] = _pack_taps(w, jnp.float32)     # (K*K, Cin, 1)
        if bn:
            layer["gamma"] = jnp.ones((cout,), jnp.float32)
            layer["beta"] = jnp.zeros((cout,), jnp.float32)
        return layer

    key, sub = jax.random.split(key)
    layers.append(convt(sub, nin, ngf * scale, 4, 1, 0, True, first=True))
    for _ in range(depth):
        key, sub = jax.random.split(key)
        layers.append(convt(sub, ngf * scale, ngf * scale // 2, 4, 2, 1, True))
        scale //= 2
    key, sub = jax.random.split(key)
    layers.append(convt(sub, ngf, 1, 3, 2, 1, False))
    return layers


def conv_generator_forward(layers, z):
    # mirror: if len(z.size()) < 4: z = z.view(-1, z.size(1), 1, 1)
    if z.ndim < 4:
        z2 = z.reshape(-1, z.shape[1])
    else:
        assert z.shape[2] == 1 and z.shape[3] == 1, "generator latent is 1x1"
        z2 = z.reshape(z.shape[0], z.shape[1])
    x = first_layer(z2.astype(jnp.float32), layers[0])     # (N, 4, 4, C0) bf16
    for layer in layers[1:-1]:
        x = conv_bn_lrelu_layer(x, layer)
    return conv_final_layer(x, layers[-1])                  # (N, 1, W, W) f32


# ------------------------- pure-JAX f32 reference --------------------------- #

def _reference_forward(layers, z):
    if z.ndim < 4:
        x = z.reshape(-1, z.shape[1], 1, 1)
    else:
        x = z
    x = x.astype(jnp.float32)
    for layer in layers:
        w = layer["w"]                                      # (Cin, Cout, K, K)
        K, s, p = layer["K"], layer["stride"], layer["padding"]
        w_conv = jnp.flip(w, axis=(2, 3)).transpose(1, 0, 2, 3)  # OIHW
        pad = K - 1 - p
        x = lax.conv_general_dilated(
            x, w_conv, window_strides=(1, 1),
            padding=[(pad, pad), (pad, pad)], lhs_dilation=(s, s),
            dimension_numbers=("NCHW", "OIHW", "NCHW"))
        if layer["bn"]:
            mean = jnp.mean(x, axis=(0, 2, 3), keepdims=True)
            var = jnp.mean(jnp.square(x - mean), axis=(0, 2, 3), keepdims=True)
            x = (x - mean) * lax.rsqrt(var + BN_EPS)
            x = x * layer["gamma"].reshape(1, -1, 1, 1) \
                + layer["beta"].reshape(1, -1, 1, 1)
            x = jnp.where(x >= 0.0, x, LRELU_SLOPE * x)
    return x


# ---------------------------------- main ------------------------------------ #

if __name__ == "__main__":
    # small config: nin=4, units=8, depth=2  ->  output width 8*2**2 - 1 = 31
    nin, units, depth, batch = 4, 8, 2, 2
    key = jax.random.PRNGKey(0)
    key, zkey = jax.random.split(key)
    layers = init_conv_generator(key, nin, units=units, depth=depth)
    z = jax.random.normal(zkey, (batch, nin), jnp.float32)

    fwd = jax.jit(functools.partial(conv_generator_forward, layers))
    out = jax.block_until_ready(fwd(z))

    expected_width = 8 * 2 ** depth - 1
    assert out.shape == (batch, 1, expected_width, expected_width), out.shape
    assert bool(jnp.all(jnp.isfinite(out)))

    # bf16 matmul operands / bf16 intermediates vs f32 reference -> relaxed tol
    ref = _reference_forward(layers, z)
    err = float(jnp.max(jnp.abs(out - ref)) / (jnp.max(jnp.abs(ref)) + 1e-6))
    assert err < 0.1, f"mismatch vs f32 reference: rel_err={err}"

    print("KERNEL_OK")
</pallas_src>

<mosaic_0001>
module attributes {stable_mosaic.version = 11 : i64} {
  func.func @_matmul_kernel(%arg0: i32, %arg1: memref<2x4xf32, #tpu.memory_space<vmem>>, %arg2: memref<4x512xf32, #tpu.memory_space<vmem>>, %arg3: memref<2x512xf32, #tpu.memory_space<vmem>>) attributes {dimension_semantics = [#tpu.dimension_semantics<parallel>], iteration_bounds = array<i64: 1>, scalar_prefetch = 0 : i64, scratch_operands = 0 : i64, tpu.core_type = #tpu.core_type<tc>, window_params = [{pipeline_mode = #tpu.pipeline_mode<synchronous>, transform_indices = @transform_0, window_bounds = array<i64: 2, 4>}, {pipeline_mode = #tpu.pipeline_mode<synchronous>, transform_indices = @transform_1, window_bounds = array<i64: 4, 512>}, {pipeline_mode = #tpu.pipeline_mode<synchronous>, transform_indices = @transform_2, window_bounds = array<i64: 2, 512>}]} {
    %c0 = arith.constant 0 : index
    %c0_0 = arith.constant 0 : index
    %0 = vector.load %arg1[%c0, %c0_0] : memref<2x4xf32, #tpu.memory_space<vmem>>, vector<2x4xf32>
    %c0_1 = arith.constant 0 : index
    %c0_2 = arith.constant 0 : index
    %1 = vector.load %arg2[%c0_1, %c0_2] : memref<4x512xf32, #tpu.memory_space<vmem>>, vector<4x512xf32>
    %cst = arith.constant dense<0.000000e+00> : vector<2x512xf32>
    %2 = tpu.matmul %0, %1, %cst {dimension_numbers = #tpu.dot_dimension_numbers<[1], [0], [0], [1], [0, 0, 1, 1], [], []>} : vector<2x4xf32>, vector<4x512xf32>, vector<2x512xf32> -> vector<2x512xf32>
    %c0_3 = arith.constant 0 : index
    %c0_4 = arith.constant 0 : index
    %3 = vector.load %arg3[%c0_3, %c0_4] : memref<2x512xf32, #tpu.memory_space<vmem>>, vector<2x512xf32>
    tpu.vector_store %arg3[%c0_3, %c0_4], %2 {strides = array<i32>} : memref<2x512xf32, #tpu.memory_space<vmem>>, vector<2x512xf32>,
    return
  }
  func.func @transform_0(%arg0: i32) -> (i32, i32) {
    %c0_i32 = arith.constant 0 : i32
    %c0_i32_0 = arith.constant 0 : i32
    %c0_i32_1 = arith.constant 0 : i32
    return %c0_i32, %c0_i32_0 : i32, i32
  }
  func.func @transform_1(%arg0: i32) -> (i32, i32) {
    %c0_i32 = arith.constant 0 : i32
    %c0_i32_0 = arith.constant 0 : i32
    %c0_i32_1 = arith.constant 0 : i32
    return %c0_i32, %c0_i32_0 : i32, i32
  }
  func.func @transform_2(%arg0: i32) -> (i32, i32) {
    %c0_i32 = arith.constant 0 : i32
    %c0_i32_0 = arith.constant 0 : i32
    %c0_i32_1 = arith.constant 0 : i32
    return %c0_i32, %c0_i32_0 : i32, i32
  }
}

module attributes {stable_mosaic.version = 11 : i64} {
  func.func @_bn_lrelu_kernel(%arg0: i32, %arg1: memref<1x4x4x32xf32, #tpu.memory_space<vmem>>, %arg2: memref<1x1x1x32xf32, #tpu.memory_space<vmem>>, %arg3: memref<1x1x1x32xf32, #tpu.memory_space<vmem>>, %arg4: memref<1x4x4x32xbf16, #tpu.memory_space<vmem>>) attributes {dimension_semantics = [#tpu.dimension_semantics<parallel>], iteration_bounds = array<i64: 2>, scalar_prefetch = 0 : i64, scratch_operands = 0 : i64, tpu.core_type = #tpu.core_type<tc>, window_params = [{transform_indices = @transform_0, window_bounds = array<i64: 1, 4, 4, 32>}, {pipeline_mode = #tpu.pipeline_mode<synchronous>, transform_indices = @transform_1, window_bounds = array<i64: 1, 1, 1, 32>}, {pipeline_mode = #tpu.pipeline_mode<synchronous>, transform_indices = @transform_2, window_bounds = array<i64: 1, 1, 1, 32>}, {transform_indices = @transform_3, window_bounds = array<i64: 1, 4, 4, 32>}]} {
    %c0 = arith.constant 0 : index
    %c0_0 = arith.constant 0 : index
    %c0_1 = arith.constant 0 : index
    %c0_2 = arith.constant 0 : index
    %0 = vector.load %arg1[%c0, %c0_0, %c0_1, %c0_2] : memref<1x4x4x32xf32, #tpu.memory_space<vmem>>, vector<1x4x4x32xf32>
    %c0_3 = arith.constant 0 : index
    %c0_4 = arith.constant 0 : index
    %c0_5 = arith.constant 0 : index
    %c0_6 = arith.constant 0 : index
    %1 = vector.load %arg2[%c0_3, %c0_4, %c0_5, %c0_6] : memref<1x1x1x32xf32, #tpu.memory_space<vmem>>, vector<1x1x1x32xf32>
    %2 = vector.broadcast %1 : vector<1x1x1x32xf32> to vector<1x4x4x32xf32>
    %3 = arith.mulf %0, %2 : vector<1x4x4x32xf32>
    %c0_7 = arith.constant 0 : index
    %c0_8 = arith.constant 0 : index
    %c0_9 = arith.constant 0 : index
    %c0_10 = arith.constant 0 : index
    %4 = vector.load %arg3[%c0_7, %c0_8, %c0_9, %c0_10] : memref<1x1x1x32xf32, #tpu.memory_space<vmem>>, vector<1x1x1x32xf32>
    %5 = vector.broadcast %4 : vector<1x1x1x32xf32> to vector<1x4x4x32xf32>
    %6 = arith.addf %3, %5 : vector<1x4x4x32xf32>
    %cst = arith.constant 0.000000e+00 : f32
    %7 = vector.broadcast %cst : f32 to vector<1x4x4x32xf32>
    %8 = arith.cmpf oge, %6, %7 : vector<1x4x4x32xf32>
    %cst_11 = arith.constant 0.00999999977 : f32
    %9 = vector.broadcast %cst_11 : f32 to vector<1x4x4x32xf32>
    %10 = arith.mulf %9, %6 : vector<1x4x4x32xf32>
    %11 = arith.select %8, %6, %10 : vector<1x4x4x32xi1>, vector<1x4x4x32xf32>
    %12 = arith.truncf %11 : vector<1x4x4x32xf32> to vector<1x4x4x32xbf16>
    %c0_12 = arith.constant 0 : index
    %c0_13 = arith.constant 0 : index
    %c0_14 = arith.constant 0 : index
    %c0_15 = arith.constant 0 : index
    %13 = vector.load %arg4[%c0_12, %c0_13, %c0_14, %c0_15] : memref<1x4x4x32xbf16, #tpu.memory_space<vmem>>, vector<1x4x4x32xbf16>
    tpu.vector_store %arg4[%c0_12, %c0_13, %c0_14, %c0_15], %12 {strides = array<i32>} : memref<1x4x4x32xbf16, #tpu.memory_space<vmem>>, vector<1x4x4x32xbf16>,
    return
  }
  func.func @transform_0(%arg0: i32) -> (i32, i32, i32, i32) {
    %c0_i32 = arith.constant 0 : i32
    %c0_i32_0 = arith.constant 0 : i32
    %c0_i32_1 = arith.constant 0 : i32
    %c0_i32_2 = arith.constant 0 : i32
    return %arg0, %c0_i32, %c0_i32_0, %c0_i32_1 : i32, i32, i32, i32
  }
  func.func @transform_1(%arg0: i32) -> (i32, i32, i32, i32) {
    %c0_i32 = arith.constant 0 : i32
    %c0_i32_0 = arith.constant 0 : i32
    %c0_i32_1 = arith.constant 0 : i32
    %c0_i32_2 = arith.constant 0 : i32
    %c0_i32_3 = arith.constant 0 : i32
    return %c0_i32, %c0_i32_0, %c0_i32_1, %c0_i32_2 : i32, i32, i32, i32
  }
  func.func @transform_2(%arg0: i32) -> (i32, i32, i32, i32) {
    %c0_i32 = arith.constant 0 : i32
    %c0_i32_0 = arith.constant 0 : i32
    %c0_i32_1 = arith.constant 0 : i32
    %c0_i32_2 = arith.constant 0 : i32
    %c0_i32_3 = arith.constant 0 : i32
    return %c0_i32, %c0_i32_0, %c0_i32_1, %c0_i32_2 : i32, i32, i32, i32
  }
  func.func @transform_3(%arg0: i32) -> (i32, i32, i32, i32) {
    %c0_i32 = arith.constant 0 : i32
    %c0_i32_0 = arith.constant 0 : i32
    %c0_i32_1 = arith.constant 0 : i32
    %c0_i32_2 = arith.constant 0 : i32
    return %arg0, %c0_i32, %c0_i32_0, %c0_i32_1 : i32, i32, i32, i32
  }
}

module attributes {stable_mosaic.version = 11 : i64} {
  func.func @_convt_stats_kernel(%arg0: i32, %arg1: memref<1x132x32xbf16, #tpu.memory_space<vmem>>, %arg2: memref<512x16xbf16, #tpu.memory_space<vmem>>, %arg3: memref<88x1xf32, #tpu.memory_space<vmem>>, %arg4: memref<1x88x16xbf16, #tpu.memory_space<vmem>>, %arg5: memref<1x2x16xf32, #tpu.memory_space<vmem>>, %arg6: memref<88x512xbf16, #tpu.memory_space<vmem>>) attributes {dimension_semantics = [#tpu.dimension_semantics<parallel>], iteration_bounds = array<i64: 2>, scalar_prefetch = 0 : i64, scratch_operands = 1 : i64, tpu.core_type = #tpu.core_type<tc>, window_params = [{transform_indices = @transform_0, window_bounds = array<i64: 1, 132, 32>}, {pipeline_mode = #tpu.pipeline_mode<synchronous>, transform_indices = @transform_1, window_bounds = array<i64: 512, 16>}, {pipeline_mode = #tpu.pipeline_mode<synchronous>, transform_indices = @transform_2, window_bounds = array<i64: 88, 1>}, {transform_indices = @transform_3, window_bounds = array<i64: 1, 88, 16>}, {transform_indices = @transform_4, window_bounds = array<i64: 1, 2, 16>}]} {
    %c0 = arith.constant 0 : index
    %c0_0 = arith.constant 0 : index
    %0 = vector.load %arg3[%c0, %c0_0] : memref<88x1xf32, #tpu.memory_space<vmem>>, vector<88x1xf32>
    %cst = arith.constant 0.000000e+00 : f32
    %1 = vector.broadcast %cst : f32 to vector<1x16xf32>
    %cst_1 = arith.constant 0.000000e+00 : f32
    %2 = vector.broadcast %cst_1 : f32 to vector<1x16xf32>
    %c0_2 = arith.constant 0 : index
    %c0_3 = arith.constant 0 : index
    %c0_4 = arith.constant 0 : index
    %3 = vector.load %arg1[%c0_2, %c0_3, %c0_4] : memref<1x132x32xbf16, #tpu.memory_space<vmem>>, vector<1x88x32xbf16>
    %4 = vector.shape_cast %3 : vector<1x88x32xbf16> to vector<88x32xbf16>
    %c0_5 = arith.constant 0 : index
    %c0_6 = arith.constant 0 : index
    %5 = vector.load %arg6[%c0_5, %c0_6] : memref<88x512xbf16, #tpu.memory_space<vmem>>, vector<88x32xbf16>
    tpu.vector_store %arg6[%c0_5, %c0_6], %4 {strides = array<i32>} : memref<88x512xbf16, #tpu.memory_space<vmem>>, vector<88x32xbf16>,
    %c0_7 = arith.constant 0 : index
    %c1 = arith.constant 1 : index
    %c0_8 = arith.constant 0 : index
    %6 = vector.load %arg1[%c0_7, %c1, %c0_8] : memref<1x132x32xbf16, #tpu.memory_space<vmem>>, vector<1x88x32xbf16>
    %7 = vector.shape_cast %6 : vector<1x88x32xbf16> to vector<88x32xbf16>
    %c0_9 = arith.constant 0 : index
    %c32 = arith.constant 32 : index
    %8 = vector.load %arg6[%c0_9, %c32] : memref<88x512xbf16, #tpu.memory_space<vmem>>, vector<88x32xbf16>
    tpu.vector_store %arg6[%c0_9, %c32], %7 {strides = array<i32>} : memref<88x512xbf16, #tpu.memory_space<vmem>>, vector<88x32xbf16>,
    %c0_10 = arith.constant 0 : index
    %c2 = arith.constant 2 : index
    %c0_11 = arith.constant 0 : index
    %9 = vector.load %arg1[%c0_10, %c2, %c0_11] : memref<1x132x32xbf16, #tpu.memory_space<vmem>>, vector<1x88x32xbf16>
    %10 = vector.shape_cast %9 : vector<1x88x32xbf16> to vector<88x32xbf16>
    %c0_12 = arith.constant 0 : index
    %c64 = arith.constant 64 : index
    %11 = vector.load %arg6[%c0_12, %c64] : memref<88x512xbf16, #tpu.memory_space<vmem>>, vector<88x32xbf16>
    tpu.vector_store %arg6[%c0_12, %c64], %10 {strides = array<i32>} : memref<88x512xbf16, #tpu.memory_space<vmem>>, vector<88x32xbf16>,
    %c0_13 = arith.constant 0 : index
    %c3 = arith.constant 3 : index
    %c0_14 = arith.constant 0 : index
    %12 = vector.load %arg1[%c0_13, %c3, %c0_14] : memref<1x132x32xbf16, #tpu.memory_space<vmem>>, vector<1x88x32xbf16>
    %13 = vector.shape_cast %12 : vector<1x88x32xbf16> to vector<88x32xbf16>
    %c0_15 = arith.constant 0 : index
    %c96 = arith.constant 96 : index
    %14 = vector.load %arg6[%c0_15, %c96] : memref<88x512xbf16, #tpu.memory_space<vmem>>, vector<88x32xbf16>
    tpu.vector_store %arg6[%c0_15, %c96], %13 {strides = array<i32>} : memref<88x512xbf16, #tpu.memory_space<vmem>>, vector<88x32xbf16>,
    %c0_16 = arith.constant 0 : index
    %c11 = arith.constant 11 : index
    %c0_17 = arith.constant 0 : index
    %15 = vector.load %arg1[%c0_16, %c11, %c0_17] : memref<1x132x32xbf16, #tpu.memory_space<vmem>>, vector<1x88x32xbf16>
    %16 = vector.shape_cast %15 : vector<1x88x32xbf16> to vector<88x32xbf16>
    %c0_18 = arith.constant 0 : index
    %c128 = arith.constant 128 : index
    %17 = vector.load %arg6[%c0_18, %c128] : memref<88x512xbf16, #tpu.memory_space<vmem>>, vector<88x32xbf16>
    tpu.vector_store %arg6[%c0_18, %c128], %16 {strides = array<i32>} : memref<88x512xbf16, #tpu.memory_space<vmem>>, vector<88x32xbf16>,
    %c0_19 = arith.constant 0 : index
    %c12 = arith.constant 12 : index
    %c0_20 = arith.constant 0 : index
    %18 = vector.load %arg1[%c0_19, %c12, %c0_20] : memref<1x132x32xbf16, #tpu.memory_space<vmem>>, vector<1x88x32xbf16>
    %19 = vector.shape_cast %18 : vector<1x88x32xbf16> to vector<88x32xbf16>
    %c0_21 = arith.constant 0 : index
    %c160 = arith.constant 160 : index
    %20 = vector.load %arg6[%c0_21, %c160] : memref<88x512xbf16, #tpu.memory_space<vmem>>, vector<88x32xbf16>
    tpu.vector_store %arg6[%c0_21, %c160], %19 {strides = array<i32>} : memref<88x512xbf16, #tpu.memory_space<vmem>>, vector<88x32xbf16>,
    %c0_22 = arith.constant 0 : index
    %c13 = arith.constant 13 : index
    %c0_23 = arith.constant 0 : index
    %21 = vector.load %arg1[%c0_22, %c13, %c0_23] : memref<1x132x32xbf16, #tpu.memory_space<vmem>>, vector<1x88x32xbf16>
    %22 = vector.shape_cast %21 : vector<1x88x32xbf16> to vector<88x32xbf16>
    %c0_24 = arith.constant 0 : index
    %c192 = arith.constant 192 : index
    %23 = vector.load %arg6[%c0_24, %c192] : memref<88x512xbf16, #tpu.memory_space<vmem>>, vector<88x32xbf16>
    tpu.vector_store %arg6[%c0_24, %c192], %22 {strides = array<i32>} : memref<88x512xbf16, #tpu.memory_space<vmem>>, vector<88x32xbf16>,
    %c0_25 = arith.constant 0 : index
    %c14 = arith.constant 14 : index
    %c0_26 = arith.constant 0 : index
    %24 = vector.load %arg1[%c0_25, %c14, %c0_26] : memref<1x132x32xbf16, #tpu.memory_space<vmem>>, vector<1x88x32xbf16>
    %25 = vector.shape_cast %24 : vector<1x88x32xbf16> to vector<88x32xbf16>
    %c0_27 = arith.constant 0 : index
    %c224 = arith.constant 224 : index
    %26 = vector.load %arg6[%c0_27, %c224] : memref<88x512xbf16, #tpu.memory_space<vmem>>, vector<88x32xbf16>
    tpu.vector_store %arg6[%c0_27, %c224], %25 {strides = array<i32>} : memref<88x512xbf16, #tpu.memory_space<vmem>>, vector<88x32xbf16>,
    %c0_28 = arith.constant 0 : index
    %c22 = arith.constant 22 : index
    %c0_29 = arith.constant 0 : index
    %27 = vector.load %arg1[%c0_28, %c22, %c0_29] : memref<1x132x32xbf16, #tpu.memory_space<vmem>>, vector<1x88x32xbf16>
    %28 = vector.shape_cast %27 : vector<1x88x32xbf16> to vector<88x32xbf16>
    %c0_30 = arith.constant 0 : index
    %c256 = arith.constant 256 : index
    %29 = vector.load %arg6[%c0_30, %c256] : memref<88x512xbf16, #tpu.memory_space<vmem>>, vector<88x32xbf16>
    tpu.vector_store %arg6[%c0_30, %c256], %28 {strides = array<i32>} : memref<88x512xbf16, #tpu.memory_space<vmem>>, vector<88x32xbf16>,
    %c0_31 = arith.constant 0 : index
    %c23 = arith.constant 23 : index
    %c0_32 = arith.constant 0 : index
    %30 = vector.load %arg1[%c0_31, %c23, %c0_32] : memref<1x132x32xbf16, #tpu.memory_space<vmem>>, vector<1x88x32xbf16>
    %31 = vector.shape_cast %30 : vector<1x88x32xbf16> to vector<88x32xbf16>
    %c0_33 = arith.constant 0 : index
    %c288 = arith.constant 288 : index
    %32 = vector.load %arg6[%c0_33, %c288] : memref<88x512xbf16, #tpu.memory_space<vmem>>, vector<88x32xbf16>
    tpu.vector_store %arg6[%c0_33, %c288], %31 {strides = array<i32>} : memref<88x512xbf16, #tpu.memory_space<vmem>>, vector<88x32xbf16>,
    %c0_34 = arith.constant 0 : index
    %c24 = arith.constant 24 : index
    %c0_35 = arith.constant 0 : index
    %33 = vector.load %arg1[%c0_34, %c24, %c0_35] : memref<1x132x32xbf16, #tpu.memory_space<vmem>>, vector<1x88x32xbf16>
    %34 = vector.shape_cast %33 : vector<1x88x32xbf16> to vector<88x32xbf16>
    %c0_36 = arith.constant 0 : index
    %c320 = arith.constant 320 : index
    %35 = vector.load %arg6[%c0_36, %c320] : memref<88x512xbf16, #tpu.memory_space<vmem>>, vector<88x32xbf16>
    tpu.vector_store %arg6[%c0_36, %c320], %34 {strides = array<i32>} : memref<88x512xbf16, #tpu.memory_space<vmem>>, vector<88x32xbf16>,
    %c0_37 = arith.constant 0 : index
    %c25 = arith.constant 25 : index
    %c0_38 = arith.constant 0 : index
    %36 = vector.load %arg1[%c0_37, %c25, %c0_38] : memref<1x132x32xbf16, #tpu.memory_space<vmem>>, vector<1x88x32xbf16>
    %37 = vector.shape_cast %36 : vector<1x88x32xbf16> to vector<88x32xbf16>
    %c0_39 = arith.constant 0 : index
    %c352 = arith.constant 352 : index
    %38 = vector.load %arg6[%c0_39, %c352] : memref<88x512xbf16, #tpu.memory_space<vmem>>, vector<88x32xbf16>
    tpu.vector_store %arg6[%c0_39, %c352], %37 {strides = array<i32>} : memref<88x512xbf16, #tpu.memory_space<vmem>>, vector<88x32xbf16>,
    %c0_40 = arith.constant 0 : index
    %c33 = arith.constant 33 : index
    %c0_41 = arith.constant 0 : index
    %39 = vector.load %arg1[%c0_40, %c33, %c0_41] : memref<1x132x32xbf16, #tpu.memory_space<vmem>>, vector<1x88x32xbf16>
    %40 = vector.shape_cast %39 : vector<1x88x32xbf16> to vector<88x32xbf16>
    %c0_42 = arith.constant 0 : index
    %c384 = arith.constant 384 : index
    %41 = vector.load %arg6[%c0_42, %c384] : memref<88x512xbf16, #tpu.memory_space<vmem>>, vector<88x32xbf16>
    tpu.vector_store %arg6[%c0_42, %c384], %40 {strides = array<i32>} : memref<88x512xbf16, #tpu.memory_space<vmem>>, vector<88x32xbf16>,
    %c0_43 = arith.constant 0 : index
    %c34 = arith.constant 34 : index
    %c0_44 = arith.constant 0 : index
    %42 = vector.load %arg1[%c0_43, %c34, %c0_44] : memref<1x132x32xbf16, #tpu.memory_space<vmem>>, vector<1x88x32xbf16>
    %43 = vector.shape_cast %42 : vector<1x88x32xbf16> to vector<88x32xbf16>
    %c0_45 = arith.constant 0 : index
    %c416 = arith.constant 416 : index
    %44 = vector.load %arg6[%c0_45, %c416] : memref<88x512xbf16, #tpu.memory_space<vmem>>, vector<88x32xbf16>
    tpu.vector_store %arg6[%c0_45, %c416], %43 {strides = array<i32>} : memref<88x512xbf16, #tpu.memory_space<vmem>>, vector<88x32xbf16>,
    %c0_46 = arith.constant 0 : index
    %c35 = arith.constant 35 : index
    %c0_47 = arith.constant 0 : index
    %45 = vector.load %arg1[%c0_46, %c35, %c0_47] : memref<1x132x32xbf16, #tpu.memory_space<vmem>>, vector<1x88x32xbf16>
    %46 = vector.shape_cast %45 : vector<1x88x32xbf16> to vector<88x32xbf16>
    %c0_48 = arith.constant 0 : index
    %c448 = arith.constant 448 : index
    %47 = vector.load %arg6[%c0_48, %c448] : memref<88x512xbf16, #tpu.memory_space<vmem>>, vector<88x32xbf16>
    tpu.vector_store %arg6[%c0_48, %c448], %46 {strides = array<i32>} : memref<88x512xbf16, #tpu.memory_space<vmem>>, vector<88x32xbf16>,
    %c0_49 = arith.constant 0 : index
    %c36 = arith.constant 36 : index
    %c0_50 = arith.constant 0 : index
    %48 = vector.load %arg1[%c0_49, %c36, %c0_50] : memref<1x132x32xbf16, #tpu.memory_space<vmem>>, vector<1x88x32xbf16>
    %49 = vector.shape_cast %48 : vector<1x88x32xbf16> to vector<88x32xbf16>
    %c0_51 = arith.constant 0 : index
    %c480 = arith.constant 480 : index
    %50 = vector.load %arg6[%c0_51, %c480] : memref<88x512xbf16, #tpu.memory_space<vmem>>, vector<88x32xbf16>
    tpu.vector_store %arg6[%c0_51, %c480], %49 {strides = array<i32>} : memref<88x512xbf16, #tpu.memory_space<vmem>>, vector<88x32xbf16>,
    %c0_52 = arith.constant 0 : index
    %c0_53 = arith.constant 0 : index
    %51 = vector.load %arg6[%c0_52, %c0_53] : memref<88x512xbf16, #tpu.memory_space<vmem>>, vector<88x512xbf16>
    %c0_54 = arith.constant 0 : index
    %c0_55 = arith.constant 0 : index
    %52 = vector.load %arg2[%c0_54, %c0_55] : memref<512x16xbf16, #tpu.memory_space<vmem>>, vector<512x16xbf16>
    %cst_56 = arith.constant dense<0.000000e+00> : vector<88x16xf32>
    %53 = tpu.matmul %51, %52, %cst_56 {dimension_numbers = #tpu.dot_dimension_numbers<[1], [0], [0], [1], [0, 0, 1, 1], [], []>} : vector<88x512xbf16>, vector<512x16xbf16>, vector<88x16xf32> -> vector<88x16xf32>
    %54 = arith.truncf %53 : vector<88x16xf32> to vector<88x16xbf16>
    %c0_57 = arith.constant 0 : index
    %c0_58 = arith.constant 0 : index
    %c0_59 = arith.constant 0 : index
    %55 = vector.load %arg4[%c0_57, %c0_58, %c0_59] : memref<1x88x16xbf16, #tpu.memory_space<vmem>>, vector<1x88x16xbf16>
    %56 = vector.shape_cast %55 : vector<1x88x16xbf16> to vector<88x16xbf16>
    %57 = vector.shape_cast %54 : vector<88x16xbf16> to vector<1x88x16xbf16>
    tpu.vector_store %arg4[%c0_57, %c0_58, %c0_59], %57 {strides = array<i32>} : memref<1x88x16xbf16, #tpu.memory_space<vmem>>, vector<1x88x16xbf16>,
    %58 = vector.broadcast %0 : vector<88x1xf32> to vector<88x16xf32>
    %59 = arith.mulf %53, %58 : vector<88x16xf32>
    %cst_60 = arith.constant dense<0.000000e+00> : vector<16xf32>
    %60 = vector.multi_reduction <add>, %59, %cst_60 [0] : vector<88x16xf32> to vector<16xf32>
    %61 = vector.shape_cast %60 : vector<16xf32> to vector<1x16xf32>
    %62 = arith.addf %1, %61 : vector<1x16xf32>
    %63 = arith.mulf %53, %53 : vector<88x16xf32>
    %64 = vector.broadcast %0 : vector<88x1xf32> to vector<88x16xf32>
    %65 = arith.mulf %63, %64 : vector<88x16xf32>
    %cst_61 = arith.constant dense<0.000000e+00> : vector<16xf32>
    %66 = vector.multi_reduction <add>, %65, %cst_61 [0] : vector<88x16xf32> to vector<16xf32>
    %67 = vector.shape_cast %66 : vector<16xf32> to vector<1x16xf32>
    %68 = arith.addf %2, %67 : vector<1x16xf32>
    %c0_62 = arith.constant 0 : index
    %c0_63 = arith.constant 0 : index
    %c0_64 = arith.constant 0 : index
    %69 = vector.load %arg5[%c0_62, %c0_63, %c0_64] : memref<1x2x16xf32, #tpu.memory_space<vmem>>, vector<1x1x16xf32>
    %70 = vector.shape_cast %69 : vector<1x1x16xf32> to vector<1x16xf32>
    %71 = vector.shape_cast %62 : vector<1x16xf32> to vector<1x1x16xf32>
    tpu.vector_store %arg5[%c0_62, %c0_63, %c0_64], %71 {strides = array<i32>} : memref<1x2x16xf32, #tpu.memory_space<vmem>>, vector<1x1x16xf32>,
    %c0_65 = arith.constant 0 : index
    %c1_66 = arith.constant 1 : index
    %c0_67 = arith.constant 0 : index
    %72 = vector.load %arg5[%c0_65, %c1_66, %c0_67] : memref<1x2x16xf32, #tpu.memory_space<vmem>>, vector<1x1x16xf32>
    %73 = vector.shape_cast %72 : vector<1x1x16xf32> to vector<1x16xf32>
    %74 = vector.shape_cast %68 : vector<1x16xf32> to vector<1x1x16xf32>
    tpu.vector_store %arg5[%c0_65, %c1_66, %c0_67], %74 {strides = array<i32>} : memref<1x2x16xf32, #tpu.memory_space<vmem>>, vector<1x1x16xf32>,
    return
  }
  func.func @transform_0(%arg0: i32) -> (i32, i32, i32) {
    %c0_i32 = arith.constant 0 : i32
    %c0_i32_0 = arith.constant 0 : i32
    %c0_i32_1 = arith.constant 0 : i32
    return %arg0, %c0_i32, %c0_i32_0 : i32, i32, i32
  }
  func.func @transform_1(%arg0: i32) -> (i32, i32) {
    %c0_i32 = arith.constant 0 : i32
    %c0_i32_0 = arith.constant 0 : i32
    %c0_i32_1 = arith.constant 0 : i32
    return %c0_i32, %c0_i32_0 : i32, i32
  }
  func.func @transform_2(%arg0: i32) -> (i32, i32) {
    %c0_i32 = arith.constant 0 : i32
    %c0_i32_0 = arith.constant 0 : i32
    %c0_i32_1 = arith.constant 0 : i32
    return %c0_i32, %c0_i32_0 : i32, i32
  }
  func.func @transform_3(%arg0: i32) -> (i32, i32, i32) {
    %c0_i32 = arith.constant 0 : i32
    %c0_i32_0 = arith.constant 0 : i32
    %c0_i32_1 = arith.constant 0 : i32
    return %arg0, %c0_i32, %c0_i32_0 : i32, i32, i32
  }
  func.func @transform_4(%arg0: i32) -> (i32, i32, i32) {
    %c0_i32 = arith.constant 0 : i32
    %c0_i32_0 = arith.constant 0 : i32
    %c0_i32_1 = arith.constant 0 : i32
    return %arg0, %c0_i32, %c0_i32_0 : i32, i32, i32
  }
}

module attributes {stable_mosaic.version = 11 : i64} {
  func.func @_bn_lrelu_kernel(%arg0: i32, %arg1: memref<1x8x11x16xbf16, #tpu.memory_space<vmem>>, %arg2: memref<1x1x1x16xf32, #tpu.memory_space<vmem>>, %arg3: memref<1x1x1x16xf32, #tpu.memory_space<vmem>>, %arg4: memref<1x8x8x16xbf16, #tpu.memory_space<vmem>>) attributes {dimension_semantics = [#tpu.dimension_semantics<parallel>], iteration_bounds = array<i64: 2>, scalar_prefetch = 0 : i64, scratch_operands = 0 : i64, tpu.core_type = #tpu.core_type<tc>, window_params = [{transform_indices = @transform_0, window_bounds = array<i64: 1, 8, 11, 16>}, {pipeline_mode = #tpu.pipeline_mode<synchronous>, transform_indices = @transform_1, window_bounds = array<i64: 1, 1, 1, 16>}, {pipeline_mode = #tpu.pipeline_mode<synchronous>, transform_indices = @transform_2, window_bounds = array<i64: 1, 1, 1, 16>}, {transform_indices = @transform_3, window_bounds = array<i64: 1, 8, 8, 16>}]} {
    %c0 = arith.constant 0 : index
    %c0_0 = arith.constant 0 : index
    %c0_1 = arith.constant 0 : index
    %c0_2 = arith.constant 0 : index
    %0 = vector.load %arg1[%c0, %c0_0, %c0_1, %c0_2] : memref<1x8x11x16xbf16, #tpu.memory_space<vmem>>, vector<1x8x11x16xbf16>
    %1 = vector.extract_strided_slice %0 {offsets = [0, 0, 0, 0], sizes = [1, 8, 8, 16], strides = [1, 1, 1, 1]} : vector<1x8x11x16xbf16> to vector<1x8x8x16xbf16>
    %2 = arith.extf %1 : vector<1x8x8x16xbf16> to vector<1x8x8x16xf32>
    %c0_3 = arith.constant 0 : index
    %c0_4 = arith.constant 0 : index
    %c0_5 = arith.constant 0 : index
    %c0_6 = arith.constant 0 : index
    %3 = vector.load %arg2[%c0_3, %c0_4, %c0_5, %c0_6] : memref<1x1x1x16xf32, #tpu.memory_space<vmem>>, vector<1x1x1x16xf32>
    %4 = vector.broadcast %3 : vector<1x1x1x16xf32> to vector<1x8x8x16xf32>
    %5 = arith.mulf %2, %4 : vector<1x8x8x16xf32>
    %c0_7 = arith.constant 0 : index
    %c0_8 = arith.constant 0 : index
    %c0_9 = arith.constant 0 : index
    %c0_10 = arith.constant 0 : index
    %6 = vector.load %arg3[%c0_7, %c0_8, %c0_9, %c0_10] : memref<1x1x1x16xf32, #tpu.memory_space<vmem>>, vector<1x1x1x16xf32>
    %7 = vector.broadcast %6 : vector<1x1x1x16xf32> to vector<1x8x8x16xf32>
    %8 = arith.addf %5, %7 : vector<1x8x8x16xf32>
    %cst = arith.constant 0.000000e+00 : f32
    %9 = vector.broadcast %cst : f32 to vector<1x8x8x16xf32>
    %10 = arith.cmpf oge, %8, %9 : vector<1x8x8x16xf32>
    %cst_11 = arith.constant 0.00999999977 : f32
    %11 = vector.broadcast %cst_11 : f32 to vector<1x8x8x16xf32>
    %12 = arith.mulf %11, %8 : vector<1x8x8x16xf32>
    %13 = arith.select %10, %8, %12 : vector<1x8x8x16xi1>, vector<1x8x8x16xf32>
    %14 = arith.truncf %13 : vector<1x8x8x16xf32> to vector<1x8x8x16xbf16>
    %c0_12 = arith.constant 0 : index
    %c0_13 = arith.constant 0 : index
    %c0_14 = arith.constant 0 : index
    %c0_15 = arith.constant 0 : index
    %15 = vector.load %arg4[%c0_12, %c0_13, %c0_14, %c0_15] : memref<1x8x8x16xbf16, #tpu.memory_space<vmem>>, vector<1x8x8x16xbf16>
    tpu.vector_store %arg4[%c0_12, %c0_13, %c0_14, %c0_15], %14 {strides = array<i32>} : memref<1x8x8x16xbf16, #tpu.memory_space<vmem>>, vector<1x8x8x16xbf16>,
    return
  }
  func.func @transform_0(%arg0: i32) -> (i32, i32, i32, i32) {
    %c0_i32 = arith.constant 0 : i32
    %c0_i32_0 = arith.constant 0 : i32
    %c0_i32_1 = arith.constant 0 : i32
    %c0_i32_2 = arith.constant 0 : i32
    return %arg0, %c0_i32, %c0_i32_0, %c0_i32_1 : i32, i32, i32, i32
  }
  func.func @transform_1(%arg0: i32) -> (i32, i32, i32, i32) {
    %c0_i32 = arith.constant 0 : i32
    %c0_i32_0 = arith.constant 0 : i32
    %c0_i32_1 = arith.constant 0 : i32
    %c0_i32_2 = arith.constant 0 : i32
    %c0_i32_3 = arith.constant 0 : i32
    return %c0_i32, %c0_i32_0, %c0_i32_1, %c0_i32_2 : i32, i32, i32, i32
  }
  func.func @transform_2(%arg0: i32) -> (i32, i32, i32, i32) {
    %c0_i32 = arith.constant 0 : i32
    %c0_i32_0 = arith.constant 0 : i32
    %c0_i32_1 = arith.constant 0 : i32
    %c0_i32_2 = arith.constant 0 : i32
    %c0_i32_3 = arith.constant 0 : i32
    return %c0_i32, %c0_i32_0, %c0_i32_1, %c0_i32_2 : i32, i32, i32, i32
  }
  func.func @transform_3(%arg0: i32) -> (i32, i32, i32, i32) {
    %c0_i32 = arith.constant 0 : i32
    %c0_i32_0 = arith.constant 0 : i32
    %c0_i32_1 = arith.constant 0 : i32
    %c0_i32_2 = arith.constant 0 : i32
    return %arg0, %c0_i32, %c0_i32_0, %c0_i32_1 : i32, i32, i32, i32
  }
}

module attributes {stable_mosaic.version = 11 : i64} {
  func.func @_convt_stats_kernel(%arg0: i32, %arg1: memref<1x380x16xbf16, #tpu.memory_space<vmem>>, %arg2: memref<256x8xbf16, #tpu.memory_space<vmem>>, %arg3: memref<304x1xf32, #tpu.memory_space<vmem>>, %arg4: memref<1x304x8xbf16, #tpu.memory_space<vmem>>, %arg5: memref<1x2x8xf32, #tpu.memory_space<vmem>>, %arg6: memref<304x256xbf16, #tpu.memory_space<vmem>>) attributes {dimension_semantics = [#tpu.dimension_semantics<parallel>], iteration_bounds = array<i64: 2>, scalar_prefetch = 0 : i64, scratch_operands = 1 : i64, tpu.core_type = #tpu.core_type<tc>, window_params = [{transform_indices = @transform_0, window_bounds = array<i64: 1, 380, 16>}, {pipeline_mode = #tpu.pipeline_mode<synchronous>, transform_indices = @transform_1, window_bounds = array<i64: 256, 8>}, {pipeline_mode = #tpu.pipeline_mode<synchronous>, transform_indices = @transform_2, window_bounds = array<i64: 304, 1>}, {transform_indices = @transform_3, window_bounds = array<i64: 1, 304, 8>}, {transform_indices = @transform_4, window_bounds = array<i64: 1, 2, 8>}]} {
    %c0 = arith.constant 0 : index
    %c0_0 = arith.constant 0 : index
    %0 = vector.load %arg3[%c0, %c0_0] : memref<304x1xf32, #tpu.memory_space<vmem>>, vector<304x1xf32>
    %cst = arith.constant 0.000000e+00 : f32
    %1 = vector.broadcast %cst : f32 to vector<1x8xf32>
    %cst_1 = arith.constant 0.000000e+00 : f32
    %2 = vector.broadcast %cst_1 : f32 to vector<1x8xf32>
    %c0_2 = arith.constant 0 : index
    %c0_3 = arith.constant 0 : index
    %c0_4 = arith.constant 0 : index
    %3 = vector.load %arg1[%c0_2, %c0_3, %c0_4] : memref<1x380x16xbf16, #tpu.memory_space<vmem>>, vector<1x304x16xbf16>
    %4 = vector.shape_cast %3 : vector<1x304x16xbf16> to vector<304x16xbf16>
    %c0_5 = arith.constant 0 : index
    %c0_6 = arith.constant 0 : index
    %5 = vector.load %arg6[%c0_5, %c0_6] : memref<304x256xbf16, #tpu.memory_space<vmem>>, vector<304x16xbf16>
    tpu.vector_store %arg6[%c0_5, %c0_6], %4 {strides = array<i32>} : memref<304x256xbf16, #tpu.memory_space<vmem>>, vector<304x16xbf16>,
    %c0_7 = arith.constant 0 : index
    %c1 = arith.constant 1 : index
    %c0_8 = arith.constant 0 : index
    %6 = vector.load %arg1[%c0_7, %c1, %c0_8] : memref<1x380x16xbf16, #tpu.memory_space<vmem>>, vector<1x304x16xbf16>
    %7 = vector.shape_cast %6 : vector<1x304x16xbf16> to vector<304x16xbf16>
    %c0_9 = arith.constant 0 : index
    %c16 = arith.constant 16 : index
    %8 = vector.load %arg6[%c0_9, %c16] : memref<304x256xbf16, #tpu.memory_space<vmem>>, vector<304x16xbf16>
    tpu.vector_store %arg6[%c0_9, %c16], %7 {strides = array<i32>} : memref<304x256xbf16, #tpu.memory_space<vmem>>, vector<304x16xbf16>,
    %c0_10 = arith.constant 0 : index
    %c2 = arith.constant 2 : index
    %c0_11 = arith.constant 0 : index
    %9 = vector.load %arg1[%c0_10, %c2, %c0_11] : memref<1x380x16xbf16, #tpu.memory_space<vmem>>, vector<1x304x16xbf16>
    %10 = vector.shape_cast %9 : vector<1x304x16xbf16> to vector<304x16xbf16>
    %c0_12 = arith.constant 0 : index
    %c32 = arith.constant 32 : index
    %11 = vector.load %arg6[%c0_12, %c32] : memref<304x256xbf16, #tpu.memory_space<vmem>>, vector<304x16xbf16>
    tpu.vector_store %arg6[%c0_12, %c32], %10 {strides = array<i32>} : memref<304x256xbf16, #tpu.memory_space<vmem>>, vector<304x16xbf16>,
    %c0_13 = arith.constant 0 : index
    %c3 = arith.constant 3 : index
    %c0_14 = arith.constant 0 : index
    %12 = vector.load %arg1[%c0_13, %c3, %c0_14] : memref<1x380x16xbf16, #tpu.memory_space<vmem>>, vector<1x304x16xbf16>
    %13 = vector.shape_cast %12 : vector<1x304x16xbf16> to vector<304x16xbf16>
    %c0_15 = arith.constant 0 : index
    %c48 = arith.constant 48 : index
    %14 = vector.load %arg6[%c0_15, %c48] : memref<304x256xbf16, #tpu.memory_space<vmem>>, vector<304x16xbf16>
    tpu.vector_store %arg6[%c0_15, %c48], %13 {strides = array<i32>} : memref<304x256xbf16, #tpu.memory_space<vmem>>, vector<304x16xbf16>,
    %c0_16 = arith.constant 0 : index
    %c19 = arith.constant 19 : index
    %c0_17 = arith.constant 0 : index
    %15 = vector.load %arg1[%c0_16, %c19, %c0_17] : memref<1x380x16xbf16, #tpu.memory_space<vmem>>, vector<1x304x16xbf16>
    %16 = vector.shape_cast %15 : vector<1x304x16xbf16> to vector<304x16xbf16>
    %c0_18 = arith.constant 0 : index
    %c64 = arith.constant 64 : index
    %17 = vector.load %arg6[%c0_18, %c64] : memref<304x256xbf16, #tpu.memory_space<vmem>>, vector<304x16xbf16>
    tpu.vector_store %arg6[%c0_18, %c64], %16 {strides = array<i32>} : memref<304x256xbf16, #tpu.memory_space<vmem>>, vector<304x16xbf16>,
    %c0_19 = arith.constant 0 : index
    %c20 = arith.constant 20 : index
    %c0_20 = arith.constant 0 : index
    %18 = vector.load %arg1[%c0_19, %c20, %c0_20] : memref<1x380x16xbf16, #tpu.memory_space<vmem>>, vector<1x304x16xbf16>
    %19 = vector.shape_cast %18 : vector<1x304x16xbf16> to vector<304x16xbf16>
    %c0_21 = arith.constant 0 : index
    %c80 = arith.constant 80 : index
    %20 = vector.load %arg6[%c0_21, %c80] : memref<304x256xbf16, #tpu.memory_space<vmem>>, vector<304x16xbf16>
    tpu.vector_store %arg6[%c0_21, %c80], %19 {strides = array<i32>} : memref<304x256xbf16, #tpu.memory_space<vmem>>, vector<304x16xbf16>,
    %c0_22 = arith.constant 0 : index
    %c21 = arith.constant 21 : index
    %c0_23 = arith.constant 0 : index
    %21 = vector.load %arg1[%c0_22, %c21, %c0_23] : memref<1x380x16xbf16, #tpu.memory_space<vmem>>, vector<1x304x16xbf16>
    %22 = vector.shape_cast %21 : vector<1x304x16xbf16> to vector<304x16xbf16>
    %c0_24 = arith.constant 0 : index
    %c96 = arith.constant 96 : index
    %23 = vector.load %arg6[%c0_24, %c96] : memref<304x256xbf16, #tpu.memory_space<vmem>>, vector<304x16xbf16>
    tpu.vector_store %arg6[%c0_24, %c96], %22 {strides = array<i32>} : memref<304x256xbf16, #tpu.memory_space<vmem>>, vector<304x16xbf16>,
    %c0_25 = arith.constant 0 : index
    %c22 = arith.constant 22 : index
    %c0_26 = arith.constant 0 : index
    %24 = vector.load %arg1[%c0_25, %c22, %c0_26] : memref<1x380x16xbf16, #tpu.memory_space<vmem>>, vector<1x304x16xbf16>
    %25 = vector.shape_cast %24 : vector<1x304x16xbf16> to vector<304x16xbf16>
    %c0_27 = arith.constant 0 : index
    %c112 = arith.constant 112 : index
    %26 = vector.load %arg6[%c0_27, %c112] : memref<304x256xbf16, #tpu.memory_space<vmem>>, vector<304x16xbf16>
    tpu.vector_store %arg6[%c0_27, %c112], %25 {strides = array<i32>} : memref<304x256xbf16, #tpu.memory_space<vmem>>, vector<304x16xbf16>,
    %c0_28 = arith.constant 0 : index
    %c38 = arith.constant 38 : index
    %c0_29 = arith.constant 0 : index
    %27 = vector.load %arg1[%c0_28, %c38, %c0_29] : memref<1x380x16xbf16, #tpu.memory_space<vmem>>, vector<1x304x16xbf16>
    %28 = vector.shape_cast %27 : vector<1x304x16xbf16> to vector<304x16xbf16>
    %c0_30 = arith.constant 0 : index
    %c128 = arith.constant 128 : index
    %29 = vector.load %arg6[%c0_30, %c128] : memref<304x256xbf16, #tpu.memory_space<vmem>>, vector<304x16xbf16>
    tpu.vector_store %arg6[%c0_30, %c128], %28 {strides = array<i32>} : memref<304x256xbf16, #tpu.memory_space<vmem>>, vector<304x16xbf16>,
    %c0_31 = arith.constant 0 : index
    %c39 = arith.constant 39 : index
    %c0_32 = arith.constant 0 : index
    %30 = vector.load %arg1[%c0_31, %c39, %c0_32] : memref<1x380x16xbf16, #tpu.memory_space<vmem>>, vector<1x304x16xbf16>
    %31 = vector.shape_cast %30 : vector<1x304x16xbf16> to vector<304x16xbf16>
    %c0_33 = arith.constant 0 : index
    %c144 = arith.constant 144 : index
    %32 = vector.load %arg6[%c0_33, %c144] : memref<304x256xbf16, #tpu.memory_space<vmem>>, vector<304x16xbf16>
    tpu.vector_store %arg6[%c0_33, %c144], %31 {strides = array<i32>} : memref<304x256xbf16, #tpu.memory_space<vmem>>, vector<304x16xbf16>,
    %c0_34 = arith.constant 0 : index
    %c40 = arith.constant 40 : index
    %c0_35 = arith.constant 0 : index
    %33 = vector.load %arg1[%c0_34, %c40, %c0_35] : memref<1x380x16xbf16, #tpu.memory_space<vmem>>, vector<1x304x16xbf16>
    %34 = vector.shape_cast %33 : vector<1x304x16xbf16> to vector<304x16xbf16>
    %c0_36 = arith.constant 0 : index
    %c160 = arith.constant 160 : index
    %35 = vector.load %arg6[%c0_36, %c160] : memref<304x256xbf16, #tpu.memory_space<vmem>>, vector<304x16xbf16>
    tpu.vector_store %arg6[%c0_36, %c160], %34 {strides = array<i32>} : memref<304x256xbf16, #tpu.memory_space<vmem>>, vector<304x16xbf16>,
    %c0_37 = arith.constant 0 : index
    %c41 = arith.constant 41 : index
    %c0_38 = arith.constant 0 : index
    %36 = vector.load %arg1[%c0_37, %c41, %c0_38] : memref<1x380x16xbf16, #tpu.memory_space<vmem>>, vector<1x304x16xbf16>
    %37 = vector.shape_cast %36 : vector<1x304x16xbf16> to vector<304x16xbf16>
    %c0_39 = arith.constant 0 : index
    %c176 = arith.constant 176 : index
    %38 = vector.load %arg6[%c0_39, %c176] : memref<304x256xbf16, #tpu.memory_space<vmem>>, vector<304x16xbf16>
    tpu.vector_store %arg6[%c0_39, %c176], %37 {strides = array<i32>} : memref<304x256xbf16, #tpu.memory_space<vmem>>, vector<304x16xbf16>,
    %c0_40 = arith.constant 0 : index
    %c57 = arith.constant 57 : index
    %c0_41 = arith.constant 0 : index
    %39 = vector.load %arg1[%c0_40, %c57, %c0_41] : memref<1x380x16xbf16, #tpu.memory_space<vmem>>, vector<1x304x16xbf16>
    %40 = vector.shape_cast %39 : vector<1x304x16xbf16> to vector<304x16xbf16>
    %c0_42 = arith.constant 0 : index
    %c192 = arith.constant 192 : index
    %41 = vector.load %arg6[%c0_42, %c192] : memref<304x256xbf16, #tpu.memory_space<vmem>>, vector<304x16xbf16>
    tpu.vector_store %arg6[%c0_42, %c192], %40 {strides = array<i32>} : memref<304x256xbf16, #tpu.memory_space<vmem>>, vector<304x16xbf16>,
    %c0_43 = arith.constant 0 : index
    %c58 = arith.constant 58 : index
    %c0_44 = arith.constant 0 : index
    %42 = vector.load %arg1[%c0_43, %c58, %c0_44] : memref<1x380x16xbf16, #tpu.memory_space<vmem>>, vector<1x304x16xbf16>
    %43 = vector.shape_cast %42 : vector<1x304x16xbf16> to vector<304x16xbf16>
    %c0_45 = arith.constant 0 : index
    %c208 = arith.constant 208 : index
    %44 = vector.load %arg6[%c0_45, %c208] : memref<304x256xbf16, #tpu.memory_space<vmem>>, vector<304x16xbf16>
    tpu.vector_store %arg6[%c0_45, %c208], %43 {strides = array<i32>} : memref<304x256xbf16, #tpu.memory_space<vmem>>, vector<304x16xbf16>,
    %c0_46 = arith.constant 0 : index
    %c59 = arith.constant 59 : index
    %c0_47 = arith.constant 0 : index
    %45 = vector.load %arg1[%c0_46, %c59, %c0_47] : memref<1x380x16xbf16, #tpu.memory_space<vmem>>, vector<1x304x16xbf16>
    %46 = vector.shape_cast %45 : vector<1x304x16xbf16> to vector<304x16xbf16>
    %c0_48 = arith.constant 0 : index
    %c224 = arith.constant 224 : index
    %47 = vector.load %arg6[%c0_48, %c224] : memref<304x256xbf16, #tpu.memory_space<vmem>>, vector<304x16xbf16>
    tpu.vector_store %arg6[%c0_48, %c224], %46 {strides = array<i32>} : memref<304x256xbf16, #tpu.memory_space<vmem>>, vector<304x16xbf16>,
    %c0_49 = arith.constant 0 : index
    %c60 = arith.constant 60 : index
    %c0_50 = arith.constant 0 : index
    %48 = vector.load %arg1[%c0_49, %c60, %c0_50] : memref<1x380x16xbf16, #tpu.memory_space<vmem>>, vector<1x304x16xbf16>
    %49 = vector.shape_cast %48 : vector<1x304x16xbf16> to vector<304x16xbf16>
    %c0_51 = arith.constant 0 : index
    %c240 = arith.constant 240 : index
    %50 = vector.load %arg6[%c0_51, %c240] : memref<304x256xbf16, #tpu.memory_space<vmem>>, vector<304x16xbf16>
    tpu.vector_store %arg6[%c0_51, %c240], %49 {strides = array<i32>} : memref<304x256xbf16, #tpu.memory_space<vmem>>, vector<304x16xbf16>,
    %c0_52 = arith.constant 0 : index
    %c0_53 = arith.constant 0 : index
    %51 = vector.load %arg6[%c0_52, %c0_53] : memref<304x256xbf16, #tpu.memory_space<vmem>>, vector<304x256xbf16>
    %c0_54 = arith.constant 0 : index
    %c0_55 = arith.constant 0 : index
    %52 = vector.load %arg2[%c0_54, %c0_55] : memref<256x8xbf16, #tpu.memory_space<vmem>>, vector<256x8xbf16>
    %cst_56 = arith.constant dense<0.000000e+00> : vector<304x8xf32>
    %53 = tpu.matmul %51, %52, %cst_56 {dimension_numbers = #tpu.dot_dimension_numbers<[1], [0], [0], [1], [0, 0, 1, 1], [], []>} : vector<304x256xbf16>, vector<256x8xbf16>, vector<304x8xf32> -> vector<304x8xf32>
    %54 = arith.truncf %53 : vector<304x8xf32> to vector<304x8xbf16>
    %c0_57 = arith.constant 0 : index
    %c0_58 = arith.constant 0 : index
    %c0_59 = arith.constant 0 : index
    %55 = vector.load %arg4[%c0_57, %c0_58, %c0_59] : memref<1x304x8xbf16, #tpu.memory_space<vmem>>, vector<1x304x8xbf16>
    %56 = vector.shape_cast %55 : vector<1x304x8xbf16> to vector<304x8xbf16>
    %57 = vector.shape_cast %54 : vector<304x8xbf16> to vector<1x304x8xbf16>
    tpu.vector_store %arg4[%c0_57, %c0_58, %c0_59], %57 {strides = array<i32>} : memref<1x304x8xbf16, #tpu.memory_space<vmem>>, vector<1x304x8xbf16>,
    %58 = vector.broadcast %0 : vector<304x1xf32> to vector<304x8xf32>
    %59 = arith.mulf %53, %58 : vector<304x8xf32>
    %cst_60 = arith.constant dense<0.000000e+00> : vector<8xf32>
    %60 = vector.multi_reduction <add>, %59, %cst_60 [0] : vector<304x8xf32> to vector<8xf32>
    %61 = vector.shape_cast %60 : vector<8xf32> to vector<1x8xf32>
    %62 = arith.addf %1, %61 : vector<1x8xf32>
    %63 = arith.mulf %53, %53 : vector<304x8xf32>
    %64 = vector.broadcast %0 : vector<304x1xf32> to vector<304x8xf32>
    %65 = arith.mulf %63, %64 : vector<304x8xf32>
    %cst_61 = arith.constant dense<0.000000e+00> : vector<8xf32>
    %66 = vector.multi_reduction <add>, %65, %cst_61 [0] : vector<304x8xf32> to vector<8xf32>
    %67 = vector.shape_cast %66 : vector<8xf32> to vector<1x8xf32>
    %68 = arith.addf %2, %67 : vector<1x8xf32>
    %c0_62 = arith.constant 0 : index
    %c0_63 = arith.constant 0 : index
    %c0_64 = arith.constant 0 : index
    %69 = vector.load %arg5[%c0_62, %c0_63, %c0_64] : memref<1x2x8xf32, #tpu.memory_space<vmem>>, vector<1x1x8xf32>
    %70 = vector.shape_cast %69 : vector<1x1x8xf32> to vector<1x8xf32>
    %71 = vector.shape_cast %62 : vector<1x8xf32> to vector<1x1x8xf32>
    tpu.vector_store %arg5[%c0_62, %c0_63, %c0_64], %71 {strides = array<i32>} : memref<1x2x8xf32, #tpu.memory_space<vmem>>, vector<1x1x8xf32>,
    %c0_65 = arith.constant 0 : index
    %c1_66 = arith.constant 1 : index
    %c0_67 = arith.constant 0 : index
    %72 = vector.load %arg5[%c0_65, %c1_66, %c0_67] : memref<1x2x8xf32, #tpu.memory_space<vmem>>, vector<1x1x8xf32>
    %73 = vector.shape_cast %72 : vector<1x1x8xf32> to vector<1x8xf32>
    %74 = vector.shape_cast %68 : vector<1x8xf32> to vector<1x1x8xf32>
    tpu.vector_store %arg5[%c0_65, %c1_66, %c0_67], %74 {strides = array<i32>} : memref<1x2x8xf32, #tpu.memory_space<vmem>>, vector<1x1x8xf32>,
    return
  }
  func.func @transform_0(%arg0: i32) -> (i32, i32, i32) {
    %c0_i32 = arith.constant 0 : i32
    %c0_i32_0 = arith.constant 0 : i32
    %c0_i32_1 = arith.constant 0 : i32
    return %arg0, %c0_i32, %c0_i32_0 : i32, i32, i32
  }
  func.func @transform_1(%arg0: i32) -> (i32, i32) {
    %c0_i32 = arith.constant 0 : i32
    %c0_i32_0 = arith.constant 0 : i32
    %c0_i32_1 = arith.constant 0 : i32
    return %c0_i32, %c0_i32_0 : i32, i32
  }
  func.func @transform_2(%arg0: i32) -> (i32, i32) {
    %c0_i32 = arith.constant 0 : i32
    %c0_i32_0 = arith.constant 0 : i32
    %c0_i32_1 = arith.constant 0 : i32
    return %c0_i32, %c0_i32_0 : i32, i32
  }
  func.func @transform_3(%arg0: i32) -> (i32, i32, i32) {
    %c0_i32 = arith.constant 0 : i32
    %c0_i32_0 = arith.constant 0 : i32
    %c0_i32_1 = arith.constant 0 : i32
    return %arg0, %c0_i32, %c0_i32_0 : i32, i32, i32
  }
  func.func @transform_4(%arg0: i32) -> (i32, i32, i32) {
    %c0_i32 = arith.constant 0 : i32
    %c0_i32_0 = arith.constant 0 : i32
    %c0_i32_1 = arith.constant 0 : i32
    return %arg0, %c0_i32, %c0_i32_0 : i32, i32, i32
  }
}

module attributes {stable_mosaic.version = 11 : i64} {
  func.func @_bn_lrelu_kernel(%arg0: i32, %arg1: memref<1x16x19x8xbf16, #tpu.memory_space<vmem>>, %arg2: memref<1x1x1x8xf32, #tpu.memory_space<vmem>>, %arg3: memref<1x1x1x8xf32, #tpu.memory_space<vmem>>, %arg4: memref<1x16x16x8xbf16, #tpu.memory_space<vmem>>) attributes {dimension_semantics = [#tpu.dimension_semantics<parallel>], iteration_bounds = array<i64: 2>, scalar_prefetch = 0 : i64, scratch_operands = 0 : i64, tpu.core_type = #tpu.core_type<tc>, window_params = [{transform_indices = @transform_0, window_bounds = array<i64: 1, 16, 19, 8>}, {pipeline_mode = #tpu.pipeline_mode<synchronous>, transform_indices = @transform_1, window_bounds = array<i64: 1, 1, 1, 8>}, {pipeline_mode = #tpu.pipeline_mode<synchronous>, transform_indices = @transform_2, window_bounds = array<i64: 1, 1, 1, 8>}, {transform_indices = @transform_3, window_bounds = array<i64: 1, 16, 16, 8>}]} {
    %c0 = arith.constant 0 : index
    %c0_0 = arith.constant 0 : index
    %c0_1 = arith.constant 0 : index
    %c0_2 = arith.constant 0 : index
    %0 = vector.load %arg1[%c0, %c0_0, %c0_1, %c0_2] : memref<1x16x19x8xbf16, #tpu.memory_space<vmem>>, vector<1x16x19x8xbf16>
    %1 = vector.extract_strided_slice %0 {offsets = [0, 0, 0, 0], sizes = [1, 16, 16, 8], strides = [1, 1, 1, 1]} : vector<1x16x19x8xbf16> to vector<1x16x16x8xbf16>
    %2 = arith.extf %1 : vector<1x16x16x8xbf16> to vector<1x16x16x8xf32>
    %c0_3 = arith.constant 0 : index
    %c0_4 = arith.constant 0 : index
    %c0_5 = arith.constant 0 : index
    %c0_6 = arith.constant 0 : index
    %3 = vector.load %arg2[%c0_3, %c0_4, %c0_5, %c0_6] : memref<1x1x1x8xf32, #tpu.memory_space<vmem>>, vector<1x1x1x8xf32>
    %4 = vector.broadcast %3 : vector<1x1x1x8xf32> to vector<1x16x16x8xf32>
    %5 = arith.mulf %2, %4 : vector<1x16x16x8xf32>
    %c0_7 = arith.constant 0 : index
    %c0_8 = arith.constant 0 : index
    %c0_9 = arith.constant 0 : index
    %c0_10 = arith.constant 0 : index
    %6 = vector.load %arg3[%c0_7, %c0_8, %c0_9, %c0_10] : memref<1x1x1x8xf32, #tpu.memory_space<vmem>>, vector<1x1x1x8xf32>
    %7 = vector.broadcast %6 : vector<1x1x1x8xf32> to vector<1x16x16x8xf32>
    %8 = arith.addf %5, %7 : vector<1x16x16x8xf32>
    %cst = arith.constant 0.000000e+00 : f32
    %9 = vector.broadcast %cst : f32 to vector<1x16x16x8xf32>
    %10 = arith.cmpf oge, %8, %9 : vector<1x16x16x8xf32>
    %cst_11 = arith.constant 0.00999999977 : f32
    %11 = vector.broadcast %cst_11 : f32 to vector<1x16x16x8xf32>
    %12 = arith.mulf %11, %8 : vector<1x16x16x8xf32>
    %13 = arith.select %10, %8, %12 : vector<1x16x16x8xi1>, vector<1x16x16x8xf32>
    %14 = arith.truncf %13 : vector<1x16x16x8xf32> to vector<1x16x16x8xbf16>
    %c0_12 = arith.constant 0 : index
    %c0_13 = arith.constant 0 : index
    %c0_14 = arith.constant 0 : index
    %c0_15 = arith.constant 0 : index
    %15 = vector.load %arg4[%c0_12, %c0_13, %c0_14, %c0_15] : memref<1x16x16x8xbf16, #tpu.memory_space<vmem>>, vector<1x16x16x8xbf16>
    tpu.vector_store %arg4[%c0_12, %c0_13, %c0_14, %c0_15], %14 {strides = array<i32>} : memref<1x16x16x8xbf16, #tpu.memory_space<vmem>>, vector<1x16x16x8xbf16>,
    return
  }
  func.func @transform_0(%arg0: i32) -> (i32, i32, i32, i32) {
    %c0_i32 = arith.constant 0 : i32
    %c0_i32_0 = arith.constant 0 : i32
    %c0_i32_1 = arith.constant 0 : i32
    %c0_i32_2 = arith.constant 0 : i32
    return %arg0, %c0_i32, %c0_i32_0, %c0_i32_1 : i32, i32, i32, i32
  }
  func.func @transform_1(%arg0: i32) -> (i32, i32, i32, i32) {
    %c0_i32 = arith.constant 0 : i32
    %c0_i32_0 = arith.constant 0 : i32
    %c0_i32_1 = arith.constant 0 : i32
    %c0_i32_2 = arith.constant 0 : i32
    %c0_i32_3 = arith.constant 0 : i32
    return %c0_i32, %c0_i32_0, %c0_i32_1, %c0_i32_2 : i32, i32, i32, i32
  }
  func.func @transform_2(%arg0: i32) -> (i32, i32, i32, i32) {
    %c0_i32 = arith.constant 0 : i32
    %c0_i32_0 = arith.constant 0 : i32
    %c0_i32_1 = arith.constant 0 : i32
    %c0_i32_2 = arith.constant 0 : i32
    %c0_i32_3 = arith.constant 0 : i32
    return %c0_i32, %c0_i32_0, %c0_i32_1, %c0_i32_2 : i32, i32, i32, i32
  }
  func.func @transform_3(%arg0: i32) -> (i32, i32, i32, i32) {
    %c0_i32 = arith.constant 0 : i32
    %c0_i32_0 = arith.constant 0 : i32
    %c0_i32_1 = arith.constant 0 : i32
    %c0_i32_2 = arith.constant 0 : i32
    return %arg0, %c0_i32, %c0_i32_0, %c0_i32_1 : i32, i32, i32, i32
  }
}

module attributes {stable_mosaic.version = 11 : i64} {
  func.func @_convt_cout1_kernel(%arg0: i32, %arg1: memref<1x8x1122xbf16, #tpu.memory_space<vmem>>, %arg2: memref<9x8x1xf32, #tpu.memory_space<vmem>>, %arg3: memref<1x1x1023xf32, #tpu.memory_space<vmem>>) attributes {dimension_semantics = [#tpu.dimension_semantics<parallel>], iteration_bounds = array<i64: 2>, scalar_prefetch = 0 : i64, scratch_operands = 0 : i64, tpu.core_type = #tpu.core_type<tc>, window_params = [{transform_indices = @transform_0, window_bounds = array<i64: 1, 8, 1122>}, {pipeline_mode = #tpu.pipeline_mode<synchronous>, transform_indices = @transform_1, window_bounds = array<i64: 9, 8, 1>}, {transform_indices = @transform_2, window_bounds = array<i64: 1, 1, 1023>}]} {
    %c0 = arith.constant 0 : index
    %c0_0 = arith.constant 0 : index
    %c0_1 = arith.constant 0 : index
    %0 = vector.load %arg1[%c0, %c0_0, %c0_1] : memref<1x8x1122xbf16, #tpu.memory_space<vmem>>, vector<1x8x1122xbf16>
    %1 = vector.shape_cast %0 : vector<1x8x1122xbf16> to vector<8x1122xbf16>
    %2 = arith.extf %1 : vector<8x1122xbf16> to vector<8x1122xf32>
    %cst = arith.constant 0.000000e+00 : f32
    %3 = vector.broadcast %cst : f32 to vector<8x1023xf32>
    %4 = vector.extract_strided_slice %2 {offsets = [0, 0], sizes = [8, 1023], strides = [1, 1]} : vector<8x1122xf32> to vector<8x1023xf32>
    %c0_2 = arith.constant 0 : index
    %c0_3 = arith.constant 0 : index
    %c0_4 = arith.constant 0 : index
    %5 = vector.load %arg2[%c0_2, %c0_3, %c0_4] : memref<9x8x1xf32, #tpu.memory_space<vmem>>, vector<1x8x1xf32>
    %6 = vector.shape_cast %5 : vector<1x8x1xf32> to vector<8x1xf32>
    %7 = vector.broadcast %6 : vector<8x1xf32> to vector<8x1023xf32>
    %8 = arith.mulf %4, %7 : vector<8x1023xf32>
    %9 = arith.addf %3, %8 : vector<8x1023xf32>
    %10 = vector.extract_strided_slice %2 {offsets = [0, 1], sizes = [8, 1023], strides = [1, 1]} : vector<8x1122xf32> to vector<8x1023xf32>
    %c1 = arith.constant 1 : index
    %c0_5 = arith.constant 0 : index
    %c0_6 = arith.constant 0 : index
    %11 = vector.load %arg2[%c1, %c0_5, %c0_6] : memref<9x8x1xf32, #tpu.memory_space<vmem>>, vector<1x8x1xf32>
    %12 = vector.shape_cast %11 : vector<1x8x1xf32> to vector<8x1xf32>
    %13 = vector.broadcast %12 : vector<8x1xf32> to vector<8x1023xf32>
    %14 = arith.mulf %10, %13 : vector<8x1023xf32>
    %15 = arith.addf %9, %14 : vector<8x1023xf32>
    %16 = vector.extract_strided_slice %2 {offsets = [0, 2], sizes = [8, 1023], strides = [1, 1]} : vector<8x1122xf32> to vector<8x1023xf32>
    %c2 = arith.constant 2 : index
    %c0_7 = arith.constant 0 : index
    %c0_8 = arith.constant 0 : index
    %17 = vector.load %arg2[%c2, %c0_7, %c0_8] : memref<9x8x1xf32, #tpu.memory_space<vmem>>, vector<1x8x1xf32>
    %18 = vector.shape_cast %17 : vector<1x8x1xf32> to vector<8x1xf32>
    %19 = vector.broadcast %18 : vector<8x1xf32> to vector<8x1023xf32>
    %20 = arith.mulf %16, %19 : vector<8x1023xf32>
    %21 = arith.addf %15, %20 : vector<8x1023xf32>
    %22 = vector.extract_strided_slice %2 {offsets = [0, 33], sizes = [8, 1023], strides = [1, 1]} : vector<8x1122xf32> to vector<8x1023xf32>
    %c3 = arith.constant 3 : index
    %c0_9 = arith.constant 0 : index
    %c0_10 = arith.constant 0 : index
    %23 = vector.load %arg2[%c3, %c0_9, %c0_10] : memref<9x8x1xf32, #tpu.memory_space<vmem>>, vector<1x8x1xf32>
    %24 = vector.shape_cast %23 : vector<1x8x1xf32> to vector<8x1xf32>
    %25 = vector.broadcast %24 : vector<8x1xf32> to vector<8x1023xf32>
    %26 = arith.mulf %22, %25 : vector<8x1023xf32>
    %27 = arith.addf %21, %26 : vector<8x1023xf32>
    %28 = vector.extract_strided_slice %2 {offsets = [0, 34], sizes = [8, 1023], strides = [1, 1]} : vector<8x1122xf32> to vector<8x1023xf32>
    %c4 = arith.constant 4 : index
    %c0_11 = arith.constant 0 : index
    %c0_12 = arith.constant 0 : index
    %29 = vector.load %arg2[%c4, %c0_11, %c0_12] : memref<9x8x1xf32, #tpu.memory_space<vmem>>, vector<1x8x1xf32>
    %30 = vector.shape_cast %29 : vector<1x8x1xf32> to vector<8x1xf32>
    %31 = vector.broadcast %30 : vector<8x1xf32> to vector<8x1023xf32>
    %32 = arith.mulf %28, %31 : vector<8x1023xf32>
    %33 = arith.addf %27, %32 : vector<8x1023xf32>
    %34 = vector.extract_strided_slice %2 {offsets = [0, 35], sizes = [8, 1023], strides = [1, 1]} : vector<8x1122xf32> to vector<8x1023xf32>
    %c5 = arith.constant 5 : index
    %c0_13 = arith.constant 0 : index
    %c0_14 = arith.constant 0 : index
    %35 = vector.load %arg2[%c5, %c0_13, %c0_14] : memref<9x8x1xf32, #tpu.memory_space<vmem>>, vector<1x8x1xf32>
    %36 = vector.shape_cast %35 : vector<1x8x1xf32> to vector<8x1xf32>
    %37 = vector.broadcast %36 : vector<8x1xf32> to vector<8x1023xf32>
    %38 = arith.mulf %34, %37 : vector<8x1023xf32>
    %39 = arith.addf %33, %38 : vector<8x1023xf32>
    %40 = vector.extract_strided_slice %2 {offsets = [0, 66], sizes = [8, 1023], strides = [1, 1]} : vector<8x1122xf32> to vector<8x1023xf32>
    %c6 = arith.constant 6 : index
    %c0_15 = arith.constant 0 : index
    %c0_16 = arith.constant 0 : index
    %41 = vector.load %arg2[%c6, %c0_15, %c0_16] : memref<9x8x1xf32, #tpu.memory_space<vmem>>, vector<1x8x1xf32>
    %42 = vector.shape_cast %41 : vector<1x8x1xf32> to vector<8x1xf32>
    %43 = vector.broadcast %42 : vector<8x1xf32> to vector<8x1023xf32>
    %44 = arith.mulf %40, %43 : vector<8x1023xf32>
    %45 = arith.addf %39, %44 : vector<8x1023xf32>
    %46 = vector.extract_strided_slice %2 {offsets = [0, 67], sizes = [8, 1023], strides = [1, 1]} : vector<8x1122xf32> to vector<8x1023xf32>
    %c7 = arith.constant 7 : index
    %c0_17 = arith.constant 0 : index
    %c0_18 = arith.constant 0 : index
    %47 = vector.load %arg2[%c7, %c0_17, %c0_18] : memref<9x8x1xf32, #tpu.memory_space<vmem>>, vector<1x8x1xf32>
    %48 = vector.shape_cast %47 : vector<1x8x1xf32> to vector<8x1xf32>
    %49 = vector.broadcast %48 : vector<8x1xf32> to vector<8x1023xf32>
    %50 = arith.mulf %46, %49 : vector<8x1023xf32>
    %51 = arith.addf %45, %50 : vector<8x1023xf32>
    %52 = vector.extract_strided_slice %2 {offsets = [0, 68], sizes = [8, 1023], strides = [1, 1]} : vector<8x1122xf32> to vector<8x1023xf32>
    %c8 = arith.constant 8 : index
    %c0_19 = arith.constant 0 : index
    %c0_20 = arith.constant 0 : index
    %53 = vector.load %arg2[%c8, %c0_19, %c0_20] : memref<9x8x1xf32, #tpu.memory_space<vmem>>, vector<1x8x1xf32>
    %54 = vector.shape_cast %53 : vector<1x8x1xf32> to vector<8x1xf32>
    %55 = vector.broadcast %54 : vector<8x1xf32> to vector<8x1023xf32>
    %56 = arith.mulf %52, %55 : vector<8x1023xf32>
    %57 = arith.addf %51, %56 : vector<8x1023xf32>
    %cst_21 = arith.constant dense<0.000000e+00> : vector<1023xf32>
    %58 = vector.multi_reduction <add>, %57, %cst_21 [0] : vector<8x1023xf32> to vector<1023xf32>
    %59 = vector.shape_cast %58 : vector<1023xf32> to vector<1x1023xf32>
    %c0_22 = arith.constant 0 : index
    %c0_23 = arith.constant 0 : index
    %c0_24 = arith.constant 0 : index
    %60 = vector.load %arg3[%c0_22, %c0_23, %c0_24] : memref<1x1x1023xf32, #tpu.memory_space<vmem>>, vector<1x1x1023xf32>
    %61 = vector.shape_cast %60 : vector<1x1x1023xf32> to vector<1x1023xf32>
    %62 = vector.shape_cast %59 : vector<1x1023xf32> to vector<1x1x1023xf32>
    tpu.vector_store %arg3[%c0_22, %c0_23, %c0_24], %62 {strides = array<i32>} : memref<1x1x1023xf32, #tpu.memory_space<vmem>>, vector<1x1x1023xf32>,
    return
  }
  func.func @transform_0(%arg0: i32) -> (i32, i32, i32) {
    %c0_i32 = arith.constant 0 : i32
    %c0_i32_0 = arith.constant 0 : i32
    %c0_i32_1 = arith.constant 0 : i32
    return %arg0, %c0_i32, %c0_i32_0 : i32, i32, i32
  }
  func.func @transform_1(%arg0: i32) -> (i32, i32, i32) {
    %c0_i32 = arith.constant 0 : i32
    %c0_i32_0 = arith.constant 0 : i32
    %c0_i32_1 = arith.constant 0 : i32
    %c0_i32_2 = arith.constant 0 : i32
    return %c0_i32, %c0_i32_0, %c0_i32_1 : i32, i32, i32
  }
  func.func @transform_2(%arg0: i32) -> (i32, i32, i32) {
    %c0_i32 = arith.constant 0 : i32
    %c0_i32_0 = arith.constant 0 : i32
    %c0_i32_1 = arith.constant 0 : i32
    return %arg0, %c0_i32, %c0_i32_0 : i32, i32, i32
  }
}

</mosaic_0001>

<llo_original>
// kernel: conv_generator_forward.8
$region0: #{conv_generator_forward.8}
  #allocation0 [shape = 'u32[]', space=smem, size = 0x4, offset = 0x4, fixed_abs, tag = 'smem constant byte address 0x4 - core index']
  #allocation1 [shape = 'u32[144,128]{1,0:T(1,128)}', space=vmem, size = 0x12000, scoped, tag = 'internal scratch']
  %s0 = inlined_call_operand.vmem [shape: f32[2,4,4,32], index: 0, kind: input, shape index: {}]
  %s1 = inlined_call_operand.vmem [shape: f32[1,1,1,32], index: 1, kind: input, shape index: {}]
  %s2 = inlined_call_operand.vmem [shape: f32[1,1,1,32], index: 2, kind: input, shape index: {}]
  %s3 = inlined_call_operand.vmem [shape: bf16[2,4,4,32], index: 3, kind: output, shape index: {}]
  %s4 = sld [smem:[#allocation0]]
  $region45: #{conv_generator_forward.8} parent=0
    _
  %s6 = ssub.s32 1, %s4
  %s7 = scalar_select 0, %s6, %s4
  loop: start=0, step=1, limit=4
  $region2: #{conv_generator_forward.8} parent=0 // loop_pre_header
    _
  $region3: #{conv_generator_forward.8} parent=0 // loop_header
    %s9 = sphi 0, %s13
    %p10 = scmp.ge.s32.totalorder %s9, 4
    %s19 = sphi 0, %s21
    %s22 = sphi 0, %s19
    %s23 = sphi 0, %s22
    %s39 = sphi 0, %s23
    %s43 = sphi 0, %s43
    %s45 = sphi 0, %s43
    %s46 = sphi 0, %s45
    %s60 = sphi 0, %s46
    %s64 = sphi 0, %s64
    %s66 = sphi 0, %s64
    %s67 = sphi 0, %s66
    %s81 = sphi 0, %s67
    %s87 = sphi 0, %s89
    %s90 = sphi 0, %s87
    %s91 = sphi 0, %s90
    %s107 = sphi 0, %s91
  $region4: #{conv_generator_forward.8} parent=0 // loop_header_branch
    %12 = sbr.rel (%p10) target = $region8
  $region5: #{conv_generator_forward.8} parent=0 // loop_body
    %s14 = ssub.s32 %s9, 1
    %s15 = ssub.s32 %s9, 2
    %s16 = sadd.s32 %s9, 1
    %s17 = ssub.s32 %s9, %s16
    %p18 = scmp.eq.s32.totalorder %s17, 0
    %s20 = sadd.s32 %s19, 1
    %s21 = scalar_select %p18, %s19, %s20
    %p24 = pneg %p18
    %p25 = scmp.eq.s32.totalorder %s9, 1
    %p26 = por %p24, %p25
    %p27 = scmp.ne.s32.totalorder %s19, %s22
    %p28 = scmp.eq.s32.totalorder %s9, 0
    %p29 = por %p27, %p28
    %p30 = scmp.ne.s32.totalorder %s19, %s22
    %p31 = scmp.eq.s32.totalorder %s14, 1
    %p32 = por %p30, %p31
    %p33 = scmp.ne.s32.totalorder %s22, %s23
    %p34 = scmp.eq.s32.totalorder %s14, 0
    %p35 = por %p33, %p34
    %p36 = scmp.ne.s32.totalorder %s22, %s23
    %p37 = scmp.eq.s32.totalorder %s15, 1
    %p38 = por %p36, %p37
    %p40 = scmp.ne.s32.totalorder %s23, %s39
    %p41 = scmp.eq.s32.totalorder %s15, 0
    %p42 = por %p40, %p41
    %s44 = sadd.s32 %s43, 1
    %p47 = scmp.eq.s32.totalorder %s9, 1
    %p48 = scmp.ne.s32.totalorder %s43, %s45
    %p49 = scmp.eq.s32.totalorder %s9, 0
    %p50 = por %p48, %p49
    %p51 = scmp.ne.s32.totalorder %s43, %s45
    %p52 = scmp.eq.s32.totalorder %s14, 1
    %p53 = por %p51, %p52
    %p54 = scmp.ne.s32.totalorder %s45, %s46
    %p55 = scmp.eq.s32.totalorder %s14, 0
    %p56 = por %p54, %p55
    %p57 = scmp.ne.s32.totalorder %s45, %s46
    %p58 = scmp.eq.s32.totalorder %s15, 1
    %p59 = por %p57, %p58
    %p61 = scmp.ne.s32.totalorder %s46, %s60
    %p62 = scmp.eq.s32.totalorder %s15, 0
    %p63 = por %p61, %p62
    %s65 = sadd.s32 %s64, 1
    %p68 = scmp.eq.s32.totalorder %s9, 1
    %p69 = scmp.ne.s32.totalorder %s64, %s66
    %p70 = scmp.eq.s32.totalorder %s9, 0
    %p71 = por %p69, %p70
    %p72 = scmp.ne.s32.totalorder %s64, %s66
    %p73 = scmp.eq.s32.totalorder %s14, 1
    %p74 = por %p72, %p73
    %p75 = scmp.ne.s32.totalorder %s66, %s67
    %p76 = scmp.eq.s32.totalorder %s14, 0
    %p77 = por %p75, %p76
    %p78 = scmp.ne.s32.totalorder %s66, %s67
    %p79 = scmp.eq.s32.totalorder %s15, 1
    %p80 = por %p78, %p79
    %p82 = scmp.ne.s32.totalorder %s67, %s81
    %p83 = scmp.eq.s32.totalorder %s15, 0
    %p84 = por %p82, %p83
    %s85 = ssub.s32 %s9, %s16
    %p86 = scmp.eq.s32.totalorder %s85, 0
    %s88 = sadd.s32 %s87, 1
    %s89 = scalar_select %p86, %s87, %s88
    %p92 = pneg %p86
    %p93 = scmp.eq.s32.totalorder %s9, 1
    %p94 = por %p92, %p93
    %p95 = scmp.ne.s32.totalorder %s87, %s90
    %p96 = scmp.eq.s32.totalorder %s9, 0
    %p97 = por %p95, %p96
    %p98 = scmp.ne.s32.totalorder %s87, %s90
    %p99 = scmp.eq.s32.totalorder %s14, 1
    %p100 = por %p98, %p99
    %p101 = scmp.ne.s32.totalorder %s90, %s91
    %p102 = scmp.eq.s32.totalorder %s14, 0
    %p103 = por %p101, %p102
    %p104 = scmp.ne.s32.totalorder %s90, %s91
    %p105 = scmp.eq.s32.totalorder %s15, 1
    %p106 = por %p104, %p105
    %p108 = scmp.ne.s32.totalorder %s91, %s107
    %p109 = scmp.eq.s32.totalorder %s15, 0
    %p110 = por %p108, %p109
    %p111 = scmp.le.s32.totalorder 1, %s9
    %p112 = scmp.lt.s32.totalorder %s9, 3
    %p113 = pnand %p111, %p112
    %p114 = pneg %p113
    // Predicated region
    $region9: #{conv_generator_forward.8} parent=5 // pred_check
      _
    $region10: #{conv_generator_forward.8} parent=5 // pred_check_branch
      %116 = sbr.rel (%p113) target = $region12
    $region11: #{conv_generator_forward.8} parent=5 // pred_region
      %s117 = ssub.s32 %s9, 1
      // Predicated region
      $region13: #{conv_generator_forward.8} parent=11 // pred_check
        %p118 = pneg %p56
      $region14: #{conv_generator_forward.8} parent=11 // pred_check_branch
        %120 = sbr.rel (%p118) target = $region16
      $region15: #{conv_generator_forward.8} parent=11 // pred_region
        _
      $region16: #{conv_generator_forward.8} parent=11 // pred_fallthru
        _
      // Predicated region
      $region17: #{conv_generator_forward.8} parent=11 // pred_check
        %p121 = pneg %p77
      $region18: #{conv_generator_forward.8} parent=11 // pred_check_branch
        %123 = sbr.rel (%p121) target = $region20
      $region19: #{conv_generator_forward.8} parent=11 // pred_region
        _
      $region20: #{conv_generator_forward.8} parent=11 // pred_fallthru
        _
    $region12: #{conv_generator_forward.8} parent=5 // pred_fallthru
      _
    %p124 = scmp.lt.s32.totalorder %s9, 2
    // Predicated region
    $region21: #{conv_generator_forward.8} parent=5 // pred_check
      %p125 = pneg %p124
    $region22: #{conv_generator_forward.8} parent=5 // pred_check_branch
      %127 = sbr.rel (%p125) target = $region24
    $region23: #{conv_generator_forward.8} parent=5 // pred_region
      // Predicated region
      $region25: #{conv_generator_forward.8} parent=23 // pred_check
        %p128 = pneg %p29
      $region26: #{conv_generator_forward.8} parent=23 // pred_check_branch
        %130 = sbr.rel (%p128) target = $region28
      $region27: #{conv_generator_forward.8} parent=23 // pred_region
        %p131 = scmp.lt.s32.totalorder %s9, 1
        %s132 = scalar_select %p131, %s9, 1
        %s133 = smul.addr %s132, 4
        %s134 = smul.addr %s133, 4
        %s135 = scalar_lea.vmem %s0, %s134
      $region28: #{conv_generator_forward.8} parent=23 // pred_fallthru
        _
    $region24: #{conv_generator_forward.8} parent=5 // pred_fallthru
      _
    %p136 = scmp.le.s32.totalorder 1, %s9
    %p137 = scmp.lt.s32.totalorder %s9, 3
    %p138 = pnand %p136, %p137
    %p139 = pneg %p138
    // Predicated region
    $region29: #{conv_generator_forward.8} parent=5 // pred_check
      _
    $region30: #{conv_generator_forward.8} parent=5 // pred_check_branch
      %141 = sbr.rel (%p138) target = $region32
    $region31: #{conv_generator_forward.8} parent=5 // pred_region
      %s142 = ssub.s32 %s9, 1
      %p143 = scmp.lt.s32.totalorder %s14, 1
      %s144 = scalar_select %p143, %s14, 1
      %s145 = smul.addr %s144, 4
      %s146 = smul.addr %s145, 4
      %s147 = scalar_lea.vmem %s0, %s146
      %p148 = pneg %p35
      %p149 = pneg %p32
      %p150 = pneg %p56
      %p151 = pneg %p53
      %p152 = pneg %p77
      %p153 = pneg %p74
      %p154 = pneg %p103
      %p155 = pneg %p100
      %p156 = scmp.lt.s32.totalorder %s14, 1
      %s157 = scalar_select %p156, %s14, 1
      %s158 = smul.addr %s157, 4
      %s159 = smul.addr %s158, 2
      %s160 = scalar_lea.vmem %s3, %s159
      %p161 = scmp.lt.s32.totalorder %s14, 1
      %s162 = scalar_select %p161, %s14, 1
      %s163 = smul.addr %s162, 4
      %s164 = smul.addr %s163, 4
      %s165 = scalar_lea.vmem %s0, %s164
      %p166 = scmp.lt.s32.totalorder %s14, 1
      %s167 = scalar_select %p166, %s14, 1
      %s168 = smul.addr %s167, 4
      %s169 = smul.addr %s168, 2
      %s170 = scalar_lea.vmem %s3, %s169
      %v171 = vld [vmem:[%s165] sm:$0xf]
      %v172 = vld [vmem:[%s165 + $0x4] sm:$0xf]
      %v173 = vld [vmem:[%s165 + $0x8] sm:$0xf]
      %v174 = vld [vmem:[%s165 + $0xc] sm:$0xf]
      %v175 = vld [vmem:[%s1] sm:$0x1]
      %v177 = vlaneseq
      %v178 = vshrl.u32 %v177, 7
      %v179 = vsub.s32 0, %v178
      %v180 = vrot.slane %v175, %v179
      %v182 = vmul.f32 %v171, %v180
      %v183 = vmul.f32 %v172, %v180
      %v184 = vmul.f32 %v173, %v180
      %v185 = vmul.f32 %v174, %v180
      %v186 = vld [vmem:[%s2] sm:$0x1]
      %v188 = vlaneseq
      %v189 = vshrl.u32 %v188, 7
      %v190 = vsub.s32 0, %v189
      %v191 = vrot.slane %v186, %v190
      %v193 = vadd.f32 %v182, %v191
      %v194 = vadd.f32 %v183, %v191
      %v195 = vadd.f32 %v184, %v191
      %v196 = vadd.f32 %v185, %v191
      %vm197 = vcmp.ge.f32.partialorder %v193, 0.0
      %vm198 = vcmp.ge.f32.partialorder %v194, 0.0
      %vm199 = vcmp.ge.f32.partialorder %v195, 0.0
      %vm200 = vcmp.ge.f32.partialorder %v196, 0.0
      %v201 = vmul.f32 %v193, 0.01
      %v202 = vmul.f32 %v194, 0.01
      %v203 = vmul.f32 %v195, 0.01
      %v204 = vmul.f32 %v196, 0.01
      %v205 = vsel %vm197, %v193, %v201
      %v206 = vsel %vm198, %v194, %v202
      %v207 = vsel %vm199, %v195, %v203
      %v208 = vsel %vm200, %v196, %v204
      %v209 = vpack.c.bf16 %v205, %v205
      %v210 = vpack.c.bf16 %v206, %v206
      %v211 = vpack.c.bf16 %v207, %v207
      %v212 = vpack.c.bf16 %v208, %v208
      %vm213 = vcmask 254976
      %214 = vst.msk [vmem:[%s170] sm:$0x3] %vm213, %v209
      %215 = vst.msk [vmem:[%s170 + $0x2] sm:$0x3] %vm213, %v210
      %216 = vst.msk [vmem:[%s170 + $0x4] sm:$0x3] %vm213, %v211
      %217 = vst.msk [vmem:[%s170 + $0x6] sm:$0x3] %vm213, %v212
      %p218 = scmp.lt.s32.totalorder %s14, 1
      %s219 = scalar_select %p218, %s14, 1
      %s220 = smul.addr %s219, 4
      %s221 = smul.addr %s220, 2
      %s222 = scalar_lea.vmem %s3, %s221
      // Predicated region
      $region33: #{conv_generator_forward.8} parent=31 // pred_check
        %p223 = pneg %p100
      $region34: #{conv_generator_forward.8} parent=31 // pred_check_branch
        %225 = sbr.rel (%p223) target = $region36
      $region35: #{conv_generator_forward.8} parent=31 // pred_region
        _
      $region36: #{conv_generator_forward.8} parent=31 // pred_fallthru
        _
    $region32: #{conv_generator_forward.8} parent=5 // pred_fallthru
      _
    %p226 = scmp.le.s32.totalorder 2, %s9
    // Predicated region
    $region37: #{conv_generator_forward.8} parent=5 // pred_check
      %p227 = pneg %p226
    $region38: #{conv_generator_forward.8} parent=5 // pred_check_branch
      %229 = sbr.rel (%p227) target = $region40
    $region39: #{conv_generator_forward.8} parent=5 // pred_region
      %s230 = ssub.s32 %s9, 2
      // Predicated region
      $region41: #{conv_generator_forward.8} parent=39 // pred_check
        %p231 = pneg %p106
      $region42: #{conv_generator_forward.8} parent=39 // pred_check_branch
        %233 = sbr.rel (%p231) target = $region44
      $region43: #{conv_generator_forward.8} parent=39 // pred_region
        %p234 = scmp.lt.s32.totalorder %s15, 1
        %s235 = scalar_select %p234, %s15, 1
        %s236 = smul.addr %s235, 4
        %s237 = smul.addr %s236, 2
        %s238 = scalar_lea.vmem %s3, %s237
      $region44: #{conv_generator_forward.8} parent=39 // pred_fallthru
        _
    $region40: #{conv_generator_forward.8} parent=5 // pred_fallthru
      _
  $region6: #{conv_generator_forward.8} parent=0 // loop_footer
    %s13 = sadd.s32 1, %s9
  $region7: #{conv_generator_forward.8} parent=0 // loop_footer_branch
    %8 = sbr.rel target = $region3
  $region8: #{conv_generator_forward.8} parent=0 // loop_exit
    _

// kernel: conv_generator_forward.7
$region0: #{conv_generator_forward.7}
  #allocation0 [shape = 'u32[]', space=smem, size = 0x4, offset = 0x4, fixed_abs, tag = 'smem constant byte address 0x4 - core index']
  #allocation1 [shape = 'u32[144,128]{1,0:T(1,128)}', space=vmem, size = 0x12000, scoped, tag = 'internal scratch']
  %s0 = inlined_call_operand.vmem [shape: f32[2,4], index: 0, kind: input, shape index: {}]
  %s1 = inlined_call_operand.vmem [shape: f32[4,512], index: 1, kind: input, shape index: {}]
  %s2 = inlined_call_operand.vmem [shape: f32[2,512], index: 2, kind: output, shape index: {}]
  %s3 = sld [smem:[#allocation0]]
  $region18: #{conv_generator_forward.7} parent=0
    _
  %s5 = ssub.s32 1, %s3
  %s6 = scalar_select 0, %s5, %s3
  // Predicated region
  $region2: #{conv_generator_forward.7} parent=0 // pred_check
    _
  $region3: #{conv_generator_forward.7} parent=0 // pred_check_branch
    %8 = sbr.rel (0) target = $region5
  $region4: #{conv_generator_forward.7} parent=0 // pred_region
    _
  $region5: #{conv_generator_forward.7} parent=0 // pred_fallthru
    _
  // Predicated region
  $region6: #{conv_generator_forward.7} parent=0 // pred_check
    _
  $region7: #{conv_generator_forward.7} parent=0 // pred_check_branch
    %10 = sbr.rel (0) target = $region9
  $region8: #{conv_generator_forward.7} parent=0 // pred_region
    _
  $region9: #{conv_generator_forward.7} parent=0 // pred_fallthru
    _
  %v11 = vld [vmem:[%s0] sm:$0x3]
  %v12 = vld [vmem:[%s1] sm:$0xff]
  %v13 = vld [vmem:[%s1 + $0x8] sm:$0xff]
  %v16 = vcombine.high %v12, %v12
  %v17 = vcombine.high %v13, %v13
  %vm18 = vcmask 31744
  %v20 = vsel %vm18, %v11, 0
  %vm22 = vcmask 1043456
  %v23 = vsel %vm22, %v12, 0
  %v25 = vsel %vm22, %v16, 0
  %v27 = vsel %vm22, %v13, 0
  %v29 = vsel %vm22, %v17, 0
  %31 = vmatprep.subr.mxu0 %v25
  %32 = vmatpush1.msra.mxu0 %v23
  %33 = vmatprep.subr.mxu0 0.0
  %34 = vmatpush1.msra.mxu0 0.0
  %35 = vmatprep.subr.mxu0 0.0
  %36 = vmatpush1.msra.mxu0 0.0
  %37 = vmatprep.subr.mxu0 0.0
  %38 = vmatpush1.msra.mxu0 0.0
  %39 = vmatprep.subr.mxu0 0.0
  %40 = vmatpush1.msra.mxu0 0.0
  %41 = vmatprep.subr.mxu0 0.0
  %42 = vmatpush1.msra.mxu0 0.0
  %43 = vmatprep.subr.mxu0 0.0
  %44 = vmatpush1.msra.mxu0 0.0
  %45 = vmatprep.subr.mxu0 0.0
  %46 = vmatpush1.msra.mxu0 0.0
  %47 = vmatprep.subr.mxu0 0.0
  %48 = vmatpush1.msra.mxu0 0.0
  %49 = vmatprep.subr.mxu0 0.0
  %50 = vmatpush1.msra.mxu0 0.0
  %51 = vmatprep.subr.mxu0 0.0
  %52 = vmatpush1.msra.mxu0 0.0
  %53 = vmatprep.subr.mxu0 0.0
  %54 = vmatpush1.msra.mxu0 0.0
  %55 = vmatprep.subr.mxu0 0.0
  %56 = vmatpush1.msra.mxu0 0.0
  %57 = vmatprep.subr.mxu0 0.0
  %58 = vmatpush1.msra.mxu0 0.0
  %59 = vmatprep.subr.mxu0 0.0
  %60 = vmatpush1.msra.mxu0 0.0
  %61 = vmatprep.subr.mxu0 0.0
  %62 = vmatpush1.msra.mxu0 0.0
  %63 = vmatprep.subr.mxu0 0.0
  %64 = vmatpush1.msra.mxu0 0.0
  %65 = vmatprep.subr.mxu0 0.0
  %66 = vmatpush1.msra.mxu0 0.0
  %67 = vmatprep.subr.mxu0 0.0
  %68 = vmatpush1.msra.mxu0 0.0
  %69 = vmatprep.subr.mxu0 0.0
  %70 = vmatpush1.msra.mxu0 0.0
  %71 = vmatprep.subr.mxu0 0.0
  %72 = vmatpush1.msra.mxu0 0.0
  %73 = vmatprep.subr.mxu0 0.0
  %74 = vmatpush1.msra.mxu0 0.0
  %75 = vmatprep.subr.mxu0 0.0
  %76 = vmatpush1.msra.mxu0 0.0
  %77 = vmatprep.subr.mxu0 0.0
  %78 = vmatpush1.msra.mxu0 0.0
  %79 = vmatprep.subr.mxu0 0.0
  %80 = vmatpush1.msra.mxu0 0.0
  %81 = vmatprep.subr.mxu0 0.0
  %82 = vmatpush1.msra.mxu0 0.0
  %83 = vmatprep.subr.mxu0 0.0
  %84 = vmatpush1.msra.mxu0 0.0
  %85 = vmatprep.subr.mxu0 0.0
  %86 = vmatpush1.msra.mxu0 0.0
  %87 = vmatprep.subr.mxu0 0.0
  %88 = vmatpush1.msra.mxu0 0.0
  %89 = vmatprep.subr.mxu0 0.0
  %90 = vmatpush1.msra.mxu0 0.0
  %91 = vmatprep.subr.mxu0 0.0
  %92 = vmatpush1.msra.mxu0 0.0
  %93 = vmatprep.subr.mxu0 0.0
  %94 = vmatpush1.msra.mxu0 0.0
  %95 = vmatprep.mubr.f32.mxu0 0.0
  %96 = vmatmul.mubr.f32.gmra.mrb[0].mxu0 %v20
  %v97 = vpop.f32.mrb[0].mxu0
  %v98 = vadd.f32 0.0, %v97
  %v99 = vpop.f32.mrb[0].mxu0
  %v100 = vadd.f32 0.0, %v99
  %101 = vdwg.mxu0
  %102 = vmatprep.subr.mxu0 %v29
  %103 = vmatpush1.msra.mxu0 %v27
  %104 = vmatprep.subr.mxu0 0.0
  %105 = vmatpush1.msra.mxu0 0.0
  %106 = vmatprep.subr.mxu0 0.0
  %107 = vmatpush1.msra.mxu0 0.0
  %108 = vmatprep.subr.mxu0 0.0
  %109 = vmatpush1.msra.mxu0 0.0
  %110 = vmatprep.subr.mxu0 0.0
  %111 = vmatpush1.msra.mxu0 0.0
  %112 = vmatprep.subr.mxu0 0.0
  %113 = vmatpush1.msra.mxu0 0.0
  %114 = vmatprep.subr.mxu0 0.0
  %115 = vmatpush1.msra.mxu0 0.0
  %116 = vmatprep.subr.mxu0 0.0
  %117 = vmatpush1.msra.mxu0 0.0
  %118 = vmatprep.subr.mxu0 0.0
  %119 = vmatpush1.msra.mxu0 0.0
  %120 = vmatprep.subr.mxu0 0.0
  %121 = vmatpush1.msra.mxu0 0.0
  %122 = vmatprep.subr.mxu0 0.0
  %123 = vmatpush1.msra.mxu0 0.0
  %124 = vmatprep.subr.mxu0 0.0
  %125 = vmatpush1.msra.mxu0 0.0
  %126 = vmatprep.subr.mxu0 0.0
  %127 = vmatpush1.msra.mxu0 0.0
  %128 = vmatprep.subr.mxu0 0.0
  %129 = vmatpush1.msra.mxu0 0.0
  %130 = vmatprep.subr.mxu0 0.0
  %131 = vmatpush1.msra.mxu0 0.0
  %132 = vmatprep.subr.mxu0 0.0
  %133 = vmatpush1.msra.mxu0 0.0
  %134 = vmatprep.subr.mxu0 0.0
  %135 = vmatpush1.msra.mxu0 0.0
  %136 = vmatprep.subr.mxu0 0.0
  %137 = vmatpush1.msra.mxu0 0.0
  %138 = vmatprep.subr.mxu0 0.0
  %139 = vmatpush1.msra.mxu0 0.0
  %140 = vmatprep.subr.mxu0 0.0
  %141 = vmatpush1.msra.mxu0 0.0
  %142 = vmatprep.subr.mxu0 0.0
  %143 = vmatpush1.msra.mxu0 0.0
  %144 = vmatprep.subr.mxu0 0.0
  %145 = vmatpush1.msra.mxu0 0.0
  %146 = vmatprep.subr.mxu0 0.0
  %147 = vmatpush1.msra.mxu0 0.0
  %148 = vmatprep.subr.mxu0 0.0
  %149 = vmatpush1.msra.mxu0 0.0
  %150 = vmatprep.subr.mxu0 0.0
  %151 = vmatpush1.msra.mxu0 0.0
  %152 = vmatprep.subr.mxu0 0.0
  %153 = vmatpush1.msra.mxu0 0.0
  %154 = vmatprep.subr.mxu0 0.0
  %155 = vmatpush1.msra.mxu0 0.0
  %156 = vmatprep.subr.mxu0 0.0
  %157 = vmatpush1.msra.mxu0 0.0
  %158 = vmatprep.subr.mxu0 0.0
  %159 = vmatpush1.msra.mxu0 0.0
  %160 = vmatprep.subr.mxu0 0.0
  %161 = vmatpush1.msra.mxu0 0.0
  %162 = vmatprep.subr.mxu0 0.0
  %163 = vmatpush1.msra.mxu0 0.0
  %164 = vmatprep.subr.mxu0 0.0
  %165 = vmatpush1.msra.mxu0 0.0
  %166 = vmatprep.mubr.f32.mxu0 0.0
  %167 = vmatmul.mubr.f32.gmra.mrb[0].mxu0 %v20
  %v168 = vpop.f32.mrb[0].mxu0
  %v169 = vadd.f32 0.0, %v168
  %v170 = vpop.f32.mrb[0].mxu0
  %v171 = vadd.f32 0.0, %v170
  %172 = vdwg.mxu0
  %v177 = vcombine.low %v98, %v100
  %v178 = vcombine.low %v169, %v171
  %v180 = vunpack.c.l.s4 1983009808
  %v181 = vunpack.c.0.s8 %v180
  %v182 = vlaneseq
  %v183 = vshrl.u32 %v182, 7
  %v184 = vsub.s32 %v181, %v183
  %v185 = vrot.slane %v177, %v184
  %v187 = vunpack.c.l.s4 1983009808
  %v188 = vunpack.c.0.s8 %v187
  %v189 = vlaneseq
  %v190 = vshrl.u32 %v189, 7
  %v191 = vsub.s32 %v188, %v190
  %v192 = vrot.slane %v178, %v191
  %v193 = vcombine.low %v185, %v192
  %195 = vst [vmem:[%s2] sm:$0xff] %v193
  // Predicated region
  $region10: #{conv_generator_forward.7} parent=0 // pred_check
    _
  $region11: #{conv_generator_forward.7} parent=0 // pred_check_branch
    %197 = sbr.rel (0) target = $region13
  $region12: #{conv_generator_forward.7} parent=0 // pred_region
    _
  $region13: #{conv_generator_forward.7} parent=0 // pred_fallthru
    _
  // Predicated region
  $region14: #{conv_generator_forward.7} parent=0 // pred_check
    _
  $region15: #{conv_generator_forward.7} parent=0 // pred_check_branch
    %199 = sbr.rel (0) target = $region17
  $region16: #{conv_generator_forward.7} parent=0 // pred_region
    _
  $region17: #{conv_generator_forward.7} parent=0 // pred_fallthru
    _

// kernel: conv_generator_forward.10
$region0: #{conv_generator_forward.10}
  #allocation0 [shape = 'u32[]', space=smem, size = 0x4, offset = 0x4, fixed_abs, tag = 'smem constant byte address 0x4 - core index']
  #allocation1 [shape = 'u32[144,128]{1,0:T(1,128)}', space=vmem, size = 0x12000, scoped, tag = 'internal scratch']
  %s0 = inlined_call_operand.vmem [shape: bf16[2,8,11,16], index: 0, kind: input, shape index: {}]
  %s1 = inlined_call_operand.vmem [shape: f32[1,1,1,16], index: 1, kind: input, shape index: {}]
  %s2 = inlined_call_operand.vmem [shape: f32[1,1,1,16], index: 2, kind: input, shape index: {}]
  %s3 = inlined_call_operand.vmem [shape: bf16[2,8,8,16], index: 3, kind: output, shape index: {}]
  %s4 = sld [smem:[#allocation0]]
  $region45: #{conv_generator_forward.10} parent=0
    _
  %s6 = ssub.s32 1, %s4
  %s7 = scalar_select 0, %s6, %s4
  loop: start=0, step=1, limit=4
  $region2: #{conv_generator_forward.10} parent=0 // loop_pre_header
    _
  $region3: #{conv_generator_forward.10} parent=0 // loop_header
    %s9 = sphi 0, %s13
    %p10 = scmp.ge.s32.totalorder %s9, 4
    %s19 = sphi 0, %s21
    %s22 = sphi 0, %s19
    %s23 = sphi 0, %s22
    %s39 = sphi 0, %s23
    %s43 = sphi 0, %s43
    %s45 = sphi 0, %s43
    %s46 = sphi 0, %s45
    %s60 = sphi 0, %s46
    %s64 = sphi 0, %s64
    %s66 = sphi 0, %s64
    %s67 = sphi 0, %s66
    %s81 = sphi 0, %s67
    %s87 = sphi 0, %s89
    %s90 = sphi 0, %s87
    %s91 = sphi 0, %s90
    %s107 = sphi 0, %s91
  $region4: #{conv_generator_forward.10} parent=0 // loop_header_branch
    %12 = sbr.rel (%p10) target = $region8
  $region5: #{conv_generator_forward.10} parent=0 // loop_body
    %s14 = ssub.s32 %s9, 1
    %s15 = ssub.s32 %s9, 2
    %s16 = sadd.s32 %s9, 1
    %s17 = ssub.s32 %s9, %s16
    %p18 = scmp.eq.s32.totalorder %s17, 0
    %s20 = sadd.s32 %s19, 1
    %s21 = scalar_select %p18, %s19, %s20
    %p24 = pneg %p18
    %p25 = scmp.eq.s32.totalorder %s9, 1
    %p26 = por %p24, %p25
    %p27 = scmp.ne.s32.totalorder %s19, %s22
    %p28 = scmp.eq.s32.totalorder %s9, 0
    %p29 = por %p27, %p28
    %p30 = scmp.ne.s32.totalorder %s19, %s22
    %p31 = scmp.eq.s32.totalorder %s14, 1
    %p32 = por %p30, %p31
    %p33 = scmp.ne.s32.totalorder %s22, %s23
    %p34 = scmp.eq.s32.totalorder %s14, 0
    %p35 = por %p33, %p34
    %p36 = scmp.ne.s32.totalorder %s22, %s23
    %p37 = scmp.eq.s32.totalorder %s15, 1
    %p38 = por %p36, %p37
    %p40 = scmp.ne.s32.totalorder %s23, %s39
    %p41 = scmp.eq.s32.totalorder %s15, 0
    %p42 = por %p40, %p41
    %s44 = sadd.s32 %s43, 1
    %p47 = scmp.eq.s32.totalorder %s9, 1
    %p48 = scmp.ne.s32.totalorder %s43, %s45
    %p49 = scmp.eq.s32.totalorder %s9, 0
    %p50 = por %p48, %p49
    %p51 = scmp.ne.s32.totalorder %s43, %s45
    %p52 = scmp.eq.s32.totalorder %s14, 1
    %p53 = por %p51, %p52
    %p54 = scmp.ne.s32.totalorder %s45, %s46
    %p55 = scmp.eq.s32.totalorder %s14, 0
    %p56 = por %p54, %p55
    %p57 = scmp.ne.s32.totalorder %s45, %s46
    %p58 = scmp.eq.s32.totalorder %s15, 1
    %p59 = por %p57, %p58
    %p61 = scmp.ne.s32.totalorder %s46, %s60
    %p62 = scmp.eq.s32.totalorder %s15, 0
    %p63 = por %p61, %p62
    %s65 = sadd.s32 %s64, 1
    %p68 = scmp.eq.s32.totalorder %s9, 1
    %p69 = scmp.ne.s32.totalorder %s64, %s66
    %p70 = scmp.eq.s32.totalorder %s9, 0
    %p71 = por %p69, %p70
    %p72 = scmp.ne.s32.totalorder %s64, %s66
    %p73 = scmp.eq.s32.totalorder %s14, 1
    %p74 = por %p72, %p73
    %p75 = scmp.ne.s32.totalorder %s66, %s67
    %p76 = scmp.eq.s32.totalorder %s14, 0
    %p77 = por %p75, %p76
    %p78 = scmp.ne.s32.totalorder %s66, %s67
    %p79 = scmp.eq.s32.totalorder %s15, 1
    %p80 = por %p78, %p79
    %p82 = scmp.ne.s32.totalorder %s67, %s81
    %p83 = scmp.eq.s32.totalorder %s15, 0
    %p84 = por %p82, %p83
    %s85 = ssub.s32 %s9, %s16
    %p86 = scmp.eq.s32.totalorder %s85, 0
    %s88 = sadd.s32 %s87, 1
    %s89 = scalar_select %p86, %s87, %s88
    %p92 = pneg %p86
    %p93 = scmp.eq.s32.totalorder %s9, 1
    %p94 = por %p92, %p93
    %p95 = scmp.ne.s32.totalorder %s87, %s90
    %p96 = scmp.eq.s32.totalorder %s9, 0
    %p97 = por %p95, %p96
    %p98 = scmp.ne.s32.totalorder %s87, %s90
    %p99 = scmp.eq.s32.totalorder %s14, 1
    %p100 = por %p98, %p99
    %p101 = scmp.ne.s32.totalorder %s90, %s91
    %p102 = scmp.eq.s32.totalorder %s14, 0
    %p103 = por %p101, %p102
    %p104 = scmp.ne.s32.totalorder %s90, %s91
    %p105 = scmp.eq.s32.totalorder %s15, 1
    %p106 = por %p104, %p105
    %p108 = scmp.ne.s32.totalorder %s91, %s107
    %p109 = scmp.eq.s32.totalorder %s15, 0
    %p110 = por %p108, %p109
    %p111 = scmp.le.s32.totalorder 1, %s9
    %p112 = scmp.lt.s32.totalorder %s9, 3
    %p113 = pnand %p111, %p112
    %p114 = pneg %p113
    // Predicated region
    $region9: #{conv_generator_forward.10} parent=5 // pred_check
      _
    $region10: #{conv_generator_forward.10} parent=5 // pred_check_branch
      %116 = sbr.rel (%p113) target = $region12
    $region11: #{conv_generator_forward.10} parent=5 // pred_region
      %s117 = ssub.s32 %s9, 1
      // Predicated region
      $region13: #{conv_generator_forward.10} parent=11 // pred_check
        %p118 = pneg %p56
      $region14: #{conv_generator_forward.10} parent=11 // pred_check_branch
        %120 = sbr.rel (%p118) target = $region16
      $region15: #{conv_generator_forward.10} parent=11 // pred_region
        _
      $region16: #{conv_generator_forward.10} parent=11 // pred_fallthru
        _
      // Predicated region
      $region17: #{conv_generator_forward.10} parent=11 // pred_check
        %p121 = pneg %p77
      $region18: #{conv_generator_forward.10} parent=11 // pred_check_branch
        %123 = sbr.rel (%p121) target = $region20
      $region19: #{conv_generator_forward.10} parent=11 // pred_region
        _
      $region20: #{conv_generator_forward.10} parent=11 // pred_fallthru
        _
    $region12: #{conv_generator_forward.10} parent=5 // pred_fallthru
      _
    %p124 = scmp.lt.s32.totalorder %s9, 2
    // Predicated region
    $region21: #{conv_generator_forward.10} parent=5 // pred_check
      %p125 = pneg %p124
    $region22: #{conv_generator_forward.10} parent=5 // pred_check_branch
      %127 = sbr.rel (%p125) target = $region24
    $region23: #{conv_generator_forward.10} parent=5 // pred_region
      // Predicated region
      $region25: #{conv_generator_forward.10} parent=23 // pred_check
        %p128 = pneg %p29
      $region26: #{conv_generator_forward.10} parent=23 // pred_check_branch
        %130 = sbr.rel (%p128) target = $region28
      $region27: #{conv_generator_forward.10} parent=23 // pred_region
        %p131 = scmp.lt.s32.totalorder %s9, 1
        %s132 = scalar_select %p131, %s9, 1
        %s133 = smul.addr %s132, 16
        %s134 = smul.addr %s133, 4
        %s135 = scalar_lea.vmem %s0, %s134
      $region28: #{conv_generator_forward.10} parent=23 // pred_fallthru
        _
    $region24: #{conv_generator_forward.10} parent=5 // pred_fallthru
      _
    %p136 = scmp.le.s32.totalorder 1, %s9
    %p137 = scmp.lt.s32.totalorder %s9, 3
    %p138 = pnand %p136, %p137
    %p139 = pneg %p138
    // Predicated region
    $region29: #{conv_generator_forward.10} parent=5 // pred_check
      _
    $region30: #{conv_generator_forward.10} parent=5 // pred_check_branch
      %141 = sbr.rel (%p138) target = $region32
    $region31: #{conv_generator_forward.10} parent=5 // pred_region
      %s142 = ssub.s32 %s9, 1
      %p143 = scmp.lt.s32.totalorder %s14, 1
      %s144 = scalar_select %p143, %s14, 1
      %s145 = smul.addr %s144, 16
      %s146 = smul.addr %s145, 4
      %s147 = scalar_lea.vmem %s0, %s146
      %p148 = pneg %p35
      %p149 = pneg %p32
      %p150 = pneg %p56
      %p151 = pneg %p53
      %p152 = pneg %p77
      %p153 = pneg %p74
      %p154 = pneg %p103
      %p155 = pneg %p100
      %p156 = scmp.lt.s32.totalorder %s14, 1
      %s157 = scalar_select %p156, %s14, 1
      %s158 = smul.addr %s157, 8
      %s159 = smul.addr %s158, 4
      %s160 = scalar_lea.vmem %s3, %s159
      %p161 = scmp.lt.s32.totalorder %s14, 1
      %s162 = scalar_select %p161, %s14, 1
      %s163 = smul.addr %s162, 16
      %s164 = smul.addr %s163, 4
      %s165 = scalar_lea.vmem %s0, %s164
      %p166 = scmp.lt.s32.totalorder %s14, 1
      %s167 = scalar_select %p166, %s14, 1
      %s168 = smul.addr %s167, 8
      %s169 = smul.addr %s168, 4
      %s170 = scalar_lea.vmem %s3, %s169
      %v171 = vld [vmem:[%s165] sm:$0xf]
      %v172 = vld [vmem:[%s165 + $0x8] sm:$0xf]
      %v173 = vld [vmem:[%s165 + $0x10] sm:$0xf]
      %v174 = vld [vmem:[%s165 + $0x18] sm:$0xf]
      %v175 = vld [vmem:[%s165 + $0x20] sm:$0xf]
      %v176 = vld [vmem:[%s165 + $0x28] sm:$0xf]
      %v177 = vld [vmem:[%s165 + $0x30] sm:$0xf]
      %v178 = vld [vmem:[%s165 + $0x38] sm:$0xf]
      %v179 = vunpack.c.l.bf16 %v171
      %v180 = vunpack.c.l.bf16 %v172
      %v181 = vunpack.c.l.bf16 %v173
      %v182 = vunpack.c.l.bf16 %v174
      %v183 = vunpack.c.l.bf16 %v175
      %v184 = vunpack.c.l.bf16 %v176
      %v185 = vunpack.c.l.bf16 %v177
      %v186 = vunpack.c.l.bf16 %v178
      %v187 = vld [vmem:[%s1] sm:$0x1]
      %v189 = vlaneseq
      %v190 = vshrl.u32 %v189, 7
      %v191 = vsub.s32 0, %v190
      %v192 = vrot.slane %v187, %v191
      %v194 = vmul.f32 %v179, %v192
      %v195 = vmul.f32 %v180, %v192
      %v196 = vmul.f32 %v181, %v192
      %v197 = vmul.f32 %v182, %v192
      %v198 = vmul.f32 %v183, %v192
      %v199 = vmul.f32 %v184, %v192
      %v200 = vmul.f32 %v185, %v192
      %v201 = vmul.f32 %v186, %v192
      %v202 = vld [vmem:[%s2] sm:$0x1]
      %v204 = vlaneseq
      %v205 = vshrl.u32 %v204, 7
      %v206 = vsub.s32 0, %v205
      %v207 = vrot.slane %v202, %v206
      %v209 = vadd.f32 %v194, %v207
      %v210 = vadd.f32 %v195, %v207
      %v211 = vadd.f32 %v196, %v207
      %v212 = vadd.f32 %v197, %v207
      %v213 = vadd.f32 %v198, %v207
      %v214 = vadd.f32 %v199, %v207
      %v215 = vadd.f32 %v200, %v207
      %v216 = vadd.f32 %v201, %v207
      %vm217 = vcmp.ge.f32.partialorder %v209, 0.0
      %vm218 = vcmp.ge.f32.partialorder %v210, 0.0
      %vm219 = vcmp.ge.f32.partialorder %v211, 0.0
      %vm220 = vcmp.ge.f32.partialorder %v212, 0.0
      %vm221 = vcmp.ge.f32.partialorder %v213, 0.0
      %vm222 = vcmp.ge.f32.partialorder %v214, 0.0
      %vm223 = vcmp.ge.f32.partialorder %v215, 0.0
      %vm224 = vcmp.ge.f32.partialorder %v216, 0.0
      %v225 = vmul.f32 %v209, 0.01
      %v226 = vmul.f32 %v210, 0.01
      %v227 = vmul.f32 %v211, 0.01
      %v228 = vmul.f32 %v212, 0.01
      %v229 = vmul.f32 %v213, 0.01
      %v230 = vmul.f32 %v214, 0.01
      %v231 = vmul.f32 %v215, 0.01
      %v232 = vmul.f32 %v216, 0.01
      %v233 = vsel %vm217, %v209, %v225
      %v234 = vsel %vm218, %v210, %v226
      %v235 = vsel %vm219, %v211, %v227
      %v236 = vsel %vm220, %v212, %v228
      %v237 = vsel %vm221, %v213, %v229
      %v238 = vsel %vm222, %v214, %v230
      %v239 = vsel %vm223, %v215, %v231
      %v240 = vsel %vm224, %v216, %v232
      %v241 = vpack.c.bf16 %v233, %v233
      %v242 = vpack.c.bf16 %v234, %v234
      %v243 = vpack.c.bf16 %v235, %v235
      %v244 = vpack.c.bf16 %v236, %v236
      %v245 = vpack.c.bf16 %v237, %v237
      %v246 = vpack.c.bf16 %v238, %v238
      %v247 = vpack.c.bf16 %v239, %v239
      %v248 = vpack.c.bf16 %v240, %v240
      %vm249 = vcmask 125952
      %250 = vst.msk [vmem:[%s170] sm:$0xf] %vm249, %v241
      %251 = vst.msk [vmem:[%s170 + $0x4] sm:$0xf] %vm249, %v242
      %252 = vst.msk [vmem:[%s170 + $0x8] sm:$0xf] %vm249, %v243
      %253 = vst.msk [vmem:[%s170 + $0xc] sm:$0xf] %vm249, %v244
      %254 = vst.msk [vmem:[%s170 + $0x10] sm:$0xf] %vm249, %v245
      %255 = vst.msk [vmem:[%s170 + $0x14] sm:$0xf] %vm249, %v246
      %256 = vst.msk [vmem:[%s170 + $0x18] sm:$0xf] %vm249, %v247
      %257 = vst.msk [vmem:[%s170 + $0x1c] sm:$0xf] %vm249, %v248
      %p258 = scmp.lt.s32.totalorder %s14, 1
      %s259 = scalar_select %p258, %s14, 1
      %s260 = smul.addr %s259, 8
      %s261 = smul.addr %s260, 4
      %s262 = scalar_lea.vmem %s3, %s261
      // Predicated region
      $region33: #{conv_generator_forward.10} parent=31 // pred_check
        %p263 = pneg %p100
      $region34: #{conv_generator_forward.10} parent=31 // pred_check_branch
        %265 = sbr.rel (%p263) target = $region36
      $region35: #{conv_generator_forward.10} parent=31 // pred_region
        _
      $region36: #{conv_generator_forward.10} parent=31 // pred_fallthru
        _
    $region32: #{conv_generator_forward.10} parent=5 // pred_fallthru
      _
    %p266 = scmp.le.s32.totalorder 2, %s9
    // Predicated region
    $region37: #{conv_generator_forward.10} parent=5 // pred_check
      %p267 = pneg %p266
    $region38: #{conv_generator_forward.10} parent=5 // pred_check_branch
      %269 = sbr.rel (%p267) target = $region40
    $region39: #{conv_generator_forward.10} parent=5 // pred_region
      %s270 = ssub.s32 %s9, 2
      // Predicated region
      $region41: #{conv_generator_forward.10} parent=39 // pred_check
        %p271 = pneg %p106
      $region42: #{conv_generator_forward.10} parent=39 // pred_check_branch
        %273 = sbr.rel (%p271) target = $region44
      $region43: #{conv_generator_forward.10} parent=39 // pred_region
        %p274 = scmp.lt.s32.totalorder %s15, 1
        %s275 = scalar_select %p274, %s15, 1
        %s276 = smul.addr %s275, 8
        %s277 = smul.addr %s276, 4
        %s278 = scalar_lea.vmem %s3, %s277
      $region44: #{conv_generator_forward.10} parent=39 // pred_fallthru
        _
    $region40: #{conv_generator_forward.10} parent=5 // pred_fallthru
      _
  $region6: #{conv_generator_forward.10} parent=0 // loop_footer
    %s13 = sadd.s32 1, %s9
  $region7: #{conv_generator_forward.10} parent=0 // loop_footer_branch
    %8 = sbr.rel target = $region3
  $region8: #{conv_generator_forward.10} parent=0 // loop_exit
    _

// kernel: conv_generator_forward.12
$region0: #{conv_generator_forward.12}
  #allocation0 [shape = 'u32[]', space=smem, size = 0x4, offset = 0x4, fixed_abs, tag = 'smem constant byte address 0x4 - core index']
  #allocation1 [shape = 'u32[144,128]{1,0:T(1,128)}', space=vmem, size = 0x12000, scoped, tag = 'internal scratch']
  %s0 = inlined_call_operand.vmem [shape: bf16[2,16,19,8], index: 0, kind: input, shape index: {}]
  %s1 = inlined_call_operand.vmem [shape: f32[1,1,1,8], index: 1, kind: input, shape index: {}]
  %s2 = inlined_call_operand.vmem [shape: f32[1,1,1,8], index: 2, kind: input, shape index: {}]
  %s3 = inlined_call_operand.vmem [shape: bf16[2,16,16,8], index: 3, kind: output, shape index: {}]
  %s4 = sld [smem:[#allocation0]]
  $region45: #{conv_generator_forward.12} parent=0
    _
  %s6 = ssub.s32 1, %s4
  %s7 = scalar_select 0, %s6, %s4
  loop: start=0, step=1, limit=4
  $region2: #{conv_generator_forward.12} parent=0 // loop_pre_header
    _
  $region3: #{conv_generator_forward.12} parent=0 // loop_header
    %s9 = sphi 0, %s13
    %p10 = scmp.ge.s32.totalorder %s9, 4
    %s19 = sphi 0, %s21
    %s22 = sphi 0, %s19
    %s23 = sphi 0, %s22
    %s39 = sphi 0, %s23
    %s43 = sphi 0, %s43
    %s45 = sphi 0, %s43
    %s46 = sphi 0, %s45
    %s60 = sphi 0, %s46
    %s64 = sphi 0, %s64
    %s66 = sphi 0, %s64
    %s67 = sphi 0, %s66
    %s81 = sphi 0, %s67
    %s87 = sphi 0, %s89
    %s90 = sphi 0, %s87
    %s91 = sphi 0, %s90
    %s107 = sphi 0, %s91
  $region4: #{conv_generator_forward.12} parent=0 // loop_header_branch
    %12 = sbr.rel (%p10) target = $region8
  $region5: #{conv_generator_forward.12} parent=0 // loop_body
    %s14 = ssub.s32 %s9, 1
    %s15 = ssub.s32 %s9, 2
    %s16 = sadd.s32 %s9, 1
    %s17 = ssub.s32 %s9, %s16
    %p18 = scmp.eq.s32.totalorder %s17, 0
    %s20 = sadd.s32 %s19, 1
    %s21 = scalar_select %p18, %s19, %s20
    %p24 = pneg %p18
    %p25 = scmp.eq.s32.totalorder %s9, 1
    %p26 = por %p24, %p25
    %p27 = scmp.ne.s32.totalorder %s19, %s22
    %p28 = scmp.eq.s32.totalorder %s9, 0
    %p29 = por %p27, %p28
    %p30 = scmp.ne.s32.totalorder %s19, %s22
    %p31 = scmp.eq.s32.totalorder %s14, 1
    %p32 = por %p30, %p31
    %p33 = scmp.ne.s32.totalorder %s22, %s23
    %p34 = scmp.eq.s32.totalorder %s14, 0
    %p35 = por %p33, %p34
    %p36 = scmp.ne.s32.totalorder %s22, %s23
    %p37 = scmp.eq.s32.totalorder %s15, 1
    %p38 = por %p36, %p37
    %p40 = scmp.ne.s32.totalorder %s23, %s39
    %p41 = scmp.eq.s32.totalorder %s15, 0
    %p42 = por %p40, %p41
    %s44 = sadd.s32 %s43, 1
    %p47 = scmp.eq.s32.totalorder %s9, 1
    %p48 = scmp.ne.s32.totalorder %s43, %s45
    %p49 = scmp.eq.s32.totalorder %s9, 0
    %p50 = por %p48, %p49
    %p51 = scmp.ne.s32.totalorder %s43, %s45
    %p52 = scmp.eq.s32.totalorder %s14, 1
    %p53 = por %p51, %p52
    %p54 = scmp.ne.s32.totalorder %s45, %s46
    %p55 = scmp.eq.s32.totalorder %s14, 0
    %p56 = por %p54, %p55
    %p57 = scmp.ne.s32.totalorder %s45, %s46
    %p58 = scmp.eq.s32.totalorder %s15, 1
    %p59 = por %p57, %p58
    %p61 = scmp.ne.s32.totalorder %s46, %s60
    %p62 = scmp.eq.s32.totalorder %s15, 0
    %p63 = por %p61, %p62
    %s65 = sadd.s32 %s64, 1
    %p68 = scmp.eq.s32.totalorder %s9, 1
    %p69 = scmp.ne.s32.totalorder %s64, %s66
    %p70 = scmp.eq.s32.totalorder %s9, 0
    %p71 = por %p69, %p70
    %p72 = scmp.ne.s32.totalorder %s64, %s66
    %p73 = scmp.eq.s32.totalorder %s14, 1
    %p74 = por %p72, %p73
    %p75 = scmp.ne.s32.totalorder %s66, %s67
    %p76 = scmp.eq.s32.totalorder %s14, 0
    %p77 = por %p75, %p76
    %p78 = scmp.ne.s32.totalorder %s66, %s67
    %p79 = scmp.eq.s32.totalorder %s15, 1
    %p80 = por %p78, %p79
    %p82 = scmp.ne.s32.totalorder %s67, %s81
    %p83 = scmp.eq.s32.totalorder %s15, 0
    %p84 = por %p82, %p83
    %s85 = ssub.s32 %s9, %s16
    %p86 = scmp.eq.s32.totalorder %s85, 0
    %s88 = sadd.s32 %s87, 1
    %s89 = scalar_select %p86, %s87, %s88
    %p92 = pneg %p86
    %p93 = scmp.eq.s32.totalorder %s9, 1
    %p94 = por %p92, %p93
    %p95 = scmp.ne.s32.totalorder %s87, %s90
    %p96 = scmp.eq.s32.totalorder %s9, 0
    %p97 = por %p95, %p96
    %p98 = scmp.ne.s32.totalorder %s87, %s90
    %p99 = scmp.eq.s32.totalorder %s14, 1
    %p100 = por %p98, %p99
    %p101 = scmp.ne.s32.totalorder %s90, %s91
    %p102 = scmp.eq.s32.totalorder %s14, 0
    %p103 = por %p101, %p102
    %p104 = scmp.ne.s32.totalorder %s90, %s91
    %p105 = scmp.eq.s32.totalorder %s15, 1
    %p106 = por %p104, %p105
    %p108 = scmp.ne.s32.totalorder %s91, %s107
    %p109 = scmp.eq.s32.totalorder %s15, 0
    %p110 = por %p108, %p109
    %p111 = scmp.le.s32.totalorder 1, %s9
    %p112 = scmp.lt.s32.totalorder %s9, 3
    %p113 = pnand %p111, %p112
    %p114 = pneg %p113
    // Predicated region
    $region9: #{conv_generator_forward.12} parent=5 // pred_check
      _
    $region10: #{conv_generator_forward.12} parent=5 // pred_check_branch
      %116 = sbr.rel (%p113) target = $region12
    $region11: #{conv_generator_forward.12} parent=5 // pred_region
      %s117 = ssub.s32 %s9, 1
      // Predicated region
      $region13: #{conv_generator_forward.12} parent=11 // pred_check
        %p118 = pneg %p56
      $region14: #{conv_generator_forward.12} parent=11 // pred_check_branch
        %120 = sbr.rel (%p118) target = $region16
      $region15: #{conv_generator_forward.12} parent=11 // pred_region
        _
      $region16: #{conv_generator_forward.12} parent=11 // pred_fallthru
        _
      // Predicated region
      $region17: #{conv_generator_forward.12} parent=11 // pred_check
        %p121 = pneg %p77
      $region18: #{conv_generator_forward.12} parent=11 // pred_check_branch
        %123 = sbr.rel (%p121) target = $region20
      $region19: #{conv_generator_forward.12} parent=11 // pred_region
        _
      $region20: #{conv_generator_forward.12} parent=11 // pred_fallthru
        _
    $region12: #{conv_generator_forward.12} parent=5 // pred_fallthru
      _
    %p124 = scmp.lt.s32.totalorder %s9, 2
    // Predicated region
    $region21: #{conv_generator_forward.12} parent=5 // pred_check
      %p125 = pneg %p124
    $region22: #{conv_generator_forward.12} parent=5 // pred_check_branch
      %127 = sbr.rel (%p125) target = $region24
    $region23: #{conv_generator_forward.12} parent=5 // pred_region
      // Predicated region
      $region25: #{conv_generator_forward.12} parent=23 // pred_check
        %p128 = pneg %p29
      $region26: #{conv_generator_forward.12} parent=23 // pred_check_branch
        %130 = sbr.rel (%p128) target = $region28
      $region27: #{conv_generator_forward.12} parent=23 // pred_region
        %p131 = scmp.lt.s32.totalorder %s9, 1
        %s132 = scalar_select %p131, %s9, 1
        %s133 = smul.addr %s132, 48
        %s134 = smul.addr %s133, 4
        %s135 = scalar_lea.vmem %s0, %s134
      $region28: #{conv_generator_forward.12} parent=23 // pred_fallthru
        _
    $region24: #{conv_generator_forward.12} parent=5 // pred_fallthru
      _
    %p136 = scmp.le.s32.totalorder 1, %s9
    %p137 = scmp.lt.s32.totalorder %s9, 3
    %p138 = pnand %p136, %p137
    %p139 = pneg %p138
    // Predicated region
    $region29: #{conv_generator_forward.12} parent=5 // pred_check
      _
    $region30: #{conv_generator_forward.12} parent=5 // pred_check_branch
      %141 = sbr.rel (%p138) target = $region32
    $region31: #{conv_generator_forward.12} parent=5 // pred_region
      %s142 = ssub.s32 %s9, 1
      %p143 = scmp.lt.s32.totalorder %s14, 1
      %s144 = scalar_select %p143, %s14, 1
      %s145 = smul.addr %s144, 48
      %s146 = smul.addr %s145, 4
      %s147 = scalar_lea.vmem %s0, %s146
      %p148 = pneg %p35
      %p149 = pneg %p32
      %p150 = pneg %p56
      %p151 = pneg %p53
      %p152 = pneg %p77
      %p153 = pneg %p74
      %p154 = pneg %p103
      %p155 = pneg %p100
      %p156 = scmp.lt.s32.totalorder %s14, 1
      %s157 = scalar_select %p156, %s14, 1
      %s158 = smul.addr %s157, 32
      %s159 = smul.addr %s158, 4
      %s160 = scalar_lea.vmem %s3, %s159
      %p161 = scmp.lt.s32.totalorder %s14, 1
      %s162 = scalar_select %p161, %s14, 1
      %s163 = smul.addr %s162, 48
      %s164 = smul.addr %s163, 4
      %s165 = scalar_lea.vmem %s0, %s164
      %p166 = scmp.lt.s32.totalorder %s14, 1
      %s167 = scalar_select %p166, %s14, 1
      %s168 = smul.addr %s167, 32
      %s169 = smul.addr %s168, 4
      %s170 = scalar_lea.vmem %s3, %s169
      %v171 = vld [vmem:[%s165] sm:$0xf]
      %v172 = vld [vmem:[%s165 + $0x4] sm:$0xf]
      %v173 = vld [vmem:[%s165 + $0xc] sm:$0xf]
      %v174 = vld [vmem:[%s165 + $0x10] sm:$0xf]
      %v175 = vld [vmem:[%s165 + $0x18] sm:$0xf]
      %v176 = vld [vmem:[%s165 + $0x1c] sm:$0xf]
      %v177 = vld [vmem:[%s165 + $0x24] sm:$0xf]
      %v178 = vld [vmem:[%s165 + $0x28] sm:$0xf]
      %v179 = vld [vmem:[%s165 + $0x30] sm:$0xf]
      %v180 = vld [vmem:[%s165 + $0x34] sm:$0xf]
      %v181 = vld [vmem:[%s165 + $0x3c] sm:$0xf]
      %v182 = vld [vmem:[%s165 + $0x40] sm:$0xf]
      %v183 = vld [vmem:[%s165 + $0x48] sm:$0xf]
      %v184 = vld [vmem:[%s165 + $0x4c] sm:$0xf]
      %v185 = vld [vmem:[%s165 + $0x54] sm:$0xf]
      %v186 = vld [vmem:[%s165 + $0x58] sm:$0xf]
      %v187 = vld [vmem:[%s165 + $0x60] sm:$0xf]
      %v188 = vld [vmem:[%s165 + $0x64] sm:$0xf]
      %v189 = vld [vmem:[%s165 + $0x6c] sm:$0xf]
      %v190 = vld [vmem:[%s165 + $0x70] sm:$0xf]
      %v191 = vld [vmem:[%s165 + $0x78] sm:$0xf]
      %v192 = vld [vmem:[%s165 + $0x7c] sm:$0xf]
      %v193 = vld [vmem:[%s165 + $0x84] sm:$0xf]
      %v194 = vld [vmem:[%s165 + $0x88] sm:$0xf]
      %v195 = vld [vmem:[%s165 + $0x90] sm:$0xf]
      %v196 = vld [vmem:[%s165 + $0x94] sm:$0xf]
      %v197 = vld [vmem:[%s165 + $0x9c] sm:$0xf]
      %v198 = vld [vmem:[%s165 + $0xa0] sm:$0xf]
      %v199 = vld [vmem:[%s165 + $0xa8] sm:$0xf]
      %v200 = vld [vmem:[%s165 + $0xac] sm:$0xf]
      %v201 = vld [vmem:[%s165 + $0xb4] sm:$0xf]
      %v202 = vld [vmem:[%s165 + $0xb8] sm:$0xf]
      %v203 = vunpack.c.l.bf16 %v171
      %v204 = vunpack.c.l.bf16 %v172
      %v205 = vunpack.c.l.bf16 %v173
      %v206 = vunpack.c.l.bf16 %v174
      %v207 = vunpack.c.l.bf16 %v175
      %v208 = vunpack.c.l.bf16 %v176
      %v209 = vunpack.c.l.bf16 %v177
      %v210 = vunpack.c.l.bf16 %v178
      %v211 = vunpack.c.l.bf16 %v179
      %v212 = vunpack.c.l.bf16 %v180
      %v213 = vunpack.c.l.bf16 %v181
      %v214 = vunpack.c.l.bf16 %v182
      %v215 = vunpack.c.l.bf16 %v183
      %v216 = vunpack.c.l.bf16 %v184
      %v217 = vunpack.c.l.bf16 %v185
      %v218 = vunpack.c.l.bf16 %v186
      %v219 = vunpack.c.l.bf16 %v187
      %v220 = vunpack.c.l.bf16 %v188
      %v221 = vunpack.c.l.bf16 %v189
      %v222 = vunpack.c.l.bf16 %v190
      %v223 = vunpack.c.l.bf16 %v191
      %v224 = vunpack.c.l.bf16 %v192
      %v225 = vunpack.c.l.bf16 %v193
      %v226 = vunpack.c.l.bf16 %v194
      %v227 = vunpack.c.l.bf16 %v195
      %v228 = vunpack.c.l.bf16 %v196
      %v229 = vunpack.c.l.bf16 %v197
      %v230 = vunpack.c.l.bf16 %v198
      %v231 = vunpack.c.l.bf16 %v199
      %v232 = vunpack.c.l.bf16 %v200
      %v233 = vunpack.c.l.bf16 %v201
      %v234 = vunpack.c.l.bf16 %v202
      %v235 = vld [vmem:[%s1] sm:$0x1]
      %v237 = vlaneseq
      %v238 = vshrl.u32 %v237, 7
      %v239 = vsub.s32 0, %v238
      %v240 = vrot.slane %v235, %v239
      %v242 = vmul.f32 %v203, %v240
      %v243 = vmul.f32 %v204, %v240
      %v244 = vmul.f32 %v205, %v240
      %v245 = vmul.f32 %v206, %v240
      %v246 = vmul.f32 %v207, %v240
      %v247 = vmul.f32 %v208, %v240
      %v248 = vmul.f32 %v209, %v240
      %v249 = vmul.f32 %v210, %v240
      %v250 = vmul.f32 %v211, %v240
      %v251 = vmul.f32 %v212, %v240
      %v252 = vmul.f32 %v213, %v240
      %v253 = vmul.f32 %v214, %v240
      %v254 = vmul.f32 %v215, %v240
      %v255 = vmul.f32 %v216, %v240
      %v256 = vmul.f32 %v217, %v240
      %v257 = vmul.f32 %v218, %v240
      %v258 = vmul.f32 %v219, %v240
      %v259 = vmul.f32 %v220, %v240
      %v260 = vmul.f32 %v221, %v240
      %v261 = vmul.f32 %v222, %v240
      %v262 = vmul.f32 %v223, %v240
      %v263 = vmul.f32 %v224, %v240
      %v264 = vmul.f32 %v225, %v240
      %v265 = vmul.f32 %v226, %v240
      %v266 = vmul.f32 %v227, %v240
      %v267 = vmul.f32 %v228, %v240
      %v268 = vmul.f32 %v229, %v240
      %v269 = vmul.f32 %v230, %v240
      %v270 = vmul.f32 %v231, %v240
      %v271 = vmul.f32 %v232, %v240
      %v272 = vmul.f32 %v233, %v240
      %v273 = vmul.f32 %v234, %v240
      %v274 = vld [vmem:[%s2] sm:$0x1]
      %v276 = vlaneseq
      %v277 = vshrl.u32 %v276, 7
      %v278 = vsub.s32 0, %v277
      %v279 = vrot.slane %v274, %v278
      %v281 = vadd.f32 %v242, %v279
      %v282 = vadd.f32 %v243, %v279
      %v283 = vadd.f32 %v244, %v279
      %v284 = vadd.f32 %v245, %v279
      %v285 = vadd.f32 %v246, %v279
      %v286 = vadd.f32 %v247, %v279
      %v287 = vadd.f32 %v248, %v279
      %v288 = vadd.f32 %v249, %v279
      %v289 = vadd.f32 %v250, %v279
      %v290 = vadd.f32 %v251, %v279
      %v291 = vadd.f32 %v252, %v279
      %v292 = vadd.f32 %v253, %v279
      %v293 = vadd.f32 %v254, %v279
      %v294 = vadd.f32 %v255, %v279
      %v295 = vadd.f32 %v256, %v279
      %v296 = vadd.f32 %v257, %v279
      %v297 = vadd.f32 %v258, %v279
      %v298 = vadd.f32 %v259, %v279
      %v299 = vadd.f32 %v260, %v279
      %v300 = vadd.f32 %v261, %v279
      %v301 = vadd.f32 %v262, %v279
      %v302 = vadd.f32 %v263, %v279
      %v303 = vadd.f32 %v264, %v279
      %v304 = vadd.f32 %v265, %v279
      %v305 = vadd.f32 %v266, %v279
      %v306 = vadd.f32 %v267, %v279
      %v307 = vadd.f32 %v268, %v279
      %v308 = vadd.f32 %v269, %v279
      %v309 = vadd.f32 %v270, %v279
      %v310 = vadd.f32 %v271, %v279
      %v311 = vadd.f32 %v272, %v279
      %v312 = vadd.f32 %v273, %v279
      %vm313 = vcmp.ge.f32.partialorder %v281, 0.0
      %vm314 = vcmp.ge.f32.partialorder %v282, 0.0
      %vm315 = vcmp.ge.f32.partialorder %v283, 0.0
      %vm316 = vcmp.ge.f32.partialorder %v284, 0.0
      %vm317 = vcmp.ge.f32.partialorder %v285, 0.0
      %vm318 = vcmp.ge.f32.partialorder %v286, 0.0
      %vm319 = vcmp.ge.f32.partialorder %v287, 0.0
      %vm320 = vcmp.ge.f32.partialorder %v288, 0.0
      %vm321 = vcmp.ge.f32.partialorder %v289, 0.0
      %vm322 = vcmp.ge.f32.partialorder %v290, 0.0
      %vm323 = vcmp.ge.f32.partialorder %v291, 0.0
      %vm324 = vcmp.ge.f32.partialorder %v292, 0.0
      %vm325 = vcmp.ge.f32.partialorder %v293, 0.0
      %vm326 = vcmp.ge.f32.partialorder %v294, 0.0
      %vm327 = vcmp.ge.f32.partialorder %v295, 0.0
      %vm328 = vcmp.ge.f32.partialorder %v296, 0.0
      %vm329 = vcmp.ge.f32.partialorder %v297, 0.0
      %vm330 = vcmp.ge.f32.partialorder %v298, 0.0
      %vm331 = vcmp.ge.f32.partialorder %v299, 0.0
      %vm332 = vcmp.ge.f32.partialorder %v300, 0.0
      %vm333 = vcmp.ge.f32.partialorder %v301, 0.0
      %vm334 = vcmp.ge.f32.partialorder %v302, 0.0
      %vm335 = vcmp.ge.f32.partialorder %v303, 0.0
      %vm336 = vcmp.ge.f32.partialorder %v304, 0.0
      %vm337 = vcmp.ge.f32.partialorder %v305, 0.0
      %vm338 = vcmp.ge.f32.partialorder %v306, 0.0
      %vm339 = vcmp.ge.f32.partialorder %v307, 0.0
      %vm340 = vcmp.ge.f32.partialorder %v308, 0.0
      %vm341 = vcmp.ge.f32.partialorder %v309, 0.0
      %vm342 = vcmp.ge.f32.partialorder %v310, 0.0
      %vm343 = vcmp.ge.f32.partialorder %v311, 0.0
      %vm344 = vcmp.ge.f32.partialorder %v312, 0.0
      %v345 = vmul.f32 %v281, 0.01
      %v346 = vmul.f32 %v282, 0.01
      %v347 = vmul.f32 %v283, 0.01
      %v348 = vmul.f32 %v284, 0.01
      %v349 = vmul.f32 %v285, 0.01
      %v350 = vmul.f32 %v286, 0.01
      %v351 = vmul.f32 %v287, 0.01
      %v352 = vmul.f32 %v288, 0.01
      %v353 = vmul.f32 %v289, 0.01
      %v354 = vmul.f32 %v290, 0.01
      %v355 = vmul.f32 %v291, 0.01
      %v356 = vmul.f32 %v292, 0.01
      %v357 = vmul.f32 %v293, 0.01
      %v358 = vmul.f32 %v294, 0.01
      %v359 = vmul.f32 %v295, 0.01
      %v360 = vmul.f32 %v296, 0.01
      %v361 = vmul.f32 %v297, 0.01
      %v362 = vmul.f32 %v298, 0.01
      %v363 = vmul.f32 %v299, 0.01
      %v364 = vmul.f32 %v300, 0.01
      %v365 = vmul.f32 %v301, 0.01
      %v366 = vmul.f32 %v302, 0.01
      %v367 = vmul.f32 %v303, 0.01
      %v368 = vmul.f32 %v304, 0.01
      %v369 = vmul.f32 %v305, 0.01
      %v370 = vmul.f32 %v306, 0.01
      %v371 = vmul.f32 %v307, 0.01
      %v372 = vmul.f32 %v308, 0.01
      %v373 = vmul.f32 %v309, 0.01
      %v374 = vmul.f32 %v310, 0.01
      %v375 = vmul.f32 %v311, 0.01
      %v376 = vmul.f32 %v312, 0.01
      %v377 = vsel %vm313, %v281, %v345
      %v378 = vsel %vm314, %v282, %v346
      %v379 = vsel %vm315, %v283, %v347
      %v380 = vsel %vm316, %v284, %v348
      %v381 = vsel %vm317, %v285, %v349
      %v382 = vsel %vm318, %v286, %v350
      %v383 = vsel %vm319, %v287, %v351
      %v384 = vsel %vm320, %v288, %v352
      %v385 = vsel %vm321, %v289, %v353
      %v386 = vsel %vm322, %v290, %v354
      %v387 = vsel %vm323, %v291, %v355
      %v388 = vsel %vm324, %v292, %v356
      %v389 = vsel %vm325, %v293, %v357
      %v390 = vsel %vm326, %v294, %v358
      %v391 = vsel %vm327, %v295, %v359
      %v392 = vsel %vm328, %v296, %v360
      %v393 = vsel %vm329, %v297, %v361
      %v394 = vsel %vm330, %v298, %v362
      %v395 = vsel %vm331, %v299, %v363
      %v396 = vsel %vm332, %v300, %v364
      %v397 = vsel %vm333, %v301, %v365
      %v398 = vsel %vm334, %v302, %v366
      %v399 = vsel %vm335, %v303, %v367
      %v400 = vsel %vm336, %v304, %v368
      %v401 = vsel %vm337, %v305, %v369
      %v402 = vsel %vm338, %v306, %v370
      %v403 = vsel %vm339, %v307, %v371
      %v404 = vsel %vm340, %v308, %v372
      %v405 = vsel %vm341, %v309, %v373
      %v406 = vsel %vm342, %v310, %v374
      %v407 = vsel %vm343, %v311, %v375
      %v408 = vsel %vm344, %v312, %v376
      %v409 = vpack.c.bf16 %v378, %v377
      %v410 = vpack.c.bf16 %v380, %v379
      %v411 = vpack.c.bf16 %v382, %v381
      %v412 = vpack.c.bf16 %v384, %v383
      %v413 = vpack.c.bf16 %v386, %v385
      %v414 = vpack.c.bf16 %v388, %v387
      %v415 = vpack.c.bf16 %v390, %v389
      %v416 = vpack.c.bf16 %v392, %v391
      %v417 = vpack.c.bf16 %v394, %v393
      %v418 = vpack.c.bf16 %v396, %v395
      %v419 = vpack.c.bf16 %v398, %v397
      %v420 = vpack.c.bf16 %v400, %v399
      %v421 = vpack.c.bf16 %v402, %v401
      %v422 = vpack.c.bf16 %v404, %v403
      %v423 = vpack.c.bf16 %v406, %v405
      %v424 = vpack.c.bf16 %v408, %v407
      %v441 = vunpack.c.l.b16 %v409
      %v442 = vunpack.c.h.b16 %v409
      %v443 = vunpack.c.l.b16 %v410
      %v444 = vunpack.c.h.b16 %v410
      %v445 = vunpack.c.l.b16 %v411
      %v446 = vunpack.c.h.b16 %v411
      %v447 = vunpack.c.l.b16 %v412
      %v448 = vunpack.c.h.b16 %v412
      %v449 = vunpack.c.l.b16 %v413
      %v450 = vunpack.c.h.b16 %v413
      %v451 = vunpack.c.l.b16 %v414
      %v452 = vunpack.c.h.b16 %v414
      %v453 = vunpack.c.l.b16 %v415
      %v454 = vunpack.c.h.b16 %v415
      %v455 = vunpack.c.l.b16 %v416
      %v456 = vunpack.c.h.b16 %v416
      %v457 = vunpack.c.l.b16 %v417
      %v458 = vunpack.c.h.b16 %v417
      %v459 = vunpack.c.l.b16 %v418
      %v460 = vunpack.c.h.b16 %v418
      %v461 = vunpack.c.l.b16 %v419
      %v462 = vunpack.c.h.b16 %v419
      %v463 = vunpack.c.l.b16 %v420
      %v464 = vunpack.c.h.b16 %v420
      %v465 = vunpack.c.l.b16 %v421
      %v466 = vunpack.c.h.b16 %v421
      %v467 = vunpack.c.l.b16 %v422
      %v468 = vunpack.c.h.b16 %v422
      %v469 = vunpack.c.l.b16 %v423
      %v470 = vunpack.c.h.b16 %v423
      %v471 = vunpack.c.l.b16 %v424
      %v472 = vunpack.c.h.b16 %v424
      %v473 = vpack.c.b16 %v441, %v441
      %v474 = vpack.c.b16 %v442, %v442
      %v475 = vpack.c.b16 %v443, %v443
      %v476 = vpack.c.b16 %v444, %v444
      %v477 = vpack.c.b16 %v445, %v445
      %v478 = vpack.c.b16 %v446, %v446
      %v479 = vpack.c.b16 %v447, %v447
      %v480 = vpack.c.b16 %v448, %v448
      %v481 = vpack.c.b16 %v449, %v449
      %v482 = vpack.c.b16 %v450, %v450
      %v483 = vpack.c.b16 %v451, %v451
      %v484 = vpack.c.b16 %v452, %v452
      %v485 = vpack.c.b16 %v453, %v453
      %v486 = vpack.c.b16 %v454, %v454
      %v487 = vpack.c.b16 %v455, %v455
      %v488 = vpack.c.b16 %v456, %v456
      %v489 = vpack.c.b16 %v457, %v457
      %v490 = vpack.c.b16 %v458, %v458
      %v491 = vpack.c.b16 %v459, %v459
      %v492 = vpack.c.b16 %v460, %v460
      %v493 = vpack.c.b16 %v461, %v461
      %v494 = vpack.c.b16 %v462, %v462
      %v495 = vpack.c.b16 %v463, %v463
      %v496 = vpack.c.b16 %v464, %v464
      %v497 = vpack.c.b16 %v465, %v465
      %v498 = vpack.c.b16 %v466, %v466
      %v499 = vpack.c.b16 %v467, %v467
      %v500 = vpack.c.b16 %v468, %v468
      %v501 = vpack.c.b16 %v469, %v469
      %v502 = vpack.c.b16 %v470, %v470
      %v503 = vpack.c.b16 %v471, %v471
      %v504 = vpack.c.b16 %v472, %v472
      %vm537 = vcmask 60416
      %538 = vst.msk [vmem:[%s170] sm:$0xf] %vm537, %v473
      %539 = vst.msk [vmem:[%s170 + $0x4] sm:$0xf] %vm537, %v474
      %540 = vst.msk [vmem:[%s170 + $0x8] sm:$0xf] %vm537, %v475
      %541 = vst.msk [vmem:[%s170 + $0xc] sm:$0xf] %vm537, %v476
      %542 = vst.msk [vmem:[%s170 + $0x10] sm:$0xf] %vm537, %v477
      %543 = vst.msk [vmem:[%s170 + $0x14] sm:$0xf] %vm537, %v478
      %544 = vst.msk [vmem:[%s170 + $0x18] sm:$0xf] %vm537, %v479
      %545 = vst.msk [vmem:[%s170 + $0x1c] sm:$0xf] %vm537, %v480
      %546 = vst.msk [vmem:[%s170 + $0x20] sm:$0xf] %vm537, %v481
      %547 = vst.msk [vmem:[%s170 + $0x24] sm:$0xf] %vm537, %v482
      %548 = vst.msk [vmem:[%s170 + $0x28] sm:$0xf] %vm537, %v483
      %549 = vst.msk [vmem:[%s170 + $0x2c] sm:$0xf] %vm537, %v484
      %550 = vst.msk [vmem:[%s170 + $0x30] sm:$0xf] %vm537, %v485
      %551 = vst.msk [vmem:[%s170 + $0x34] sm:$0xf] %vm537, %v486
      %552 = vst.msk [vmem:[%s170 + $0x38] sm:$0xf] %vm537, %v487
      %553 = vst.msk [vmem:[%s170 + $0x3c] sm:$0xf] %vm537, %v488
      %554 = vst.msk [vmem:[%s170 + $0x40] sm:$0xf] %vm537, %v489
      %555 = vst.msk [vmem:[%s170 + $0x44] sm:$0xf] %vm537, %v490
      %556 = vst.msk [vmem:[%s170 + $0x48] sm:$0xf] %vm537, %v491
      %557 = vst.msk [vmem:[%s170 + $0x4c] sm:$0xf] %vm537, %v492
      %558 = vst.msk [vmem:[%s170 + $0x50] sm:$0xf] %vm537, %v493
      %559 = vst.msk [vmem:[%s170 + $0x54] sm:$0xf] %vm537, %v494
      %560 = vst.msk [vmem:[%s170 + $0x58] sm:$0xf] %vm537, %v495
      %561 = vst.msk [vmem:[%s170 + $0x5c] sm:$0xf] %vm537, %v496
      %562 = vst.msk [vmem:[%s170 + $0x60] sm:$0xf] %vm537, %v497
      %563 = vst.msk [vmem:[%s170 + $0x64] sm:$0xf] %vm537, %v498
      %564 = vst.msk [vmem:[%s170 + $0x68] sm:$0xf] %vm537, %v499
      %565 = vst.msk [vmem:[%s170 + $0x6c] sm:$0xf] %vm537, %v500
      %566 = vst.msk [vmem:[%s170 + $0x70] sm:$0xf] %vm537, %v501
      %567 = vst.msk [vmem:[%s170 + $0x74] sm:$0xf] %vm537, %v502
      %568 = vst.msk [vmem:[%s170 + $0x78] sm:$0xf] %vm537, %v503
      %569 = vst.msk [vmem:[%s170 + $0x7c] sm:$0xf] %vm537, %v504
      %p570 = scmp.lt.s32.totalorder %s14, 1
      %s571 = scalar_select %p570, %s14, 1
      %s572 = smul.addr %s571, 32
      %s573 = smul.addr %s572, 4
      %s574 = scalar_lea.vmem %s3, %s573
      // Predicated region
      $region33: #{conv_generator_forward.12} parent=31 // pred_check
        %p575 = pneg %p100
      $region34: #{conv_generator_forward.12} parent=31 // pred_check_branch
        %577 = sbr.rel (%p575) target = $region36
      $region35: #{conv_generator_forward.12} parent=31 // pred_region
        _
      $region36: #{conv_generator_forward.12} parent=31 // pred_fallthru
        _
    $region32: #{conv_generator_forward.12} parent=5 // pred_fallthru
      _
    %p578 = scmp.le.s32.totalorder 2, %s9
    // Predicated region
    $region37: #{conv_generator_forward.12} parent=5 // pred_check
      %p579 = pneg %p578
    $region38: #{conv_generator_forward.12} parent=5 // pred_check_branch
      %581 = sbr.rel (%p579) target = $region40
    $region39: #{conv_generator_forward.12} parent=5 // pred_region
      %s582 = ssub.s32 %s9, 2
      // Predicated region
      $region41: #{conv_generator_forward.12} parent=39 // pred_check
        %p583 = pneg %p106
      $region42: #{conv_generator_forward.12} parent=39 // pred_check_branch
        %585 = sbr.rel (%p583) target = $region44
      $region43: #{conv_generator_forward.12} parent=39 // pred_region
        %p586 = scmp.lt.s32.totalorder %s15, 1
        %s587 = scalar_select %p586, %s15, 1
        %s588 = smul.addr %s587, 32
        %s589 = smul.addr %s588, 4
        %s590 = scalar_lea.vmem %s3, %s589
      $region44: #{conv_generator_forward.12} parent=39 // pred_fallthru
        _
    $region40: #{conv_generator_forward.12} parent=5 // pred_fallthru
      _
  $region6: #{conv_generator_forward.12} parent=0 // loop_footer
    %s13 = sadd.s32 1, %s9
  $region7: #{conv_generator_forward.12} parent=0 // loop_footer_branch
    %8 = sbr.rel target = $region3
  $region8: #{conv_generator_forward.12} parent=0 // loop_exit
    _

// kernel: conv_generator_forward.9
$region0: #{conv_generator_forward.9}
  #allocation0 [shape = 'u32[]', space=smem, size = 0x4, offset = 0x4, fixed_abs, tag = 'smem constant byte address 0x4 - core index']
  #allocation1 [shape = 'u32[144,128]{1,0:T(1,128)}', space=vmem, size = 0x12000, scoped, tag = 'internal scratch']
  #allocation2 [shape = 'bf16[88,512]{1,0:T(8,128)(2,1)}', space=vmem, size = 0x16000, scoped, tag = 'scratch operand']
  %s0 = inlined_call_operand.vmem [shape: bf16[2,132,32], index: 0, kind: input, shape index: {}]
  %s1 = inlined_call_operand.vmem [shape: bf16[512,16], index: 1, kind: input, shape index: {}]
  %s2 = inlined_call_operand.vmem [shape: f32[88,1], index: 2, kind: input, shape index: {}]
  %s3 = inlined_call_operand.vmem [shape: bf16[2,88,16], index: 3, kind: output, shape index: {0}]
  %s4 = inlined_call_operand.vmem [shape: f32[2,2,16], index: 4, kind: output, shape index: {1}]
  %5 = xla_tuple %s3, %s4
  %s6 = sld [smem:[#allocation0]]
  $region53: #{conv_generator_forward.9} parent=0
    _
  %s8 = ssub.s32 1, %s6
  %s9 = scalar_select 0, %s8, %s6
  loop: start=0, step=1, limit=4
  $region2: #{conv_generator_forward.9} parent=0 // loop_pre_header
    _
  $region3: #{conv_generator_forward.9} parent=0 // loop_header
    %s11 = sphi 0, %s15
    %p12 = scmp.ge.s32.totalorder %s11, 4
    %s21 = sphi 0, %s23
    %s24 = sphi 0, %s21
    %s25 = sphi 0, %s24
    %s41 = sphi 0, %s25
    %s45 = sphi 0, %s45
    %s47 = sphi 0, %s45
    %s48 = sphi 0, %s47
    %s62 = sphi 0, %s48
    %s66 = sphi 0, %s66
    %s68 = sphi 0, %s66
    %s69 = sphi 0, %s68
    %s83 = sphi 0, %s69
    %s89 = sphi 0, %s91
    %s92 = sphi 0, %s89
    %s93 = sphi 0, %s92
    %s109 = sphi 0, %s93
    %s115 = sphi 0, %s117
    %s118 = sphi 0, %s115
    %s119 = sphi 0, %s118
    %s135 = sphi 0, %s119
  $region4: #{conv_generator_forward.9} parent=0 // loop_header_branch
    %14 = sbr.rel (%p12) target = $region8
  $region5: #{conv_generator_forward.9} parent=0 // loop_body
    %s16 = ssub.s32 %s11, 1
    %s17 = ssub.s32 %s11, 2
    %s18 = sadd.s32 %s11, 1
    %s19 = ssub.s32 %s11, %s18
    %p20 = scmp.eq.s32.totalorder %s19, 0
    %s22 = sadd.s32 %s21, 1
    %s23 = scalar_select %p20, %s21, %s22
    %p26 = pneg %p20
    %p27 = scmp.eq.s32.totalorder %s11, 1
    %p28 = por %p26, %p27
    %p29 = scmp.ne.s32.totalorder %s21, %s24
    %p30 = scmp.eq.s32.totalorder %s11, 0
    %p31 = por %p29, %p30
    %p32 = scmp.ne.s32.totalorder %s21, %s24
    %p33 = scmp.eq.s32.totalorder %s16, 1
    %p34 = por %p32, %p33
    %p35 = scmp.ne.s32.totalorder %s24, %s25
    %p36 = scmp.eq.s32.totalorder %s16, 0
    %p37 = por %p35, %p36
    %p38 = scmp.ne.s32.totalorder %s24, %s25
    %p39 = scmp.eq.s32.totalorder %s17, 1
    %p40 = por %p38, %p39
    %p42 = scmp.ne.s32.totalorder %s25, %s41
    %p43 = scmp.eq.s32.totalorder %s17, 0
    %p44 = por %p42, %p43
    %s46 = sadd.s32 %s45, 1
    %p49 = scmp.eq.s32.totalorder %s11, 1
    %p50 = scmp.ne.s32.totalorder %s45, %s47
    %p51 = scmp.eq.s32.totalorder %s11, 0
    %p52 = por %p50, %p51
    %p53 = scmp.ne.s32.totalorder %s45, %s47
    %p54 = scmp.eq.s32.totalorder %s16, 1
    %p55 = por %p53, %p54
    %p56 = scmp.ne.s32.totalorder %s47, %s48
    %p57 = scmp.eq.s32.totalorder %s16, 0
    %p58 = por %p56, %p57
    %p59 = scmp.ne.s32.totalorder %s47, %s48
    %p60 = scmp.eq.s32.totalorder %s17, 1
    %p61 = por %p59, %p60
    %p63 = scmp.ne.s32.totalorder %s48, %s62
    %p64 = scmp.eq.s32.totalorder %s17, 0
    %p65 = por %p63, %p64
    %s67 = sadd.s32 %s66, 1
    %p70 = scmp.eq.s32.totalorder %s11, 1
    %p71 = scmp.ne.s32.totalorder %s66, %s68
    %p72 = scmp.eq.s32.totalorder %s11, 0
    %p73 = por %p71, %p72
    %p74 = scmp.ne.s32.totalorder %s66, %s68
    %p75 = scmp.eq.s32.totalorder %s16, 1
    %p76 = por %p74, %p75
    %p77 = scmp.ne.s32.totalorder %s68, %s69
    %p78 = scmp.eq.s32.totalorder %s16, 0
    %p79 = por %p77, %p78
    %p80 = scmp.ne.s32.totalorder %s68, %s69
    %p81 = scmp.eq.s32.totalorder %s17, 1
    %p82 = por %p80, %p81
    %p84 = scmp.ne.s32.totalorder %s69, %s83
    %p85 = scmp.eq.s32.totalorder %s17, 0
    %p86 = por %p84, %p85
    %s87 = ssub.s32 %s11, %s18
    %p88 = scmp.eq.s32.totalorder %s87, 0
    %s90 = sadd.s32 %s89, 1
    %s91 = scalar_select %p88, %s89, %s90
    %p94 = pneg %p88
    %p95 = scmp.eq.s32.totalorder %s11, 1
    %p96 = por %p94, %p95
    %p97 = scmp.ne.s32.totalorder %s89, %s92
    %p98 = scmp.eq.s32.totalorder %s11, 0
    %p99 = por %p97, %p98
    %p100 = scmp.ne.s32.totalorder %s89, %s92
    %p101 = scmp.eq.s32.totalorder %s16, 1
    %p102 = por %p100, %p101
    %p103 = scmp.ne.s32.totalorder %s92, %s93
    %p104 = scmp.eq.s32.totalorder %s16, 0
    %p105 = por %p103, %p104
    %p106 = scmp.ne.s32.totalorder %s92, %s93
    %p107 = scmp.eq.s32.totalorder %s17, 1
    %p108 = por %p106, %p107
    %p110 = scmp.ne.s32.totalorder %s93, %s109
    %p111 = scmp.eq.s32.totalorder %s17, 0
    %p112 = por %p110, %p111
    %s113 = ssub.s32 %s11, %s18
    %p114 = scmp.eq.s32.totalorder %s113, 0
    %s116 = sadd.s32 %s115, 1
    %s117 = scalar_select %p114, %s115, %s116
    %p120 = pneg %p114
    %p121 = scmp.eq.s32.totalorder %s11, 1
    %p122 = por %p120, %p121
    %p123 = scmp.ne.s32.totalorder %s115, %s118
    %p124 = scmp.eq.s32.totalorder %s11, 0
    %p125 = por %p123, %p124
    %p126 = scmp.ne.s32.totalorder %s115, %s118
    %p127 = scmp.eq.s32.totalorder %s16, 1
    %p128 = por %p126, %p127
    %p129 = scmp.ne.s32.totalorder %s118, %s119
    %p130 = scmp.eq.s32.totalorder %s16, 0
    %p131 = por %p129, %p130
    %p132 = scmp.ne.s32.totalorder %s118, %s119
    %p133 = scmp.eq.s32.totalorder %s17, 1
    %p134 = por %p132, %p133
    %p136 = scmp.ne.s32.totalorder %s119, %s135
    %p137 = scmp.eq.s32.totalorder %s17, 0
    %p138 = por %p136, %p137
    %p139 = scmp.le.s32.totalorder 1, %s11
    %p140 = scmp.lt.s32.totalorder %s11, 3
    %p141 = pnand %p139, %p140
    %p142 = pneg %p141
    // Predicated region
    $region9: #{conv_generator_forward.9} parent=5 // pred_check
      _
    $region10: #{conv_generator_forward.9} parent=5 // pred_check_branch
      %144 = sbr.rel (%p141) target = $region12
    $region11: #{conv_generator_forward.9} parent=5 // pred_region
      %s145 = ssub.s32 %s11, 1
      // Predicated region
      $region13: #{conv_generator_forward.9} parent=11 // pred_check
        %p146 = pneg %p58
      $region14: #{conv_generator_forward.9} parent=11 // pred_check_branch
        %148 = sbr.rel (%p146) target = $region16
      $region15: #{conv_generator_forward.9} parent=11 // pred_region
        _
      $region16: #{conv_generator_forward.9} parent=11 // pred_fallthru
        _
      // Predicated region
      $region17: #{conv_generator_forward.9} parent=11 // pred_check
        %p149 = pneg %p79
      $region18: #{conv_generator_forward.9} parent=11 // pred_check_branch
        %151 = sbr.rel (%p149) target = $region20
      $region19: #{conv_generator_forward.9} parent=11 // pred_region
        _
      $region20: #{conv_generator_forward.9} parent=11 // pred_fallthru
        _
    $region12: #{conv_generator_forward.9} parent=5 // pred_fallthru
      _
    %p152 = scmp.lt.s32.totalorder %s11, 2
    // Predicated region
    $region21: #{conv_generator_forward.9} parent=5 // pred_check
      %p153 = pneg %p152
    $region22: #{conv_generator_forward.9} parent=5 // pred_check_branch
      %155 = sbr.rel (%p153) target = $region24
    $region23: #{conv_generator_forward.9} parent=5 // pred_region
      // Predicated region
      $region25: #{conv_generator_forward.9} parent=23 // pred_check
        %p156 = pneg %p31
      $region26: #{conv_generator_forward.9} parent=23 // pred_check_branch
        %158 = sbr.rel (%p156) target = $region28
      $region27: #{conv_generator_forward.9} parent=23 // pred_region
        %p159 = scmp.lt.s32.totalorder %s11, 1
        %s160 = scalar_select %p159, %s11, 1
        %s161 = smul.addr %s160, 17
        %s162 = smul.addr %s161, 4
        %s163 = scalar_lea.vmem %s0, %s162
      $region28: #{conv_generator_forward.9} parent=23 // pred_fallthru
        _
    $region24: #{conv_generator_forward.9} parent=5 // pred_fallthru
      _
    %p164 = scmp.le.s32.totalorder 1, %s11
    %p165 = scmp.lt.s32.totalorder %s11, 3
    %p166 = pnand %p164, %p165
    %p167 = pneg %p166
    // Predicated region
    $region29: #{conv_generator_forward.9} parent=5 // pred_check
      _
    $region30: #{conv_generator_forward.9} parent=5 // pred_check_branch
      %169 = sbr.rel (%p166) target = $region32
    $region31: #{conv_generator_forward.9} parent=5 // pred_region
      %s170 = ssub.s32 %s11, 1
      %p171 = scmp.lt.s32.totalorder %s16, 1
      %s172 = scalar_select %p171, %s16, 1
      %s173 = smul.addr %s172, 17
      %s174 = smul.addr %s173, 4
      %s175 = scalar_lea.vmem %s0, %s174
      %p176 = pneg %p37
      %p177 = pneg %p34
      %p178 = pneg %p58
      %p179 = pneg %p55
      %p180 = pneg %p79
      %p181 = pneg %p76
      %p182 = pneg %p105
      %p183 = pneg %p102
      %p184 = scmp.lt.s32.totalorder %s16, 1
      %s185 = scalar_select %p184, %s16, 1
      %s186 = smul.addr %s185, 11
      %s187 = smul.addr %s186, 4
      %s188 = scalar_lea.vmem %s3, %s187
      %p189 = pneg %p131
      %p190 = pneg %p128
      %p191 = scmp.lt.s32.totalorder %s16, 1
      %s192 = scalar_select %p191, %s16, 1
      %s193 = smul.addr %s192, 2
      %s194 = scalar_lea.vmem %s4, %s193
      %p195 = scmp.lt.s32.totalorder %s16, 1
      %s196 = scalar_select %p195, %s16, 1
      %s197 = smul.addr %s196, 17
      %s198 = smul.addr %s197, 4
      %s199 = scalar_lea.vmem %s0, %s198
      %p200 = scmp.lt.s32.totalorder %s16, 1
      %s201 = scalar_select %p200, %s16, 1
      %s202 = smul.addr %s201, 11
      %s203 = smul.addr %s202, 4
      %s204 = scalar_lea.vmem %s3, %s203
      %p205 = scmp.lt.s32.totalorder %s16, 1
      %s206 = scalar_select %p205, %s16, 1
      %s207 = smul.addr %s206, 2
      %s208 = scalar_lea.vmem %s4, %s207
      %v210 = vld [vmem:[%s2] sm:$0xff]
      %v211 = vld [vmem:[%s2 + $0x8] sm:$0xff]
      %v212 = vld [vmem:[%s2 + $0x10] sm:$0xff]
      %v213 = vld [vmem:[%s2 + $0x18] sm:$0xff]
      %v214 = vld [vmem:[%s2 + $0x20] sm:$0xff]
      %v215 = vld [vmem:[%s2 + $0x28] sm:$0xff]
      %v216 = vld [vmem:[%s2 + $0x30] sm:$0xff]
      %v217 = vld [vmem:[%s2 + $0x38] sm:$0xff]
      %v218 = vld [vmem:[%s2 + $0x40] sm:$0xff]
      %v219 = vld [vmem:[%s2 + $0x48] sm:$0xff]
      %v220 = vld [vmem:[%s2 + $0x50] sm:$0xff]
      %v221 = vld [vmem:[%s199] sm:$0xf]
      %v222 = vld [vmem:[%s199 + $0x4] sm:$0xf]
      %v223 = vld [vmem:[%s199 + $0x8] sm:$0xf]
      %v224 = vld [vmem:[%s199 + $0xc] sm:$0xf]
      %v225 = vld [vmem:[%s199 + $0x10] sm:$0xf]
      %v226 = vld [vmem:[%s199 + $0x14] sm:$0xf]
      %v227 = vld [vmem:[%s199 + $0x18] sm:$0xf]
      %v228 = vld [vmem:[%s199 + $0x1c] sm:$0xf]
      %v229 = vld [vmem:[%s199 + $0x20] sm:$0xf]
      %v230 = vld [vmem:[%s199 + $0x24] sm:$0xf]
      %v231 = vld [vmem:[%s199 + $0x28] sm:$0xf]
      %vm232 = vcmask 257024
      %233 = vst.msk [vmem:[#allocation2] sm:$0xf] %vm232, %v221
      %234 = vst.msk [vmem:[#allocation2 + $0x10] sm:$0xf] %vm232, %v222
      %235 = vst.msk [vmem:[#allocation2 + $0x20] sm:$0xf] %vm232, %v223
      %236 = vst.msk [vmem:[#allocation2 + $0x30] sm:$0xf] %vm232, %v224
      %237 = vst.msk [vmem:[#allocation2 + $0x40] sm:$0xf] %vm232, %v225
      %238 = vst.msk [vmem:[#allocation2 + $0x50] sm:$0xf] %vm232, %v226
      %239 = vst.msk [vmem:[#allocation2 + $0x60] sm:$0xf] %vm232, %v227
      %240 = vst.msk [vmem:[#allocation2 + $0x70] sm:$0xf] %vm232, %v228
      %241 = vst.msk [vmem:[#allocation2 + $0x80] sm:$0xf] %vm232, %v229
      %242 = vst.msk [vmem:[#allocation2 + $0x90] sm:$0xf] %vm232, %v230
      %243 = vst.msk [vmem:[#allocation2 + $0xa0] sm:$0xf] %vm232, %v231
      %v244 = vld [vmem:[%s199] sm:$0xf]
      %v245 = vld [vmem:[%s199 + $0x4] sm:$0xf]
      %v246 = vld [vmem:[%s199 + $0x8] sm:$0xf]
      %v247 = vld [vmem:[%s199 + $0xc] sm:$0xf]
      %v248 = vld [vmem:[%s199 + $0x10] sm:$0xf]
      %v249 = vld [vmem:[%s199 + $0x14] sm:$0xf]
      %v250 = vld [vmem:[%s199 + $0x18] sm:$0xf]
      %v251 = vld [vmem:[%s199 + $0x1c] sm:$0xf]
      %v252 = vld [vmem:[%s199 + $0x20] sm:$0xf]
      %v253 = vld [vmem:[%s199 + $0x24] sm:$0xf]
      %v254 = vld [vmem:[%s199 + $0x28] sm:$0xf]
      %v255 = vld [vmem:[%s199 + $0x2c] sm:$0x1]
      %vm256 = vsmask.f32 3328
      %vm257 = vsmask.f32 7440
      %vm258 = vmor %vm256, %vm257
      %v260 = vshrl.u32 %v244, 16
      %v262 = vrot.slane %v260, 4
      %v263 = vshll.u32 %v244, 16
      %v265 = vrot.slane %v263, 5
      %v266 = vor.u32 %v262, %v265
      %v267 = vrot.slane %v266, 4
      %v269 = vshll.u32 %v245, 16
      %v271 = vrot.slane %v269, 5
      %v272 = vsel %vm258, %v267, %v271
      %v273 = vshrl.u32 %v245, 16
      %v275 = vrot.slane %v273, 4
      %v276 = vor.u32 %v275, %v271
      %v277 = vrot.slane %v276, 4
      %v279 = vshll.u32 %v246, 16
      %v281 = vrot.slane %v279, 5
      %v282 = vsel %vm258, %v277, %v281
      %v283 = vshrl.u32 %v246, 16
      %v285 = vrot.slane %v283, 4
      %v286 = vor.u32 %v285, %v281
      %v287 = vrot.slane %v286, 4
      %v289 = vshll.u32 %v247, 16
      %v291 = vrot.slane %v289, 5
      %v292 = vsel %vm258, %v287, %v291
      %v293 = vshrl.u32 %v247, 16
      %v295 = vrot.slane %v293, 4
      %v296 = vor.u32 %v295, %v291
      %v297 = vrot.slane %v296, 4
      %v299 = vshll.u32 %v248, 16
      %v301 = vrot.slane %v299, 5
      %v302 = vsel %vm258, %v297, %v301
      %v303 = vshrl.u32 %v248, 16
      %v305 = vrot.slane %v303, 4
      %v306 = vor.u32 %v305, %v301
      %v307 = vrot.slane %v306, 4
      %v309 = vshll.u32 %v249, 16
      %v311 = vrot.slane %v309, 5
      %v312 = vsel %vm258, %v307, %v311
      %v313 = vshrl.u32 %v249, 16
      %v315 = vrot.slane %v313, 4
      %v316 = vor.u32 %v315, %v311
      %v317 = vrot.slane %v316, 4
      %v319 = vshll.u32 %v250, 16
      %v321 = vrot.slane %v319, 5
      %v322 = vsel %vm258, %v317, %v321
      %v323 = vshrl.u32 %v250, 16
      %v325 = vrot.slane %v323, 4
      %v326 = vor.u32 %v325, %v321
      %v327 = vrot.slane %v326, 4
      %v329 = vshll.u32 %v251, 16
      %v331 = vrot.slane %v329, 5
      %v332 = vsel %vm258, %v327, %v331
      %v333 = vshrl.u32 %v251, 16
      %v335 = vrot.slane %v333, 4
      %v336 = vor.u32 %v335, %v331
      %v337 = vrot.slane %v336, 4
      %v339 = vshll.u32 %v252, 16
      %v341 = vrot.slane %v339, 5
      %v342 = vsel %vm258, %v337, %v341
      %v343 = vshrl.u32 %v252, 16
      %v345 = vrot.slane %v343, 4
      %v346 = vor.u32 %v345, %v341
      %v347 = vrot.slane %v346, 4
      %v349 = vshll.u32 %v253, 16
      %v351 = vrot.slane %v349, 5
      %v352 = vsel %vm258, %v347, %v351
      %v353 = vshrl.u32 %v253, 16
      %v355 = vrot.slane %v353, 4
      %v356 = vor.u32 %v355, %v351
      %v357 = vrot.slane %v356, 4
      %v359 = vshll.u32 %v254, 16
      %v361 = vrot.slane %v359, 5
      %v362 = vsel %vm258, %v357, %v361
      %v363 = vshrl.u32 %v254, 16
      %v365 = vrot.slane %v363, 4
      %v366 = vor.u32 %v365, %v361
      %v367 = vrot.slane %v366, 4
      %v369 = vshll.u32 %v255, 16
      %v371 = vrot.slane %v369, 5
      %v372 = vsel %vm258, %v367, %v371
      %373 = vrot.lane.b32.xlu0 %v272, 32
      %v374 = vpop.permute.xlu0 %373
      %375 = vrot.lane.b32.xlu0 %v282, 32
      %v376 = vpop.permute.xlu0 %375
      %377 = vrot.lane.b32.xlu0 %v292, 32
      %v378 = vpop.permute.xlu0 %377
      %379 = vrot.lane.b32.xlu0 %v302, 32
      %v380 = vpop.permute.xlu0 %379
      %381 = vrot.lane.b32.xlu0 %v312, 32
      %v382 = vpop.permute.xlu0 %381
      %383 = vrot.lane.b32.xlu0 %v322, 32
      %v384 = vpop.permute.xlu0 %383
      %385 = vrot.lane.b32.xlu0 %v332, 32
      %v386 = vpop.permute.xlu0 %385
      %387 = vrot.lane.b32.xlu0 %v342, 32
      %v388 = vpop.permute.xlu0 %387
      %389 = vrot.lane.b32.xlu0 %v352, 32
      %v390 = vpop.permute.xlu0 %389
      %391 = vrot.lane.b32.xlu0 %v362, 32
      %v392 = vpop.permute.xlu0 %391
      %393 = vrot.lane.b32.xlu0 %v372, 32
      %v394 = vpop.permute.xlu0 %393
      %vm406 = vcmask 519424
      %407 = vst.msk [vmem:[#allocation2] sm:$0xf] %vm406, %v374
      %408 = vst.msk [vmem:[#allocation2 + $0x10] sm:$0xf] %vm406, %v376
      %409 = vst.msk [vmem:[#allocation2 + $0x20] sm:$0xf] %vm406, %v378
      %410 = vst.msk [vmem:[#allocation2 + $0x30] sm:$0xf] %vm406, %v380
      %411 = vst.msk [vmem:[#allocation2 + $0x40] sm:$0xf] %vm406, %v382
      %412 = vst.msk [vmem:[#allocation2 + $0x50] sm:$0xf] %vm406, %v384
      %413 = vst.msk [vmem:[#allocation2 + $0x60] sm:$0xf] %vm406, %v386
      %414 = vst.msk [vmem:[#allocation2 + $0x70] sm:$0xf] %vm406, %v388
      %415 = vst.msk [vmem:[#allocation2 + $0x80] sm:$0xf] %vm406, %v390
      %416 = vst.msk [vmem:[#allocation2 + $0x90] sm:$0xf] %vm406, %v392
      %417 = vst.msk [vmem:[#allocation2 + $0xa0] sm:$0xf] %vm406, %v394
      %v418 = vld [vmem:[%s199] sm:$0xe]
      %v419 = vld [vmem:[%s199 + $0x4] sm:$0xf]
      %v420 = vld [vmem:[%s199 + $0x8] sm:$0xf]
      %v421 = vld [vmem:[%s199 + $0xc] sm:$0xf]
      %v422 = vld [vmem:[%s199 + $0x10] sm:$0xf]
      %v423 = vld [vmem:[%s199 + $0x14] sm:$0xf]
      %v424 = vld [vmem:[%s199 + $0x18] sm:$0xf]
      %v425 = vld [vmem:[%s199 + $0x1c] sm:$0xf]
      %v426 = vld [vmem:[%s199 + $0x20] sm:$0xf]
      %v427 = vld [vmem:[%s199 + $0x24] sm:$0xf]
      %v428 = vld [vmem:[%s199 + $0x28] sm:$0xf]
      %v429 = vld [vmem:[%s199 + $0x2c] sm:$0x1]
      %vm442 = vcmask 1042432
      %vm443 = vcmask 1046532
      %vm444 = vmor %vm442, %vm443
      %v445 = vrot.slane %v418, 5
      %v446 = vrot.slane %v445, 4
      %v447 = vrot.slane %v419, 5
      %v448 = vsel %vm444, %v446, %v447
      %v449 = vrot.slane %v447, 4
      %v450 = vrot.slane %v420, 5
      %v451 = vsel %vm444, %v449, %v450
      %v452 = vrot.slane %v450, 4
      %v453 = vrot.slane %v421, 5
      %v454 = vsel %vm444, %v452, %v453
      %v455 = vrot.slane %v453, 4
      %v456 = vrot.slane %v422, 5
      %v457 = vsel %vm444, %v455, %v456
      %v458 = vrot.slane %v456, 4
      %v459 = vrot.slane %v423, 5
      %v460 = vsel %vm444, %v458, %v459
      %v461 = vrot.slane %v459, 4
      %v462 = vrot.slane %v424, 5
      %v463 = vsel %vm444, %v461, %v462
      %v464 = vrot.slane %v462, 4
      %v465 = vrot.slane %v425, 5
      %v466 = vsel %vm444, %v464, %v465
      %v467 = vrot.slane %v465, 4
      %v468 = vrot.slane %v426, 5
      %v469 = vsel %vm444, %v467, %v468
      %v470 = vrot.slane %v468, 4
      %v471 = vrot.slane %v427, 5
      %v472 = vsel %vm444, %v470, %v471
      %v473 = vrot.slane %v471, 4
      %v474 = vrot.slane %v428, 5
      %v475 = vsel %vm444, %v473, %v474
      %v476 = vrot.slane %v474, 4
      %v477 = vrot.slane %v429, 5
      %v478 = vsel %vm444, %v476, %v477
      %479 = vrot.lane.b32.xlu0 %v448, 64
      %v480 = vpop.permute.xlu0 %479
      %481 = vrot.lane.b32.xlu0 %v451, 64
      %v482 = vpop.permute.xlu0 %481
      %483 = vrot.lane.b32.xlu0 %v454, 64
      %v484 = vpop.permute.xlu0 %483
      %485 = vrot.lane.b32.xlu0 %v457, 64
      %v486 = vpop.permute.xlu0 %485
      %487 = vrot.lane.b32.xlu0 %v460, 64
      %v488 = vpop.permute.xlu0 %487
      %489 = vrot.lane.b32.xlu0 %v463, 64
      %v490 = vpop.permute.xlu0 %489
      %491 = vrot.lane.b32.xlu0 %v466, 64
      %v492 = vpop.permute.xlu0 %491
      %493 = vrot.lane.b32.xlu0 %v469, 64
      %v494 = vpop.permute.xlu0 %493
      %495 = vrot.lane.b32.xlu0 %v472, 64
      %v496 = vpop.permute.xlu0 %495
      %497 = vrot.lane.b32.xlu0 %v475, 64
      %v498 = vpop.permute.xlu0 %497
      %499 = vrot.lane.b32.xlu0 %v478, 64
      %v500 = vpop.permute.xlu0 %499
      %vm512 = vcmask 781824
      %513 = vst.msk [vmem:[#allocation2] sm:$0xf] %vm512, %v480
      %514 = vst.msk [vmem:[#allocation2 + $0x10] sm:$0xf] %vm512, %v482
      %515 = vst.msk [vmem:[#allocation2 + $0x20] sm:$0xf] %vm512, %v484
      %516 = vst.msk [vmem:[#allocation2 + $0x30] sm:$0xf] %vm512, %v486
      %517 = vst.msk [vmem:[#allocation2 + $0x40] sm:$0xf] %vm512, %v488
      %518 = vst.msk [vmem:[#allocation2 + $0x50] sm:$0xf] %vm512, %v490
      %519 = vst.msk [vmem:[#allocation2 + $0x60] sm:$0xf] %vm512, %v492
      %520 = vst.msk [vmem:[#allocation2 + $0x70] sm:$0xf] %vm512, %v494
      %521 = vst.msk [vmem:[#allocation2 + $0x80] sm:$0xf] %vm512, %v496
      %522 = vst.msk [vmem:[#allocation2 + $0x90] sm:$0xf] %vm512, %v498
      %523 = vst.msk [vmem:[#allocation2 + $0xa0] sm:$0xf] %vm512, %v500
      %v524 = vld [vmem:[%s199] sm:$0xe]
      %v525 = vld [vmem:[%s199 + $0x4] sm:$0xf]
      %v526 = vld [vmem:[%s199 + $0x8] sm:$0xf]
      %v527 = vld [vmem:[%s199 + $0xc] sm:$0xf]
      %v528 = vld [vmem:[%s199 + $0x10] sm:$0xf]
      %v529 = vld [vmem:[%s199 + $0x14] sm:$0xf]
      %v530 = vld [vmem:[%s199 + $0x18] sm:$0xf]
      %v531 = vld [vmem:[%s199 + $0x1c] sm:$0xf]
      %v532 = vld [vmem:[%s199 + $0x20] sm:$0xf]
      %v533 = vld [vmem:[%s199 + $0x24] sm:$0xf]
      %v534 = vld [vmem:[%s199 + $0x28] sm:$0xf]
      %v535 = vld [vmem:[%s199 + $0x2c] sm:$0x3]
      %vm536 = vsmask.f32 2304
      %vm537 = vsmask.f32 6416
      %vm538 = vmor %vm536, %vm537
      %v540 = vshrl.u32 %v524, 16
      %v542 = vrot.slane %v540, 5
      %v543 = vshll.u32 %v524, 16
      %v545 = vrot.slane %v543, 6
      %v546 = vor.u32 %v542, %v545
      %v547 = vrot.slane %v546, 4
      %v549 = vshrl.u32 %v525, 16
      %v551 = vrot.slane %v549, 5
      %v552 = vshll.u32 %v525, 16
      %v554 = vrot.slane %v552, 6
      %v555 = vor.u32 %v551, %v554
      %v556 = vsel %vm538, %v547, %v555
      %v557 = vrot.slane %v555, 4
      %v559 = vshrl.u32 %v526, 16
      %v561 = vrot.slane %v559, 5
      %v562 = vshll.u32 %v526, 16
      %v564 = vrot.slane %v562, 6
      %v565 = vor.u32 %v561, %v564
      %v566 = vsel %vm538, %v557, %v565
      %v567 = vrot.slane %v565, 4
      %v569 = vshrl.u32 %v527, 16
      %v571 = vrot.slane %v569, 5
      %v572 = vshll.u32 %v527, 16
      %v574 = vrot.slane %v572, 6
      %v575 = vor.u32 %v571, %v574
      %v576 = vsel %vm538, %v567, %v575
      %v577 = vrot.slane %v575, 4
      %v579 = vshrl.u32 %v528, 16
      %v581 = vrot.slane %v579, 5
      %v582 = vshll.u32 %v528, 16
      %v584 = vrot.slane %v582, 6
      %v585 = vor.u32 %v581, %v584
      %v586 = vsel %vm538, %v577, %v585
      %v587 = vrot.slane %v585, 4
      %v589 = vshrl.u32 %v529, 16
      %v591 = vrot.slane %v589, 5
      %v592 = vshll.u32 %v529, 16
      %v594 = vrot.slane %v592, 6
      %v595 = vor.u32 %v591, %v594
      %v596 = vsel %vm538, %v587, %v595
      %v597 = vrot.slane %v595, 4
      %v599 = vshrl.u32 %v530, 16
      %v601 = vrot.slane %v599, 5
      %v602 = vshll.u32 %v530, 16
      %v604 = vrot.slane %v602, 6
      %v605 = vor.u32 %v601, %v604
      %v606 = vsel %vm538, %v597, %v605
      %v607 = vrot.slane %v605, 4
      %v609 = vshrl.u32 %v531, 16
      %v611 = vrot.slane %v609, 5
      %v612 = vshll.u32 %v531, 16
      %v614 = vrot.slane %v612, 6
      %v615 = vor.u32 %v611, %v614
      %v616 = vsel %vm538, %v607, %v615
      %v617 = vrot.slane %v615, 4
      %v619 = vshrl.u32 %v532, 16
      %v621 = vrot.slane %v619, 5
      %v622 = vshll.u32 %v532, 16
      %v624 = vrot.slane %v622, 6
      %v625 = vor.u32 %v621, %v624
      %v626 = vsel %vm538, %v617, %v625
      %v627 = vrot.slane %v625, 4
      %v629 = vshrl.u32 %v533, 16
      %v631 = vrot.slane %v629, 5
      %v632 = vshll.u32 %v533, 16
      %v634 = vrot.slane %v632, 6
      %v635 = vor.u32 %v631, %v634
      %v636 = vsel %vm538, %v627, %v635
      %v637 = vrot.slane %v635, 4
      %v639 = vshrl.u32 %v534, 16
      %v641 = vrot.slane %v639, 5
      %v642 = vshll.u32 %v534, 16
      %v644 = vrot.slane %v642, 6
      %v645 = vor.u32 %v641, %v644
      %v646 = vsel %vm538, %v637, %v645
      %v647 = vrot.slane %v645, 4
      %v649 = vshrl.u32 %v535, 16
      %v651 = vrot.slane %v649, 5
      %v652 = vshll.u32 %v535, 16
      %v654 = vrot.slane %v652, 6
      %v655 = vor.u32 %v651, %v654
      %v656 = vsel %vm538, %v647, %v655
      %657 = vrot.lane.b32.xlu0 %v556, 96
      %v658 = vpop.permute.xlu0 %657
      %659 = vrot.lane.b32.xlu0 %v566, 96
      %v660 = vpop.permute.xlu0 %659
      %661 = vrot.lane.b32.xlu0 %v576, 96
      %v662 = vpop.permute.xlu0 %661
      %663 = vrot.lane.b32.xlu0 %v586, 96
      %v664 = vpop.permute.xlu0 %663
      %665 = vrot.lane.b32.xlu0 %v596, 96
      %v666 = vpop.permute.xlu0 %665
      %667 = vrot.lane.b32.xlu0 %v606, 96
      %v668 = vpop.permute.xlu0 %667
      %669 = vrot.lane.b32.xlu0 %v616, 96
      %v670 = vpop.permute.xlu0 %669
      %671 = vrot.lane.b32.xlu0 %v626, 96
      %v672 = vpop.permute.xlu0 %671
      %673 = vrot.lane.b32.xlu0 %v636, 96
      %v674 = vpop.permute.xlu0 %673
      %675 = vrot.lane.b32.xlu0 %v646, 96
      %v676 = vpop.permute.xlu0 %675
      %677 = vrot.lane.b32.xlu0 %v656, 96
      %v678 = vpop.permute.xlu0 %677
      %vm690 = vcmask 1044224
      %691 = vst.msk [vmem:[#allocation2] sm:$0xf] %vm690, %v658
      %692 = vst.msk [vmem:[#allocation2 + $0x10] sm:$0xf] %vm690, %v660
      %693 = vst.msk [vmem:[#allocation2 + $0x20] sm:$0xf] %vm690, %v662
      %694 = vst.msk [vmem:[#allocation2 + $0x30] sm:$0xf] %vm690, %v664
      %695 = vst.msk [vmem:[#allocation2 + $0x40] sm:$0xf] %vm690, %v666
      %696 = vst.msk [vmem:[#allocation2 + $0x50] sm:$0xf] %vm690, %v668
      %697 = vst.msk [vmem:[#allocation2 + $0x60] sm:$0xf] %vm690, %v670
      %698 = vst.msk [vmem:[#allocation2 + $0x70] sm:$0xf] %vm690, %v672
      %699 = vst.msk [vmem:[#allocation2 + $0x80] sm:$0xf] %vm690, %v674
      %700 = vst.msk [vmem:[#allocation2 + $0x90] sm:$0xf] %vm690, %v676
      %701 = vst.msk [vmem:[#allocation2 + $0xa0] sm:$0xf] %vm690, %v678
      %v702 = vld [vmem:[%s199 + $0x4] sm:$0xe]
      %v703 = vld [vmem:[%s199 + $0x8] sm:$0xf]
      %v704 = vld [vmem:[%s199 + $0xc] sm:$0xf]
      %v705 = vld [vmem:[%s199 + $0x10] sm:$0xf]
      %v706 = vld [vmem:[%s199 + $0x14] sm:$0xf]
      %v707 = vld [vmem:[%s199 + $0x18] sm:$0xf]
      %v708 = vld [vmem:[%s199 + $0x1c] sm:$0xf]
      %v709 = vld [vmem:[%s199 + $0x20] sm:$0xf]
      %v710 = vld [vmem:[%s199 + $0x24] sm:$0xf]
      %v711 = vld [vmem:[%s199 + $0x28] sm:$0xf]
      %v712 = vld [vmem:[%s199 + $0x2c] sm:$0xf]
      %v713 = vld [vmem:[%s199 + $0x30] sm:$0x3]
      %v715 = vshrl.u32 %v702, 16
      %v717 = vrot.slane %v715, 5
      %v718 = vshll.u32 %v702, 16
      %v720 = vrot.slane %v718, 6
      %v721 = vor.u32 %v717, %v720
      %v722 = vrot.slane %v721, 4
      %v724 = vshrl.u32 %v703, 16
      %v726 = vrot.slane %v724, 5
      %v727 = vshll.u32 %v703, 16
      %v729 = vrot.slane %v727, 6
      %v730 = vor.u32 %v726, %v729
      %v731 = vsel %vm538, %v722, %v730
      %v732 = vrot.slane %v730, 4
      %v734 = vshrl.u32 %v704, 16
      %v736 = vrot.slane %v734, 5
      %v737 = vshll.u32 %v704, 16
      %v739 = vrot.slane %v737, 6
      %v740 = vor.u32 %v736, %v739
      %v741 = vsel %vm538, %v732, %v740
      %v742 = vrot.slane %v740, 4
      %v744 = vshrl.u32 %v705, 16
      %v746 = vrot.slane %v744, 5
      %v747 = vshll.u32 %v705, 16
      %v749 = vrot.slane %v747, 6
      %v750 = vor.u32 %v746, %v749
      %v751 = vsel %vm538, %v742, %v750
      %v752 = vrot.slane %v750, 4
      %v754 = vshrl.u32 %v706, 16
      %v756 = vrot.slane %v754, 5
      %v757 = vshll.u32 %v706, 16
      %v759 = vrot.slane %v757, 6
      %v760 = vor.u32 %v756, %v759
      %v761 = vsel %vm538, %v752, %v760
      %v762 = vrot.slane %v760, 4
      %v764 = vshrl.u32 %v707, 16
      %v766 = vrot.slane %v764, 5
      %v767 = vshll.u32 %v707, 16
      %v769 = vrot.slane %v767, 6
      %v770 = vor.u32 %v766, %v769
      %v771 = vsel %vm538, %v762, %v770
      %v772 = vrot.slane %v770, 4
      %v774 = vshrl.u32 %v708, 16
      %v776 = vrot.slane %v774, 5
      %v777 = vshll.u32 %v708, 16
      %v779 = vrot.slane %v777, 6
      %v780 = vor.u32 %v776, %v779
      %v781 = vsel %vm538, %v772, %v780
      %v782 = vrot.slane %v780, 4
      %v784 = vshrl.u32 %v709, 16
      %v786 = vrot.slane %v784, 5
      %v787 = vshll.u32 %v709, 16
      %v789 = vrot.slane %v787, 6
      %v790 = vor.u32 %v786, %v789
      %v791 = vsel %vm538, %v782, %v790
      %v792 = vrot.slane %v790, 4
      %v794 = vshrl.u32 %v710, 16
      %v796 = vrot.slane %v794, 5
      %v797 = vshll.u32 %v710, 16
      %v799 = vrot.slane %v797, 6
      %v800 = vor.u32 %v796, %v799
      %v801 = vsel %vm538, %v792, %v800
      %v802 = vrot.slane %v800, 4
      %v804 = vshrl.u32 %v711, 16
      %v806 = vrot.slane %v804, 5
      %v807 = vshll.u32 %v711, 16
      %v809 = vrot.slane %v807, 6
      %v810 = vor.u32 %v806, %v809
      %v811 = vsel %vm538, %v802, %v810
      %v812 = vrot.slane %v810, 4
      %v814 = vshrl.u32 %v712, 16
      %v816 = vrot.slane %v814, 5
      %v817 = vshll.u32 %v712, 16
      %v819 = vrot.slane %v817, 6
      %v820 = vor.u32 %v816, %v819
      %v821 = vsel %vm538, %v812, %v820
      %v822 = vrot.slane %v820, 4
      %v824 = vshrl.u32 %v713, 16
      %v826 = vrot.slane %v824, 5
      %v827 = vshll.u32 %v713, 16
      %v829 = vrot.slane %v827, 6
      %v830 = vor.u32 %v826, %v829
      %v831 = vsel %vm538, %v822, %v830
      %843 = vst.msk [vmem:[#allocation2 + $0x4] sm:$0xf] %vm232, %v731
      %844 = vst.msk [vmem:[#allocation2 + $0x14] sm:$0xf] %vm232, %v741
      %845 = vst.msk [vmem:[#allocation2 + $0x24] sm:$0xf] %vm232, %v751
      %846 = vst.msk [vmem:[#allocation2 + $0x34] sm:$0xf] %vm232, %v761
      %847 = vst.msk [vmem:[#allocation2 + $0x44] sm:$0xf] %vm232, %v771
      %848 = vst.msk [vmem:[#allocation2 + $0x54] sm:$0xf] %vm232, %v781
      %849 = vst.msk [vmem:[#allocation2 + $0x64] sm:$0xf] %vm232, %v791
      %850 = vst.msk [vmem:[#allocation2 + $0x74] sm:$0xf] %vm232, %v801
      %851 = vst.msk [vmem:[#allocation2 + $0x84] sm:$0xf] %vm232, %v811
      %852 = vst.msk [vmem:[#allocation2 + $0x94] sm:$0xf] %vm232, %v821
      %853 = vst.msk [vmem:[#allocation2 + $0xa4] sm:$0xf] %vm232, %v831
      %v854 = vld [vmem:[%s199 + $0x4] sm:$0xc]
      %v855 = vld [vmem:[%s199 + $0x8] sm:$0xf]
      %v856 = vld [vmem:[%s199 + $0xc] sm:$0xf]
      %v857 = vld [vmem:[%s199 + $0x10] sm:$0xf]
      %v858 = vld [vmem:[%s199 + $0x14] sm:$0xf]
      %v859 = vld [vmem:[%s199 + $0x18] sm:$0xf]
      %v860 = vld [vmem:[%s199 + $0x1c] sm:$0xf]
      %v861 = vld [vmem:[%s199 + $0x20] sm:$0xf]
      %v862 = vld [vmem:[%s199 + $0x24] sm:$0xf]
      %v863 = vld [vmem:[%s199 + $0x28] sm:$0xf]
      %v864 = vld [vmem:[%s199 + $0x2c] sm:$0xf]
      %v865 = vld [vmem:[%s199 + $0x30] sm:$0x3]
      %vm878 = vcmask 1041408
      %vm879 = vcmask 1045508
      %vm880 = vmor %vm878, %vm879
      %v881 = vrot.slane %v854, 6
      %v882 = vrot.slane %v881, 4
      %v883 = vrot.slane %v855, 6
      %v884 = vsel %vm880, %v882, %v883
      %v885 = vrot.slane %v883, 4
      %v886 = vrot.slane %v856, 6
      %v887 = vsel %vm880, %v885, %v886
      %v888 = vrot.slane %v886, 4
      %v889 = vrot.slane %v857, 6
      %v890 = vsel %vm880, %v888, %v889
      %v891 = vrot.slane %v889, 4
      %v892 = vrot.slane %v858, 6
      %v893 = vsel %vm880, %v891, %v892
      %v894 = vrot.slane %v892, 4
      %v895 = vrot.slane %v859, 6
      %v896 = vsel %vm880, %v894, %v895
      %v897 = vrot.slane %v895, 4
      %v898 = vrot.slane %v860, 6
      %v899 = vsel %vm880, %v897, %v898
      %v900 = vrot.slane %v898, 4
      %v901 = vrot.slane %v861, 6
      %v902 = vsel %vm880, %v900, %v901
      %v903 = vrot.slane %v901, 4
      %v904 = vrot.slane %v862, 6
      %v905 = vsel %vm880, %v903, %v904
      %v906 = vrot.slane %v904, 4
      %v907 = vrot.slane %v863, 6
      %v908 = vsel %vm880, %v906, %v907
      %v909 = vrot.slane %v907, 4
      %v910 = vrot.slane %v864, 6
      %v911 = vsel %vm880, %v909, %v910
      %v912 = vrot.slane %v910, 4
      %v913 = vrot.slane %v865, 6
      %v914 = vsel %vm880, %v912, %v913
      %915 = vrot.lane.b32.xlu0 %v884, 32
      %v916 = vpop.permute.xlu0 %915
      %917 = vrot.lane.b32.xlu0 %v887, 32
      %v918 = vpop.permute.xlu0 %917
      %919 = vrot.lane.b32.xlu0 %v890, 32
      %v920 = vpop.permute.xlu0 %919
      %921 = vrot.lane.b32.xlu0 %v893, 32
      %v922 = vpop.permute.xlu0 %921
      %923 = vrot.lane.b32.xlu0 %v896, 32
      %v924 = vpop.permute.xlu0 %923
      %925 = vrot.lane.b32.xlu0 %v899, 32
      %v926 = vpop.permute.xlu0 %925
      %927 = vrot.lane.b32.xlu0 %v902, 32
      %v928 = vpop.permute.xlu0 %927
      %929 = vrot.lane.b32.xlu0 %v905, 32
      %v930 = vpop.permute.xlu0 %929
      %931 = vrot.lane.b32.xlu0 %v908, 32
      %v932 = vpop.permute.xlu0 %931
      %933 = vrot.lane.b32.xlu0 %v911, 32
      %v934 = vpop.permute.xlu0 %933
      %935 = vrot.lane.b32.xlu0 %v914, 32
      %v936 = vpop.permute.xlu0 %935
      %948 = vst.msk [vmem:[#allocation2 + $0x4] sm:$0xf] %vm406, %v916
      %949 = vst.msk [vmem:[#allocation2 + $0x14] sm:$0xf] %vm406, %v918
      %950 = vst.msk [vmem:[#allocation2 + $0x24] sm:$0xf] %vm406, %v920
      %951 = vst.msk [vmem:[#allocation2 + $0x34] sm:$0xf] %vm406, %v922
      %952 = vst.msk [vmem:[#allocation2 + $0x44] sm:$0xf] %vm406, %v924
      %953 = vst.msk [vmem:[#allocation2 + $0x54] sm:$0xf] %vm406, %v926
      %954 = vst.msk [vmem:[#allocation2 + $0x64] sm:$0xf] %vm406, %v928
      %955 = vst.msk [vmem:[#allocation2 + $0x74] sm:$0xf] %vm406, %v930
      %956 = vst.msk [vmem:[#allocation2 + $0x84] sm:$0xf] %vm406, %v932
      %957 = vst.msk [vmem:[#allocation2 + $0x94] sm:$0xf] %vm406, %v934
      %958 = vst.msk [vmem:[#allocation2 + $0xa4] sm:$0xf] %vm406, %v936
      %v959 = vld [vmem:[%s199 + $0x4] sm:$0xc]
      %v960 = vld [vmem:[%s199 + $0x8] sm:$0xf]
      %v961 = vld [vmem:[%s199 + $0xc] sm:$0xf]
      %v962 = vld [vmem:[%s199 + $0x10] sm:$0xf]
      %v963 = vld [vmem:[%s199 + $0x14] sm:$0xf]
      %v964 = vld [vmem:[%s199 + $0x18] sm:$0xf]
      %v965 = vld [vmem:[%s199 + $0x1c] sm:$0xf]
      %v966 = vld [vmem:[%s199 + $0x20] sm:$0xf]
      %v967 = vld [vmem:[%s199 + $0x24] sm:$0xf]
      %v968 = vld [vmem:[%s199 + $0x28] sm:$0xf]
      %v969 = vld [vmem:[%s199 + $0x2c] sm:$0xf]
      %v970 = vld [vmem:[%s199 + $0x30] sm:$0x7]
      %vm971 = vsmask.f32 1280
      %vm972 = vsmask.f32 5392
      %vm973 = vmor %vm971, %vm972
      %v975 = vshrl.u32 %v959, 16
      %v977 = vrot.slane %v975, 6
      %v978 = vshll.u32 %v959, 16
      %v980 = vrot.slane %v978, 7
      %v981 = vor.u32 %v977, %v980
      %v982 = vrot.slane %v981, 4
      %v984 = vshrl.u32 %v960, 16
      %v986 = vrot.slane %v984, 6
      %v987 = vshll.u32 %v960, 16
      %v989 = vrot.slane %v987, 7
      %v990 = vor.u32 %v986, %v989
      %v991 = vsel %vm973, %v982, %v990
      %v992 = vrot.slane %v990, 4
      %v994 = vshrl.u32 %v961, 16
      %v996 = vrot.slane %v994, 6
      %v997 = vshll.u32 %v961, 16
      %v999 = vrot.slane %v997, 7
      %v1000 = vor.u32 %v996, %v999
      %v1001 = vsel %vm973, %v992, %v1000
      %v1002 = vrot.slane %v1000, 4
      %v1004 = vshrl.u32 %v962, 16
      %v1006 = vrot.slane %v1004, 6
      %v1007 = vshll.u32 %v962, 16
      %v1009 = vrot.slane %v1007, 7
      %v1010 = vor.u32 %v1006, %v1009
      %v1011 = vsel %vm973, %v1002, %v1010
      %v1012 = vrot.slane %v1010, 4
      %v1014 = vshrl.u32 %v963, 16
      %v1016 = vrot.slane %v1014, 6
      %v1017 = vshll.u32 %v963, 16
      %v1019 = vrot.slane %v1017, 7
      %v1020 = vor.u32 %v1016, %v1019
      %v1021 = vsel %vm973, %v1012, %v1020
      %v1022 = vrot.slane %v1020, 4
      %v1024 = vshrl.u32 %v964, 16
      %v1026 = vrot.slane %v1024, 6
      %v1027 = vshll.u32 %v964, 16
      %v1029 = vrot.slane %v1027, 7
      %v1030 = vor.u32 %v1026, %v1029
      %v1031 = vsel %vm973, %v1022, %v1030
      %v1032 = vrot.slane %v1030, 4
      %v1034 = vshrl.u32 %v965, 16
      %v1036 = vrot.slane %v1034, 6
      %v1037 = vshll.u32 %v965, 16
      %v1039 = vrot.slane %v1037, 7
      %v1040 = vor.u32 %v1036, %v1039
      %v1041 = vsel %vm973, %v1032, %v1040
      %v1042 = vrot.slane %v1040, 4
      %v1044 = vshrl.u32 %v966, 16
      %v1046 = vrot.slane %v1044, 6
      %v1047 = vshll.u32 %v966, 16
      %v1049 = vrot.slane %v1047, 7
      %v1050 = vor.u32 %v1046, %v1049
      %v1051 = vsel %vm973, %v1042, %v1050
      %v1052 = vrot.slane %v1050, 4
      %v1054 = vshrl.u32 %v967, 16
      %v1056 = vrot.slane %v1054, 6
      %v1057 = vshll.u32 %v967, 16
      %v1059 = vrot.slane %v1057, 7
      %v1060 = vor.u32 %v1056, %v1059
      %v1061 = vsel %vm973, %v1052, %v1060
      %v1062 = vrot.slane %v1060, 4
      %v1064 = vshrl.u32 %v968, 16
      %v1066 = vrot.slane %v1064, 6
      %v1067 = vshll.u32 %v968, 16
      %v1069 = vrot.slane %v1067, 7
      %v1070 = vor.u32 %v1066, %v1069
      %v1071 = vsel %vm973, %v1062, %v1070
      %v1072 = vrot.slane %v1070, 4
      %v1074 = vshrl.u32 %v969, 16
      %v1076 = vrot.slane %v1074, 6
      %v1077 = vshll.u32 %v969, 16
      %v1079 = vrot.slane %v1077, 7
      %v1080 = vor.u32 %v1076, %v1079
      %v1081 = vsel %vm973, %v1072, %v1080
      %v1082 = vrot.slane %v1080, 4
      %v1084 = vshrl.u32 %v970, 16
      %v1086 = vrot.slane %v1084, 6
      %v1087 = vshll.u32 %v970, 16
      %v1089 = vrot.slane %v1087, 7
      %v1090 = vor.u32 %v1086, %v1089
      %v1091 = vsel %vm973, %v1082, %v1090
      %1092 = vrot.lane.b32.xlu0 %v991, 64
      %v1093 = vpop.permute.xlu0 %1092
      %1094 = vrot.lane.b32.xlu0 %v1001, 64
      %v1095 = vpop.permute.xlu0 %1094
      %1096 = vrot.lane.b32.xlu0 %v1011, 64
      %v1097 = vpop.permute.xlu0 %1096
      %1098 = vrot.lane.b32.xlu0 %v1021, 64
      %v1099 = vpop.permute.xlu0 %1098
      %1100 = vrot.lane.b32.xlu0 %v1031, 64
      %v1101 = vpop.permute.xlu0 %1100
      %1102 = vrot.lane.b32.xlu0 %v1041, 64
      %v1103 = vpop.permute.xlu0 %1102
      %1104 = vrot.lane.b32.xlu0 %v1051, 64
      %v1105 = vpop.permute.xlu0 %1104
      %1106 = vrot.lane.b32.xlu0 %v1061, 64
      %v1107 = vpop.permute.xlu0 %1106
      %1108 = vrot.lane.b32.xlu0 %v1071, 64
      %v1109 = vpop.permute.xlu0 %1108
      %1110 = vrot.lane.b32.xlu0 %v1081, 64
      %v1111 = vpop.permute.xlu0 %1110
      %1112 = vrot.lane.b32.xlu0 %v1091, 64
      %v1113 = vpop.permute.xlu0 %1112
      %1125 = vst.msk [vmem:[#allocation2 + $0x4] sm:$0xf] %vm512, %v1093
      %1126 = vst.msk [vmem:[#allocation2 + $0x14] sm:$0xf] %vm512, %v1095
      %1127 = vst.msk [vmem:[#allocation2 + $0x24] sm:$0xf] %vm512, %v1097
      %1128 = vst.msk [vmem:[#allocation2 + $0x34] sm:$0xf] %vm512, %v1099
      %1129 = vst.msk [vmem:[#allocation2 + $0x44] sm:$0xf] %vm512, %v1101
      %1130 = vst.msk [vmem:[#allocation2 + $0x54] sm:$0xf] %vm512, %v1103
      %1131 = vst.msk [vmem:[#allocation2 + $0x64] sm:$0xf] %vm512, %v1105
      %1132 = vst.msk [vmem:[#allocation2 + $0x74] sm:$0xf] %vm512, %v1107
      %1133 = vst.msk [vmem:[#allocation2 + $0x84] sm:$0xf] %vm512, %v1109
      %1134 = vst.msk [vmem:[#allocation2 + $0x94] sm:$0xf] %vm512, %v1111
      %1135 = vst.msk [vmem:[#allocation2 + $0xa4] sm:$0xf] %vm512, %v1113
      %v1136 = vld [vmem:[%s199 + $0x4] sm:$0x8]
      %v1137 = vld [vmem:[%s199 + $0x8] sm:$0xf]
      %v1138 = vld [vmem:[%s199 + $0xc] sm:$0xf]
      %v1139 = vld [vmem:[%s199 + $0x10] sm:$0xf]
      %v1140 = vld [vmem:[%s199 + $0x14] sm:$0xf]
      %v1141 = vld [vmem:[%s199 + $0x18] sm:$0xf]
      %v1142 = vld [vmem:[%s199 + $0x1c] sm:$0xf]
      %v1143 = vld [vmem:[%s199 + $0x20] sm:$0xf]
      %v1144 = vld [vmem:[%s199 + $0x24] sm:$0xf]
      %v1145 = vld [vmem:[%s199 + $0x28] sm:$0xf]
      %v1146 = vld [vmem:[%s199 + $0x2c] sm:$0xf]
      %v1147 = vld [vmem:[%s199 + $0x30] sm:$0x7]
      %vm1160 = vcmask 1040384
      %vm1161 = vcmask 1044484
      %vm1162 = vmor %vm1160, %vm1161
      %v1163 = vrot.slane %v1136, 7
      %v1164 = vrot.slane %v1163, 4
      %v1165 = vrot.slane %v1137, 7
      %v1166 = vsel %vm1162, %v1164, %v1165
      %v1167 = vrot.slane %v1165, 4
      %v1168 = vrot.slane %v1138, 7
      %v1169 = vsel %vm1162, %v1167, %v1168
      %v1170 = vrot.slane %v1168, 4
      %v1171 = vrot.slane %v1139, 7
      %v1172 = vsel %vm1162, %v1170, %v1171
      %v1173 = vrot.slane %v1171, 4
      %v1174 = vrot.slane %v1140, 7
      %v1175 = vsel %vm1162, %v1173, %v1174
      %v1176 = vrot.slane %v1174, 4
      %v1177 = vrot.slane %v1141, 7
      %v1178 = vsel %vm1162, %v1176, %v1177
      %v1179 = vrot.slane %v1177, 4
      %v1180 = vrot.slane %v1142, 7
      %v1181 = vsel %vm1162, %v1179, %v1180
      %v1182 = vrot.slane %v1180, 4
      %v1183 = vrot.slane %v1143, 7
      %v1184 = vsel %vm1162, %v1182, %v1183
      %v1185 = vrot.slane %v1183, 4
      %v1186 = vrot.slane %v1144, 7
      %v1187 = vsel %vm1162, %v1185, %v1186
      %v1188 = vrot.slane %v1186, 4
      %v1189 = vrot.slane %v1145, 7
      %v1190 = vsel %vm1162, %v1188, %v1189
      %v1191 = vrot.slane %v1189, 4
      %v1192 = vrot.slane %v1146, 7
      %v1193 = vsel %vm1162, %v1191, %v1192
      %v1194 = vrot.slane %v1192, 4
      %v1195 = vrot.slane %v1147, 7
      %v1196 = vsel %vm1162, %v1194, %v1195
      %1197 = vrot.lane.b32.xlu0 %v1166, 96
      %v1198 = vpop.permute.xlu0 %1197
      %1199 = vrot.lane.b32.xlu0 %v1169, 96
      %v1200 = vpop.permute.xlu0 %1199
      %1201 = vrot.lane.b32.xlu0 %v1172, 96
      %v1202 = vpop.permute.xlu0 %1201
      %1203 = vrot.lane.b32.xlu0 %v1175, 96
      %v1204 = vpop.permute.xlu0 %1203
      %1205 = vrot.lane.b32.xlu0 %v1178, 96
      %v1206 = vpop.permute.xlu0 %1205
      %1207 = vrot.lane.b32.xlu0 %v1181, 96
      %v1208 = vpop.permute.xlu0 %1207
      %1209 = vrot.lane.b32.xlu0 %v1184, 96
      %v1210 = vpop.permute.xlu0 %1209
      %1211 = vrot.lane.b32.xlu0 %v1187, 96
      %v1212 = vpop.permute.xlu0 %1211
      %1213 = vrot.lane.b32.xlu0 %v1190, 96
      %v1214 = vpop.permute.xlu0 %1213
      %1215 = vrot.lane.b32.xlu0 %v1193, 96
      %v1216 = vpop.permute.xlu0 %1215
      %1217 = vrot.lane.b32.xlu0 %v1196, 96
      %v1218 = vpop.permute.xlu0 %1217
      %1230 = vst.msk [vmem:[#allocation2 + $0x4] sm:$0xf] %vm690, %v1198
      %1231 = vst.msk [vmem:[#allocation2 + $0x14] sm:$0xf] %vm690, %v1200
      %1232 = vst.msk [vmem:[#allocation2 + $0x24] sm:$0xf] %vm690, %v1202
      %1233 = vst.msk [vmem:[#allocation2 + $0x34] sm:$0xf] %vm690, %v1204
      %1234 = vst.msk [vmem:[#allocation2 + $0x44] sm:$0xf] %vm690, %v1206
      %1235 = vst.msk [vmem:[#allocation2 + $0x54] sm:$0xf] %vm690, %v1208
      %1236 = vst.msk [vmem:[#allocation2 + $0x64] sm:$0xf] %vm690, %v1210
      %1237 = vst.msk [vmem:[#allocation2 + $0x74] sm:$0xf] %vm690, %v1212
      %1238 = vst.msk [vmem:[#allocation2 + $0x84] sm:$0xf] %vm690, %v1214
      %1239 = vst.msk [vmem:[#allocation2 + $0x94] sm:$0xf] %vm690, %v1216
      %1240 = vst.msk [vmem:[#allocation2 + $0xa4] sm:$0xf] %vm690, %v1218
      %v1241 = vld [vmem:[%s199 + $0x8] sm:$0x8]
      %v1242 = vld [vmem:[%s199 + $0xc] sm:$0xf]
      %v1243 = vld [vmem:[%s199 + $0x10] sm:$0xf]
      %v1244 = vld [vmem:[%s199 + $0x14] sm:$0xf]
      %v1245 = vld [vmem:[%s199 + $0x18] sm:$0xf]
      %v1246 = vld [vmem:[%s199 + $0x1c] sm:$0xf]
      %v1247 = vld [vmem:[%s199 + $0x20] sm:$0xf]
      %v1248 = vld [vmem:[%s199 + $0x24] sm:$0xf]
      %v1249 = vld [vmem:[%s199 + $0x28] sm:$0xf]
      %v1250 = vld [vmem:[%s199 + $0x2c] sm:$0xf]
      %v1251 = vld [vmem:[%s199 + $0x30] sm:$0xf]
      %v1252 = vld [vmem:[%s199 + $0x34] sm:$0x7]
      %v1265 = vrot.slane %v1241, 7
      %v1266 = vrot.slane %v1265, 4
      %v1267 = vrot.slane %v1242, 7
      %v1268 = vsel %vm1162, %v1266, %v1267
      %v1269 = vrot.slane %v1267, 4
      %v1270 = vrot.slane %v1243, 7
      %v1271 = vsel %vm1162, %v1269, %v1270
      %v1272 = vrot.slane %v1270, 4
      %v1273 = vrot.slane %v1244, 7
      %v1274 = vsel %vm1162, %v1272, %v1273
      %v1275 = vrot.slane %v1273, 4
      %v1276 = vrot.slane %v1245, 7
      %v1277 = vsel %vm1162, %v1275, %v1276
      %v1278 = vrot.slane %v1276, 4
      %v1279 = vrot.slane %v1246, 7
      %v1280 = vsel %vm1162, %v1278, %v1279
      %v1281 = vrot.slane %v1279, 4
      %v1282 = vrot.slane %v1247, 7
      %v1283 = vsel %vm1162, %v1281, %v1282
      %v1284 = vrot.slane %v1282, 4
      %v1285 = vrot.slane %v1248, 7
      %v1286 = vsel %vm1162, %v1284, %v1285
      %v1287 = vrot.slane %v1285, 4
      %v1288 = vrot.slane %v1249, 7
      %v1289 = vsel %vm1162, %v1287, %v1288
      %v1290 = vrot.slane %v1288, 4
      %v1291 = vrot.slane %v1250, 7
      %v1292 = vsel %vm1162, %v1290, %v1291
      %v1293 = vrot.slane %v1291, 4
      %v1294 = vrot.slane %v1251, 7
      %v1295 = vsel %vm1162, %v1293, %v1294
      %v1296 = vrot.slane %v1294, 4
      %v1297 = vrot.slane %v1252, 7
      %v1298 = vsel %vm1162, %v1296, %v1297
      %1310 = vst.msk [vmem:[#allocation2 + $0x8] sm:$0xf] %vm232, %v1268
      %1311 = vst.msk [vmem:[#allocation2 + $0x18] sm:$0xf] %vm232, %v1271
      %1312 = vst.msk [vmem:[#allocation2 + $0x28] sm:$0xf] %vm232, %v1274
      %1313 = vst.msk [vmem:[#allocation2 + $0x38] sm:$0xf] %vm232, %v1277
      %1314 = vst.msk [vmem:[#allocation2 + $0x48] sm:$0xf] %vm232, %v1280
      %1315 = vst.msk [vmem:[#allocation2 + $0x58] sm:$0xf] %vm232, %v1283
      %1316 = vst.msk [vmem:[#allocation2 + $0x68] sm:$0xf] %vm232, %v1286
      %1317 = vst.msk [vmem:[#allocation2 + $0x78] sm:$0xf] %vm232, %v1289
      %1318 = vst.msk [vmem:[#allocation2 + $0x88] sm:$0xf] %vm232, %v1292
      %1319 = vst.msk [vmem:[#allocation2 + $0x98] sm:$0xf] %vm232, %v1295
      %1320 = vst.msk [vmem:[#allocation2 + $0xa8] sm:$0xf] %vm232, %v1298
      %v1321 = vld [vmem:[%s199 + $0x8] sm:$0x8]
      %v1322 = vld [vmem:[%s199 + $0xc] sm:$0xf]
      %v1323 = vld [vmem:[%s199 + $0x10] sm:$0xf]
      %v1324 = vld [vmem:[%s199 + $0x14] sm:$0xf]
      %v1325 = vld [vmem:[%s199 + $0x18] sm:$0xf]
      %v1326 = vld [vmem:[%s199 + $0x1c] sm:$0xf]
      %v1327 = vld [vmem:[%s199 + $0x20] sm:$0xf]
      %v1328 = vld [vmem:[%s199 + $0x24] sm:$0xf]
      %v1329 = vld [vmem:[%s199 + $0x28] sm:$0xf]
      %v1330 = vld [vmem:[%s199 + $0x2c] sm:$0xf]
      %v1331 = vld [vmem:[%s199 + $0x30] sm:$0xf]
      %v1332 = vld [vmem:[%s199 + $0x34] sm:$0xf]
      %vm1333 = vsmask.f32 256
      %vm1334 = vsmask.f32 4368
      %vm1335 = vmor %vm1333, %vm1334
      %v1337 = vshrl.u32 %v1321, 16
      %v1339 = vrot.slane %v1337, 7
      %v1340 = vrot.slane %v1339, 4
      %v1342 = vshrl.u32 %v1322, 16
      %v1344 = vrot.slane %v1342, 7
      %v1345 = vshll.u32 %v1322, 16
      %v1347 = vor.u32 %v1344, %v1345
      %v1348 = vsel %vm1335, %v1340, %v1347
      %v1349 = vrot.slane %v1344, 4
      %v1351 = vshrl.u32 %v1323, 16
      %v1353 = vrot.slane %v1351, 7
      %v1354 = vshll.u32 %v1323, 16
      %v1356 = vor.u32 %v1353, %v1354
      %v1357 = vsel %vm1335, %v1349, %v1356
      %v1358 = vrot.slane %v1353, 4
      %v1360 = vshrl.u32 %v1324, 16
      %v1362 = vrot.slane %v1360, 7
      %v1363 = vshll.u32 %v1324, 16
      %v1365 = vor.u32 %v1362, %v1363
      %v1366 = vsel %vm1335, %v1358, %v1365
      %v1367 = vrot.slane %v1362, 4
      %v1369 = vshrl.u32 %v1325, 16
      %v1371 = vrot.slane %v1369, 7
      %v1372 = vshll.u32 %v1325, 16
      %v1374 = vor.u32 %v1371, %v1372
      %v1375 = vsel %vm1335, %v1367, %v1374
      %v1376 = vrot.slane %v1371, 4
      %v1378 = vshrl.u32 %v1326, 16
      %v1380 = vrot.slane %v1378, 7
      %v1381 = vshll.u32 %v1326, 16
      %v1383 = vor.u32 %v1380, %v1381
      %v1384 = vsel %vm1335, %v1376, %v1383
      %v1385 = vrot.slane %v1380, 4
      %v1387 = vshrl.u32 %v1327, 16
      %v1389 = vrot.slane %v1387, 7
      %v1390 = vshll.u32 %v1327, 16
      %v1392 = vor.u32 %v1389, %v1390
      %v1393 = vsel %vm1335, %v1385, %v1392
      %v1394 = vrot.slane %v1389, 4
      %v1396 = vshrl.u32 %v1328, 16
      %v1398 = vrot.slane %v1396, 7
      %v1399 = vshll.u32 %v1328, 16
      %v1401 = vor.u32 %v1398, %v1399
      %v1402 = vsel %vm1335, %v1394, %v1401
      %v1403 = vrot.slane %v1398, 4
      %v1405 = vshrl.u32 %v1329, 16
      %v1407 = vrot.slane %v1405, 7
      %v1408 = vshll.u32 %v1329, 16
      %v1410 = vor.u32 %v1407, %v1408
      %v1411 = vsel %vm1335, %v1403, %v1410
      %v1412 = vrot.slane %v1407, 4
      %v1414 = vshrl.u32 %v1330, 16
      %v1416 = vrot.slane %v1414, 7
      %v1417 = vshll.u32 %v1330, 16
      %v1419 = vor.u32 %v1416, %v1417
      %v1420 = vsel %vm1335, %v1412, %v1419
      %v1421 = vrot.slane %v1416, 4
      %v1423 = vshrl.u32 %v1331, 16
      %v1425 = vrot.slane %v1423, 7
      %v1426 = vshll.u32 %v1331, 16
      %v1428 = vor.u32 %v1425, %v1426
      %v1429 = vsel %vm1335, %v1421, %v1428
      %v1430 = vrot.slane %v1425, 4
      %v1432 = vshrl.u32 %v1332, 16
      %v1434 = vrot.slane %v1432, 7
      %v1435 = vshll.u32 %v1332, 16
      %v1437 = vor.u32 %v1434, %v1435
      %v1438 = vsel %vm1335, %v1430, %v1437
      %1439 = vrot.lane.b32.xlu0 %v1348, 32
      %v1440 = vpop.permute.xlu0 %1439
      %1441 = vrot.lane.b32.xlu0 %v1357, 32
      %v1442 = vpop.permute.xlu0 %1441
      %1443 = vrot.lane.b32.xlu0 %v1366, 32
      %v1444 = vpop.permute.xlu0 %1443
      %1445 = vrot.lane.b32.xlu0 %v1375, 32
      %v1446 = vpop.permute.xlu0 %1445
      %1447 = vrot.lane.b32.xlu0 %v1384, 32
      %v1448 = vpop.permute.xlu0 %1447
      %1449 = vrot.lane.b32.xlu0 %v1393, 32
      %v1450 = vpop.permute.xlu0 %1449
      %1451 = vrot.lane.b32.xlu0 %v1402, 32
      %v1452 = vpop.permute.xlu0 %1451
      %1453 = vrot.lane.b32.xlu0 %v1411, 32
      %v1454 = vpop.permute.xlu0 %1453
      %1455 = vrot.lane.b32.xlu0 %v1420, 32
      %v1456 = vpop.permute.xlu0 %1455
      %1457 = vrot.lane.b32.xlu0 %v1429, 32
      %v1458 = vpop.permute.xlu0 %1457
      %1459 = vrot.lane.b32.xlu0 %v1438, 32
      %v1460 = vpop.permute.xlu0 %1459
      %1472 = vst.msk [vmem:[#allocation2 + $0x8] sm:$0xf] %vm406, %v1440
      %1473 = vst.msk [vmem:[#allocation2 + $0x18] sm:$0xf] %vm406, %v1442
      %1474 = vst.msk [vmem:[#allocation2 + $0x28] sm:$0xf] %vm406, %v1444
      %1475 = vst.msk [vmem:[#allocation2 + $0x38] sm:$0xf] %vm406, %v1446
      %1476 = vst.msk [vmem:[#allocation2 + $0x48] sm:$0xf] %vm406, %v1448
      %1477 = vst.msk [vmem:[#allocation2 + $0x58] sm:$0xf] %vm406, %v1450
      %1478 = vst.msk [vmem:[#allocation2 + $0x68] sm:$0xf] %vm406, %v1452
      %1479 = vst.msk [vmem:[#allocation2 + $0x78] sm:$0xf] %vm406, %v1454
      %1480 = vst.msk [vmem:[#allocation2 + $0x88] sm:$0xf] %vm406, %v1456
      %1481 = vst.msk [vmem:[#allocation2 + $0x98] sm:$0xf] %vm406, %v1458
      %1482 = vst.msk [vmem:[#allocation2 + $0xa8] sm:$0xf] %vm406, %v1460
      %v1483 = vld [vmem:[%s199 + $0xc] sm:$0xf]
      %v1484 = vld [vmem:[%s199 + $0x10] sm:$0xf]
      %v1485 = vld [vmem:[%s199 + $0x14] sm:$0xf]
      %v1486 = vld [vmem:[%s199 + $0x18] sm:$0xf]
      %v1487 = vld [vmem:[%s199 + $0x1c] sm:$0xf]
      %v1488 = vld [vmem:[%s199 + $0x20] sm:$0xf]
      %v1489 = vld [vmem:[%s199 + $0x24] sm:$0xf]
      %v1490 = vld [vmem:[%s199 + $0x28] sm:$0xf]
      %v1491 = vld [vmem:[%s199 + $0x2c] sm:$0xf]
      %v1492 = vld [vmem:[%s199 + $0x30] sm:$0xf]
      %v1493 = vld [vmem:[%s199 + $0x34] sm:$0xf]
      %1505 = vrot.lane.b32.xlu0 %v1483, 64
      %v1506 = vpop.permute.xlu0 %1505
      %1507 = vrot.lane.b32.xlu0 %v1484, 64
      %v1508 = vpop.permute.xlu0 %1507
      %1509 = vrot.lane.b32.xlu0 %v1485, 64
      %v1510 = vpop.permute.xlu0 %1509
      %1511 = vrot.lane.b32.xlu0 %v1486, 64
      %v1512 = vpop.permute.xlu0 %1511
      %1513 = vrot.lane.b32.xlu0 %v1487, 64
      %v1514 = vpop.permute.xlu0 %1513
      %1515 = vrot.lane.b32.xlu0 %v1488, 64
      %v1516 = vpop.permute.xlu0 %1515
      %1517 = vrot.lane.b32.xlu0 %v1489, 64
      %v1518 = vpop.permute.xlu0 %1517
      %1519 = vrot.lane.b32.xlu0 %v1490, 64
      %v1520 = vpop.permute.xlu0 %1519
      %1521 = vrot.lane.b32.xlu0 %v1491, 64
      %v1522 = vpop.permute.xlu0 %1521
      %1523 = vrot.lane.b32.xlu0 %v1492, 64
      %v1524 = vpop.permute.xlu0 %1523
      %1525 = vrot.lane.b32.xlu0 %v1493, 64
      %v1526 = vpop.permute.xlu0 %1525
      %1538 = vst.msk [vmem:[#allocation2 + $0x8] sm:$0xf] %vm512, %v1506
      %1539 = vst.msk [vmem:[#allocation2 + $0x18] sm:$0xf] %vm512, %v1508
      %1540 = vst.msk [vmem:[#allocation2 + $0x28] sm:$0xf] %vm512, %v1510
      %1541 = vst.msk [vmem:[#allocation2 + $0x38] sm:$0xf] %vm512, %v1512
      %1542 = vst.msk [vmem:[#allocation2 + $0x48] sm:$0xf] %vm512, %v1514
      %1543 = vst.msk [vmem:[#allocation2 + $0x58] sm:$0xf] %vm512, %v1516
      %1544 = vst.msk [vmem:[#allocation2 + $0x68] sm:$0xf] %vm512, %v1518
      %1545 = vst.msk [vmem:[#allocation2 + $0x78] sm:$0xf] %vm512, %v1520
      %1546 = vst.msk [vmem:[#allocation2 + $0x88] sm:$0xf] %vm512, %v1522
      %1547 = vst.msk [vmem:[#allocation2 + $0x98] sm:$0xf] %vm512, %v1524
      %1548 = vst.msk [vmem:[#allocation2 + $0xa8] sm:$0xf] %vm512, %v1526
      %v1549 = vld [vmem:[%s199 + $0xc] sm:$0xf]
      %v1550 = vld [vmem:[%s199 + $0x10] sm:$0xf]
      %v1551 = vld [vmem:[%s199 + $0x14] sm:$0xf]
      %v1552 = vld [vmem:[%s199 + $0x18] sm:$0xf]
      %v1553 = vld [vmem:[%s199 + $0x1c] sm:$0xf]
      %v1554 = vld [vmem:[%s199 + $0x20] sm:$0xf]
      %v1555 = vld [vmem:[%s199 + $0x24] sm:$0xf]
      %v1556 = vld [vmem:[%s199 + $0x28] sm:$0xf]
      %v1557 = vld [vmem:[%s199 + $0x2c] sm:$0xf]
      %v1558 = vld [vmem:[%s199 + $0x30] sm:$0xf]
      %v1559 = vld [vmem:[%s199 + $0x34] sm:$0xf]
      %v1560 = vld [vmem:[%s199 + $0x38] sm:$0x1]
      %v1562 = vshrl.u32 %v1549, 16
      %v1564 = vrot.slane %v1562, 4
      %v1565 = vshll.u32 %v1549, 16
      %v1567 = vrot.slane %v1565, 5
      %v1568 = vor.u32 %v1564, %v1567
      %v1569 = vrot.slane %v1568, 4
      %v1571 = vshll.u32 %v1550, 16
      %v1573 = vrot.slane %v1571, 5
      %v1574 = vsel %vm258, %v1569, %v1573
      %v1575 = vshrl.u32 %v1550, 16
      %v1577 = vrot.slane %v1575, 4
      %v1578 = vor.u32 %v1577, %v1573
      %v1579 = vrot.slane %v1578, 4
      %v1581 = vshll.u32 %v1551, 16
      %v1583 = vrot.slane %v1581, 5
      %v1584 = vsel %vm258, %v1579, %v1583
      %v1585 = vshrl.u32 %v1551, 16
      %v1587 = vrot.slane %v1585, 4
      %v1588 = vor.u32 %v1587, %v1583
      %v1589 = vrot.slane %v1588, 4
      %v1591 = vshll.u32 %v1552, 16
      %v1593 = vrot.slane %v1591, 5
      %v1594 = vsel %vm258, %v1589, %v1593
      %v1595 = vshrl.u32 %v1552, 16
      %v1597 = vrot.slane %v1595, 4
      %v1598 = vor.u32 %v1597, %v1593
      %v1599 = vrot.slane %v1598, 4
      %v1601 = vshll.u32 %v1553, 16
      %v1603 = vrot.slane %v1601, 5
      %v1604 = vsel %vm258, %v1599, %v1603
      %v1605 = vshrl.u32 %v1553, 16
      %v1607 = vrot.slane %v1605, 4
      %v1608 = vor.u32 %v1607, %v1603
      %v1609 = vrot.slane %v1608, 4
      %v1611 = vshll.u32 %v1554, 16
      %v1613 = vrot.slane %v1611, 5
      %v1614 = vsel %vm258, %v1609, %v1613
      %v1615 = vshrl.u32 %v1554, 16
      %v1617 = vrot.slane %v1615, 4
      %v1618 = vor.u32 %v1617, %v1613
      %v1619 = vrot.slane %v1618, 4
      %v1621 = vshll.u32 %v1555, 16
      %v1623 = vrot.slane %v1621, 5
      %v1624 = vsel %vm258, %v1619, %v1623
      %v1625 = vshrl.u32 %v1555, 16
      %v1627 = vrot.slane %v1625, 4
      %v1628 = vor.u32 %v1627, %v1623
      %v1629 = vrot.slane %v1628, 4
      %v1631 = vshll.u32 %v1556, 16
      %v1633 = vrot.slane %v1631, 5
      %v1634 = vsel %vm258, %v1629, %v1633
      %v1635 = vshrl.u32 %v1556, 16
      %v1637 = vrot.slane %v1635, 4
      %v1638 = vor.u32 %v1637, %v1633
      %v1639 = vrot.slane %v1638, 4
      %v1641 = vshll.u32 %v1557, 16
      %v1643 = vrot.slane %v1641, 5
      %v1644 = vsel %vm258, %v1639, %v1643
      %v1645 = vshrl.u32 %v1557, 16
      %v1647 = vrot.slane %v1645, 4
      %v1648 = vor.u32 %v1647, %v1643
      %v1649 = vrot.slane %v1648, 4
      %v1651 = vshll.u32 %v1558, 16
      %v1653 = vrot.slane %v1651, 5
      %v1654 = vsel %vm258, %v1649, %v1653
      %v1655 = vshrl.u32 %v1558, 16
      %v1657 = vrot.slane %v1655, 4
      %v1658 = vor.u32 %v1657, %v1653
      %v1659 = vrot.slane %v1658, 4
      %v1661 = vshll.u32 %v1559, 16
      %v1663 = vrot.slane %v1661, 5
      %v1664 = vsel %vm258, %v1659, %v1663
      %v1665 = vshrl.u32 %v1559, 16
      %v1667 = vrot.slane %v1665, 4
      %v1668 = vor.u32 %v1667, %v1663
      %v1669 = vrot.slane %v1668, 4
      %v1671 = vshll.u32 %v1560, 16
      %v1673 = vrot.slane %v1671, 5
      %v1674 = vsel %vm258, %v1669, %v1673
      %1675 = vrot.lane.b32.xlu0 %v1574, 96
      %v1676 = vpop.permute.xlu0 %1675
      %1677 = vrot.lane.b32.xlu0 %v1584, 96
      %v1678 = vpop.permute.xlu0 %1677
      %1679 = vrot.lane.b32.xlu0 %v1594, 96
      %v1680 = vpop.permute.xlu0 %1679
      %1681 = vrot.lane.b32.xlu0 %v1604, 96
      %v1682 = vpop.permute.xlu0 %1681
      %1683 = vrot.lane.b32.xlu0 %v1614, 96
      %v1684 = vpop.permute.xlu0 %1683
      %1685 = vrot.lane.b32.xlu0 %v1624, 96
      %v1686 = vpop.permute.xlu0 %1685
      %1687 = vrot.lane.b32.xlu0 %v1634, 96
      %v1688 = vpop.permute.xlu0 %1687
      %1689 = vrot.lane.b32.xlu0 %v1644, 96
      %v1690 = vpop.permute.xlu0 %1689
      %1691 = vrot.lane.b32.xlu0 %v1654, 96
      %v1692 = vpop.permute.xlu0 %1691
      %1693 = vrot.lane.b32.xlu0 %v1664, 96
      %v1694 = vpop.permute.xlu0 %1693
      %1695 = vrot.lane.b32.xlu0 %v1674, 96
      %v1696 = vpop.permute.xlu0 %1695
      %1708 = vst.msk [vmem:[#allocation2 + $0x8] sm:$0xf] %vm690, %v1676
      %1709 = vst.msk [vmem:[#allocation2 + $0x18] sm:$0xf] %vm690, %v1678
      %1710 = vst.msk [vmem:[#allocation2 + $0x28] sm:$0xf] %vm690, %v1680
      %1711 = vst.msk [vmem:[#allocation2 + $0x38] sm:$0xf] %vm690, %v1682
      %1712 = vst.msk [vmem:[#allocation2 + $0x48] sm:$0xf] %vm690, %v1684
      %1713 = vst.msk [vmem:[#allocation2 + $0x58] sm:$0xf] %vm690, %v1686
      %1714 = vst.msk [vmem:[#allocation2 + $0x68] sm:$0xf] %vm690, %v1688
      %1715 = vst.msk [vmem:[#allocation2 + $0x78] sm:$0xf] %vm690, %v1690
      %1716 = vst.msk [vmem:[#allocation2 + $0x88] sm:$0xf] %vm690, %v1692
      %1717 = vst.msk [vmem:[#allocation2 + $0x98] sm:$0xf] %vm690, %v1694
      %1718 = vst.msk [vmem:[#allocation2 + $0xa8] sm:$0xf] %vm690, %v1696
      %v1719 = vld [vmem:[%s199 + $0x10] sm:$0xf]
      %v1720 = vld [vmem:[%s199 + $0x14] sm:$0xf]
      %v1721 = vld [vmem:[%s199 + $0x18] sm:$0xf]
      %v1722 = vld [vmem:[%s199 + $0x1c] sm:$0xf]
      %v1723 = vld [vmem:[%s199 + $0x20] sm:$0xf]
      %v1724 = vld [vmem:[%s199 + $0x24] sm:$0xf]
      %v1725 = vld [vmem:[%s199 + $0x28] sm:$0xf]
      %v1726 = vld [vmem:[%s199 + $0x2c] sm:$0xf]
      %v1727 = vld [vmem:[%s199 + $0x30] sm:$0xf]
      %v1728 = vld [vmem:[%s199 + $0x34] sm:$0xf]
      %v1729 = vld [vmem:[%s199 + $0x38] sm:$0xf]
      %v1730 = vld [vmem:[%s199 + $0x3c] sm:$0x1]
      %v1732 = vshrl.u32 %v1719, 16
      %v1734 = vrot.slane %v1732, 4
      %v1735 = vshll.u32 %v1719, 16
      %v1737 = vrot.slane %v1735, 5
      %v1738 = vor.u32 %v1734, %v1737
      %v1739 = vrot.slane %v1738, 4
      %v1741 = vshll.u32 %v1720, 16
      %v1743 = vrot.slane %v1741, 5
      %v1744 = vsel %vm258, %v1739, %v1743
      %v1745 = vshrl.u32 %v1720, 16
      %v1747 = vrot.slane %v1745, 4
      %v1748 = vor.u32 %v1747, %v1743
      %v1749 = vrot.slane %v1748, 4
      %v1751 = vshll.u32 %v1721, 16
      %v1753 = vrot.slane %v1751, 5
      %v1754 = vsel %vm258, %v1749, %v1753
      %v1755 = vshrl.u32 %v1721, 16
      %v1757 = vrot.slane %v1755, 4
      %v1758 = vor.u32 %v1757, %v1753
      %v1759 = vrot.slane %v1758, 4
      %v1761 = vshll.u32 %v1722, 16
      %v1763 = vrot.slane %v1761, 5
      %v1764 = vsel %vm258, %v1759, %v1763
      %v1765 = vshrl.u32 %v1722, 16
      %v1767 = vrot.slane %v1765, 4
      %v1768 = vor.u32 %v1767, %v1763
      %v1769 = vrot.slane %v1768, 4
      %v1771 = vshll.u32 %v1723, 16
      %v1773 = vrot.slane %v1771, 5
      %v1774 = vsel %vm258, %v1769, %v1773
      %v1775 = vshrl.u32 %v1723, 16
      %v1777 = vrot.slane %v1775, 4
      %v1778 = vor.u32 %v1777, %v1773
      %v1779 = vrot.slane %v1778, 4
      %v1781 = vshll.u32 %v1724, 16
      %v1783 = vrot.slane %v1781, 5
      %v1784 = vsel %vm258, %v1779, %v1783
      %v1785 = vshrl.u32 %v1724, 16
      %v1787 = vrot.slane %v1785, 4
      %v1788 = vor.u32 %v1787, %v1783
      %v1789 = vrot.slane %v1788, 4
      %v1791 = vshll.u32 %v1725, 16
      %v1793 = vrot.slane %v1791, 5
      %v1794 = vsel %vm258, %v1789, %v1793
      %v1795 = vshrl.u32 %v1725, 16
      %v1797 = vrot.slane %v1795, 4
      %v1798 = vor.u32 %v1797, %v1793
      %v1799 = vrot.slane %v1798, 4
      %v1801 = vshll.u32 %v1726, 16
      %v1803 = vrot.slane %v1801, 5
      %v1804 = vsel %vm258, %v1799, %v1803
      %v1805 = vshrl.u32 %v1726, 16
      %v1807 = vrot.slane %v1805, 4
      %v1808 = vor.u32 %v1807, %v1803
      %v1809 = vrot.slane %v1808, 4
      %v1811 = vshll.u32 %v1727, 16
      %v1813 = vrot.slane %v1811, 5
      %v1814 = vsel %vm258, %v1809, %v1813
      %v1815 = vshrl.u32 %v1727, 16
      %v1817 = vrot.slane %v1815, 4
      %v1818 = vor.u32 %v1817, %v1813
      %v1819 = vrot.slane %v1818, 4
      %v1821 = vshll.u32 %v1728, 16
      %v1823 = vrot.slane %v1821, 5
      %v1824 = vsel %vm258, %v1819, %v1823
      %v1825 = vshrl.u32 %v1728, 16
      %v1827 = vrot.slane %v1825, 4
      %v1828 = vor.u32 %v1827, %v1823
      %v1829 = vrot.slane %v1828, 4
      %v1831 = vshll.u32 %v1729, 16
      %v1833 = vrot.slane %v1831, 5
      %v1834 = vsel %vm258, %v1829, %v1833
      %v1835 = vshrl.u32 %v1729, 16
      %v1837 = vrot.slane %v1835, 4
      %v1838 = vor.u32 %v1837, %v1833
      %v1839 = vrot.slane %v1838, 4
      %v1841 = vshll.u32 %v1730, 16
      %v1843 = vrot.slane %v1841, 5
      %v1844 = vsel %vm258, %v1839, %v1843
      %1856 = vst.msk [vmem:[#allocation2 + $0xc] sm:$0xf] %vm232, %v1744
      %1857 = vst.msk [vmem:[#allocation2 + $0x1c] sm:$0xf] %vm232, %v1754
      %1858 = vst.msk [vmem:[#allocation2 + $0x2c] sm:$0xf] %vm232, %v1764
      %1859 = vst.msk [vmem:[#allocation2 + $0x3c] sm:$0xf] %vm232, %v1774
      %1860 = vst.msk [vmem:[#allocation2 + $0x4c] sm:$0xf] %vm232, %v1784
      %1861 = vst.msk [vmem:[#allocation2 + $0x5c] sm:$0xf] %vm232, %v1794
      %1862 = vst.msk [vmem:[#allocation2 + $0x6c] sm:$0xf] %vm232, %v1804
      %1863 = vst.msk [vmem:[#allocation2 + $0x7c] sm:$0xf] %vm232, %v1814
      %1864 = vst.msk [vmem:[#allocation2 + $0x8c] sm:$0xf] %vm232, %v1824
      %1865 = vst.msk [vmem:[#allocation2 + $0x9c] sm:$0xf] %vm232, %v1834
      %1866 = vst.msk [vmem:[#allocation2 + $0xac] sm:$0xf] %vm232, %v1844
      %v1867 = vld [vmem:[%s199 + $0x10] sm:$0xe]
      %v1868 = vld [vmem:[%s199 + $0x14] sm:$0xf]
      %v1869 = vld [vmem:[%s199 + $0x18] sm:$0xf]
      %v1870 = vld [vmem:[%s199 + $0x1c] sm:$0xf]
      %v1871 = vld [vmem:[%s199 + $0x20] sm:$0xf]
      %v1872 = vld [vmem:[%s199 + $0x24] sm:$0xf]
      %v1873 = vld [vmem:[%s199 + $0x28] sm:$0xf]
      %v1874 = vld [vmem:[%s199 + $0x2c] sm:$0xf]
      %v1875 = vld [vmem:[%s199 + $0x30] sm:$0xf]
      %v1876 = vld [vmem:[%s199 + $0x34] sm:$0xf]
      %v1877 = vld [vmem:[%s199 + $0x38] sm:$0xf]
      %v1878 = vld [vmem:[%s199 + $0x3c] sm:$0x1]
      %v1891 = vrot.slane %v1867, 5
      %v1892 = vrot.slane %v1891, 4
      %v1893 = vrot.slane %v1868, 5
      %v1894 = vsel %vm444, %v1892, %v1893
      %v1895 = vrot.slane %v1893, 4
      %v1896 = vrot.slane %v1869, 5
      %v1897 = vsel %vm444, %v1895, %v1896
      %v1898 = vrot.slane %v1896, 4
      %v1899 = vrot.slane %v1870, 5
      %v1900 = vsel %vm444, %v1898, %v1899
      %v1901 = vrot.slane %v1899, 4
      %v1902 = vrot.slane %v1871, 5
      %v1903 = vsel %vm444, %v1901, %v1902
      %v1904 = vrot.slane %v1902, 4
      %v1905 = vrot.slane %v1872, 5
      %v1906 = vsel %vm444, %v1904, %v1905
      %v1907 = vrot.slane %v1905, 4
      %v1908 = vrot.slane %v1873, 5
      %v1909 = vsel %vm444, %v1907, %v1908
      %v1910 = vrot.slane %v1908, 4
      %v1911 = vrot.slane %v1874, 5
      %v1912 = vsel %vm444, %v1910, %v1911
      %v1913 = vrot.slane %v1911, 4
      %v1914 = vrot.slane %v1875, 5
      %v1915 = vsel %vm444, %v1913, %v1914
      %v1916 = vrot.slane %v1914, 4
      %v1917 = vrot.slane %v1876, 5
      %v1918 = vsel %vm444, %v1916, %v1917
      %v1919 = vrot.slane %v1917, 4
      %v1920 = vrot.slane %v1877, 5
      %v1921 = vsel %vm444, %v1919, %v1920
      %v1922 = vrot.slane %v1920, 4
      %v1923 = vrot.slane %v1878, 5
      %v1924 = vsel %vm444, %v1922, %v1923
      %1925 = vrot.lane.b32.xlu0 %v1894, 32
      %v1926 = vpop.permute.xlu0 %1925
      %1927 = vrot.lane.b32.xlu0 %v1897, 32
      %v1928 = vpop.permute.xlu0 %1927
      %1929 = vrot.lane.b32.xlu0 %v1900, 32
      %v1930 = vpop.permute.xlu0 %1929
      %1931 = vrot.lane.b32.xlu0 %v1903, 32
      %v1932 = vpop.permute.xlu0 %1931
      %1933 = vrot.lane.b32.xlu0 %v1906, 32
      %v1934 = vpop.permute.xlu0 %1933
      %1935 = vrot.lane.b32.xlu0 %v1909, 32
      %v1936 = vpop.permute.xlu0 %1935
      %1937 = vrot.lane.b32.xlu0 %v1912, 32
      %v1938 = vpop.permute.xlu0 %1937
      %1939 = vrot.lane.b32.xlu0 %v1915, 32
      %v1940 = vpop.permute.xlu0 %1939
      %1941 = vrot.lane.b32.xlu0 %v1918, 32
      %v1942 = vpop.permute.xlu0 %1941
      %1943 = vrot.lane.b32.xlu0 %v1921, 32
      %v1944 = vpop.permute.xlu0 %1943
      %1945 = vrot.lane.b32.xlu0 %v1924, 32
      %v1946 = vpop.permute.xlu0 %1945
      %1958 = vst.msk [vmem:[#allocation2 + $0xc] sm:$0xf] %vm406, %v1926
      %1959 = vst.msk [vmem:[#allocation2 + $0x1c] sm:$0xf] %vm406, %v1928
      %1960 = vst.msk [vmem:[#allocation2 + $0x2c] sm:$0xf] %vm406, %v1930
      %1961 = vst.msk [vmem:[#allocation2 + $0x3c] sm:$0xf] %vm406, %v1932
      %1962 = vst.msk [vmem:[#allocation2 + $0x4c] sm:$0xf] %vm406, %v1934
      %1963 = vst.msk [vmem:[#allocation2 + $0x5c] sm:$0xf] %vm406, %v1936
      %1964 = vst.msk [vmem:[#allocation2 + $0x6c] sm:$0xf] %vm406, %v1938
      %1965 = vst.msk [vmem:[#allocation2 + $0x7c] sm:$0xf] %vm406, %v1940
      %1966 = vst.msk [vmem:[#allocation2 + $0x8c] sm:$0xf] %vm406, %v1942
      %1967 = vst.msk [vmem:[#allocation2 + $0x9c] sm:$0xf] %vm406, %v1944
      %1968 = vst.msk [vmem:[#allocation2 + $0xac] sm:$0xf] %vm406, %v1946
      %v1969 = vld [vmem:[%s199 + $0x10] sm:$0xe]
      %v1970 = vld [vmem:[%s199 + $0x14] sm:$0xf]
      %v1971 = vld [vmem:[%s199 + $0x18] sm:$0xf]
      %v1972 = vld [vmem:[%s199 + $0x1c] sm:$0xf]
      %v1973 = vld [vmem:[%s199 + $0x20] sm:$0xf]
      %v1974 = vld [vmem:[%s199 + $0x24] sm:$0xf]
      %v1975 = vld [vmem:[%s199 + $0x28] sm:$0xf]
      %v1976 = vld [vmem:[%s199 + $0x2c] sm:$0xf]
      %v1977 = vld [vmem:[%s199 + $0x30] sm:$0xf]
      %v1978 = vld [vmem:[%s199 + $0x34] sm:$0xf]
      %v1979 = vld [vmem:[%s199 + $0x38] sm:$0xf]
      %v1980 = vld [vmem:[%s199 + $0x3c] sm:$0x3]
      %v1982 = vshrl.u32 %v1969, 16
      %v1984 = vrot.slane %v1982, 5
      %v1985 = vshll.u32 %v1969, 16
      %v1987 = vrot.slane %v1985, 6
      %v1988 = vor.u32 %v1984, %v1987
      %v1989 = vrot.slane %v1988, 4
      %v1991 = vshrl.u32 %v1970, 16
      %v1993 = vrot.slane %v1991, 5
      %v1994 = vshll.u32 %v1970, 16
      %v1996 = vrot.slane %v1994, 6
      %v1997 = vor.u32 %v1993, %v1996
      %v1998 = vsel %vm538, %v1989, %v1997
      %v1999 = vrot.slane %v1997, 4
      %v2001 = vshrl.u32 %v1971, 16
      %v2003 = vrot.slane %v2001, 5
      %v2004 = vshll.u32 %v1971, 16
      %v2006 = vrot.slane %v2004, 6
      %v2007 = vor.u32 %v2003, %v2006
      %v2008 = vsel %vm538, %v1999, %v2007
      %v2009 = vrot.slane %v2007, 4
      %v2011 = vshrl.u32 %v1972, 16
      %v2013 = vrot.slane %v2011, 5
      %v2014 = vshll.u32 %v1972, 16
      %v2016 = vrot.slane %v2014, 6
      %v2017 = vor.u32 %v2013, %v2016
      %v2018 = vsel %vm538, %v2009, %v2017
      %v2019 = vrot.slane %v2017, 4
      %v2021 = vshrl.u32 %v1973, 16
      %v2023 = vrot.slane %v2021, 5
      %v2024 = vshll.u32 %v1973, 16
      %v2026 = vrot.slane %v2024, 6
      %v2027 = vor.u32 %v2023, %v2026
      %v2028 = vsel %vm538, %v2019, %v2027
      %v2029 = vrot.slane %v2027, 4
      %v2031 = vshrl.u32 %v1974, 16
      %v2033 = vrot.slane %v2031, 5
      %v2034 = vshll.u32 %v1974, 16
      %v2036 = vrot.slane %v2034, 6
      %v2037 = vor.u32 %v2033, %v2036
      %v2038 = vsel %vm538, %v2029, %v2037
      %v2039 = vrot.slane %v2037, 4
      %v2041 = vshrl.u32 %v1975, 16
      %v2043 = vrot.slane %v2041, 5
      %v2044 = vshll.u32 %v1975, 16
      %v2046 = vrot.slane %v2044, 6
      %v2047 = vor.u32 %v2043, %v2046
      %v2048 = vsel %vm538, %v2039, %v2047
      %v2049 = vrot.slane %v2047, 4
      %v2051 = vshrl.u32 %v1976, 16
      %v2053 = vrot.slane %v2051, 5
      %v2054 = vshll.u32 %v1976, 16
      %v2056 = vrot.slane %v2054, 6
      %v2057 = vor.u32 %v2053, %v2056
      %v2058 = vsel %vm538, %v2049, %v2057
      %v2059 = vrot.slane %v2057, 4
      %v2061 = vshrl.u32 %v1977, 16
      %v2063 = vrot.slane %v2061, 5
      %v2064 = vshll.u32 %v1977, 16
      %v2066 = vrot.slane %v2064, 6
      %v2067 = vor.u32 %v2063, %v2066
      %v2068 = vsel %vm538, %v2059, %v2067
      %v2069 = vrot.slane %v2067, 4
      %v2071 = vshrl.u32 %v1978, 16
      %v2073 = vrot.slane %v2071, 5
      %v2074 = vshll.u32 %v1978, 16
      %v2076 = vrot.slane %v2074, 6
      %v2077 = vor.u32 %v2073, %v2076
      %v2078 = vsel %vm538, %v2069, %v2077
      %v2079 = vrot.slane %v2077, 4
      %v2081 = vshrl.u32 %v1979, 16
      %v2083 = vrot.slane %v2081, 5
      %v2084 = vshll.u32 %v1979, 16
      %v2086 = vrot.slane %v2084, 6
      %v2087 = vor.u32 %v2083, %v2086
      %v2088 = vsel %vm538, %v2079, %v2087
      %v2089 = vrot.slane %v2087, 4
      %v2091 = vshrl.u32 %v1980, 16
      %v2093 = vrot.slane %v2091, 5
      %v2094 = vshll.u32 %v1980, 16
      %v2096 = vrot.slane %v2094, 6
      %v2097 = vor.u32 %v2093, %v2096
      %v2098 = vsel %vm538, %v2089, %v2097
      %2099 = vrot.lane.b32.xlu0 %v1998, 64
      %v2100 = vpop.permute.xlu0 %2099
      %2101 = vrot.lane.b32.xlu0 %v2008, 64
      %v2102 = vpop.permute.xlu0 %2101
      %2103 = vrot.lane.b32.xlu0 %v2018, 64
      %v2104 = vpop.permute.xlu0 %2103
      %2105 = vrot.lane.b32.xlu0 %v2028, 64
      %v2106 = vpop.permute.xlu0 %2105
      %2107 = vrot.lane.b32.xlu0 %v2038, 64
      %v2108 = vpop.permute.xlu0 %2107
      %2109 = vrot.lane.b32.xlu0 %v2048, 64
      %v2110 = vpop.permute.xlu0 %2109
      %2111 = vrot.lane.b32.xlu0 %v2058, 64
      %v2112 = vpop.permute.xlu0 %2111
      %2113 = vrot.lane.b32.xlu0 %v2068, 64
      %v2114 = vpop.permute.xlu0 %2113
      %2115 = vrot.lane.b32.xlu0 %v2078, 64
      %v2116 = vpop.permute.xlu0 %2115
      %2117 = vrot.lane.b32.xlu0 %v2088, 64
      %v2118 = vpop.permute.xlu0 %2117
      %2119 = vrot.lane.b32.xlu0 %v2098, 64
      %v2120 = vpop.permute.xlu0 %2119
      %2132 = vst.msk [vmem:[#allocation2 + $0xc] sm:$0xf] %vm512, %v2100
      %2133 = vst.msk [vmem:[#allocation2 + $0x1c] sm:$0xf] %vm512, %v2102
      %2134 = vst.msk [vmem:[#allocation2 + $0x2c] sm:$0xf] %vm512, %v2104
      %2135 = vst.msk [vmem:[#allocation2 + $0x3c] sm:$0xf] %vm512, %v2106
      %2136 = vst.msk [vmem:[#allocation2 + $0x4c] sm:$0xf] %vm512, %v2108
      %2137 = vst.msk [vmem:[#allocation2 + $0x5c] sm:$0xf] %vm512, %v2110
      %2138 = vst.msk [vmem:[#allocation2 + $0x6c] sm:$0xf] %vm512, %v2112
      %2139 = vst.msk [vmem:[#allocation2 + $0x7c] sm:$0xf] %vm512, %v2114
      %2140 = vst.msk [vmem:[#allocation2 + $0x8c] sm:$0xf] %vm512, %v2116
      %2141 = vst.msk [vmem:[#allocation2 + $0x9c] sm:$0xf] %vm512, %v2118
      %2142 = vst.msk [vmem:[#allocation2 + $0xac] sm:$0xf] %vm512, %v2120
      %v2143 = vld [vmem:[%s199 + $0x10] sm:$0xc]
      %v2144 = vld [vmem:[%s199 + $0x14] sm:$0xf]
      %v2145 = vld [vmem:[%s199 + $0x18] sm:$0xf]
      %v2146 = vld [vmem:[%s199 + $0x1c] sm:$0xf]
      %v2147 = vld [vmem:[%s199 + $0x20] sm:$0xf]
      %v2148 = vld [vmem:[%s199 + $0x24] sm:$0xf]
      %v2149 = vld [vmem:[%s199 + $0x28] sm:$0xf]
      %v2150 = vld [vmem:[%s199 + $0x2c] sm:$0xf]
      %v2151 = vld [vmem:[%s199 + $0x30] sm:$0xf]
      %v2152 = vld [vmem:[%s199 + $0x34] sm:$0xf]
      %v2153 = vld [vmem:[%s199 + $0x38] sm:$0xf]
      %v2154 = vld [vmem:[%s199 + $0x3c] sm:$0x3]
      %v2167 = vrot.slane %v2143, 6
      %v2168 = vrot.slane %v2167, 4
      %v2169 = vrot.slane %v2144, 6
      %v2170 = vsel %vm880, %v2168, %v2169
      %v2171 = vrot.slane %v2169, 4
      %v2172 = vrot.slane %v2145, 6
      %v2173 = vsel %vm880, %v2171, %v2172
      %v2174 = vrot.slane %v2172, 4
      %v2175 = vrot.slane %v2146, 6
      %v2176 = vsel %vm880, %v2174, %v2175
      %v2177 = vrot.slane %v2175, 4
      %v2178 = vrot.slane %v2147, 6
      %v2179 = vsel %vm880, %v2177, %v2178
      %v2180 = vrot.slane %v2178, 4
      %v2181 = vrot.slane %v2148, 6
      %v2182 = vsel %vm880, %v2180, %v2181
      %v2183 = vrot.slane %v2181, 4
      %v2184 = vrot.slane %v2149, 6
      %v2185 = vsel %vm880, %v2183, %v2184
      %v2186 = vrot.slane %v2184, 4
      %v2187 = vrot.slane %v2150, 6
      %v2188 = vsel %vm880, %v2186, %v2187
      %v2189 = vrot.slane %v2187, 4
      %v2190 = vrot.slane %v2151, 6
      %v2191 = vsel %vm880, %v2189, %v2190
      %v2192 = vrot.slane %v2190, 4
      %v2193 = vrot.slane %v2152, 6
      %v2194 = vsel %vm880, %v2192, %v2193
      %v2195 = vrot.slane %v2193, 4
      %v2196 = vrot.slane %v2153, 6
      %v2197 = vsel %vm880, %v2195, %v2196
      %v2198 = vrot.slane %v2196, 4
      %v2199 = vrot.slane %v2154, 6
      %v2200 = vsel %vm880, %v2198, %v2199
      %2201 = vrot.lane.b32.xlu0 %v2170, 96
      %v2202 = vpop.permute.xlu0 %2201
      %2203 = vrot.lane.b32.xlu0 %v2173, 96
      %v2204 = vpop.permute.xlu0 %2203
      %2205 = vrot.lane.b32.xlu0 %v2176, 96
      %v2206 = vpop.permute.xlu0 %2205
      %2207 = vrot.lane.b32.xlu0 %v2179, 96
      %v2208 = vpop.permute.xlu0 %2207
      %2209 = vrot.lane.b32.xlu0 %v2182, 96
      %v2210 = vpop.permute.xlu0 %2209
      %2211 = vrot.lane.b32.xlu0 %v2185, 96
      %v2212 = vpop.permute.xlu0 %2211
      %2213 = vrot.lane.b32.xlu0 %v2188, 96
      %v2214 = vpop.permute.xlu0 %2213
      %2215 = vrot.lane.b32.xlu0 %v2191, 96
      %v2216 = vpop.permute.xlu0 %2215
      %2217 = vrot.lane.b32.xlu0 %v2194, 96
      %v2218 = vpop.permute.xlu0 %2217
      %2219 = vrot.lane.b32.xlu0 %v2197, 96
      %v2220 = vpop.permute.xlu0 %2219
      %2221 = vrot.lane.b32.xlu0 %v2200, 96
      %v2222 = vpop.permute.xlu0 %2221
      %2234 = vst.msk [vmem:[#allocation2 + $0xc] sm:$0xf] %vm690, %v2202
      %2235 = vst.msk [vmem:[#allocation2 + $0x1c] sm:$0xf] %vm690, %v2204
      %2236 = vst.msk [vmem:[#allocation2 + $0x2c] sm:$0xf] %vm690, %v2206
      %2237 = vst.msk [vmem:[#allocation2 + $0x3c] sm:$0xf] %vm690, %v2208
      %2238 = vst.msk [vmem:[#allocation2 + $0x4c] sm:$0xf] %vm690, %v2210
      %2239 = vst.msk [vmem:[#allocation2 + $0x5c] sm:$0xf] %vm690, %v2212
      %2240 = vst.msk [vmem:[#allocation2 + $0x6c] sm:$0xf] %vm690, %v2214
      %2241 = vst.msk [vmem:[#allocation2 + $0x7c] sm:$0xf] %vm690, %v2216
      %2242 = vst.msk [vmem:[#allocation2 + $0x8c] sm:$0xf] %vm690, %v2218
      %2243 = vst.msk [vmem:[#allocation2 + $0x9c] sm:$0xf] %vm690, %v2220
      %2244 = vst.msk [vmem:[#allocation2 + $0xac] sm:$0xf] %vm690, %v2222
      %v2245 = vld [vmem:[#allocation2] sm:$0xff]
      %v2246 = vld [vmem:[#allocation2 + $0x8] sm:$0xff]
      %v2247 = vld [vmem:[#allocation2 + $0x10] sm:$0xff]
      %v2248 = vld [vmem:[#allocation2 + $0x18] sm:$0xff]
      %v2249 = vld [vmem:[#allocation2 + $0x20] sm:$0xff]
      %v2250 = vld [vmem:[#allocation2 + $0x28] sm:$0xff]
      %v2251 = vld [vmem:[#allocation2 + $0x30] sm:$0xff]
      %v2252 = vld [vmem:[#allocation2 + $0x38] sm:$0xff]
      %v2253 = vld [vmem:[#allocation2 + $0x40] sm:$0xff]
      %v2254 = vld [vmem:[#allocation2 + $0x48] sm:$0xff]
      %v2255 = vld [vmem:[#allocation2 + $0x50] sm:$0xff]
      %v2256 = vld [vmem:[#allocation2 + $0x58] sm:$0xff]
      %v2257 = vld [vmem:[#allocation2 + $0x60] sm:$0xff]
      %v2258 = vld [vmem:[#allocation2 + $0x68] sm:$0xff]
      %v2259 = vld [vmem:[#allocation2 + $0x70] sm:$0xff]
      %v2260 = vld [vmem:[#allocation2 + $0x78] sm:$0xff]
      %v2261 = vld [vmem:[#allocation2 + $0x80] sm:$0xff]
      %v2262 = vld [vmem:[#allocation2 + $0x88] sm:$0xff]
      %v2263 = vld [vmem:[#allocation2 + $0x90] sm:$0xff]
      %v2264 = vld [vmem:[#allocation2 + $0x98] sm:$0xff]
      %v2265 = vld [vmem:[#allocation2 + $0xa0] sm:$0xff]
      %v2266 = vld [vmem:[#allocation2 + $0xa8] sm:$0xff]
      %v2267 = vld [vmem:[%s1] sm:$0xf]
      %v2268 = vld [vmem:[%s1 + $0x4] sm:$0xf]
      %v2269 = vld [vmem:[%s1 + $0x8] sm:$0xf]
      %v2270 = vld [vmem:[%s1 + $0xc] sm:$0xf]
      %v2271 = vld [vmem:[%s1 + $0x10] sm:$0xf]
      %v2272 = vld [vmem:[%s1 + $0x14] sm:$0xf]
      %v2273 = vld [vmem:[%s1 + $0x18] sm:$0xf]
      %v2274 = vld [vmem:[%s1 + $0x1c] sm:$0xf]
      %v2275 = vld [vmem:[%s1 + $0x20] sm:$0xf]
      %v2276 = vld [vmem:[%s1 + $0x24] sm:$0xf]
      %v2277 = vld [vmem:[%s1 + $0x28] sm:$0xf]
      %v2278 = vld [vmem:[%s1 + $0x2c] sm:$0xf]
      %v2279 = vld [vmem:[%s1 + $0x30] sm:$0xf]
      %v2280 = vld [vmem:[%s1 + $0x34] sm:$0xf]
      %v2281 = vld [vmem:[%s1 + $0x38] sm:$0xf]
      %v2282 = vld [vmem:[%s1 + $0x3c] sm:$0xf]
      %v2283 = vld [vmem:[%s1 + $0x40] sm:$0xf]
      %v2284 = vld [vmem:[%s1 + $0x44] sm:$0xf]
      %v2285 = vld [vmem:[%s1 + $0x48] sm:$0xf]
      %v2286 = vld [vmem:[%s1 + $0x4c] sm:$0xf]
      %v2287 = vld [vmem:[%s1 + $0x50] sm:$0xf]
      %v2288 = vld [vmem:[%s1 + $0x54] sm:$0xf]
      %v2289 = vld [vmem:[%s1 + $0x58] sm:$0xf]
      %v2290 = vld [vmem:[%s1 + $0x5c] sm:$0xf]
      %v2291 = vld [vmem:[%s1 + $0x60] sm:$0xf]
      %v2292 = vld [vmem:[%s1 + $0x64] sm:$0xf]
      %v2293 = vld [vmem:[%s1 + $0x68] sm:$0xf]
      %v2294 = vld [vmem:[%s1 + $0x6c] sm:$0xf]
      %v2295 = vld [vmem:[%s1 + $0x70] sm:$0xf]
      %v2296 = vld [vmem:[%s1 + $0x74] sm:$0xf]
      %v2297 = vld [vmem:[%s1 + $0x78] sm:$0xf]
      %v2298 = vld [vmem:[%s1 + $0x7c] sm:$0xf]
      %v2299 = vld [vmem:[%s1 + $0x80] sm:$0xf]
      %v2300 = vld [vmem:[%s1 + $0x84] sm:$0xf]
      %v2301 = vld [vmem:[%s1 + $0x88] sm:$0xf]
      %v2302 = vld [vmem:[%s1 + $0x8c] sm:$0xf]
      %v2303 = vld [vmem:[%s1 + $0x90] sm:$0xf]
      %v2304 = vld [vmem:[%s1 + $0x94] sm:$0xf]
      %v2305 = vld [vmem:[%s1 + $0x98] sm:$0xf]
      %v2306 = vld [vmem:[%s1 + $0x9c] sm:$0xf]
      %v2307 = vld [vmem:[%s1 + $0xa0] sm:$0xf]
      %v2308 = vld [vmem:[%s1 + $0xa4] sm:$0xf]
      %v2309 = vld [vmem:[%s1 + $0xa8] sm:$0xf]
      %v2310 = vld [vmem:[%s1 + $0xac] sm:$0xf]
      %v2311 = vld [vmem:[%s1 + $0xb0] sm:$0xf]
      %v2312 = vld [vmem:[%s1 + $0xb4] sm:$0xf]
      %v2313 = vld [vmem:[%s1 + $0xb8] sm:$0xf]
      %v2314 = vld [vmem:[%s1 + $0xbc] sm:$0xf]
      %v2315 = vld [vmem:[%s1 + $0xc0] sm:$0xf]
      %v2316 = vld [vmem:[%s1 + $0xc4] sm:$0xf]
      %v2317 = vld [vmem:[%s1 + $0xc8] sm:$0xf]
      %v2318 = vld [vmem:[%s1 + $0xcc] sm:$0xf]
      %v2319 = vld [vmem:[%s1 + $0xd0] sm:$0xf]
      %v2320 = vld [vmem:[%s1 + $0xd4] sm:$0xf]
      %v2321 = vld [vmem:[%s1 + $0xd8] sm:$0xf]
      %v2322 = vld [vmem:[%s1 + $0xdc] sm:$0xf]
      %v2323 = vld [vmem:[%s1 + $0xe0] sm:$0xf]
      %v2324 = vld [vmem:[%s1 + $0xe4] sm:$0xf]
      %v2325 = vld [vmem:[%s1 + $0xe8] sm:$0xf]
      %v2326 = vld [vmem:[%s1 + $0xec] sm:$0xf]
      %v2327 = vld [vmem:[%s1 + $0xf0] sm:$0xf]
      %v2328 = vld [vmem:[%s1 + $0xf4] sm:$0xf]
      %v2329 = vld [vmem:[%s1 + $0xf8] sm:$0xf]
      %v2330 = vld [vmem:[%s1 + $0xfc] sm:$0xf]
      %v2353 = vunpack.c.l.b16 %v2245
      %v2354 = vunpack.c.h.b16 %v2245
      %v2355 = vunpack.c.l.b16 %v2246
      %v2356 = vunpack.c.h.b16 %v2246
      %v2357 = vunpack.c.l.b16 %v2247
      %v2358 = vunpack.c.h.b16 %v2247
      %v2359 = vunpack.c.l.b16 %v2248
      %v2360 = vunpack.c.h.b16 %v2248
      %v2361 = vunpack.c.l.b16 %v2249
      %v2362 = vunpack.c.h.b16 %v2249
      %v2363 = vunpack.c.l.b16 %v2250
      %v2364 = vunpack.c.h.b16 %v2250
      %v2365 = vunpack.c.l.b16 %v2251
      %v2366 = vunpack.c.h.b16 %v2251
      %v2367 = vunpack.c.l.b16 %v2252
      %v2368 = vunpack.c.h.b16 %v2252
      %v2369 = vunpack.c.l.b16 %v2253
      %v2370 = vunpack.c.h.b16 %v2253
      %v2371 = vunpack.c.l.b16 %v2254
      %v2372 = vunpack.c.h.b16 %v2254
      %v2373 = vunpack.c.l.b16 %v2255
      %v2374 = vunpack.c.h.b16 %v2255
      %v2375 = vunpack.c.l.b16 %v2256
      %v2376 = vunpack.c.h.b16 %v2256
      %v2377 = vunpack.c.l.b16 %v2257
      %v2378 = vunpack.c.h.b16 %v2257
      %v2379 = vunpack.c.l.b16 %v2258
      %v2380 = vunpack.c.h.b16 %v2258
      %v2381 = vunpack.c.l.b16 %v2259
      %v2382 = vunpack.c.h.b16 %v2259
      %v2383 = vunpack.c.l.b16 %v2260
      %v2384 = vunpack.c.h.b16 %v2260
      %v2385 = vunpack.c.l.b16 %v2261
      %v2386 = vunpack.c.h.b16 %v2261
      %v2387 = vunpack.c.l.b16 %v2262
      %v2388 = vunpack.c.h.b16 %v2262
      %v2389 = vunpack.c.l.b16 %v2263
      %v2390 = vunpack.c.h.b16 %v2263
      %v2391 = vunpack.c.l.b16 %v2264
      %v2392 = vunpack.c.h.b16 %v2264
      %v2393 = vunpack.c.l.b16 %v2265
      %v2394 = vunpack.c.h.b16 %v2265
      %v2395 = vunpack.c.l.b16 %v2266
      %v2396 = vunpack.c.h.b16 %v2266
      %v2397 = vpack.c.b16 %v2357, %v2353
      %v2398 = vpack.c.b16 %v2358, %v2354
      %v2399 = vpack.c.b16 %v2359, %v2355
      %v2400 = vpack.c.b16 %v2360, %v2356
      %v2401 = vpack.c.b16 %v2365, %v2361
      %v2402 = vpack.c.b16 %v2366, %v2362
      %v2403 = vpack.c.b16 %v2367, %v2363
      %v2404 = vpack.c.b16 %v2368, %v2364
      %v2405 = vpack.c.b16 %v2373, %v2369
      %v2406 = vpack.c.b16 %v2374, %v2370
      %v2407 = vpack.c.b16 %v2375, %v2371
      %v2408 = vpack.c.b16 %v2376, %v2372
      %v2409 = vpack.c.b16 %v2381, %v2377
      %v2410 = vpack.c.b16 %v2382, %v2378
      %v2411 = vpack.c.b16 %v2383, %v2379
      %v2412 = vpack.c.b16 %v2384, %v2380
      %v2413 = vpack.c.b16 %v2389, %v2385
      %v2414 = vpack.c.b16 %v2390, %v2386
      %v2415 = vpack.c.b16 %v2391, %v2387
      %v2416 = vpack.c.b16 %v2392, %v2388
      %v2417 = vpack.c.b16 %v2393, %v2393
      %v2418 = vpack.c.b16 %v2394, %v2394
      %v2419 = vpack.c.b16 %v2395, %v2395
      %v2420 = vpack.c.b16 %v2396, %v2396
      %v2509 = vunpack.c.l.b16 %v2267
      %v2510 = vunpack.c.l.b16 %v2268
      %v2511 = vunpack.c.l.b16 %v2269
      %v2512 = vunpack.c.l.b16 %v2270
      %v2513 = vunpack.c.l.b16 %v2271
      %v2514 = vunpack.c.l.b16 %v2272
      %v2515 = vunpack.c.l.b16 %v2273
      %v2516 = vunpack.c.l.b16 %v2274
      %v2517 = vunpack.c.l.b16 %v2275
      %v2518 = vunpack.c.l.b16 %v2276
      %v2519 = vunpack.c.l.b16 %v2277
      %v2520 = vunpack.c.l.b16 %v2278
      %v2521 = vunpack.c.l.b16 %v2279
      %v2522 = vunpack.c.l.b16 %v2280
      %v2523 = vunpack.c.l.b16 %v2281
      %v2524 = vunpack.c.l.b16 %v2282
      %v2525 = vunpack.c.l.b16 %v2283
      %v2526 = vunpack.c.l.b16 %v2284
      %v2527 = vunpack.c.l.b16 %v2285
      %v2528 = vunpack.c.l.b16 %v2286
      %v2529 = vunpack.c.l.b16 %v2287
      %v2530 = vunpack.c.l.b16 %v2288
      %v2531 = vunpack.c.l.b16 %v2289
      %v2532 = vunpack.c.l.b16 %v2290
      %v2533 = vunpack.c.l.b16 %v2291
      %v2534 = vunpack.c.l.b16 %v2292
      %v2535 = vunpack.c.l.b16 %v2293
      %v2536 = vunpack.c.l.b16 %v2294
      %v2537 = vunpack.c.l.b16 %v2295
      %v2538 = vunpack.c.l.b16 %v2296
      %v2539 = vunpack.c.l.b16 %v2297
      %v2540 = vunpack.c.l.b16 %v2298
      %v2541 = vunpack.c.l.b16 %v2299
      %v2542 = vunpack.c.l.b16 %v2300
      %v2543 = vunpack.c.l.b16 %v2301
      %v2544 = vunpack.c.l.b16 %v2302
      %v2545 = vunpack.c.l.b16 %v2303
      %v2546 = vunpack.c.l.b16 %v2304
      %v2547 = vunpack.c.l.b16 %v2305
      %v2548 = vunpack.c.l.b16 %v2306
      %v2549 = vunpack.c.l.b16 %v2307
      %v2550 = vunpack.c.l.b16 %v2308
      %v2551 = vunpack.c.l.b16 %v2309
      %v2552 = vunpack.c.l.b16 %v2310
      %v2553 = vunpack.c.l.b16 %v2311
      %v2554 = vunpack.c.l.b16 %v2312
      %v2555 = vunpack.c.l.b16 %v2313
      %v2556 = vunpack.c.l.b16 %v2314
      %v2557 = vunpack.c.l.b16 %v2315
      %v2558 = vunpack.c.l.b16 %v2316
      %v2559 = vunpack.c.l.b16 %v2317
      %v2560 = vunpack.c.l.b16 %v2318
      %v2561 = vunpack.c.l.b16 %v2319
      %v2562 = vunpack.c.l.b16 %v2320
      %v2563 = vunpack.c.l.b16 %v2321
      %v2564 = vunpack.c.l.b16 %v2322
      %v2565 = vunpack.c.l.b16 %v2323
      %v2566 = vunpack.c.l.b16 %v2324
      %v2567 = vunpack.c.l.b16 %v2325
      %v2568 = vunpack.c.l.b16 %v2326
      %v2569 = vunpack.c.l.b16 %v2327
      %v2570 = vunpack.c.l.b16 %v2328
      %v2571 = vunpack.c.l.b16 %v2329
      %v2572 = vunpack.c.l.b16 %v2330
      %v2573 = vpack.c.b16 %v2510, %v2509
      %v2574 = vpack.c.b16 %v2512, %v2511
      %v2575 = vpack.c.b16 %v2514, %v2513
      %v2576 = vpack.c.b16 %v2516, %v2515
      %v2577 = vpack.c.b16 %v2518, %v2517
      %v2578 = vpack.c.b16 %v2520, %v2519
      %v2579 = vpack.c.b16 %v2522, %v2521
      %v2580 = vpack.c.b16 %v2524, %v2523
      %v2581 = vpack.c.b16 %v2526, %v2525
      %v2582 = vpack.c.b16 %v2528, %v2527
      %v2583 = vpack.c.b16 %v2530, %v2529
      %v2584 = vpack.c.b16 %v2532, %v2531
      %v2585 = vpack.c.b16 %v2534, %v2533
      %v2586 = vpack.c.b16 %v2536, %v2535
      %v2587 = vpack.c.b16 %v2538, %v2537
      %v2588 = vpack.c.b16 %v2540, %v2539
      %v2589 = vpack.c.b16 %v2542, %v2541
      %v2590 = vpack.c.b16 %v2544, %v2543
      %v2591 = vpack.c.b16 %v2546, %v2545
      %v2592 = vpack.c.b16 %v2548, %v2547
      %v2593 = vpack.c.b16 %v2550, %v2549
      %v2594 = vpack.c.b16 %v2552, %v2551
      %v2595 = vpack.c.b16 %v2554, %v2553
      %v2596 = vpack.c.b16 %v2556, %v2555
      %v2597 = vpack.c.b16 %v2558, %v2557
      %v2598 = vpack.c.b16 %v2560, %v2559
      %v2599 = vpack.c.b16 %v2562, %v2561
      %v2600 = vpack.c.b16 %v2564, %v2563
      %v2601 = vpack.c.b16 %v2566, %v2565
      %v2602 = vpack.c.b16 %v2568, %v2567
      %v2603 = vpack.c.b16 %v2570, %v2569
      %v2604 = vpack.c.b16 %v2572, %v2571
      %2637 = vmatprep.subr.bf16.mxu0 0
      %2638 = vmatpush1.bf16.msra.mxu0 %v2573
      %2639 = vmatprep.subr.bf16.mxu0 0
      %2640 = vmatpush1.bf16.msra.mxu0 %v2574
      %2641 = vmatprep.subr.bf16.mxu0 0
      %2642 = vmatpush1.bf16.msra.mxu0 %v2575
      %2643 = vmatprep.subr.bf16.mxu0 0
      %2644 = vmatpush1.bf16.msra.mxu0 %v2576
      %2645 = vmatprep.subr.bf16.mxu0 0
      %2646 = vmatpush1.bf16.msra.mxu0 %v2577
      %2647 = vmatprep.subr.bf16.mxu0 0
      %2648 = vmatpush1.bf16.msra.mxu0 %v2578
      %2649 = vmatprep.subr.bf16.mxu0 0
      %2650 = vmatpush1.bf16.msra.mxu0 %v2579
      %2651 = vmatprep.subr.bf16.mxu0 0
      %2652 = vmatpush1.bf16.msra.mxu0 %v2580
      %2653 = vmatprep.subr.bf16.mxu0 0
      %2654 = vmatpush1.bf16.msra.mxu0 %v2581
      %2655 = vmatprep.subr.bf16.mxu0 0
      %2656 = vmatpush1.bf16.msra.mxu0 %v2582
      %2657 = vmatprep.subr.bf16.mxu0 0
      %2658 = vmatpush1.bf16.msra.mxu0 %v2583
      %2659 = vmatprep.subr.bf16.mxu0 0
      %2660 = vmatpush1.bf16.msra.mxu0 %v2584
      %2661 = vmatprep.subr.bf16.mxu0 0
      %2662 = vmatpush1.bf16.msra.mxu0 %v2585
      %2663 = vmatprep.subr.bf16.mxu0 0
      %2664 = vmatpush1.bf16.msra.mxu0 %v2586
      %2665 = vmatprep.subr.bf16.mxu0 0
      %2666 = vmatpush1.bf16.msra.mxu0 %v2587
      %2667 = vmatprep.subr.bf16.mxu0 0
      %2668 = vmatpush1.bf16.msra.mxu0 %v2588
      %2669 = vmatprep.mubr.bf16.mxu0 %v2398
      %2670 = vmatmul.mubr.bf16.gmra.mrb[0].mxu0 %v2397
      %v2671 = vpop.f32.mrb[0].mxu0
      %v2672 = vadd.f32 0.0, %v2671
      %v2673 = vpop.f32.mrb[0].mxu0
      %v2674 = vpop.f32.mrb[0].mxu0
      %v2675 = vadd.f32 0.0, %v2674
      %v2676 = vpop.f32.mrb[0].mxu0
      %2677 = vmatprep.mubr.bf16.mxu0 %v2402
      %2678 = vmatmul.mubr.bf16.gmra.mrb[0].mxu0 %v2401
      %v2679 = vpop.f32.mrb[0].mxu0
      %v2680 = vadd.f32 0.0, %v2679
      %v2681 = vpop.f32.mrb[0].mxu0
      %v2682 = vpop.f32.mrb[0].mxu0
      %v2683 = vadd.f32 0.0, %v2682
      %v2684 = vpop.f32.mrb[0].mxu0
      %2685 = vmatprep.mubr.bf16.mxu0 %v2406
      %2686 = vmatmul.mubr.bf16.gmra.mrb[0].mxu0 %v2405
      %v2687 = vpop.f32.mrb[0].mxu0
      %v2688 = vadd.f32 0.0, %v2687
      %v2689 = vpop.f32.mrb[0].mxu0
      %v2690 = vpop.f32.mrb[0].mxu0
      %v2691 = vadd.f32 0.0, %v2690
      %v2692 = vpop.f32.mrb[0].mxu0
      %2693 = vmatprep.mubr.bf16.mxu0 %v2410
      %2694 = vmatmul.mubr.bf16.gmra.mrb[0].mxu0 %v2409
      %v2695 = vpop.f32.mrb[0].mxu0
      %v2696 = vadd.f32 0.0, %v2695
      %v2697 = vpop.f32.mrb[0].mxu0
      %v2698 = vpop.f32.mrb[0].mxu0
      %v2699 = vadd.f32 0.0, %v2698
      %v2700 = vpop.f32.mrb[0].mxu0
      %2701 = vmatprep.mubr.bf16.mxu0 %v2414
      %2702 = vmatmul.mubr.bf16.gmra.mrb[0].mxu0 %v2413
      %v2703 = vpop.f32.mrb[0].mxu0
      %v2704 = vadd.f32 0.0, %v2703
      %v2705 = vpop.f32.mrb[0].mxu0
      %v2706 = vpop.f32.mrb[0].mxu0
      %v2707 = vadd.f32 0.0, %v2706
      %v2708 = vpop.f32.mrb[0].mxu0
      %2709 = vmatprep.mubr.bf16.mxu0 %v2418
      %2710 = vmatmul.mubr.bf16.gmra.mrb[0].mxu0 %v2417
      %v2711 = vpop.f32.mrb[0].mxu0
      %v2712 = vadd.f32 0.0, %v2711
      %v2713 = vpop.f32.mrb[0].mxu0
      %v2714 = vpop.f32.mrb[0].mxu0
      %v2715 = vpop.f32.mrb[0].mxu0
      %2716 = vdwg.mxu0
      %2717 = vmatprep.subr.bf16.mxu0 0
      %2718 = vmatpush1.bf16.msra.mxu0 %v2589
      %2719 = vmatprep.subr.bf16.mxu0 0
      %2720 = vmatpush1.bf16.msra.mxu0 %v2590
      %2721 = vmatprep.subr.bf16.mxu0 0
      %2722 = vmatpush1.bf16.msra.mxu0 %v2591
      %2723 = vmatprep.subr.bf16.mxu0 0
      %2724 = vmatpush1.bf16.msra.mxu0 %v2592
      %2725 = vmatprep.subr.bf16.mxu0 0
      %2726 = vmatpush1.bf16.msra.mxu0 %v2593
      %2727 = vmatprep.subr.bf16.mxu0 0
      %2728 = vmatpush1.bf16.msra.mxu0 %v2594
      %2729 = vmatprep.subr.bf16.mxu0 0
      %2730 = vmatpush1.bf16.msra.mxu0 %v2595
      %2731 = vmatprep.subr.bf16.mxu0 0
      %2732 = vmatpush1.bf16.msra.mxu0 %v2596
      %2733 = vmatprep.subr.bf16.mxu0 0
      %2734 = vmatpush1.bf16.msra.mxu0 %v2597
      %2735 = vmatprep.subr.bf16.mxu0 0
      %2736 = vmatpush1.bf16.msra.mxu0 %v2598
      %2737 = vmatprep.subr.bf16.mxu0 0
      %2738 = vmatpush1.bf16.msra.mxu0 %v2599
      %2739 = vmatprep.subr.bf16.mxu0 0
      %2740 = vmatpush1.bf16.msra.mxu0 %v2600
      %2741 = vmatprep.subr.bf16.mxu0 0
      %2742 = vmatpush1.bf16.msra.mxu0 %v2601
      %2743 = vmatprep.subr.bf16.mxu0 0
      %2744 = vmatpush1.bf16.msra.mxu0 %v2602
      %2745 = vmatprep.subr.bf16.mxu0 0
      %2746 = vmatpush1.bf16.msra.mxu0 %v2603
      %2747 = vmatprep.subr.bf16.mxu0 0
      %2748 = vmatpush1.bf16.msra.mxu0 %v2604
      %2749 = vmatprep.mubr.bf16.mxu0 %v2400
      %2750 = vmatmul.mubr.bf16.gmra.mrb[0].mxu0 %v2399
      %v2751 = vpop.f32.mrb[0].mxu0
      %v2752 = vadd.f32 %v2672, %v2751
      %v2753 = vpop.f32.mrb[0].mxu0
      %v2754 = vpop.f32.mrb[0].mxu0
      %v2755 = vadd.f32 %v2675, %v2754
      %v2756 = vpop.f32.mrb[0].mxu0
      %2757 = vmatprep.mubr.bf16.mxu0 %v2404
      %2758 = vmatmul.mubr.bf16.gmra.mrb[0].mxu0 %v2403
      %v2759 = vpop.f32.mrb[0].mxu0
      %v2760 = vadd.f32 %v2680, %v2759
      %v2761 = vpop.f32.mrb[0].mxu0
      %v2762 = vpop.f32.mrb[0].mxu0
      %v2763 = vadd.f32 %v2683, %v2762
      %v2764 = vpop.f32.mrb[0].mxu0
      %2765 = vmatprep.mubr.bf16.mxu0 %v2408
      %2766 = vmatmul.mubr.bf16.gmra.mrb[0].mxu0 %v2407
      %v2767 = vpop.f32.mrb[0].mxu0
      %v2768 = vadd.f32 %v2688, %v2767
      %v2769 = vpop.f32.mrb[0].mxu0
      %v2770 = vpop.f32.mrb[0].mxu0
      %v2771 = vadd.f32 %v2691, %v2770
      %v2772 = vpop.f32.mrb[0].mxu0
      %2773 = vmatprep.mubr.bf16.mxu0 %v2412
      %2774 = vmatmul.mubr.bf16.gmra.mrb[0].mxu0 %v2411
      %v2775 = vpop.f32.mrb[0].mxu0
      %v2776 = vadd.f32 %v2696, %v2775
      %v2777 = vpop.f32.mrb[0].mxu0
      %v2778 = vpop.f32.mrb[0].mxu0
      %v2779 = vadd.f32 %v2699, %v2778
      %v2780 = vpop.f32.mrb[0].mxu0
      %2781 = vmatprep.mubr.bf16.mxu0 %v2416
      %2782 = vmatmul.mubr.bf16.gmra.mrb[0].mxu0 %v2415
      %v2783 = vpop.f32.mrb[0].mxu0
      %v2784 = vadd.f32 %v2704, %v2783
      %v2785 = vpop.f32.mrb[0].mxu0
      %v2786 = vpop.f32.mrb[0].mxu0
      %v2787 = vadd.f32 %v2707, %v2786
      %v2788 = vpop.f32.mrb[0].mxu0
      %2789 = vmatprep.mubr.bf16.mxu0 %v2420
      %2790 = vmatmul.mubr.bf16.gmra.mrb[0].mxu0 %v2419
      %v2791 = vpop.f32.mrb[0].mxu0
      %v2792 = vadd.f32 %v2712, %v2791
      %v2793 = vpop.f32.mrb[0].mxu0
      %v2794 = vpop.f32.mrb[0].mxu0
      %v2795 = vpop.f32.mrb[0].mxu0
      %2796 = vdwg.mxu0
      %v2797 = vpack.c.bf16 %v2755, %v2752
      %v2798 = vpack.c.bf16 %v2763, %v2760
      %v2799 = vpack.c.bf16 %v2771, %v2768
      %v2800 = vpack.c.bf16 %v2779, %v2776
      %v2801 = vpack.c.bf16 %v2787, %v2784
      %v2802 = vpack.c.bf16 %v2792, %v2792
      %v2809 = vunpack.c.l.b16 %v2797
      %v2810 = vunpack.c.h.b16 %v2797
      %v2811 = vunpack.c.l.b16 %v2798
      %v2812 = vunpack.c.h.b16 %v2798
      %v2813 = vunpack.c.l.b16 %v2799
      %v2814 = vunpack.c.h.b16 %v2799
      %v2815 = vunpack.c.l.b16 %v2800
      %v2816 = vunpack.c.h.b16 %v2800
      %v2817 = vunpack.c.l.b16 %v2801
      %v2818 = vunpack.c.h.b16 %v2801
      %v2819 = vunpack.c.l.b16 %v2802
      %v2820 = vpack.c.b16 %v2809, %v2809
      %v2821 = vpack.c.b16 %v2810, %v2810
      %v2822 = vpack.c.b16 %v2811, %v2811
      %v2823 = vpack.c.b16 %v2812, %v2812
      %v2824 = vpack.c.b16 %v2813, %v2813
      %v2825 = vpack.c.b16 %v2814, %v2814
      %v2826 = vpack.c.b16 %v2815, %v2815
      %v2827 = vpack.c.b16 %v2816, %v2816
      %v2828 = vpack.c.b16 %v2817, %v2817
      %v2829 = vpack.c.b16 %v2818, %v2818
      %v2830 = vpack.c.b16 %v2819, %v2819
      %vm2842 = vcmask 125952
      %2843 = vst.msk [vmem:[%s204] sm:$0xf] %vm2842, %v2820
      %2844 = vst.msk [vmem:[%s204 + $0x4] sm:$0xf] %vm2842, %v2821
      %2845 = vst.msk [vmem:[%s204 + $0x8] sm:$0xf] %vm2842, %v2822
      %2846 = vst.msk [vmem:[%s204 + $0xc] sm:$0xf] %vm2842, %v2823
      %2847 = vst.msk [vmem:[%s204 + $0x10] sm:$0xf] %vm2842, %v2824
      %2848 = vst.msk [vmem:[%s204 + $0x14] sm:$0xf] %vm2842, %v2825
      %2849 = vst.msk [vmem:[%s204 + $0x18] sm:$0xf] %vm2842, %v2826
      %2850 = vst.msk [vmem:[%s204 + $0x1c] sm:$0xf] %vm2842, %v2827
      %2851 = vst.msk [vmem:[%s204 + $0x20] sm:$0xf] %vm2842, %v2828
      %2852 = vst.msk [vmem:[%s204 + $0x24] sm:$0xf] %vm2842, %v2829
      %2853 = vst.msk [vmem:[%s204 + $0x28] sm:$0xf] %vm2842, %v2830
      %2855 = vset.pattern.permute.xlu0 0
      %2856 = vperm.xlu0 %2855, %v210
      %v2857 = vpop.permute.xlu0 %2856
      %2860 = vset.pattern.permute.xlu0 0
      %2861 = vperm.xlu0 %2860, %v211
      %v2862 = vpop.permute.xlu0 %2861
      %2865 = vset.pattern.permute.xlu0 0
      %2866 = vperm.xlu0 %2865, %v212
      %v2867 = vpop.permute.xlu0 %2866
      %2870 = vset.pattern.permute.xlu0 0
      %2871 = vperm.xlu0 %2870, %v213
      %v2872 = vpop.permute.xlu0 %2871
      %2875 = vset.pattern.permute.xlu0 0
      %2876 = vperm.xlu0 %2875, %v214
      %v2877 = vpop.permute.xlu0 %2876
      %2880 = vset.pattern.permute.xlu0 0
      %2881 = vperm.xlu0 %2880, %v215
      %v2882 = vpop.permute.xlu0 %2881
      %2885 = vset.pattern.permute.xlu0 0
      %2886 = vperm.xlu0 %2885, %v216
      %v2887 = vpop.permute.xlu0 %2886
      %2890 = vset.pattern.permute.xlu0 0
      %2891 = vperm.xlu0 %2890, %v217
      %v2892 = vpop.permute.xlu0 %2891
      %2895 = vset.pattern.permute.xlu0 0
      %2896 = vperm.xlu0 %2895, %v218
      %v2897 = vpop.permute.xlu0 %2896
      %2900 = vset.pattern.permute.xlu0 0
      %2901 = vperm.xlu0 %2900, %v219
      %v2902 = vpop.permute.xlu0 %2901
      %2905 = vset.pattern.permute.xlu0 0
      %2906 = vperm.xlu0 %2905, %v220
      %v2907 = vpop.permute.xlu0 %2906
      %v2909 = vmul.f32 %v2752, %v2857
      %v2910 = vmul.f32 %v2755, %v2862
      %v2911 = vmul.f32 %v2760, %v2867
      %v2912 = vmul.f32 %v2763, %v2872
      %v2913 = vmul.f32 %v2768, %v2877
      %v2914 = vmul.f32 %v2771, %v2882
      %v2915 = vmul.f32 %v2776, %v2887
      %v2916 = vmul.f32 %v2779, %v2892
      %v2917 = vmul.f32 %v2784, %v2897
      %v2918 = vmul.f32 %v2787, %v2902
      %v2919 = vmul.f32 %v2792, %v2907
      %vm2920 = vcmask 130048
      %v2921 = vsel %vm2920, %v2909, 0.0
      %v2922 = vsel %vm2920, %v2910, 0.0
      %v2923 = vadd.f32 %v2921, %v2922
      %v2924 = vsel %vm2920, %v2911, 0.0
      %v2925 = vadd.f32 %v2923, %v2924
      %v2926 = vsel %vm2920, %v2912, 0.0
      %v2927 = vadd.f32 %v2925, %v2926
      %v2928 = vsel %vm2920, %v2913, 0.0
      %v2929 = vadd.f32 %v2927, %v2928
      %v2930 = vsel %vm2920, %v2914, 0.0
      %v2931 = vadd.f32 %v2929, %v2930
      %v2932 = vsel %vm2920, %v2915, 0.0
      %v2933 = vadd.f32 %v2931, %v2932
      %v2934 = vsel %vm2920, %v2916, 0.0
      %v2935 = vadd.f32 %v2933, %v2934
      %v2936 = vsel %vm2920, %v2917, 0.0
      %v2937 = vadd.f32 %v2935, %v2936
      %v2938 = vsel %vm2920, %v2918, 0.0
      %v2939 = vadd.f32 %v2937, %v2938
      %v2940 = vsel %vm2920, %v2919, 0.0
      %v2941 = vadd.f32 %v2939, %v2940
      %v2942 = vrot.slane %v2941, 4
      %v2943 = vadd.f32 %v2941, %v2942
      %v2944 = vrot.slane %v2943, 2
      %v2945 = vadd.f32 %v2943, %v2944
      %v2946 = vrot.slane %v2945, 1
      %v2947 = vadd.f32 %v2945, %v2946
      %v2948 = vadd.f32 %v2947, 0.0
      %v2949 = vmul.f32 %v2752, %v2752
      %v2950 = vmul.f32 %v2755, %v2755
      %v2951 = vmul.f32 %v2760, %v2760
      %v2952 = vmul.f32 %v2763, %v2763
      %v2953 = vmul.f32 %v2768, %v2768
      %v2954 = vmul.f32 %v2771, %v2771
      %v2955 = vmul.f32 %v2776, %v2776
      %v2956 = vmul.f32 %v2779, %v2779
      %v2957 = vmul.f32 %v2784, %v2784
      %v2958 = vmul.f32 %v2787, %v2787
      %v2959 = vmul.f32 %v2792, %v2792
      %v2960 = vmul.f32 %v2949, %v2857
      %v2961 = vmul.f32 %v2950, %v2862
      %v2962 = vmul.f32 %v2951, %v2867
      %v2963 = vmul.f32 %v2952, %v2872
      %v2964 = vmul.f32 %v2953, %v2877
      %v2965 = vmul.f32 %v2954, %v2882
      %v2966 = vmul.f32 %v2955, %v2887
      %v2967 = vmul.f32 %v2956, %v2892
      %v2968 = vmul.f32 %v2957, %v2897
      %v2969 = vmul.f32 %v2958, %v2902
      %v2970 = vmul.f32 %v2959, %v2907
      %v2971 = vsel %vm2920, %v2960, 0.0
      %v2972 = vsel %vm2920, %v2961, 0.0
      %v2973 = vadd.f32 %v2971, %v2972
      %v2974 = vsel %vm2920, %v2962, 0.0
      %v2975 = vadd.f32 %v2973, %v2974
      %v2976 = vsel %vm2920, %v2963, 0.0
      %v2977 = vadd.f32 %v2975, %v2976
      %v2978 = vsel %vm2920, %v2964, 0.0
      %v2979 = vadd.f32 %v2977, %v2978
      %v2980 = vsel %vm2920, %v2965, 0.0
      %v2981 = vadd.f32 %v2979, %v2980
      %v2982 = vsel %vm2920, %v2966, 0.0
      %v2983 = vadd.f32 %v2981, %v2982
      %v2984 = vsel %vm2920, %v2967, 0.0
      %v2985 = vadd.f32 %v2983, %v2984
      %v2986 = vsel %vm2920, %v2968, 0.0
      %v2987 = vadd.f32 %v2985, %v2986
      %v2988 = vsel %vm2920, %v2969, 0.0
      %v2989 = vadd.f32 %v2987, %v2988
      %v2990 = vsel %vm2920, %v2970, 0.0
      %v2991 = vadd.f32 %v2989, %v2990
      %v2992 = vrot.slane %v2991, 4
      %v2993 = vadd.f32 %v2991, %v2992
      %v2994 = vrot.slane %v2993, 2
      %v2995 = vadd.f32 %v2993, %v2994
      %v2996 = vrot.slane %v2995, 1
      %v2997 = vadd.f32 %v2995, %v2996
      %v2998 = vadd.f32 %v2997, 0.0
      %vm2999 = vcmask 122880
      %3000 = vst.msk [vmem:[%s208] sm:$0x1] %vm2999, %v2948
      %3001 = vst.msk [vmem:[%s208 + $0x1] sm:$0x1] %vm2999, %v2998
      %p3002 = scmp.lt.s32.totalorder %s16, 1
      %s3003 = scalar_select %p3002, %s16, 1
      %s3004 = smul.addr %s3003, 11
      %s3005 = smul.addr %s3004, 4
      %s3006 = scalar_lea.vmem %s3, %s3005
      %p3007 = scmp.lt.s32.totalorder %s16, 1
      %s3008 = scalar_select %p3007, %s16, 1
      %s3009 = smul.addr %s3008, 2
      %s3010 = scalar_lea.vmem %s4, %s3009
      // Predicated region
      $region33: #{conv_generator_forward.9} parent=31 // pred_check
        %p3011 = pneg %p102
      $region34: #{conv_generator_forward.9} parent=31 // pred_check_branch
        %3013 = sbr.rel (%p3011) target = $region36
      $region35: #{conv_generator_forward.9} parent=31 // pred_region
        _
      $region36: #{conv_generator_forward.9} parent=31 // pred_fallthru
        _
      // Predicated region
      $region37: #{conv_generator_forward.9} parent=31 // pred_check
        %p3014 = pneg %p128
      $region38: #{conv_generator_forward.9} parent=31 // pred_check_branch
        %3016 = sbr.rel (%p3014) target = $region40
      $region39: #{conv_generator_forward.9} parent=31 // pred_region
        _
      $region40: #{conv_generator_forward.9} parent=31 // pred_fallthru
        _
    $region32: #{conv_generator_forward.9} parent=5 // pred_fallthru
      _
    %p3017 = scmp.le.s32.totalorder 2, %s11
    // Predicated region
    $region41: #{conv_generator_forward.9} parent=5 // pred_check
      %p3018 = pneg %p3017
    $region42: #{conv_generator_forward.9} parent=5 // pred_check_branch
      %3020 = sbr.rel (%p3018) target = $region44
    $region43: #{conv_generator_forward.9} parent=5 // pred_region
      %s3021 = ssub.s32 %s11, 2
      // Predicated region
      $region45: #{conv_generator_forward.9} parent=43 // pred_check
        %p3022 = pneg %p108
      $region46: #{conv_generator_forward.9} parent=43 // pred_check_branch
        %3024 = sbr.rel (%p3022) target = $region48
      $region47: #{conv_generator_forward.9} parent=43 // pred_region
        %p3025 = scmp.lt.s32.totalorder %s17, 1
        %s3026 = scalar_select %p3025, %s17, 1
        %s3027 = smul.addr %s3026, 11
        %s3028 = smul.addr %s3027, 4
        %s3029 = scalar_lea.vmem %s3, %s3028
      $region48: #{conv_generator_forward.9} parent=43 // pred_fallthru
        _
      // Predicated region
      $region49: #{conv_generator_forward.9} parent=43 // pred_check
        %p3030 = pneg %p134
      $region50: #{conv_generator_forward.9} parent=43 // pred_check_branch
        %3032 = sbr.rel (%p3030) target = $region52
      $region51: #{conv_generator_forward.9} parent=43 // pred_region
        %p3033 = scmp.lt.s32.totalorder %s17, 1
        %s3034 = scalar_select %p3033, %s17, 1
        %s3035 = smul.addr %s3034, 2
        %s3036 = scalar_lea.vmem %s4, %s3035
      $region52: #{conv_generator_forward.9} parent=43 // pred_fallthru
        _
    $region44: #{conv_generator_forward.9} parent=5 // pred_fallthru
      _
  $region6: #{conv_generator_forward.9} parent=0 // loop_footer
    %s15 = sadd.s32 1, %s11
  $region7: #{conv_generator_forward.9} parent=0 // loop_footer_branch
    %10 = sbr.rel target = $region3
  $region8: #{conv_generator_forward.9} parent=0 // loop_exit
    _

// kernel: conv_generator_forward.13
$region0: #{conv_generator_forward.13}
  #allocation0 [shape = 'u32[]', space=smem, size = 0x4, offset = 0x4, fixed_abs, tag = 'smem constant byte address 0x4 - core index']
  #allocation1 [shape = 'u32[144,128]{1,0:T(1,128)}', space=vmem, size = 0x12000, scoped, tag = 'internal scratch']
  %s0 = inlined_call_operand.vmem [shape: bf16[2,8,1122], index: 0, kind: input, shape index: {}]
  %s1 = inlined_call_operand.vmem [shape: f32[9,8,1], index: 1, kind: input, shape index: {}]
  %s2 = inlined_call_operand.vmem [shape: f32[2,1,1023], index: 2, kind: output, shape index: {}]
  %s3 = sld [smem:[#allocation0]]
  $region41: #{conv_generator_forward.13} parent=0
    _
  %s5 = ssub.s32 1, %s3
  %s6 = scalar_select 0, %s5, %s3
  loop: start=0, step=1, limit=4
  $region2: #{conv_generator_forward.13} parent=0 // loop_pre_header
    _
  $region3: #{conv_generator_forward.13} parent=0 // loop_header
    %s8 = sphi 0, %s12
    %p9 = scmp.ge.s32.totalorder %s8, 4
    %s18 = sphi 0, %s20
    %s21 = sphi 0, %s18
    %s22 = sphi 0, %s21
    %s38 = sphi 0, %s22
    %s42 = sphi 0, %s42
    %s44 = sphi 0, %s42
    %s45 = sphi 0, %s44
    %s59 = sphi 0, %s45
    %s65 = sphi 0, %s67
    %s68 = sphi 0, %s65
    %s69 = sphi 0, %s68
    %s85 = sphi 0, %s69
  $region4: #{conv_generator_forward.13} parent=0 // loop_header_branch
    %11 = sbr.rel (%p9) target = $region8
  $region5: #{conv_generator_forward.13} parent=0 // loop_body
    %s13 = ssub.s32 %s8, 1
    %s14 = ssub.s32 %s8, 2
    %s15 = sadd.s32 %s8, 1
    %s16 = ssub.s32 %s8, %s15
    %p17 = scmp.eq.s32.totalorder %s16, 0
    %s19 = sadd.s32 %s18, 1
    %s20 = scalar_select %p17, %s18, %s19
    %p23 = pneg %p17
    %p24 = scmp.eq.s32.totalorder %s8, 1
    %p25 = por %p23, %p24
    %p26 = scmp.ne.s32.totalorder %s18, %s21
    %p27 = scmp.eq.s32.totalorder %s8, 0
    %p28 = por %p26, %p27
    %p29 = scmp.ne.s32.totalorder %s18, %s21
    %p30 = scmp.eq.s32.totalorder %s13, 1
    %p31 = por %p29, %p30
    %p32 = scmp.ne.s32.totalorder %s21, %s22
    %p33 = scmp.eq.s32.totalorder %s13, 0
    %p34 = por %p32, %p33
    %p35 = scmp.ne.s32.totalorder %s21, %s22
    %p36 = scmp.eq.s32.totalorder %s14, 1
    %p37 = por %p35, %p36
    %p39 = scmp.ne.s32.totalorder %s22, %s38
    %p40 = scmp.eq.s32.totalorder %s14, 0
    %p41 = por %p39, %p40
    %s43 = sadd.s32 %s42, 1
    %p46 = scmp.eq.s32.totalorder %s8, 1
    %p47 = scmp.ne.s32.totalorder %s42, %s44
    %p48 = scmp.eq.s32.totalorder %s8, 0
    %p49 = por %p47, %p48
    %p50 = scmp.ne.s32.totalorder %s42, %s44
    %p51 = scmp.eq.s32.totalorder %s13, 1
    %p52 = por %p50, %p51
    %p53 = scmp.ne.s32.totalorder %s44, %s45
    %p54 = scmp.eq.s32.totalorder %s13, 0
    %p55 = por %p53, %p54
    %p56 = scmp.ne.s32.totalorder %s44, %s45
    %p57 = scmp.eq.s32.totalorder %s14, 1
    %p58 = por %p56, %p57
    %p60 = scmp.ne.s32.totalorder %s45, %s59
    %p61 = scmp.eq.s32.totalorder %s14, 0
    %p62 = por %p60, %p61
    %s63 = ssub.s32 %s8, %s15
    %p64 = scmp.eq.s32.totalorder %s63, 0
    %s66 = sadd.s32 %s65, 1
    %s67 = scalar_select %p64, %s65, %s66
    %p70 = pneg %p64
    %p71 = scmp.eq.s32.totalorder %s8, 1
    %p72 = por %p70, %p71
    %p73 = scmp.ne.s32.totalorder %s65, %s68
    %p74 = scmp.eq.s32.totalorder %s8, 0
    %p75 = por %p73, %p74
    %p76 = scmp.ne.s32.totalorder %s65, %s68
    %p77 = scmp.eq.s32.totalorder %s13, 1
    %p78 = por %p76, %p77
    %p79 = scmp.ne.s32.totalorder %s68, %s69
    %p80 = scmp.eq.s32.totalorder %s13, 0
    %p81 = por %p79, %p80
    %p82 = scmp.ne.s32.totalorder %s68, %s69
    %p83 = scmp.eq.s32.totalorder %s14, 1
    %p84 = por %p82, %p83
    %p86 = scmp.ne.s32.totalorder %s69, %s85
    %p87 = scmp.eq.s32.totalorder %s14, 0
    %p88 = por %p86, %p87
    %p89 = scmp.le.s32.totalorder 1, %s8
    %p90 = scmp.lt.s32.totalorder %s8, 3
    %p91 = pnand %p89, %p90
    %p92 = pneg %p91
    // Predicated region
    $region9: #{conv_generator_forward.13} parent=5 // pred_check
      _
    $region10: #{conv_generator_forward.13} parent=5 // pred_check_branch
      %94 = sbr.rel (%p91) target = $region12
    $region11: #{conv_generator_forward.13} parent=5 // pred_region
      %s95 = ssub.s32 %s8, 1
      // Predicated region
      $region13: #{conv_generator_forward.13} parent=11 // pred_check
        %p96 = pneg %p55
      $region14: #{conv_generator_forward.13} parent=11 // pred_check_branch
        %98 = sbr.rel (%p96) target = $region16
      $region15: #{conv_generator_forward.13} parent=11 // pred_region
        _
      $region16: #{conv_generator_forward.13} parent=11 // pred_fallthru
        _
    $region12: #{conv_generator_forward.13} parent=5 // pred_fallthru
      _
    %p99 = scmp.lt.s32.totalorder %s8, 2
    // Predicated region
    $region17: #{conv_generator_forward.13} parent=5 // pred_check
      %p100 = pneg %p99
    $region18: #{conv_generator_forward.13} parent=5 // pred_check_branch
      %102 = sbr.rel (%p100) target = $region20
    $region19: #{conv_generator_forward.13} parent=5 // pred_region
      // Predicated region
      $region21: #{conv_generator_forward.13} parent=19 // pred_check
        %p103 = pneg %p28
      $region22: #{conv_generator_forward.13} parent=19 // pred_check_branch
        %105 = sbr.rel (%p103) target = $region24
      $region23: #{conv_generator_forward.13} parent=19 // pred_region
        %p106 = scmp.lt.s32.totalorder %s8, 1
        %s107 = scalar_select %p106, %s8, 1
        %s108 = smul.addr %s107, 9
        %s109 = smul.addr %s108, 4
        %s110 = scalar_lea.vmem %s0, %s109
      $region24: #{conv_generator_forward.13} parent=19 // pred_fallthru
        _
    $region20: #{conv_generator_forward.13} parent=5 // pred_fallthru
      _
    %p111 = scmp.le.s32.totalorder 1, %s8
    %p112 = scmp.lt.s32.totalorder %s8, 3
    %p113 = pnand %p111, %p112
    %p114 = pneg %p113
    // Predicated region
    $region25: #{conv_generator_forward.13} parent=5 // pred_check
      _
    $region26: #{conv_generator_forward.13} parent=5 // pred_check_branch
      %116 = sbr.rel (%p113) target = $region28
    $region27: #{conv_generator_forward.13} parent=5 // pred_region
      %s117 = ssub.s32 %s8, 1
      %p118 = scmp.lt.s32.totalorder %s13, 1
      %s119 = scalar_select %p118, %s13, 1
      %s120 = smul.addr %s119, 9
      %s121 = smul.addr %s120, 4
      %s122 = scalar_lea.vmem %s0, %s121
      %p123 = pneg %p34
      %p124 = pneg %p31
      %p125 = pneg %p55
      %p126 = pneg %p52
      %p127 = pneg %p81
      %p128 = pneg %p78
      %p129 = scmp.lt.s32.totalorder %s13, 1
      %s130 = scalar_select %p129, %s13, 1
      %s131 = smul.addr %s130, 8
      %s132 = scalar_lea.vmem %s2, %s131
      %p133 = scmp.lt.s32.totalorder %s13, 1
      %s134 = scalar_select %p133, %s13, 1
      %s135 = smul.addr %s134, 9
      %s136 = smul.addr %s135, 4
      %s137 = scalar_lea.vmem %s0, %s136
      %p138 = scmp.lt.s32.totalorder %s13, 1
      %s139 = scalar_select %p138, %s13, 1
      %s140 = smul.addr %s139, 8
      %s141 = scalar_lea.vmem %s2, %s140
      %v142 = vld [vmem:[%s137] sm:$0xff]
      %v143 = vld [vmem:[%s137 + $0x8] sm:$0xff]
      %v144 = vld [vmem:[%s137 + $0x10] sm:$0xff]
      %v145 = vld [vmem:[%s137 + $0x18] sm:$0xff]
      %v146 = vld [vmem:[%s137 + $0x20] sm:$0xf]
      %v147 = vunpack.c.l.bf16 %v142
      %v148 = vunpack.c.h.bf16 %v142
      %v149 = vunpack.c.l.bf16 %v143
      %v150 = vunpack.c.h.bf16 %v143
      %v151 = vunpack.c.l.bf16 %v144
      %v152 = vunpack.c.h.bf16 %v144
      %v153 = vunpack.c.l.bf16 %v145
      %v154 = vunpack.c.h.bf16 %v145
      %v155 = vunpack.c.l.bf16 %v146
      %v156 = vld [vmem:[%s1] sm:$0xff]
      %158 = vset.pattern.permute.xlu0 0
      %159 = vperm.xlu0 %158, %v156
      %v160 = vpop.permute.xlu0 %159
      %v162 = vmul.f32 %v147, %v160
      %v163 = vmul.f32 %v148, %v160
      %v164 = vmul.f32 %v149, %v160
      %v165 = vmul.f32 %v150, %v160
      %v166 = vmul.f32 %v151, %v160
      %v167 = vmul.f32 %v152, %v160
      %v168 = vmul.f32 %v153, %v160
      %v169 = vmul.f32 %v154, %v160
      %v170 = vadd.f32 %v162, 0.0
      %v171 = vadd.f32 %v163, 0.0
      %v172 = vadd.f32 %v164, 0.0
      %v173 = vadd.f32 %v165, 0.0
      %v174 = vadd.f32 %v166, 0.0
      %v175 = vadd.f32 %v167, 0.0
      %v176 = vadd.f32 %v168, 0.0
      %v177 = vadd.f32 %v169, 0.0
      %s178 = scalar_lea.vmem %s1, 8
      %v179 = vld [vmem:[%s178] sm:$0xff]
      %181 = vset.pattern.permute.xlu0 0
      %182 = vperm.xlu0 %181, %v179
      %v183 = vpop.permute.xlu0 %182
      %v185 = vmul.f32 %v147, %v183
      %v186 = vmul.f32 %v148, %v183
      %v187 = vmul.f32 %v149, %v183
      %v188 = vmul.f32 %v150, %v183
      %v189 = vmul.f32 %v151, %v183
      %v190 = vmul.f32 %v152, %v183
      %v191 = vmul.f32 %v153, %v183
      %v192 = vmul.f32 %v154, %v183
      %201 = vrot.lane.b32.xlu0 %v185, 127
      %v202 = vpop.permute.xlu0 %201
      %203 = vrot.lane.b32.xlu0 %v186, 127
      %v204 = vpop.permute.xlu0 %203
      %205 = vrot.lane.b32.xlu0 %v187, 127
      %v206 = vpop.permute.xlu0 %205
      %207 = vrot.lane.b32.xlu0 %v188, 127
      %v208 = vpop.permute.xlu0 %207
      %209 = vrot.lane.b32.xlu0 %v189, 127
      %v210 = vpop.permute.xlu0 %209
      %211 = vrot.lane.b32.xlu0 %v190, 127
      %v212 = vpop.permute.xlu0 %211
      %213 = vrot.lane.b32.xlu0 %v191, 127
      %v214 = vpop.permute.xlu0 %213
      %215 = vrot.lane.b32.xlu0 %v192, 127
      %v216 = vpop.permute.xlu0 %215
      %vm217 = vcmask 1039360
      %v218 = vsel %vm217, %v202, %v204
      %v219 = vsel %vm217, %v204, %v206
      %v220 = vsel %vm217, %v206, %v208
      %v221 = vsel %vm217, %v208, %v210
      %v222 = vsel %vm217, %v210, %v212
      %v223 = vsel %vm217, %v212, %v214
      %v224 = vsel %vm217, %v214, %v216
      %v233 = vadd.f32 %v170, %v218
      %v234 = vadd.f32 %v171, %v219
      %v235 = vadd.f32 %v172, %v220
      %v236 = vadd.f32 %v173, %v221
      %v237 = vadd.f32 %v174, %v222
      %v238 = vadd.f32 %v175, %v223
      %v239 = vadd.f32 %v176, %v224
      %v240 = vadd.f32 %v177, %v216
      %s241 = scalar_lea.vmem %s1, 16
      %v242 = vld [vmem:[%s241] sm:$0xff]
      %244 = vset.pattern.permute.xlu0 0
      %245 = vperm.xlu0 %244, %v242
      %v246 = vpop.permute.xlu0 %245
      %v248 = vmul.f32 %v147, %v246
      %v249 = vmul.f32 %v148, %v246
      %v250 = vmul.f32 %v149, %v246
      %v251 = vmul.f32 %v150, %v246
      %v252 = vmul.f32 %v151, %v246
      %v253 = vmul.f32 %v152, %v246
      %v254 = vmul.f32 %v153, %v246
      %v255 = vmul.f32 %v154, %v246
      %v256 = vmul.f32 %v155, %v246
      %266 = vrot.lane.b32.xlu0 %v248, 126
      %v267 = vpop.permute.xlu0 %266
      %268 = vrot.lane.b32.xlu0 %v249, 126
      %v269 = vpop.permute.xlu0 %268
      %270 = vrot.lane.b32.xlu0 %v250, 126
      %v271 = vpop.permute.xlu0 %270
      %272 = vrot.lane.b32.xlu0 %v251, 126
      %v273 = vpop.permute.xlu0 %272
      %274 = vrot.lane.b32.xlu0 %v252, 126
      %v275 = vpop.permute.xlu0 %274
      %276 = vrot.lane.b32.xlu0 %v253, 126
      %v277 = vpop.permute.xlu0 %276
      %278 = vrot.lane.b32.xlu0 %v254, 126
      %v279 = vpop.permute.xlu0 %278
      %280 = vrot.lane.b32.xlu0 %v255, 126
      %v281 = vpop.permute.xlu0 %280
      %282 = vrot.lane.b32.xlu0 %v256, 126
      %v283 = vpop.permute.xlu0 %282
      %vm284 = vcmask 1031168
      %v285 = vsel %vm284, %v267, %v269
      %v286 = vsel %vm284, %v269, %v271
      %v287 = vsel %vm284, %v271, %v273
      %v288 = vsel %vm284, %v273, %v275
      %v289 = vsel %vm284, %v275, %v277
      %v290 = vsel %vm284, %v277, %v279
      %v291 = vsel %vm284, %v279, %v281
      %v292 = vsel %vm284, %v281, %v283
      %v301 = vadd.f32 %v233, %v285
      %v302 = vadd.f32 %v234, %v286
      %v303 = vadd.f32 %v235, %v287
      %v304 = vadd.f32 %v236, %v288
      %v305 = vadd.f32 %v237, %v289
      %v306 = vadd.f32 %v238, %v290
      %v307 = vadd.f32 %v239, %v291
      %v308 = vadd.f32 %v240, %v292
      %s309 = scalar_lea.vmem %s1, 24
      %v310 = vld [vmem:[%s309] sm:$0xff]
      %312 = vset.pattern.permute.xlu0 0
      %313 = vperm.xlu0 %312, %v310
      %v314 = vpop.permute.xlu0 %313
      %v316 = vmul.f32 %v147, %v314
      %v317 = vmul.f32 %v148, %v314
      %v318 = vmul.f32 %v149, %v314
      %v319 = vmul.f32 %v150, %v314
      %v320 = vmul.f32 %v151, %v314
      %v321 = vmul.f32 %v152, %v314
      %v322 = vmul.f32 %v153, %v314
      %v323 = vmul.f32 %v154, %v314
      %v324 = vmul.f32 %v155, %v314
      %334 = vrot.lane.b32.xlu0 %v316, 95
      %v335 = vpop.permute.xlu0 %334
      %336 = vrot.lane.b32.xlu0 %v317, 95
      %v337 = vpop.permute.xlu0 %336
      %338 = vrot.lane.b32.xlu0 %v318, 95
      %v339 = vpop.permute.xlu0 %338
      %340 = vrot.lane.b32.xlu0 %v319, 95
      %v341 = vpop.permute.xlu0 %340
      %342 = vrot.lane.b32.xlu0 %v320, 95
      %v343 = vpop.permute.xlu0 %342
      %344 = vrot.lane.b32.xlu0 %v321, 95
      %v345 = vpop.permute.xlu0 %344
      %346 = vrot.lane.b32.xlu0 %v322, 95
      %v347 = vpop.permute.xlu0 %346
      %348 = vrot.lane.b32.xlu0 %v323, 95
      %v349 = vpop.permute.xlu0 %348
      %350 = vrot.lane.b32.xlu0 %v324, 95
      %v351 = vpop.permute.xlu0 %350
      %vm352 = vcmask 777216
      %v353 = vsel %vm352, %v335, %v337
      %v354 = vsel %vm352, %v337, %v339
      %v355 = vsel %vm352, %v339, %v341
      %v356 = vsel %vm352, %v341, %v343
      %v357 = vsel %vm352, %v343, %v345
      %v358 = vsel %vm352, %v345, %v347
      %v359 = vsel %vm352, %v347, %v349
      %v360 = vsel %vm352, %v349, %v351
      %v369 = vadd.f32 %v301, %v353
      %v370 = vadd.f32 %v302, %v354
      %v371 = vadd.f32 %v303, %v355
      %v372 = vadd.f32 %v304, %v356
      %v373 = vadd.f32 %v305, %v357
      %v374 = vadd.f32 %v306, %v358
      %v375 = vadd.f32 %v307, %v359
      %v376 = vadd.f32 %v308, %v360
      %s377 = scalar_lea.vmem %s1, 32
      %v378 = vld [vmem:[%s377] sm:$0xff]
      %380 = vset.pattern.permute.xlu0 0
      %381 = vperm.xlu0 %380, %v378
      %v382 = vpop.permute.xlu0 %381
      %v384 = vmul.f32 %v147, %v382
      %v385 = vmul.f32 %v148, %v382
      %v386 = vmul.f32 %v149, %v382
      %v387 = vmul.f32 %v150, %v382
      %v388 = vmul.f32 %v151, %v382
      %v389 = vmul.f32 %v152, %v382
      %v390 = vmul.f32 %v153, %v382
      %v391 = vmul.f32 %v154, %v382
      %v392 = vmul.f32 %v155, %v382
      %402 = vrot.lane.b32.xlu0 %v384, 94
      %v403 = vpop.permute.xlu0 %402
      %404 = vrot.lane.b32.xlu0 %v385, 94
      %v405 = vpop.permute.xlu0 %404
      %406 = vrot.lane.b32.xlu0 %v386, 94
      %v407 = vpop.permute.xlu0 %406
      %408 = vrot.lane.b32.xlu0 %v387, 94
      %v409 = vpop.permute.xlu0 %408
      %410 = vrot.lane.b32.xlu0 %v388, 94
      %v411 = vpop.permute.xlu0 %410
      %412 = vrot.lane.b32.xlu0 %v389, 94
      %v413 = vpop.permute.xlu0 %412
      %414 = vrot.lane.b32.xlu0 %v390, 94
      %v415 = vpop.permute.xlu0 %414
      %416 = vrot.lane.b32.xlu0 %v391, 94
      %v417 = vpop.permute.xlu0 %416
      %418 = vrot.lane.b32.xlu0 %v392, 94
      %v419 = vpop.permute.xlu0 %418
      %vm420 = vcmask 769024
      %v421 = vsel %vm420, %v403, %v405
      %v422 = vsel %vm420, %v405, %v407
      %v423 = vsel %vm420, %v407, %v409
      %v424 = vsel %vm420, %v409, %v411
      %v425 = vsel %vm420, %v411, %v413
      %v426 = vsel %vm420, %v413, %v415
      %v427 = vsel %vm420, %v415, %v417
      %v428 = vsel %vm420, %v417, %v419
      %v437 = vadd.f32 %v369, %v421
      %v438 = vadd.f32 %v370, %v422
      %v439 = vadd.f32 %v371, %v423
      %v440 = vadd.f32 %v372, %v424
      %v441 = vadd.f32 %v373, %v425
      %v442 = vadd.f32 %v374, %v426
      %v443 = vadd.f32 %v375, %v427
      %v444 = vadd.f32 %v376, %v428
      %s445 = scalar_lea.vmem %s1, 40
      %v446 = vld [vmem:[%s445] sm:$0xff]
      %448 = vset.pattern.permute.xlu0 0
      %449 = vperm.xlu0 %448, %v446
      %v450 = vpop.permute.xlu0 %449
      %v452 = vmul.f32 %v147, %v450
      %v453 = vmul.f32 %v148, %v450
      %v454 = vmul.f32 %v149, %v450
      %v455 = vmul.f32 %v150, %v450
      %v456 = vmul.f32 %v151, %v450
      %v457 = vmul.f32 %v152, %v450
      %v458 = vmul.f32 %v153, %v450
      %v459 = vmul.f32 %v154, %v450
      %v460 = vmul.f32 %v155, %v450
      %470 = vrot.lane.b32.xlu0 %v452, 93
      %v471 = vpop.permute.xlu0 %470
      %472 = vrot.lane.b32.xlu0 %v453, 93
      %v473 = vpop.permute.xlu0 %472
      %474 = vrot.lane.b32.xlu0 %v454, 93
      %v475 = vpop.permute.xlu0 %474
      %476 = vrot.lane.b32.xlu0 %v455, 93
      %v477 = vpop.permute.xlu0 %476
      %478 = vrot.lane.b32.xlu0 %v456, 93
      %v479 = vpop.permute.xlu0 %478
      %480 = vrot.lane.b32.xlu0 %v457, 93
      %v481 = vpop.permute.xlu0 %480
      %482 = vrot.lane.b32.xlu0 %v458, 93
      %v483 = vpop.permute.xlu0 %482
      %484 = vrot.lane.b32.xlu0 %v459, 93
      %v485 = vpop.permute.xlu0 %484
      %486 = vrot.lane.b32.xlu0 %v460, 93
      %v487 = vpop.permute.xlu0 %486
      %vm488 = vcmask 760832
      %v489 = vsel %vm488, %v471, %v473
      %v490 = vsel %vm488, %v473, %v475
      %v491 = vsel %vm488, %v475, %v477
      %v492 = vsel %vm488, %v477, %v479
      %v493 = vsel %vm488, %v479, %v481
      %v494 = vsel %vm488, %v481, %v483
      %v495 = vsel %vm488, %v483, %v485
      %v496 = vsel %vm488, %v485, %v487
      %v505 = vadd.f32 %v437, %v489
      %v506 = vadd.f32 %v438, %v490
      %v507 = vadd.f32 %v439, %v491
      %v508 = vadd.f32 %v440, %v492
      %v509 = vadd.f32 %v441, %v493
      %v510 = vadd.f32 %v442, %v494
      %v511 = vadd.f32 %v443, %v495
      %v512 = vadd.f32 %v444, %v496
      %s513 = scalar_lea.vmem %s1, 48
      %v514 = vld [vmem:[%s513] sm:$0xff]
      %516 = vset.pattern.permute.xlu0 0
      %517 = vperm.xlu0 %516, %v514
      %v518 = vpop.permute.xlu0 %517
      %v520 = vmul.f32 %v147, %v518
      %v521 = vmul.f32 %v148, %v518
      %v522 = vmul.f32 %v149, %v518
      %v523 = vmul.f32 %v150, %v518
      %v524 = vmul.f32 %v151, %v518
      %v525 = vmul.f32 %v152, %v518
      %v526 = vmul.f32 %v153, %v518
      %v527 = vmul.f32 %v154, %v518
      %v528 = vmul.f32 %v155, %v518
      %538 = vrot.lane.b32.xlu0 %v520, 62
      %v539 = vpop.permute.xlu0 %538
      %540 = vrot.lane.b32.xlu0 %v521, 62
      %v541 = vpop.permute.xlu0 %540
      %542 = vrot.lane.b32.xlu0 %v522, 62
      %v543 = vpop.permute.xlu0 %542
      %544 = vrot.lane.b32.xlu0 %v523, 62
      %v545 = vpop.permute.xlu0 %544
      %546 = vrot.lane.b32.xlu0 %v524, 62
      %v547 = vpop.permute.xlu0 %546
      %548 = vrot.lane.b32.xlu0 %v525, 62
      %v549 = vpop.permute.xlu0 %548
      %550 = vrot.lane.b32.xlu0 %v526, 62
      %v551 = vpop.permute.xlu0 %550
      %552 = vrot.lane.b32.xlu0 %v527, 62
      %v553 = vpop.permute.xlu0 %552
      %554 = vrot.lane.b32.xlu0 %v528, 62
      %v555 = vpop.permute.xlu0 %554
      %vm556 = vcmask 506880
      %v557 = vsel %vm556, %v539, %v541
      %v558 = vsel %vm556, %v541, %v543
      %v559 = vsel %vm556, %v543, %v545
      %v560 = vsel %vm556, %v545, %v547
      %v561 = vsel %vm556, %v547, %v549
      %v562 = vsel %vm556, %v549, %v551
      %v563 = vsel %vm556, %v551, %v553
      %v564 = vsel %vm556, %v553, %v555
      %v573 = vadd.f32 %v505, %v557
      %v574 = vadd.f32 %v506, %v558
      %v575 = vadd.f32 %v507, %v559
      %v576 = vadd.f32 %v508, %v560
      %v577 = vadd.f32 %v509, %v561
      %v578 = vadd.f32 %v510, %v562
      %v579 = vadd.f32 %v511, %v563
      %v580 = vadd.f32 %v512, %v564
      %s581 = scalar_lea.vmem %s1, 56
      %v582 = vld [vmem:[%s581] sm:$0xff]
      %584 = vset.pattern.permute.xlu0 0
      %585 = vperm.xlu0 %584, %v582
      %v586 = vpop.permute.xlu0 %585
      %v588 = vmul.f32 %v147, %v586
      %v589 = vmul.f32 %v148, %v586
      %v590 = vmul.f32 %v149, %v586
      %v591 = vmul.f32 %v150, %v586
      %v592 = vmul.f32 %v151, %v586
      %v593 = vmul.f32 %v152, %v586
      %v594 = vmul.f32 %v153, %v586
      %v595 = vmul.f32 %v154, %v586
      %v596 = vmul.f32 %v155, %v586
      %606 = vrot.lane.b32.xlu0 %v588, 61
      %v607 = vpop.permute.xlu0 %606
      %608 = vrot.lane.b32.xlu0 %v589, 61
      %v609 = vpop.permute.xlu0 %608
      %610 = vrot.lane.b32.xlu0 %v590, 61
      %v611 = vpop.permute.xlu0 %610
      %612 = vrot.lane.b32.xlu0 %v591, 61
      %v613 = vpop.permute.xlu0 %612
      %614 = vrot.lane.b32.xlu0 %v592, 61
      %v615 = vpop.permute.xlu0 %614
      %616 = vrot.lane.b32.xlu0 %v593, 61
      %v617 = vpop.permute.xlu0 %616
      %618 = vrot.lane.b32.xlu0 %v594, 61
      %v619 = vpop.permute.xlu0 %618
      %620 = vrot.lane.b32.xlu0 %v595, 61
      %v621 = vpop.permute.xlu0 %620
      %622 = vrot.lane.b32.xlu0 %v596, 61
      %v623 = vpop.permute.xlu0 %622
      %vm624 = vcmask 498688
      %v625 = vsel %vm624, %v607, %v609
      %v626 = vsel %vm624, %v609, %v611
      %v627 = vsel %vm624, %v611, %v613
      %v628 = vsel %vm624, %v613, %v615
      %v629 = vsel %vm624, %v615, %v617
      %v630 = vsel %vm624, %v617, %v619
      %v631 = vsel %vm624, %v619, %v621
      %v632 = vsel %vm624, %v621, %v623
      %v641 = vadd.f32 %v573, %v625
      %v642 = vadd.f32 %v574, %v626
      %v643 = vadd.f32 %v575, %v627
      %v644 = vadd.f32 %v576, %v628
      %v645 = vadd.f32 %v577, %v629
      %v646 = vadd.f32 %v578, %v630
      %v647 = vadd.f32 %v579, %v631
      %v648 = vadd.f32 %v580, %v632
      %s649 = scalar_lea.vmem %s1, 64
      %v650 = vld [vmem:[%s649] sm:$0xff]
      %652 = vset.pattern.permute.xlu0 0
      %653 = vperm.xlu0 %652, %v650
      %v654 = vpop.permute.xlu0 %653
      %v656 = vmul.f32 %v147, %v654
      %v657 = vmul.f32 %v148, %v654
      %v658 = vmul.f32 %v149, %v654
      %v659 = vmul.f32 %v150, %v654
      %v660 = vmul.f32 %v151, %v654
      %v661 = vmul.f32 %v152, %v654
      %v662 = vmul.f32 %v153, %v654
      %v663 = vmul.f32 %v154, %v654
      %v664 = vmul.f32 %v155, %v654
      %674 = vrot.lane.b32.xlu0 %v656, 60
      %v675 = vpop.permute.xlu0 %674
      %676 = vrot.lane.b32.xlu0 %v657, 60
      %v677 = vpop.permute.xlu0 %676
      %678 = vrot.lane.b32.xlu0 %v658, 60
      %v679 = vpop.permute.xlu0 %678
      %680 = vrot.lane.b32.xlu0 %v659, 60
      %v681 = vpop.permute.xlu0 %680
      %682 = vrot.lane.b32.xlu0 %v660, 60
      %v683 = vpop.permute.xlu0 %682
      %684 = vrot.lane.b32.xlu0 %v661, 60
      %v685 = vpop.permute.xlu0 %684
      %686 = vrot.lane.b32.xlu0 %v662, 60
      %v687 = vpop.permute.xlu0 %686
      %688 = vrot.lane.b32.xlu0 %v663, 60
      %v689 = vpop.permute.xlu0 %688
      %690 = vrot.lane.b32.xlu0 %v664, 60
      %v691 = vpop.permute.xlu0 %690
      %vm692 = vcmask 490496
      %v693 = vsel %vm692, %v675, %v677
      %v694 = vsel %vm692, %v677, %v679
      %v695 = vsel %vm692, %v679, %v681
      %v696 = vsel %vm692, %v681, %v683
      %v697 = vsel %vm692, %v683, %v685
      %v698 = vsel %vm692, %v685, %v687
      %v699 = vsel %vm692, %v687, %v689
      %v700 = vsel %vm692, %v689, %v691
      %v709 = vadd.f32 %v641, %v693
      %v710 = vadd.f32 %v642, %v694
      %v711 = vadd.f32 %v643, %v695
      %v712 = vadd.f32 %v644, %v696
      %v713 = vadd.f32 %v645, %v697
      %v714 = vadd.f32 %v646, %v698
      %v715 = vadd.f32 %v647, %v699
      %v716 = vadd.f32 %v648, %v700
      %v717 = vrot.slane %v709, 4
      %v718 = vadd.f32 %v709, %v717
      %v719 = vrot.slane %v718, 2
      %v720 = vadd.f32 %v718, %v719
      %v721 = vrot.slane %v720, 1
      %v722 = vadd.f32 %v720, %v721
      %v723 = vrot.slane %v710, 4
      %v724 = vadd.f32 %v710, %v723
      %v725 = vrot.slane %v724, 2
      %v726 = vadd.f32 %v724, %v725
      %v727 = vrot.slane %v726, 1
      %v728 = vadd.f32 %v726, %v727
      %v729 = vrot.slane %v711, 4
      %v730 = vadd.f32 %v711, %v729
      %v731 = vrot.slane %v730, 2
      %v732 = vadd.f32 %v730, %v731
      %v733 = vrot.slane %v732, 1
      %v734 = vadd.f32 %v732, %v733
      %v735 = vrot.slane %v712, 4
      %v736 = vadd.f32 %v712, %v735
      %v737 = vrot.slane %v736, 2
      %v738 = vadd.f32 %v736, %v737
      %v739 = vrot.slane %v738, 1
      %v740 = vadd.f32 %v738, %v739
      %v741 = vrot.slane %v713, 4
      %v742 = vadd.f32 %v713, %v741
      %v743 = vrot.slane %v742, 2
      %v744 = vadd.f32 %v742, %v743
      %v745 = vrot.slane %v744, 1
      %v746 = vadd.f32 %v744, %v745
      %v747 = vrot.slane %v714, 4
      %v748 = vadd.f32 %v714, %v747
      %v749 = vrot.slane %v748, 2
      %v750 = vadd.f32 %v748, %v749
      %v751 = vrot.slane %v750, 1
      %v752 = vadd.f32 %v750, %v751
      %v753 = vrot.slane %v715, 4
      %v754 = vadd.f32 %v715, %v753
      %v755 = vrot.slane %v754, 2
      %v756 = vadd.f32 %v754, %v755
      %v757 = vrot.slane %v756, 1
      %v758 = vadd.f32 %v756, %v757
      %v759 = vsel %vm217, %v716, 0.0
      %v760 = vrot.slane %v759, 4
      %v761 = vadd.f32 %v759, %v760
      %v762 = vrot.slane %v761, 2
      %v763 = vadd.f32 %v761, %v762
      %v764 = vrot.slane %v763, 1
      %v765 = vadd.f32 %v763, %v764
      %v774 = vcombine.low %v722, %v728
      %v775 = vcombine.low %v734, %v740
      %v776 = vcombine.low %v746, %v752
      %v777 = vcombine.low %v758, %v765
      %v779 = vunpack.c.l.s4 1966171168
      %v780 = vunpack.c.0.s8 %v779
      %v781 = vlaneseq
      %v782 = vshrl.u32 %v781, 7
      %v783 = vsub.s32 %v780, %v782
      %v784 = vrot.slane %v774, %v783
      %v786 = vunpack.c.l.s4 1966171168
      %v787 = vunpack.c.0.s8 %v786
      %v788 = vlaneseq
      %v789 = vshrl.u32 %v788, 7
      %v790 = vsub.s32 %v787, %v789
      %v791 = vrot.slane %v775, %v790
      %v793 = vunpack.c.l.s4 1966171168
      %v794 = vunpack.c.0.s8 %v793
      %v795 = vlaneseq
      %v796 = vshrl.u32 %v795, 7
      %v797 = vsub.s32 %v794, %v796
      %v798 = vrot.slane %v776, %v797
      %v800 = vunpack.c.l.s4 1966171168
      %v801 = vunpack.c.0.s8 %v800
      %v802 = vlaneseq
      %v803 = vshrl.u32 %v802, 7
      %v804 = vsub.s32 %v801, %v803
      %v805 = vrot.slane %v777, %v804
      %v806 = vcombine.low %v784, %v791
      %v807 = vcombine.low %v798, %v805
      %v809 = vunpack.c.l.s4 1966171168
      %v810 = vunpack.c.0.s8 %v809
      %v811 = vlaneseq
      %v812 = vshrl.u32 %v811, 7
      %v813 = vsub.s32 %v810, %v812
      %v814 = vrot.slane %v806, %v813
      %v816 = vunpack.c.l.s4 1966171168
      %v817 = vunpack.c.0.s8 %v816
      %v818 = vlaneseq
      %v819 = vshrl.u32 %v818, 7
      %v820 = vsub.s32 %v817, %v819
      %v821 = vrot.slane %v807, %v820
      %v822 = vcombine.low %v814, %v821
      %v824 = vlaneseq
      %vm825 = vcmp.ge.s32.totalorder %v824, 0
      %vm826 = vcmp.lt.s32.totalorder %v824, 1023
      %vm827 = vmand %vm825, %vm826
      %828 = vst.msk [vmem:[%s141] sm:$0xff] %vm827, %v822
      %p829 = scmp.lt.s32.totalorder %s13, 1
      %s830 = scalar_select %p829, %s13, 1
      %s831 = smul.addr %s830, 8
      %s832 = scalar_lea.vmem %s2, %s831
      // Predicated region
      $region29: #{conv_generator_forward.13} parent=27 // pred_check
        %p833 = pneg %p78
      $region30: #{conv_generator_forward.13} parent=27 // pred_check_branch
        %835 = sbr.rel (%p833) target = $region32
      $region31: #{conv_generator_forward.13} parent=27 // pred_region
        _
      $region32: #{conv_generator_forward.13} parent=27 // pred_fallthru
        _
    $region28: #{conv_generator_forward.13} parent=5 // pred_fallthru
      _
    %p836 = scmp.le.s32.totalorder 2, %s8
    // Predicated region
    $region33: #{conv_generator_forward.13} parent=5 // pred_check
      %p837 = pneg %p836
    $region34: #{conv_generator_forward.13} parent=5 // pred_check_branch
      %839 = sbr.rel (%p837) target = $region36
    $region35: #{conv_generator_forward.13} parent=5 // pred_region
      %s840 = ssub.s32 %s8, 2
      // Predicated region
      $region37: #{conv_generator_forward.13} parent=35 // pred_check
        %p841 = pneg %p84
      $region38: #{conv_generator_forward.13} parent=35 // pred_check_branch
        %843 = sbr.rel (%p841) target = $region40
      $region39: #{conv_generator_forward.13} parent=35 // pred_region
        %p844 = scmp.lt.s32.totalorder %s14, 1
        %s845 = scalar_select %p844, %s14, 1
        %s846 = smul.addr %s845, 8
        %s847 = scalar_lea.vmem %s2, %s846
      $region40: #{conv_generator_forward.13} parent=35 // pred_fallthru
        _
    $region36: #{conv_generator_forward.13} parent=5 // pred_fallthru
      _
  $region6: #{conv_generator_forward.13} parent=0 // loop_footer
    %s12 = sadd.s32 1, %s8
  $region7: #{conv_generator_forward.13} parent=0 // loop_footer_branch
    %7 = sbr.rel target = $region3
  $region8: #{conv_generator_forward.13} parent=0 // loop_exit
    _

// kernel: conv_generator_forward.11
$region0: #{conv_generator_forward.11}
  #allocation0 [shape = 'u32[]', space=smem, size = 0x4, offset = 0x4, fixed_abs, tag = 'smem constant byte address 0x4 - core index']
  #allocation1 [shape = 'u32[144,128]{1,0:T(1,128)}', space=vmem, size = 0x12000, scoped, tag = 'internal scratch']
  #allocation2 [shape = 'bf16[304,256]{1,0:T(16,128)(2,1)}', space=vmem, size = 0x26000, scoped, tag = 'scratch operand']
  %s0 = inlined_call_operand.vmem [shape: bf16[2,380,16], index: 0, kind: input, shape index: {}]
  %s1 = inlined_call_operand.vmem [shape: bf16[256,8], index: 1, kind: input, shape index: {}]
  %s2 = inlined_call_operand.vmem [shape: f32[304,1], index: 2, kind: input, shape index: {}]
  %s3 = inlined_call_operand.vmem [shape: bf16[2,304,8], index: 3, kind: output, shape index: {0}]
  %s4 = inlined_call_operand.vmem [shape: f32[2,2,8], index: 4, kind: output, shape index: {1}]
  %5 = xla_tuple %s3, %s4
  %s6 = sld [smem:[#allocation0]]
  $region53: #{conv_generator_forward.11} parent=0
    _
  %s8 = ssub.s32 1, %s6
  %s9 = scalar_select 0, %s8, %s6
  loop: start=0, step=1, limit=4
  $region2: #{conv_generator_forward.11} parent=0 // loop_pre_header
    _
  $region3: #{conv_generator_forward.11} parent=0 // loop_header
    %s11 = sphi 0, %s15
    %p12 = scmp.ge.s32.totalorder %s11, 4
    %s21 = sphi 0, %s23
    %s24 = sphi 0, %s21
    %s25 = sphi 0, %s24
    %s41 = sphi 0, %s25
    %s45 = sphi 0, %s45
    %s47 = sphi 0, %s45
    %s48 = sphi 0, %s47
    %s62 = sphi 0, %s48
    %s66 = sphi 0, %s66
    %s68 = sphi 0, %s66
    %s69 = sphi 0, %s68
    %s83 = sphi 0, %s69
    %s89 = sphi 0, %s91
    %s92 = sphi 0, %s89
    %s93 = sphi 0, %s92
    %s109 = sphi 0, %s93
    %s115 = sphi 0, %s117
    %s118 = sphi 0, %s115
    %s119 = sphi 0, %s118
    %s135 = sphi 0, %s119
  $region4: #{conv_generator_forward.11} parent=0 // loop_header_branch
    %14 = sbr.rel (%p12) target = $region8
  $region5: #{conv_generator_forward.11} parent=0 // loop_body
    %s16 = ssub.s32 %s11, 1
    %s17 = ssub.s32 %s11, 2
    %s18 = sadd.s32 %s11, 1
    %s19 = ssub.s32 %s11, %s18
    %p20 = scmp.eq.s32.totalorder %s19, 0
    %s22 = sadd.s32 %s21, 1
    %s23 = scalar_select %p20, %s21, %s22
    %p26 = pneg %p20
    %p27 = scmp.eq.s32.totalorder %s11, 1
    %p28 = por %p26, %p27
    %p29 = scmp.ne.s32.totalorder %s21, %s24
    %p30 = scmp.eq.s32.totalorder %s11, 0
    %p31 = por %p29, %p30
    %p32 = scmp.ne.s32.totalorder %s21, %s24
    %p33 = scmp.eq.s32.totalorder %s16, 1
    %p34 = por %p32, %p33
    %p35 = scmp.ne.s32.totalorder %s24, %s25
    %p36 = scmp.eq.s32.totalorder %s16, 0
    %p37 = por %p35, %p36
    %p38 = scmp.ne.s32.totalorder %s24, %s25
    %p39 = scmp.eq.s32.totalorder %s17, 1
    %p40 = por %p38, %p39
    %p42 = scmp.ne.s32.totalorder %s25, %s41
    %p43 = scmp.eq.s32.totalorder %s17, 0
    %p44 = por %p42, %p43
    %s46 = sadd.s32 %s45, 1
    %p49 = scmp.eq.s32.totalorder %s11, 1
    %p50 = scmp.ne.s32.totalorder %s45, %s47
    %p51 = scmp.eq.s32.totalorder %s11, 0
    %p52 = por %p50, %p51
    %p53 = scmp.ne.s32.totalorder %s45, %s47
    %p54 = scmp.eq.s32.totalorder %s16, 1
    %p55 = por %p53, %p54
    %p56 = scmp.ne.s32.totalorder %s47, %s48
    %p57 = scmp.eq.s32.totalorder %s16, 0
    %p58 = por %p56, %p57
    %p59 = scmp.ne.s32.totalorder %s47, %s48
    %p60 = scmp.eq.s32.totalorder %s17, 1
    %p61 = por %p59, %p60
    %p63 = scmp.ne.s32.totalorder %s48, %s62
    %p64 = scmp.eq.s32.totalorder %s17, 0
    %p65 = por %p63, %p64
    %s67 = sadd.s32 %s66, 1
    %p70 = scmp.eq.s32.totalorder %s11, 1
    %p71 = scmp.ne.s32.totalorder %s66, %s68
    %p72 = scmp.eq.s32.totalorder %s11, 0
    %p73 = por %p71, %p72
    %p74 = scmp.ne.s32.totalorder %s66, %s68
    %p75 = scmp.eq.s32.totalorder %s16, 1
    %p76 = por %p74, %p75
    %p77 = scmp.ne.s32.totalorder %s68, %s69
    %p78 = scmp.eq.s32.totalorder %s16, 0
    %p79 = por %p77, %p78
    %p80 = scmp.ne.s32.totalorder %s68, %s69
    %p81 = scmp.eq.s32.totalorder %s17, 1
    %p82 = por %p80, %p81
    %p84 = scmp.ne.s32.totalorder %s69, %s83
    %p85 = scmp.eq.s32.totalorder %s17, 0
    %p86 = por %p84, %p85
    %s87 = ssub.s32 %s11, %s18
    %p88 = scmp.eq.s32.totalorder %s87, 0
    %s90 = sadd.s32 %s89, 1
    %s91 = scalar_select %p88, %s89, %s90
    %p94 = pneg %p88
    %p95 = scmp.eq.s32.totalorder %s11, 1
    %p96 = por %p94, %p95
    %p97 = scmp.ne.s32.totalorder %s89, %s92
    %p98 = scmp.eq.s32.totalorder %s11, 0
    %p99 = por %p97, %p98
    %p100 = scmp.ne.s32.totalorder %s89, %s92
    %p101 = scmp.eq.s32.totalorder %s16, 1
    %p102 = por %p100, %p101
    %p103 = scmp.ne.s32.totalorder %s92, %s93
    %p104 = scmp.eq.s32.totalorder %s16, 0
    %p105 = por %p103, %p104
    %p106 = scmp.ne.s32.totalorder %s92, %s93
    %p107 = scmp.eq.s32.totalorder %s17, 1
    %p108 = por %p106, %p107
    %p110 = scmp.ne.s32.totalorder %s93, %s109
    %p111 = scmp.eq.s32.totalorder %s17, 0
    %p112 = por %p110, %p111
    %s113 = ssub.s32 %s11, %s18
    %p114 = scmp.eq.s32.totalorder %s113, 0
    %s116 = sadd.s32 %s115, 1
    %s117 = scalar_select %p114, %s115, %s116
    %p120 = pneg %p114
    %p121 = scmp.eq.s32.totalorder %s11, 1
    %p122 = por %p120, %p121
    %p123 = scmp.ne.s32.totalorder %s115, %s118
    %p124 = scmp.eq.s32.totalorder %s11, 0
    %p125 = por %p123, %p124
    %p126 = scmp.ne.s32.totalorder %s115, %s118
    %p127 = scmp.eq.s32.totalorder %s16, 1
    %p128 = por %p126, %p127
    %p129 = scmp.ne.s32.totalorder %s118, %s119
    %p130 = scmp.eq.s32.totalorder %s16, 0
    %p131 = por %p129, %p130
    %p132 = scmp.ne.s32.totalorder %s118, %s119
    %p133 = scmp.eq.s32.totalorder %s17, 1
    %p134 = por %p132, %p133
    %p136 = scmp.ne.s32.totalorder %s119, %s135
    %p137 = scmp.eq.s32.totalorder %s17, 0
    %p138 = por %p136, %p137
    %p139 = scmp.le.s32.totalorder 1, %s11
    %p140 = scmp.lt.s32.totalorder %s11, 3
    %p141 = pnand %p139, %p140
    %p142 = pneg %p141
    // Predicated region
    $region9: #{conv_generator_forward.11} parent=5 // pred_check
      _
    $region10: #{conv_generator_forward.11} parent=5 // pred_check_branch
      %144 = sbr.rel (%p141) target = $region12
    $region11: #{conv_generator_forward.11} parent=5 // pred_region
      %s145 = ssub.s32 %s11, 1
      // Predicated region
      $region13: #{conv_generator_forward.11} parent=11 // pred_check
        %p146 = pneg %p58
      $region14: #{conv_generator_forward.11} parent=11 // pred_check_branch
        %148 = sbr.rel (%p146) target = $region16
      $region15: #{conv_generator_forward.11} parent=11 // pred_region
        _
      $region16: #{conv_generator_forward.11} parent=11 // pred_fallthru
        _
      // Predicated region
      $region17: #{conv_generator_forward.11} parent=11 // pred_check
        %p149 = pneg %p79
      $region18: #{conv_generator_forward.11} parent=11 // pred_check_branch
        %151 = sbr.rel (%p149) target = $region20
      $region19: #{conv_generator_forward.11} parent=11 // pred_region
        _
      $region20: #{conv_generator_forward.11} parent=11 // pred_fallthru
        _
    $region12: #{conv_generator_forward.11} parent=5 // pred_fallthru
      _
    %p152 = scmp.lt.s32.totalorder %s11, 2
    // Predicated region
    $region21: #{conv_generator_forward.11} parent=5 // pred_check
      %p153 = pneg %p152
    $region22: #{conv_generator_forward.11} parent=5 // pred_check_branch
      %155 = sbr.rel (%p153) target = $region24
    $region23: #{conv_generator_forward.11} parent=5 // pred_region
      // Predicated region
      $region25: #{conv_generator_forward.11} parent=23 // pred_check
        %p156 = pneg %p31
      $region26: #{conv_generator_forward.11} parent=23 // pred_check_branch
        %158 = sbr.rel (%p156) target = $region28
      $region27: #{conv_generator_forward.11} parent=23 // pred_region
        %p159 = scmp.lt.s32.totalorder %s11, 1
        %s160 = scalar_select %p159, %s11, 1
        %s161 = smul.addr %s160, 48
        %s162 = smul.addr %s161, 4
        %s163 = scalar_lea.vmem %s0, %s162
      $region28: #{conv_generator_forward.11} parent=23 // pred_fallthru
        _
    $region24: #{conv_generator_forward.11} parent=5 // pred_fallthru
      _
    %p164 = scmp.le.s32.totalorder 1, %s11
    %p165 = scmp.lt.s32.totalorder %s11, 3
    %p166 = pnand %p164, %p165
    %p167 = pneg %p166
    // Predicated region
    $region29: #{conv_generator_forward.11} parent=5 // pred_check
      _
    $region30: #{conv_generator_forward.11} parent=5 // pred_check_branch
      %169 = sbr.rel (%p166) target = $region32
    $region31: #{conv_generator_forward.11} parent=5 // pred_region
      %s170 = ssub.s32 %s11, 1
      %p171 = scmp.lt.s32.totalorder %s16, 1
      %s172 = scalar_select %p171, %s16, 1
      %s173 = smul.addr %s172, 48
      %s174 = smul.addr %s173, 4
      %s175 = scalar_lea.vmem %s0, %s174
      %p176 = pneg %p37
      %p177 = pneg %p34
      %p178 = pneg %p58
      %p179 = pneg %p55
      %p180 = pneg %p79
      %p181 = pneg %p76
      %p182 = pneg %p105
      %p183 = pneg %p102
      %p184 = scmp.lt.s32.totalorder %s16, 1
      %s185 = scalar_select %p184, %s16, 1
      %s186 = smul.addr %s185, 38
      %s187 = smul.addr %s186, 4
      %s188 = scalar_lea.vmem %s3, %s187
      %p189 = pneg %p131
      %p190 = pneg %p128
      %p191 = scmp.lt.s32.totalorder %s16, 1
      %s192 = scalar_select %p191, %s16, 1
      %s193 = smul.addr %s192, 2
      %s194 = scalar_lea.vmem %s4, %s193
      %p195 = scmp.lt.s32.totalorder %s16, 1
      %s196 = scalar_select %p195, %s16, 1
      %s197 = smul.addr %s196, 48
      %s198 = smul.addr %s197, 4
      %s199 = scalar_lea.vmem %s0, %s198
      %p200 = scmp.lt.s32.totalorder %s16, 1
      %s201 = scalar_select %p200, %s16, 1
      %s202 = smul.addr %s201, 38
      %s203 = smul.addr %s202, 4
      %s204 = scalar_lea.vmem %s3, %s203
      %p205 = scmp.lt.s32.totalorder %s16, 1
      %s206 = scalar_select %p205, %s16, 1
      %s207 = smul.addr %s206, 2
      %s208 = scalar_lea.vmem %s4, %s207
      %v210 = vld [vmem:[%s2] sm:$0xff]
      %v211 = vld [vmem:[%s2 + $0x8] sm:$0xff]
      %v212 = vld [vmem:[%s2 + $0x10] sm:$0xff]
      %v213 = vld [vmem:[%s2 + $0x18] sm:$0xff]
      %v214 = vld [vmem:[%s2 + $0x20] sm:$0xff]
      %v215 = vld [vmem:[%s2 + $0x28] sm:$0xff]
      %v216 = vld [vmem:[%s2 + $0x30] sm:$0xff]
      %v217 = vld [vmem:[%s2 + $0x38] sm:$0xff]
      %v218 = vld [vmem:[%s2 + $0x40] sm:$0xff]
      %v219 = vld [vmem:[%s2 + $0x48] sm:$0xff]
      %v220 = vld [vmem:[%s2 + $0x50] sm:$0xff]
      %v221 = vld [vmem:[%s2 + $0x58] sm:$0xff]
      %v222 = vld [vmem:[%s2 + $0x60] sm:$0xff]
      %v223 = vld [vmem:[%s2 + $0x68] sm:$0xff]
      %v224 = vld [vmem:[%s2 + $0x70] sm:$0xff]
      %v225 = vld [vmem:[%s2 + $0x78] sm:$0xff]
      %v226 = vld [vmem:[%s2 + $0x80] sm:$0xff]
      %v227 = vld [vmem:[%s2 + $0x88] sm:$0xff]
      %v228 = vld [vmem:[%s2 + $0x90] sm:$0xff]
      %v229 = vld [vmem:[%s2 + $0x98] sm:$0xff]
      %v230 = vld [vmem:[%s2 + $0xa0] sm:$0xff]
      %v231 = vld [vmem:[%s2 + $0xa8] sm:$0xff]
      %v232 = vld [vmem:[%s2 + $0xb0] sm:$0xff]
      %v233 = vld [vmem:[%s2 + $0xb8] sm:$0xff]
      %v234 = vld [vmem:[%s2 + $0xc0] sm:$0xff]
      %v235 = vld [vmem:[%s2 + $0xc8] sm:$0xff]
      %v236 = vld [vmem:[%s2 + $0xd0] sm:$0xff]
      %v237 = vld [vmem:[%s2 + $0xd8] sm:$0xff]
      %v238 = vld [vmem:[%s2 + $0xe0] sm:$0xff]
      %v239 = vld [vmem:[%s2 + $0xe8] sm:$0xff]
      %v240 = vld [vmem:[%s2 + $0xf0] sm:$0xff]
      %v241 = vld [vmem:[%s2 + $0xf8] sm:$0xff]
      %v242 = vld [vmem:[%s2 + $0x100] sm:$0xff]
      %v243 = vld [vmem:[%s2 + $0x108] sm:$0xff]
      %v244 = vld [vmem:[%s2 + $0x110] sm:$0xff]
      %v245 = vld [vmem:[%s2 + $0x118] sm:$0xff]
      %v246 = vld [vmem:[%s2 + $0x120] sm:$0xff]
      %v247 = vld [vmem:[%s2 + $0x128] sm:$0xff]
      %v248 = vld [vmem:[%s199] sm:$0xf]
      %v249 = vld [vmem:[%s199 + $0x4] sm:$0xf]
      %v250 = vld [vmem:[%s199 + $0x8] sm:$0xf]
      %v251 = vld [vmem:[%s199 + $0xc] sm:$0xf]
      %v252 = vld [vmem:[%s199 + $0x10] sm:$0xf]
      %v253 = vld [vmem:[%s199 + $0x14] sm:$0xf]
      %v254 = vld [vmem:[%s199 + $0x18] sm:$0xf]
      %v255 = vld [vmem:[%s199 + $0x1c] sm:$0xf]
      %v256 = vld [vmem:[%s199 + $0x20] sm:$0xf]
      %v257 = vld [vmem:[%s199 + $0x24] sm:$0xf]
      %v258 = vld [vmem:[%s199 + $0x28] sm:$0xf]
      %v259 = vld [vmem:[%s199 + $0x2c] sm:$0xf]
      %v260 = vld [vmem:[%s199 + $0x30] sm:$0xf]
      %v261 = vld [vmem:[%s199 + $0x34] sm:$0xf]
      %v262 = vld [vmem:[%s199 + $0x38] sm:$0xf]
      %v263 = vld [vmem:[%s199 + $0x3c] sm:$0xf]
      %v264 = vld [vmem:[%s199 + $0x40] sm:$0xf]
      %v265 = vld [vmem:[%s199 + $0x44] sm:$0xf]
      %v266 = vld [vmem:[%s199 + $0x48] sm:$0xf]
      %v267 = vld [vmem:[%s199 + $0x4c] sm:$0xf]
      %v268 = vld [vmem:[%s199 + $0x50] sm:$0xf]
      %v269 = vld [vmem:[%s199 + $0x54] sm:$0xf]
      %v270 = vld [vmem:[%s199 + $0x58] sm:$0xf]
      %v271 = vld [vmem:[%s199 + $0x5c] sm:$0xf]
      %v272 = vld [vmem:[%s199 + $0x60] sm:$0xf]
      %v273 = vld [vmem:[%s199 + $0x64] sm:$0xf]
      %v274 = vld [vmem:[%s199 + $0x68] sm:$0xf]
      %v275 = vld [vmem:[%s199 + $0x6c] sm:$0xf]
      %v276 = vld [vmem:[%s199 + $0x70] sm:$0xf]
      %v277 = vld [vmem:[%s199 + $0x74] sm:$0xf]
      %v278 = vld [vmem:[%s199 + $0x78] sm:$0xf]
      %v279 = vld [vmem:[%s199 + $0x7c] sm:$0xf]
      %v280 = vld [vmem:[%s199 + $0x80] sm:$0xf]
      %v281 = vld [vmem:[%s199 + $0x84] sm:$0xf]
      %v282 = vld [vmem:[%s199 + $0x88] sm:$0xf]
      %v283 = vld [vmem:[%s199 + $0x8c] sm:$0xf]
      %v284 = vld [vmem:[%s199 + $0x90] sm:$0xf]
      %v285 = vld [vmem:[%s199 + $0x94] sm:$0xf]
      %v324 = vunpack.c.l.b16 %v248
      %v325 = vunpack.c.l.b16 %v249
      %v326 = vunpack.c.l.b16 %v250
      %v327 = vunpack.c.l.b16 %v251
      %v328 = vunpack.c.l.b16 %v252
      %v329 = vunpack.c.l.b16 %v253
      %v330 = vunpack.c.l.b16 %v254
      %v331 = vunpack.c.l.b16 %v255
      %v332 = vunpack.c.l.b16 %v256
      %v333 = vunpack.c.l.b16 %v257
      %v334 = vunpack.c.l.b16 %v258
      %v335 = vunpack.c.l.b16 %v259
      %v336 = vunpack.c.l.b16 %v260
      %v337 = vunpack.c.l.b16 %v261
      %v338 = vunpack.c.l.b16 %v262
      %v339 = vunpack.c.l.b16 %v263
      %v340 = vunpack.c.l.b16 %v264
      %v341 = vunpack.c.l.b16 %v265
      %v342 = vunpack.c.l.b16 %v266
      %v343 = vunpack.c.l.b16 %v267
      %v344 = vunpack.c.l.b16 %v268
      %v345 = vunpack.c.l.b16 %v269
      %v346 = vunpack.c.l.b16 %v270
      %v347 = vunpack.c.l.b16 %v271
      %v348 = vunpack.c.l.b16 %v272
      %v349 = vunpack.c.l.b16 %v273
      %v350 = vunpack.c.l.b16 %v274
      %v351 = vunpack.c.l.b16 %v275
      %v352 = vunpack.c.l.b16 %v276
      %v353 = vunpack.c.l.b16 %v277
      %v354 = vunpack.c.l.b16 %v278
      %v355 = vunpack.c.l.b16 %v279
      %v356 = vunpack.c.l.b16 %v280
      %v357 = vunpack.c.l.b16 %v281
      %v358 = vunpack.c.l.b16 %v282
      %v359 = vunpack.c.l.b16 %v283
      %v360 = vunpack.c.l.b16 %v284
      %v361 = vunpack.c.l.b16 %v285
      %v362 = vpack.c.b16 %v325, %v324
      %v363 = vpack.c.b16 %v327, %v326
      %v364 = vpack.c.b16 %v329, %v328
      %v365 = vpack.c.b16 %v331, %v330
      %v366 = vpack.c.b16 %v333, %v332
      %v367 = vpack.c.b16 %v335, %v334
      %v368 = vpack.c.b16 %v337, %v336
      %v369 = vpack.c.b16 %v339, %v338
      %v370 = vpack.c.b16 %v341, %v340
      %v371 = vpack.c.b16 %v343, %v342
      %v372 = vpack.c.b16 %v345, %v344
      %v373 = vpack.c.b16 %v347, %v346
      %v374 = vpack.c.b16 %v349, %v348
      %v375 = vpack.c.b16 %v351, %v350
      %v376 = vpack.c.b16 %v353, %v352
      %v377 = vpack.c.b16 %v355, %v354
      %v378 = vpack.c.b16 %v357, %v356
      %v379 = vpack.c.b16 %v359, %v358
      %v380 = vpack.c.b16 %v361, %v360
      %vm400 = vcmask 130048
      %401 = vst.msk [vmem:[#allocation2] sm:$0xff] %vm400, %v362
      %402 = vst.msk [vmem:[#allocation2 + $0x10] sm:$0xff] %vm400, %v363
      %403 = vst.msk [vmem:[#allocation2 + $0x20] sm:$0xff] %vm400, %v364
      %404 = vst.msk [vmem:[#allocation2 + $0x30] sm:$0xff] %vm400, %v365
      %405 = vst.msk [vmem:[#allocation2 + $0x40] sm:$0xff] %vm400, %v366
      %406 = vst.msk [vmem:[#allocation2 + $0x50] sm:$0xff] %vm400, %v367
      %407 = vst.msk [vmem:[#allocation2 + $0x60] sm:$0xff] %vm400, %v368
      %408 = vst.msk [vmem:[#allocation2 + $0x70] sm:$0xff] %vm400, %v369
      %409 = vst.msk [vmem:[#allocation2 + $0x80] sm:$0xff] %vm400, %v370
      %410 = vst.msk [vmem:[#allocation2 + $0x90] sm:$0xff] %vm400, %v371
      %411 = vst.msk [vmem:[#allocation2 + $0xa0] sm:$0xff] %vm400, %v372
      %412 = vst.msk [vmem:[#allocation2 + $0xb0] sm:$0xff] %vm400, %v373
      %413 = vst.msk [vmem:[#allocation2 + $0xc0] sm:$0xff] %vm400, %v374
      %414 = vst.msk [vmem:[#allocation2 + $0xd0] sm:$0xff] %vm400, %v375
      %415 = vst.msk [vmem:[#allocation2 + $0xe0] sm:$0xff] %vm400, %v376
      %416 = vst.msk [vmem:[#allocation2 + $0xf0] sm:$0xff] %vm400, %v377
      %417 = vst.msk [vmem:[#allocation2 + $0x100] sm:$0xff] %vm400, %v378
      %418 = vst.msk [vmem:[#allocation2 + $0x110] sm:$0xff] %vm400, %v379
      %419 = vst.msk [vmem:[#allocation2 + $0x120] sm:$0xff] %vm400, %v380
      %v420 = vld [vmem:[%s199] sm:$0xf]
      %v421 = vld [vmem:[%s199 + $0x4] sm:$0xf]
      %v422 = vld [vmem:[%s199 + $0x8] sm:$0xf]
      %v423 = vld [vmem:[%s199 + $0xc] sm:$0xf]
      %v424 = vld [vmem:[%s199 + $0x10] sm:$0xf]
      %v425 = vld [vmem:[%s199 + $0x14] sm:$0xf]
      %v426 = vld [vmem:[%s199 + $0x18] sm:$0xf]
      %v427 = vld [vmem:[%s199 + $0x1c] sm:$0xf]
      %v428 = vld [vmem:[%s199 + $0x20] sm:$0xf]
      %v429 = vld [vmem:[%s199 + $0x24] sm:$0xf]
      %v430 = vld [vmem:[%s199 + $0x28] sm:$0xf]
      %v431 = vld [vmem:[%s199 + $0x2c] sm:$0xf]
      %v432 = vld [vmem:[%s199 + $0x30] sm:$0xf]
      %v433 = vld [vmem:[%s199 + $0x34] sm:$0xf]
      %v434 = vld [vmem:[%s199 + $0x38] sm:$0xf]
      %v435 = vld [vmem:[%s199 + $0x3c] sm:$0xf]
      %v436 = vld [vmem:[%s199 + $0x40] sm:$0xf]
      %v437 = vld [vmem:[%s199 + $0x44] sm:$0xf]
      %v438 = vld [vmem:[%s199 + $0x48] sm:$0xf]
      %v439 = vld [vmem:[%s199 + $0x4c] sm:$0xf]
      %v440 = vld [vmem:[%s199 + $0x50] sm:$0xf]
      %v441 = vld [vmem:[%s199 + $0x54] sm:$0xf]
      %v442 = vld [vmem:[%s199 + $0x58] sm:$0xf]
      %v443 = vld [vmem:[%s199 + $0x5c] sm:$0xf]
      %v444 = vld [vmem:[%s199 + $0x60] sm:$0xf]
      %v445 = vld [vmem:[%s199 + $0x64] sm:$0xf]
      %v446 = vld [vmem:[%s199 + $0x68] sm:$0xf]
      %v447 = vld [vmem:[%s199 + $0x6c] sm:$0xf]
      %v448 = vld [vmem:[%s199 + $0x70] sm:$0xf]
      %v449 = vld [vmem:[%s199 + $0x74] sm:$0xf]
      %v450 = vld [vmem:[%s199 + $0x78] sm:$0xf]
      %v451 = vld [vmem:[%s199 + $0x7c] sm:$0xf]
      %v452 = vld [vmem:[%s199 + $0x80] sm:$0xf]
      %v453 = vld [vmem:[%s199 + $0x84] sm:$0xf]
      %v454 = vld [vmem:[%s199 + $0x88] sm:$0xf]
      %v455 = vld [vmem:[%s199 + $0x8c] sm:$0xf]
      %v456 = vld [vmem:[%s199 + $0x90] sm:$0xf]
      %v457 = vld [vmem:[%s199 + $0x94] sm:$0xf]
      %v458 = vld [vmem:[%s199 + $0x98] sm:$0x1]
      %v498 = vunpack.c.l.b16 %v420
      %v499 = vunpack.c.l.b16 %v421
      %v500 = vunpack.c.l.b16 %v422
      %v501 = vunpack.c.l.b16 %v423
      %v502 = vunpack.c.l.b16 %v424
      %v503 = vunpack.c.l.b16 %v425
      %v504 = vunpack.c.l.b16 %v426
      %v505 = vunpack.c.l.b16 %v427
      %v506 = vunpack.c.l.b16 %v428
      %v507 = vunpack.c.l.b16 %v429
      %v508 = vunpack.c.l.b16 %v430
      %v509 = vunpack.c.l.b16 %v431
      %v510 = vunpack.c.l.b16 %v432
      %v511 = vunpack.c.l.b16 %v433
      %v512 = vunpack.c.l.b16 %v434
      %v513 = vunpack.c.l.b16 %v435
      %v514 = vunpack.c.l.b16 %v436
      %v515 = vunpack.c.l.b16 %v437
      %v516 = vunpack.c.l.b16 %v438
      %v517 = vunpack.c.l.b16 %v439
      %v518 = vunpack.c.l.b16 %v440
      %v519 = vunpack.c.l.b16 %v441
      %v520 = vunpack.c.l.b16 %v442
      %v521 = vunpack.c.l.b16 %v443
      %v522 = vunpack.c.l.b16 %v444
      %v523 = vunpack.c.l.b16 %v445
      %v524 = vunpack.c.l.b16 %v446
      %v525 = vunpack.c.l.b16 %v447
      %v526 = vunpack.c.l.b16 %v448
      %v527 = vunpack.c.l.b16 %v449
      %v528 = vunpack.c.l.b16 %v450
      %v529 = vunpack.c.l.b16 %v451
      %v530 = vunpack.c.l.b16 %v452
      %v531 = vunpack.c.l.b16 %v453
      %v532 = vunpack.c.l.b16 %v454
      %v533 = vunpack.c.l.b16 %v455
      %v534 = vunpack.c.l.b16 %v456
      %v535 = vunpack.c.l.b16 %v457
      %v536 = vunpack.c.l.b16 %v458
      %v537 = vpack.c.b16 %v499, %v498
      %v538 = vpack.c.b16 %v501, %v500
      %v539 = vpack.c.b16 %v503, %v502
      %v540 = vpack.c.b16 %v505, %v504
      %v541 = vpack.c.b16 %v507, %v506
      %v542 = vpack.c.b16 %v509, %v508
      %v543 = vpack.c.b16 %v511, %v510
      %v544 = vpack.c.b16 %v513, %v512
      %v545 = vpack.c.b16 %v515, %v514
      %v546 = vpack.c.b16 %v517, %v516
      %v547 = vpack.c.b16 %v519, %v518
      %v548 = vpack.c.b16 %v521, %v520
      %v549 = vpack.c.b16 %v523, %v522
      %v550 = vpack.c.b16 %v525, %v524
      %v551 = vpack.c.b16 %v527, %v526
      %v552 = vpack.c.b16 %v529, %v528
      %v553 = vpack.c.b16 %v531, %v530
      %v554 = vpack.c.b16 %v533, %v532
      %v555 = vpack.c.b16 %v535, %v534
      %v556 = vpack.c.b16 %v536, %v536
      %vm557 = vsmask.f32 7424
      %v559 = vshrl.u32 %v537, 16
      %v561 = vshll.u32 %v537, 16
      %v563 = vrot.slane %v561, 1
      %v564 = vor.u32 %v559, %v563
      %v566 = vshll.u32 %v538, 16
      %v568 = vrot.slane %v566, 1
      %v569 = vsel %vm557, %v564, %v568
      %v570 = vshrl.u32 %v538, 16
      %v572 = vor.u32 %v570, %v568
      %v574 = vshll.u32 %v539, 16
      %v576 = vrot.slane %v574, 1
      %v577 = vsel %vm557, %v572, %v576
      %v578 = vshrl.u32 %v539, 16
      %v580 = vor.u32 %v578, %v576
      %v582 = vshll.u32 %v540, 16
      %v584 = vrot.slane %v582, 1
      %v585 = vsel %vm557, %v580, %v584
      %v586 = vshrl.u32 %v540, 16
      %v588 = vor.u32 %v586, %v584
      %v590 = vshll.u32 %v541, 16
      %v592 = vrot.slane %v590, 1
      %v593 = vsel %vm557, %v588, %v592
      %v594 = vshrl.u32 %v541, 16
      %v596 = vor.u32 %v594, %v592
      %v598 = vshll.u32 %v542, 16
      %v600 = vrot.slane %v598, 1
      %v601 = vsel %vm557, %v596, %v600
      %v602 = vshrl.u32 %v542, 16
      %v604 = vor.u32 %v602, %v600
      %v606 = vshll.u32 %v543, 16
      %v608 = vrot.slane %v606, 1
      %v609 = vsel %vm557, %v604, %v608
      %v610 = vshrl.u32 %v543, 16
      %v612 = vor.u32 %v610, %v608
      %v614 = vshll.u32 %v544, 16
      %v616 = vrot.slane %v614, 1
      %v617 = vsel %vm557, %v612, %v616
      %v618 = vshrl.u32 %v544, 16
      %v620 = vor.u32 %v618, %v616
      %v622 = vshll.u32 %v545, 16
      %v624 = vrot.slane %v622, 1
      %v625 = vsel %vm557, %v620, %v624
      %v626 = vshrl.u32 %v545, 16
      %v628 = vor.u32 %v626, %v624
      %v630 = vshll.u32 %v546, 16
      %v632 = vrot.slane %v630, 1
      %v633 = vsel %vm557, %v628, %v632
      %v634 = vshrl.u32 %v546, 16
      %v636 = vor.u32 %v634, %v632
      %v638 = vshll.u32 %v547, 16
      %v640 = vrot.slane %v638, 1
      %v641 = vsel %vm557, %v636, %v640
      %v642 = vshrl.u32 %v547, 16
      %v644 = vor.u32 %v642, %v640
      %v646 = vshll.u32 %v548, 16
      %v648 = vrot.slane %v646, 1
      %v649 = vsel %vm557, %v644, %v648
      %v650 = vshrl.u32 %v548, 16
      %v652 = vor.u32 %v650, %v648
      %v654 = vshll.u32 %v549, 16
      %v656 = vrot.slane %v654, 1
      %v657 = vsel %vm557, %v652, %v656
      %v658 = vshrl.u32 %v549, 16
      %v660 = vor.u32 %v658, %v656
      %v662 = vshll.u32 %v550, 16
      %v664 = vrot.slane %v662, 1
      %v665 = vsel %vm557, %v660, %v664
      %v666 = vshrl.u32 %v550, 16
      %v668 = vor.u32 %v666, %v664
      %v670 = vshll.u32 %v551, 16
      %v672 = vrot.slane %v670, 1
      %v673 = vsel %vm557, %v668, %v672
      %v674 = vshrl.u32 %v551, 16
      %v676 = vor.u32 %v674, %v672
      %v678 = vshll.u32 %v552, 16
      %v680 = vrot.slane %v678, 1
      %v681 = vsel %vm557, %v676, %v680
      %v682 = vshrl.u32 %v552, 16
      %v684 = vor.u32 %v682, %v680
      %v686 = vshll.u32 %v553, 16
      %v688 = vrot.slane %v686, 1
      %v689 = vsel %vm557, %v684, %v688
      %v690 = vshrl.u32 %v553, 16
      %v692 = vor.u32 %v690, %v688
      %v694 = vshll.u32 %v554, 16
      %v696 = vrot.slane %v694, 1
      %v697 = vsel %vm557, %v692, %v696
      %v698 = vshrl.u32 %v554, 16
      %v700 = vor.u32 %v698, %v696
      %v702 = vshll.u32 %v555, 16
      %v704 = vrot.slane %v702, 1
      %v705 = vsel %vm557, %v700, %v704
      %v706 = vshrl.u32 %v555, 16
      %v708 = vor.u32 %v706, %v704
      %v710 = vshll.u32 %v556, 16
      %v712 = vrot.slane %v710, 1
      %v713 = vsel %vm557, %v708, %v712
      %714 = vrot.lane.b32.xlu0 %v569, 16
      %v715 = vpop.permute.xlu0 %714
      %716 = vrot.lane.b32.xlu0 %v577, 16
      %v717 = vpop.permute.xlu0 %716
      %718 = vrot.lane.b32.xlu0 %v585, 16
      %v719 = vpop.permute.xlu0 %718
      %720 = vrot.lane.b32.xlu0 %v593, 16
      %v721 = vpop.permute.xlu0 %720
      %722 = vrot.lane.b32.xlu0 %v601, 16
      %v723 = vpop.permute.xlu0 %722
      %724 = vrot.lane.b32.xlu0 %v609, 16
      %v725 = vpop.permute.xlu0 %724
      %726 = vrot.lane.b32.xlu0 %v617, 16
      %v727 = vpop.permute.xlu0 %726
      %728 = vrot.lane.b32.xlu0 %v625, 16
      %v729 = vpop.permute.xlu0 %728
      %730 = vrot.lane.b32.xlu0 %v633, 16
      %v731 = vpop.permute.xlu0 %730
      %732 = vrot.lane.b32.xlu0 %v641, 16
      %v733 = vpop.permute.xlu0 %732
      %734 = vrot.lane.b32.xlu0 %v649, 16
      %v735 = vpop.permute.xlu0 %734
      %736 = vrot.lane.b32.xlu0 %v657, 16
      %v737 = vpop.permute.xlu0 %736
      %738 = vrot.lane.b32.xlu0 %v665, 16
      %v739 = vpop.permute.xlu0 %738
      %740 = vrot.lane.b32.xlu0 %v673, 16
      %v741 = vpop.permute.xlu0 %740
      %742 = vrot.lane.b32.xlu0 %v681, 16
      %v743 = vpop.permute.xlu0 %742
      %744 = vrot.lane.b32.xlu0 %v689, 16
      %v745 = vpop.permute.xlu0 %744
      %746 = vrot.lane.b32.xlu0 %v697, 16
      %v747 = vpop.permute.xlu0 %746
      %748 = vrot.lane.b32.xlu0 %v705, 16
      %v749 = vpop.permute.xlu0 %748
      %750 = vrot.lane.b32.xlu0 %v713, 16
      %v751 = vpop.permute.xlu0 %750
      %vm771 = vcmask 261248
      %772 = vst.msk [vmem:[#allocation2] sm:$0xff] %vm771, %v715
      %773 = vst.msk [vmem:[#allocation2 + $0x10] sm:$0xff] %vm771, %v717
      %774 = vst.msk [vmem:[#allocation2 + $0x20] sm:$0xff] %vm771, %v719
      %775 = vst.msk [vmem:[#allocation2 + $0x30] sm:$0xff] %vm771, %v721
      %776 = vst.msk [vmem:[#allocation2 + $0x40] sm:$0xff] %vm771, %v723
      %777 = vst.msk [vmem:[#allocation2 + $0x50] sm:$0xff] %vm771, %v725
      %778 = vst.msk [vmem:[#allocation2 + $0x60] sm:$0xff] %vm771, %v727
      %779 = vst.msk [vmem:[#allocation2 + $0x70] sm:$0xff] %vm771, %v729
      %780 = vst.msk [vmem:[#allocation2 + $0x80] sm:$0xff] %vm771, %v731
      %781 = vst.msk [vmem:[#allocation2 + $0x90] sm:$0xff] %vm771, %v733
      %782 = vst.msk [vmem:[#allocation2 + $0xa0] sm:$0xff] %vm771, %v735
      %783 = vst.msk [vmem:[#allocation2 + $0xb0] sm:$0xff] %vm771, %v737
      %784 = vst.msk [vmem:[#allocation2 + $0xc0] sm:$0xff] %vm771, %v739
      %785 = vst.msk [vmem:[#allocation2 + $0xd0] sm:$0xff] %vm771, %v741
      %786 = vst.msk [vmem:[#allocation2 + $0xe0] sm:$0xff] %vm771, %v743
      %787 = vst.msk [vmem:[#allocation2 + $0xf0] sm:$0xff] %vm771, %v745
      %788 = vst.msk [vmem:[#allocation2 + $0x100] sm:$0xff] %vm771, %v747
      %789 = vst.msk [vmem:[#allocation2 + $0x110] sm:$0xff] %vm771, %v749
      %790 = vst.msk [vmem:[#allocation2 + $0x120] sm:$0xff] %vm771, %v751
      %v791 = vld [vmem:[%s199] sm:$0xe]
      %v792 = vld [vmem:[%s199 + $0x4] sm:$0xf]
      %v793 = vld [vmem:[%s199 + $0x8] sm:$0xf]
      %v794 = vld [vmem:[%s199 + $0xc] sm:$0xf]
      %v795 = vld [vmem:[%s199 + $0x10] sm:$0xf]
      %v796 = vld [vmem:[%s199 + $0x14] sm:$0xf]
      %v797 = vld [vmem:[%s199 + $0x18] sm:$0xf]
      %v798 = vld [vmem:[%s199 + $0x1c] sm:$0xf]
      %v799 = vld [vmem:[%s199 + $0x20] sm:$0xf]
      %v800 = vld [vmem:[%s199 + $0x24] sm:$0xf]
      %v801 = vld [vmem:[%s199 + $0x28] sm:$0xf]
      %v802 = vld [vmem:[%s199 + $0x2c] sm:$0xf]
      %v803 = vld [vmem:[%s199 + $0x30] sm:$0xf]
      %v804 = vld [vmem:[%s199 + $0x34] sm:$0xf]
      %v805 = vld [vmem:[%s199 + $0x38] sm:$0xf]
      %v806 = vld [vmem:[%s199 + $0x3c] sm:$0xf]
      %v807 = vld [vmem:[%s199 + $0x40] sm:$0xf]
      %v808 = vld [vmem:[%s199 + $0x44] sm:$0xf]
      %v809 = vld [vmem:[%s199 + $0x48] sm:$0xf]
      %v810 = vld [vmem:[%s199 + $0x4c] sm:$0xf]
      %v811 = vld [vmem:[%s199 + $0x50] sm:$0xf]
      %v812 = vld [vmem:[%s199 + $0x54] sm:$0xf]
      %v813 = vld [vmem:[%s199 + $0x58] sm:$0xf]
      %v814 = vld [vmem:[%s199 + $0x5c] sm:$0xf]
      %v815 = vld [vmem:[%s199 + $0x60] sm:$0xf]
      %v816 = vld [vmem:[%s199 + $0x64] sm:$0xf]
      %v817 = vld [vmem:[%s199 + $0x68] sm:$0xf]
      %v818 = vld [vmem:[%s199 + $0x6c] sm:$0xf]
      %v819 = vld [vmem:[%s199 + $0x70] sm:$0xf]
      %v820 = vld [vmem:[%s199 + $0x74] sm:$0xf]
      %v821 = vld [vmem:[%s199 + $0x78] sm:$0xf]
      %v822 = vld [vmem:[%s199 + $0x7c] sm:$0xf]
      %v823 = vld [vmem:[%s199 + $0x80] sm:$0xf]
      %v824 = vld [vmem:[%s199 + $0x84] sm:$0xf]
      %v825 = vld [vmem:[%s199 + $0x88] sm:$0xf]
      %v826 = vld [vmem:[%s199 + $0x8c] sm:$0xf]
      %v827 = vld [vmem:[%s199 + $0x90] sm:$0xf]
      %v828 = vld [vmem:[%s199 + $0x94] sm:$0xf]
      %v829 = vld [vmem:[%s199 + $0x98] sm:$0x1]
      %v869 = vunpack.c.l.b16 %v791
      %v870 = vunpack.c.l.b16 %v792
      %v871 = vunpack.c.l.b16 %v793
      %v872 = vunpack.c.l.b16 %v794
      %v873 = vunpack.c.l.b16 %v795
      %v874 = vunpack.c.l.b16 %v796
      %v875 = vunpack.c.l.b16 %v797
      %v876 = vunpack.c.l.b16 %v798
      %v877 = vunpack.c.l.b16 %v799
      %v878 = vunpack.c.l.b16 %v800
      %v879 = vunpack.c.l.b16 %v801
      %v880 = vunpack.c.l.b16 %v802
      %v881 = vunpack.c.l.b16 %v803
      %v882 = vunpack.c.l.b16 %v804
      %v883 = vunpack.c.l.b16 %v805
      %v884 = vunpack.c.l.b16 %v806
      %v885 = vunpack.c.l.b16 %v807
      %v886 = vunpack.c.l.b16 %v808
      %v887 = vunpack.c.l.b16 %v809
      %v888 = vunpack.c.l.b16 %v810
      %v889 = vunpack.c.l.b16 %v811
      %v890 = vunpack.c.l.b16 %v812
      %v891 = vunpack.c.l.b16 %v813
      %v892 = vunpack.c.l.b16 %v814
      %v893 = vunpack.c.l.b16 %v815
      %v894 = vunpack.c.l.b16 %v816
      %v895 = vunpack.c.l.b16 %v817
      %v896 = vunpack.c.l.b16 %v818
      %v897 = vunpack.c.l.b16 %v819
      %v898 = vunpack.c.l.b16 %v820
      %v899 = vunpack.c.l.b16 %v821
      %v900 = vunpack.c.l.b16 %v822
      %v901 = vunpack.c.l.b16 %v823
      %v902 = vunpack.c.l.b16 %v824
      %v903 = vunpack.c.l.b16 %v825
      %v904 = vunpack.c.l.b16 %v826
      %v905 = vunpack.c.l.b16 %v827
      %v906 = vunpack.c.l.b16 %v828
      %v907 = vunpack.c.l.b16 %v829
      %v908 = vpack.c.b16 %v870, %v869
      %v909 = vpack.c.b16 %v872, %v871
      %v910 = vpack.c.b16 %v874, %v873
      %v911 = vpack.c.b16 %v876, %v875
      %v912 = vpack.c.b16 %v878, %v877
      %v913 = vpack.c.b16 %v880, %v879
      %v914 = vpack.c.b16 %v882, %v881
      %v915 = vpack.c.b16 %v884, %v883
      %v916 = vpack.c.b16 %v886, %v885
      %v917 = vpack.c.b16 %v888, %v887
      %v918 = vpack.c.b16 %v890, %v889
      %v919 = vpack.c.b16 %v892, %v891
      %v920 = vpack.c.b16 %v894, %v893
      %v921 = vpack.c.b16 %v896, %v895
      %v922 = vpack.c.b16 %v898, %v897
      %v923 = vpack.c.b16 %v900, %v899
      %v924 = vpack.c.b16 %v902, %v901
      %v925 = vpack.c.b16 %v904, %v903
      %v926 = vpack.c.b16 %v906, %v905
      %v927 = vpack.c.b16 %v907, %v907
      %vm928 = vcmask 1046528
      %v929 = vrot.slane %v908, 1
      %v930 = vrot.slane %v909, 1
      %v931 = vsel %vm928, %v929, %v930
      %v932 = vrot.slane %v910, 1
      %v933 = vsel %vm928, %v930, %v932
      %v934 = vrot.slane %v911, 1
      %v935 = vsel %vm928, %v932, %v934
      %v936 = vrot.slane %v912, 1
      %v937 = vsel %vm928, %v934, %v936
      %v938 = vrot.slane %v913, 1
      %v939 = vsel %vm928, %v936, %v938
      %v940 = vrot.slane %v914, 1
      %v941 = vsel %vm928, %v938, %v940
      %v942 = vrot.slane %v915, 1
      %v943 = vsel %vm928, %v940, %v942
      %v944 = vrot.slane %v916, 1
      %v945 = vsel %vm928, %v942, %v944
      %v946 = vrot.slane %v917, 1
      %v947 = vsel %vm928, %v944, %v946
      %v948 = vrot.slane %v918, 1
      %v949 = vsel %vm928, %v946, %v948
      %v950 = vrot.slane %v919, 1
      %v951 = vsel %vm928, %v948, %v950
      %v952 = vrot.slane %v920, 1
      %v953 = vsel %vm928, %v950, %v952
      %v954 = vrot.slane %v921, 1
      %v955 = vsel %vm928, %v952, %v954
      %v956 = vrot.slane %v922, 1
      %v957 = vsel %vm928, %v954, %v956
      %v958 = vrot.slane %v923, 1
      %v959 = vsel %vm928, %v956, %v958
      %v960 = vrot.slane %v924, 1
      %v961 = vsel %vm928, %v958, %v960
      %v962 = vrot.slane %v925, 1
      %v963 = vsel %vm928, %v960, %v962
      %v964 = vrot.slane %v926, 1
      %v965 = vsel %vm928, %v962, %v964
      %v966 = vrot.slane %v927, 1
      %v967 = vsel %vm928, %v964, %v966
      %968 = vrot.lane.b32.xlu0 %v931, 32
      %v969 = vpop.permute.xlu0 %968
      %970 = vrot.lane.b32.xlu0 %v933, 32
      %v971 = vpop.permute.xlu0 %970
      %972 = vrot.lane.b32.xlu0 %v935, 32
      %v973 = vpop.permute.xlu0 %972
      %974 = vrot.lane.b32.xlu0 %v937, 32
      %v975 = vpop.permute.xlu0 %974
      %976 = vrot.lane.b32.xlu0 %v939, 32
      %v977 = vpop.permute.xlu0 %976
      %978 = vrot.lane.b32.xlu0 %v941, 32
      %v979 = vpop.permute.xlu0 %978
      %980 = vrot.lane.b32.xlu0 %v943, 32
      %v981 = vpop.permute.xlu0 %980
      %982 = vrot.lane.b32.xlu0 %v945, 32
      %v983 = vpop.permute.xlu0 %982
      %984 = vrot.lane.b32.xlu0 %v947, 32
      %v985 = vpop.permute.xlu0 %984
      %986 = vrot.lane.b32.xlu0 %v949, 32
      %v987 = vpop.permute.xlu0 %986
      %988 = vrot.lane.b32.xlu0 %v951, 32
      %v989 = vpop.permute.xlu0 %988
      %990 = vrot.lane.b32.xlu0 %v953, 32
      %v991 = vpop.permute.xlu0 %990
      %992 = vrot.lane.b32.xlu0 %v955, 32
      %v993 = vpop.permute.xlu0 %992
      %994 = vrot.lane.b32.xlu0 %v957, 32
      %v995 = vpop.permute.xlu0 %994
      %996 = vrot.lane.b32.xlu0 %v959, 32
      %v997 = vpop.permute.xlu0 %996
      %998 = vrot.lane.b32.xlu0 %v961, 32
      %v999 = vpop.permute.xlu0 %998
      %1000 = vrot.lane.b32.xlu0 %v963, 32
      %v1001 = vpop.permute.xlu0 %1000
      %1002 = vrot.lane.b32.xlu0 %v965, 32
      %v1003 = vpop.permute.xlu0 %1002
      %1004 = vrot.lane.b32.xlu0 %v967, 32
      %v1005 = vpop.permute.xlu0 %1004
      %vm1025 = vcmask 392448
      %1026 = vst.msk [vmem:[#allocation2] sm:$0xff] %vm1025, %v969
      %1027 = vst.msk [vmem:[#allocation2 + $0x10] sm:$0xff] %vm1025, %v971
      %1028 = vst.msk [vmem:[#allocation2 + $0x20] sm:$0xff] %vm1025, %v973
      %1029 = vst.msk [vmem:[#allocation2 + $0x30] sm:$0xff] %vm1025, %v975
      %1030 = vst.msk [vmem:[#allocation2 + $0x40] sm:$0xff] %vm1025, %v977
      %1031 = vst.msk [vmem:[#allocation2 + $0x50] sm:$0xff] %vm1025, %v979
      %1032 = vst.msk [vmem:[#allocation2 + $0x60] sm:$0xff] %vm1025, %v981
      %1033 = vst.msk [vmem:[#allocation2 + $0x70] sm:$0xff] %vm1025, %v983
      %1034 = vst.msk [vmem:[#allocation2 + $0x80] sm:$0xff] %vm1025, %v985
      %1035 = vst.msk [vmem:[#allocation2 + $0x90] sm:$0xff] %vm1025, %v987
      %1036 = vst.msk [vmem:[#allocation2 + $0xa0] sm:$0xff] %vm1025, %v989
      %1037 = vst.msk [vmem:[#allocation2 + $0xb0] sm:$0xff] %vm1025, %v991
      %1038 = vst.msk [vmem:[#allocation2 + $0xc0] sm:$0xff] %vm1025, %v993
      %1039 = vst.msk [vmem:[#allocation2 + $0xd0] sm:$0xff] %vm1025, %v995
      %1040 = vst.msk [vmem:[#allocation2 + $0xe0] sm:$0xff] %vm1025, %v997
      %1041 = vst.msk [vmem:[#allocation2 + $0xf0] sm:$0xff] %vm1025, %v999
      %1042 = vst.msk [vmem:[#allocation2 + $0x100] sm:$0xff] %vm1025, %v1001
      %1043 = vst.msk [vmem:[#allocation2 + $0x110] sm:$0xff] %vm1025, %v1003
      %1044 = vst.msk [vmem:[#allocation2 + $0x120] sm:$0xff] %vm1025, %v1005
      %v1045 = vld [vmem:[%s199] sm:$0xe]
      %v1046 = vld [vmem:[%s199 + $0x4] sm:$0xf]
      %v1047 = vld [vmem:[%s199 + $0x8] sm:$0xf]
      %v1048 = vld [vmem:[%s199 + $0xc] sm:$0xf]
      %v1049 = vld [vmem:[%s199 + $0x10] sm:$0xf]
      %v1050 = vld [vmem:[%s199 + $0x14] sm:$0xf]
      %v1051 = vld [vmem:[%s199 + $0x18] sm:$0xf]
      %v1052 = vld [vmem:[%s199 + $0x1c] sm:$0xf]
      %v1053 = vld [vmem:[%s199 + $0x20] sm:$0xf]
      %v1054 = vld [vmem:[%s199 + $0x24] sm:$0xf]
      %v1055 = vld [vmem:[%s199 + $0x28] sm:$0xf]
      %v1056 = vld [vmem:[%s199 + $0x2c] sm:$0xf]
      %v1057 = vld [vmem:[%s199 + $0x30] sm:$0xf]
      %v1058 = vld [vmem:[%s199 + $0x34] sm:$0xf]
      %v1059 = vld [vmem:[%s199 + $0x38] sm:$0xf]
      %v1060 = vld [vmem:[%s199 + $0x3c] sm:$0xf]
      %v1061 = vld [vmem:[%s199 + $0x40] sm:$0xf]
      %v1062 = vld [vmem:[%s199 + $0x44] sm:$0xf]
      %v1063 = vld [vmem:[%s199 + $0x48] sm:$0xf]
      %v1064 = vld [vmem:[%s199 + $0x4c] sm:$0xf]
      %v1065 = vld [vmem:[%s199 + $0x50] sm:$0xf]
      %v1066 = vld [vmem:[%s199 + $0x54] sm:$0xf]
      %v1067 = vld [vmem:[%s199 + $0x58] sm:$0xf]
      %v1068 = vld [vmem:[%s199 + $0x5c] sm:$0xf]
      %v1069 = vld [vmem:[%s199 + $0x60] sm:$0xf]
      %v1070 = vld [vmem:[%s199 + $0x64] sm:$0xf]
      %v1071 = vld [vmem:[%s199 + $0x68] sm:$0xf]
      %v1072 = vld [vmem:[%s199 + $0x6c] sm:$0xf]
      %v1073 = vld [vmem:[%s199 + $0x70] sm:$0xf]
      %v1074 = vld [vmem:[%s199 + $0x74] sm:$0xf]
      %v1075 = vld [vmem:[%s199 + $0x78] sm:$0xf]
      %v1076 = vld [vmem:[%s199 + $0x7c] sm:$0xf]
      %v1077 = vld [vmem:[%s199 + $0x80] sm:$0xf]
      %v1078 = vld [vmem:[%s199 + $0x84] sm:$0xf]
      %v1079 = vld [vmem:[%s199 + $0x88] sm:$0xf]
      %v1080 = vld [vmem:[%s199 + $0x8c] sm:$0xf]
      %v1081 = vld [vmem:[%s199 + $0x90] sm:$0xf]
      %v1082 = vld [vmem:[%s199 + $0x94] sm:$0xf]
      %v1083 = vld [vmem:[%s199 + $0x98] sm:$0x3]
      %v1123 = vunpack.c.l.b16 %v1045
      %v1124 = vunpack.c.l.b16 %v1046
      %v1125 = vunpack.c.l.b16 %v1047
      %v1126 = vunpack.c.l.b16 %v1048
      %v1127 = vunpack.c.l.b16 %v1049
      %v1128 = vunpack.c.l.b16 %v1050
      %v1129 = vunpack.c.l.b16 %v1051
      %v1130 = vunpack.c.l.b16 %v1052
      %v1131 = vunpack.c.l.b16 %v1053
      %v1132 = vunpack.c.l.b16 %v1054
      %v1133 = vunpack.c.l.b16 %v1055
      %v1134 = vunpack.c.l.b16 %v1056
      %v1135 = vunpack.c.l.b16 %v1057
      %v1136 = vunpack.c.l.b16 %v1058
      %v1137 = vunpack.c.l.b16 %v1059
      %v1138 = vunpack.c.l.b16 %v1060
      %v1139 = vunpack.c.l.b16 %v1061
      %v1140 = vunpack.c.l.b16 %v1062
      %v1141 = vunpack.c.l.b16 %v1063
      %v1142 = vunpack.c.l.b16 %v1064
      %v1143 = vunpack.c.l.b16 %v1065
      %v1144 = vunpack.c.l.b16 %v1066
      %v1145 = vunpack.c.l.b16 %v1067
      %v1146 = vunpack.c.l.b16 %v1068
      %v1147 = vunpack.c.l.b16 %v1069
      %v1148 = vunpack.c.l.b16 %v1070
      %v1149 = vunpack.c.l.b16 %v1071
      %v1150 = vunpack.c.l.b16 %v1072
      %v1151 = vunpack.c.l.b16 %v1073
      %v1152 = vunpack.c.l.b16 %v1074
      %v1153 = vunpack.c.l.b16 %v1075
      %v1154 = vunpack.c.l.b16 %v1076
      %v1155 = vunpack.c.l.b16 %v1077
      %v1156 = vunpack.c.l.b16 %v1078
      %v1157 = vunpack.c.l.b16 %v1079
      %v1158 = vunpack.c.l.b16 %v1080
      %v1159 = vunpack.c.l.b16 %v1081
      %v1160 = vunpack.c.l.b16 %v1082
      %v1161 = vunpack.c.l.b16 %v1083
      %v1162 = vpack.c.b16 %v1124, %v1123
      %v1163 = vpack.c.b16 %v1126, %v1125
      %v1164 = vpack.c.b16 %v1128, %v1127
      %v1165 = vpack.c.b16 %v1130, %v1129
      %v1166 = vpack.c.b16 %v1132, %v1131
      %v1167 = vpack.c.b16 %v1134, %v1133
      %v1168 = vpack.c.b16 %v1136, %v1135
      %v1169 = vpack.c.b16 %v1138, %v1137
      %v1170 = vpack.c.b16 %v1140, %v1139
      %v1171 = vpack.c.b16 %v1142, %v1141
      %v1172 = vpack.c.b16 %v1144, %v1143
      %v1173 = vpack.c.b16 %v1146, %v1145
      %v1174 = vpack.c.b16 %v1148, %v1147
      %v1175 = vpack.c.b16 %v1150, %v1149
      %v1176 = vpack.c.b16 %v1152, %v1151
      %v1177 = vpack.c.b16 %v1154, %v1153
      %v1178 = vpack.c.b16 %v1156, %v1155
      %v1179 = vpack.c.b16 %v1158, %v1157
      %v1180 = vpack.c.b16 %v1160, %v1159
      %v1181 = vpack.c.b16 %v1161, %v1161
      %vm1182 = vsmask.f32 6400
      %v1184 = vshrl.u32 %v1162, 16
      %v1186 = vrot.slane %v1184, 1
      %v1187 = vshll.u32 %v1162, 16
      %v1189 = vrot.slane %v1187, 2
      %v1190 = vor.u32 %v1186, %v1189
      %v1192 = vshrl.u32 %v1163, 16
      %v1194 = vrot.slane %v1192, 1
      %v1195 = vshll.u32 %v1163, 16
      %v1197 = vrot.slane %v1195, 2
      %v1198 = vor.u32 %v1194, %v1197
      %v1199 = vsel %vm1182, %v1190, %v1198
      %v1201 = vshrl.u32 %v1164, 16
      %v1203 = vrot.slane %v1201, 1
      %v1204 = vshll.u32 %v1164, 16
      %v1206 = vrot.slane %v1204, 2
      %v1207 = vor.u32 %v1203, %v1206
      %v1208 = vsel %vm1182, %v1198, %v1207
      %v1210 = vshrl.u32 %v1165, 16
      %v1212 = vrot.slane %v1210, 1
      %v1213 = vshll.u32 %v1165, 16
      %v1215 = vrot.slane %v1213, 2
      %v1216 = vor.u32 %v1212, %v1215
      %v1217 = vsel %vm1182, %v1207, %v1216
      %v1219 = vshrl.u32 %v1166, 16
      %v1221 = vrot.slane %v1219, 1
      %v1222 = vshll.u32 %v1166, 16
      %v1224 = vrot.slane %v1222, 2
      %v1225 = vor.u32 %v1221, %v1224
      %v1226 = vsel %vm1182, %v1216, %v1225
      %v1228 = vshrl.u32 %v1167, 16
      %v1230 = vrot.slane %v1228, 1
      %v1231 = vshll.u32 %v1167, 16
      %v1233 = vrot.slane %v1231, 2
      %v1234 = vor.u32 %v1230, %v1233
      %v1235 = vsel %vm1182, %v1225, %v1234
      %v1237 = vshrl.u32 %v1168, 16
      %v1239 = vrot.slane %v1237, 1
      %v1240 = vshll.u32 %v1168, 16
      %v1242 = vrot.slane %v1240, 2
      %v1243 = vor.u32 %v1239, %v1242
      %v1244 = vsel %vm1182, %v1234, %v1243
      %v1246 = vshrl.u32 %v1169, 16
      %v1248 = vrot.slane %v1246, 1
      %v1249 = vshll.u32 %v1169, 16
      %v1251 = vrot.slane %v1249, 2
      %v1252 = vor.u32 %v1248, %v1251
      %v1253 = vsel %vm1182, %v1243, %v1252
      %v1255 = vshrl.u32 %v1170, 16
      %v1257 = vrot.slane %v1255, 1
      %v1258 = vshll.u32 %v1170, 16
      %v1260 = vrot.slane %v1258, 2
      %v1261 = vor.u32 %v1257, %v1260
      %v1262 = vsel %vm1182, %v1252, %v1261
      %v1264 = vshrl.u32 %v1171, 16
      %v1266 = vrot.slane %v1264, 1
      %v1267 = vshll.u32 %v1171, 16
      %v1269 = vrot.slane %v1267, 2
      %v1270 = vor.u32 %v1266, %v1269
      %v1271 = vsel %vm1182, %v1261, %v1270
      %v1273 = vshrl.u32 %v1172, 16
      %v1275 = vrot.slane %v1273, 1
      %v1276 = vshll.u32 %v1172, 16
      %v1278 = vrot.slane %v1276, 2
      %v1279 = vor.u32 %v1275, %v1278
      %v1280 = vsel %vm1182, %v1270, %v1279
      %v1282 = vshrl.u32 %v1173, 16
      %v1284 = vrot.slane %v1282, 1
      %v1285 = vshll.u32 %v1173, 16
      %v1287 = vrot.slane %v1285, 2
      %v1288 = vor.u32 %v1284, %v1287
      %v1289 = vsel %vm1182, %v1279, %v1288
      %v1291 = vshrl.u32 %v1174, 16
      %v1293 = vrot.slane %v1291, 1
      %v1294 = vshll.u32 %v1174, 16
      %v1296 = vrot.slane %v1294, 2
      %v1297 = vor.u32 %v1293, %v1296
      %v1298 = vsel %vm1182, %v1288, %v1297
      %v1300 = vshrl.u32 %v1175, 16
      %v1302 = vrot.slane %v1300, 1
      %v1303 = vshll.u32 %v1175, 16
      %v1305 = vrot.slane %v1303, 2
      %v1306 = vor.u32 %v1302, %v1305
      %v1307 = vsel %vm1182, %v1297, %v1306
      %v1309 = vshrl.u32 %v1176, 16
      %v1311 = vrot.slane %v1309, 1
      %v1312 = vshll.u32 %v1176, 16
      %v1314 = vrot.slane %v1312, 2
      %v1315 = vor.u32 %v1311, %v1314
      %v1316 = vsel %vm1182, %v1306, %v1315
      %v1318 = vshrl.u32 %v1177, 16
      %v1320 = vrot.slane %v1318, 1
      %v1321 = vshll.u32 %v1177, 16
      %v1323 = vrot.slane %v1321, 2
      %v1324 = vor.u32 %v1320, %v1323
      %v1325 = vsel %vm1182, %v1315, %v1324
      %v1327 = vshrl.u32 %v1178, 16
      %v1329 = vrot.slane %v1327, 1
      %v1330 = vshll.u32 %v1178, 16
      %v1332 = vrot.slane %v1330, 2
      %v1333 = vor.u32 %v1329, %v1332
      %v1334 = vsel %vm1182, %v1324, %v1333
      %v1336 = vshrl.u32 %v1179, 16
      %v1338 = vrot.slane %v1336, 1
      %v1339 = vshll.u32 %v1179, 16
      %v1341 = vrot.slane %v1339, 2
      %v1342 = vor.u32 %v1338, %v1341
      %v1343 = vsel %vm1182, %v1333, %v1342
      %v1345 = vshrl.u32 %v1180, 16
      %v1347 = vrot.slane %v1345, 1
      %v1348 = vshll.u32 %v1180, 16
      %v1350 = vrot.slane %v1348, 2
      %v1351 = vor.u32 %v1347, %v1350
      %v1352 = vsel %vm1182, %v1342, %v1351
      %v1354 = vshrl.u32 %v1181, 16
      %v1356 = vrot.slane %v1354, 1
      %v1357 = vshll.u32 %v1181, 16
      %v1359 = vrot.slane %v1357, 2
      %v1360 = vor.u32 %v1356, %v1359
      %v1361 = vsel %vm1182, %v1351, %v1360
      %1362 = vrot.lane.b32.xlu0 %v1199, 48
      %v1363 = vpop.permute.xlu0 %1362
      %1364 = vrot.lane.b32.xlu0 %v1208, 48
      %v1365 = vpop.permute.xlu0 %1364
      %1366 = vrot.lane.b32.xlu0 %v1217, 48
      %v1367 = vpop.permute.xlu0 %1366
      %1368 = vrot.lane.b32.xlu0 %v1226, 48
      %v1369 = vpop.permute.xlu0 %1368
      %1370 = vrot.lane.b32.xlu0 %v1235, 48
      %v1371 = vpop.permute.xlu0 %1370
      %1372 = vrot.lane.b32.xlu0 %v1244, 48
      %v1373 = vpop.permute.xlu0 %1372
      %1374 = vrot.lane.b32.xlu0 %v1253, 48
      %v1375 = vpop.permute.xlu0 %1374
      %1376 = vrot.lane.b32.xlu0 %v1262, 48
      %v1377 = vpop.permute.xlu0 %1376
      %1378 = vrot.lane.b32.xlu0 %v1271, 48
      %v1379 = vpop.permute.xlu0 %1378
      %1380 = vrot.lane.b32.xlu0 %v1280, 48
      %v1381 = vpop.permute.xlu0 %1380
      %1382 = vrot.lane.b32.xlu0 %v1289, 48
      %v1383 = vpop.permute.xlu0 %1382
      %1384 = vrot.lane.b32.xlu0 %v1298, 48
      %v1385 = vpop.permute.xlu0 %1384
      %1386 = vrot.lane.b32.xlu0 %v1307, 48
      %v1387 = vpop.permute.xlu0 %1386
      %1388 = vrot.lane.b32.xlu0 %v1316, 48
      %v1389 = vpop.permute.xlu0 %1388
      %1390 = vrot.lane.b32.xlu0 %v1325, 48
      %v1391 = vpop.permute.xlu0 %1390
      %1392 = vrot.lane.b32.xlu0 %v1334, 48
      %v1393 = vpop.permute.xlu0 %1392
      %1394 = vrot.lane.b32.xlu0 %v1343, 48
      %v1395 = vpop.permute.xlu0 %1394
      %1396 = vrot.lane.b32.xlu0 %v1352, 48
      %v1397 = vpop.permute.xlu0 %1396
      %1398 = vrot.lane.b32.xlu0 %v1361, 48
      %v1399 = vpop.permute.xlu0 %1398
      %vm1419 = vcmask 523648
      %1420 = vst.msk [vmem:[#allocation2] sm:$0xff] %vm1419, %v1363
      %1421 = vst.msk [vmem:[#allocation2 + $0x10] sm:$0xff] %vm1419, %v1365
      %1422 = vst.msk [vmem:[#allocation2 + $0x20] sm:$0xff] %vm1419, %v1367
      %1423 = vst.msk [vmem:[#allocation2 + $0x30] sm:$0xff] %vm1419, %v1369
      %1424 = vst.msk [vmem:[#allocation2 + $0x40] sm:$0xff] %vm1419, %v1371
      %1425 = vst.msk [vmem:[#allocation2 + $0x50] sm:$0xff] %vm1419, %v1373
      %1426 = vst.msk [vmem:[#allocation2 + $0x60] sm:$0xff] %vm1419, %v1375
      %1427 = vst.msk [vmem:[#allocation2 + $0x70] sm:$0xff] %vm1419, %v1377
      %1428 = vst.msk [vmem:[#allocation2 + $0x80] sm:$0xff] %vm1419, %v1379
      %1429 = vst.msk [vmem:[#allocation2 + $0x90] sm:$0xff] %vm1419, %v1381
      %1430 = vst.msk [vmem:[#allocation2 + $0xa0] sm:$0xff] %vm1419, %v1383
      %1431 = vst.msk [vmem:[#allocation2 + $0xb0] sm:$0xff] %vm1419, %v1385
      %1432 = vst.msk [vmem:[#allocation2 + $0xc0] sm:$0xff] %vm1419, %v1387
      %1433 = vst.msk [vmem:[#allocation2 + $0xd0] sm:$0xff] %vm1419, %v1389
      %1434 = vst.msk [vmem:[#allocation2 + $0xe0] sm:$0xff] %vm1419, %v1391
      %1435 = vst.msk [vmem:[#allocation2 + $0xf0] sm:$0xff] %vm1419, %v1393
      %1436 = vst.msk [vmem:[#allocation2 + $0x100] sm:$0xff] %vm1419, %v1395
      %1437 = vst.msk [vmem:[#allocation2 + $0x110] sm:$0xff] %vm1419, %v1397
      %1438 = vst.msk [vmem:[#allocation2 + $0x120] sm:$0xff] %vm1419, %v1399
      %v1439 = vld [vmem:[%s199 + $0x8] sm:$0xe]
      %v1440 = vld [vmem:[%s199 + $0xc] sm:$0xf]
      %v1441 = vld [vmem:[%s199 + $0x10] sm:$0xf]
      %v1442 = vld [vmem:[%s199 + $0x14] sm:$0xf]
      %v1443 = vld [vmem:[%s199 + $0x18] sm:$0xf]
      %v1444 = vld [vmem:[%s199 + $0x1c] sm:$0xf]
      %v1445 = vld [vmem:[%s199 + $0x20] sm:$0xf]
      %v1446 = vld [vmem:[%s199 + $0x24] sm:$0xf]
      %v1447 = vld [vmem:[%s199 + $0x28] sm:$0xf]
      %v1448 = vld [vmem:[%s199 + $0x2c] sm:$0xf]
      %v1449 = vld [vmem:[%s199 + $0x30] sm:$0xf]
      %v1450 = vld [vmem:[%s199 + $0x34] sm:$0xf]
      %v1451 = vld [vmem:[%s199 + $0x38] sm:$0xf]
      %v1452 = vld [vmem:[%s199 + $0x3c] sm:$0xf]
      %v1453 = vld [vmem:[%s199 + $0x40] sm:$0xf]
      %v1454 = vld [vmem:[%s199 + $0x44] sm:$0xf]
      %v1455 = vld [vmem:[%s199 + $0x48] sm:$0xf]
      %v1456 = vld [vmem:[%s199 + $0x4c] sm:$0xf]
      %v1457 = vld [vmem:[%s199 + $0x50] sm:$0xf]
      %v1458 = vld [vmem:[%s199 + $0x54] sm:$0xf]
      %v1459 = vld [vmem:[%s199 + $0x58] sm:$0xf]
      %v1460 = vld [vmem:[%s199 + $0x5c] sm:$0xf]
      %v1461 = vld [vmem:[%s199 + $0x60] sm:$0xf]
      %v1462 = vld [vmem:[%s199 + $0x64] sm:$0xf]
      %v1463 = vld [vmem:[%s199 + $0x68] sm:$0xf]
      %v1464 = vld [vmem:[%s199 + $0x6c] sm:$0xf]
      %v1465 = vld [vmem:[%s199 + $0x70] sm:$0xf]
      %v1466 = vld [vmem:[%s199 + $0x74] sm:$0xf]
      %v1467 = vld [vmem:[%s199 + $0x78] sm:$0xf]
      %v1468 = vld [vmem:[%s199 + $0x7c] sm:$0xf]
      %v1469 = vld [vmem:[%s199 + $0x80] sm:$0xf]
      %v1470 = vld [vmem:[%s199 + $0x84] sm:$0xf]
      %v1471 = vld [vmem:[%s199 + $0x88] sm:$0xf]
      %v1472 = vld [vmem:[%s199 + $0x8c] sm:$0xf]
      %v1473 = vld [vmem:[%s199 + $0x90] sm:$0xf]
      %v1474 = vld [vmem:[%s199 + $0x94] sm:$0xf]
      %v1475 = vld [vmem:[%s199 + $0x98] sm:$0xf]
      %v1476 = vld [vmem:[%s199 + $0x9c] sm:$0xf]
      %v1477 = vld [vmem:[%s199 + $0xa0] sm:$0x3]
      %v1517 = vunpack.c.l.b16 %v1439
      %v1518 = vunpack.c.l.b16 %v1440
      %v1519 = vunpack.c.l.b16 %v1441
      %v1520 = vunpack.c.l.b16 %v1442
      %v1521 = vunpack.c.l.b16 %v1443
      %v1522 = vunpack.c.l.b16 %v1444
      %v1523 = vunpack.c.l.b16 %v1445
      %v1524 = vunpack.c.l.b16 %v1446
      %v1525 = vunpack.c.l.b16 %v1447
      %v1526 = vunpack.c.l.b16 %v1448
      %v1527 = vunpack.c.l.b16 %v1449
      %v1528 = vunpack.c.l.b16 %v1450
      %v1529 = vunpack.c.l.b16 %v1451
      %v1530 = vunpack.c.l.b16 %v1452
      %v1531 = vunpack.c.l.b16 %v1453
      %v1532 = vunpack.c.l.b16 %v1454
      %v1533 = vunpack.c.l.b16 %v1455
      %v1534 = vunpack.c.l.b16 %v1456
      %v1535 = vunpack.c.l.b16 %v1457
      %v1536 = vunpack.c.l.b16 %v1458
      %v1537 = vunpack.c.l.b16 %v1459
      %v1538 = vunpack.c.l.b16 %v1460
      %v1539 = vunpack.c.l.b16 %v1461
      %v1540 = vunpack.c.l.b16 %v1462
      %v1541 = vunpack.c.l.b16 %v1463
      %v1542 = vunpack.c.l.b16 %v1464
      %v1543 = vunpack.c.l.b16 %v1465
      %v1544 = vunpack.c.l.b16 %v1466
      %v1545 = vunpack.c.l.b16 %v1467
      %v1546 = vunpack.c.l.b16 %v1468
      %v1547 = vunpack.c.l.b16 %v1469
      %v1548 = vunpack.c.l.b16 %v1470
      %v1549 = vunpack.c.l.b16 %v1471
      %v1550 = vunpack.c.l.b16 %v1472
      %v1551 = vunpack.c.l.b16 %v1473
      %v1552 = vunpack.c.l.b16 %v1474
      %v1553 = vunpack.c.l.b16 %v1475
      %v1554 = vunpack.c.l.b16 %v1476
      %v1555 = vunpack.c.l.b16 %v1477
      %v1556 = vpack.c.b16 %v1518, %v1517
      %v1557 = vpack.c.b16 %v1520, %v1519
      %v1558 = vpack.c.b16 %v1522, %v1521
      %v1559 = vpack.c.b16 %v1524, %v1523
      %v1560 = vpack.c.b16 %v1526, %v1525
      %v1561 = vpack.c.b16 %v1528, %v1527
      %v1562 = vpack.c.b16 %v1530, %v1529
      %v1563 = vpack.c.b16 %v1532, %v1531
      %v1564 = vpack.c.b16 %v1534, %v1533
      %v1565 = vpack.c.b16 %v1536, %v1535
      %v1566 = vpack.c.b16 %v1538, %v1537
      %v1567 = vpack.c.b16 %v1540, %v1539
      %v1568 = vpack.c.b16 %v1542, %v1541
      %v1569 = vpack.c.b16 %v1544, %v1543
      %v1570 = vpack.c.b16 %v1546, %v1545
      %v1571 = vpack.c.b16 %v1548, %v1547
      %v1572 = vpack.c.b16 %v1550, %v1549
      %v1573 = vpack.c.b16 %v1552, %v1551
      %v1574 = vpack.c.b16 %v1554, %v1553
      %v1575 = vpack.c.b16 %v1555, %v1555
      %v1577 = vshrl.u32 %v1556, 16
      %v1579 = vrot.slane %v1577, 1
      %v1580 = vshll.u32 %v1556, 16
      %v1582 = vrot.slane %v1580, 2
      %v1583 = vor.u32 %v1579, %v1582
      %v1585 = vshrl.u32 %v1557, 16
      %v1587 = vrot.slane %v1585, 1
      %v1588 = vshll.u32 %v1557, 16
      %v1590 = vrot.slane %v1588, 2
      %v1591 = vor.u32 %v1587, %v1590
      %v1592 = vsel %vm1182, %v1583, %v1591
      %v1594 = vshrl.u32 %v1558, 16
      %v1596 = vrot.slane %v1594, 1
      %v1597 = vshll.u32 %v1558, 16
      %v1599 = vrot.slane %v1597, 2
      %v1600 = vor.u32 %v1596, %v1599
      %v1601 = vsel %vm1182, %v1591, %v1600
      %v1603 = vshrl.u32 %v1559, 16
      %v1605 = vrot.slane %v1603, 1
      %v1606 = vshll.u32 %v1559, 16
      %v1608 = vrot.slane %v1606, 2
      %v1609 = vor.u32 %v1605, %v1608
      %v1610 = vsel %vm1182, %v1600, %v1609
      %v1612 = vshrl.u32 %v1560, 16
      %v1614 = vrot.slane %v1612, 1
      %v1615 = vshll.u32 %v1560, 16
      %v1617 = vrot.slane %v1615, 2
      %v1618 = vor.u32 %v1614, %v1617
      %v1619 = vsel %vm1182, %v1609, %v1618
      %v1621 = vshrl.u32 %v1561, 16
      %v1623 = vrot.slane %v1621, 1
      %v1624 = vshll.u32 %v1561, 16
      %v1626 = vrot.slane %v1624, 2
      %v1627 = vor.u32 %v1623, %v1626
      %v1628 = vsel %vm1182, %v1618, %v1627
      %v1630 = vshrl.u32 %v1562, 16
      %v1632 = vrot.slane %v1630, 1
      %v1633 = vshll.u32 %v1562, 16
      %v1635 = vrot.slane %v1633, 2
      %v1636 = vor.u32 %v1632, %v1635
      %v1637 = vsel %vm1182, %v1627, %v1636
      %v1639 = vshrl.u32 %v1563, 16
      %v1641 = vrot.slane %v1639, 1
      %v1642 = vshll.u32 %v1563, 16
      %v1644 = vrot.slane %v1642, 2
      %v1645 = vor.u32 %v1641, %v1644
      %v1646 = vsel %vm1182, %v1636, %v1645
      %v1648 = vshrl.u32 %v1564, 16
      %v1650 = vrot.slane %v1648, 1
      %v1651 = vshll.u32 %v1564, 16
      %v1653 = vrot.slane %v1651, 2
      %v1654 = vor.u32 %v1650, %v1653
      %v1655 = vsel %vm1182, %v1645, %v1654
      %v1657 = vshrl.u32 %v1565, 16
      %v1659 = vrot.slane %v1657, 1
      %v1660 = vshll.u32 %v1565, 16
      %v1662 = vrot.slane %v1660, 2
      %v1663 = vor.u32 %v1659, %v1662
      %v1664 = vsel %vm1182, %v1654, %v1663
      %v1666 = vshrl.u32 %v1566, 16
      %v1668 = vrot.slane %v1666, 1
      %v1669 = vshll.u32 %v1566, 16
      %v1671 = vrot.slane %v1669, 2
      %v1672 = vor.u32 %v1668, %v1671
      %v1673 = vsel %vm1182, %v1663, %v1672
      %v1675 = vshrl.u32 %v1567, 16
      %v1677 = vrot.slane %v1675, 1
      %v1678 = vshll.u32 %v1567, 16
      %v1680 = vrot.slane %v1678, 2
      %v1681 = vor.u32 %v1677, %v1680
      %v1682 = vsel %vm1182, %v1672, %v1681
      %v1684 = vshrl.u32 %v1568, 16
      %v1686 = vrot.slane %v1684, 1
      %v1687 = vshll.u32 %v1568, 16
      %v1689 = vrot.slane %v1687, 2
      %v1690 = vor.u32 %v1686, %v1689
      %v1691 = vsel %vm1182, %v1681, %v1690
      %v1693 = vshrl.u32 %v1569, 16
      %v1695 = vrot.slane %v1693, 1
      %v1696 = vshll.u32 %v1569, 16
      %v1698 = vrot.slane %v1696, 2
      %v1699 = vor.u32 %v1695, %v1698
      %v1700 = vsel %vm1182, %v1690, %v1699
      %v1702 = vshrl.u32 %v1570, 16
      %v1704 = vrot.slane %v1702, 1
      %v1705 = vshll.u32 %v1570, 16
      %v1707 = vrot.slane %v1705, 2
      %v1708 = vor.u32 %v1704, %v1707
      %v1709 = vsel %vm1182, %v1699, %v1708
      %v1711 = vshrl.u32 %v1571, 16
      %v1713 = vrot.slane %v1711, 1
      %v1714 = vshll.u32 %v1571, 16
      %v1716 = vrot.slane %v1714, 2
      %v1717 = vor.u32 %v1713, %v1716
      %v1718 = vsel %vm1182, %v1708, %v1717
      %v1720 = vshrl.u32 %v1572, 16
      %v1722 = vrot.slane %v1720, 1
      %v1723 = vshll.u32 %v1572, 16
      %v1725 = vrot.slane %v1723, 2
      %v1726 = vor.u32 %v1722, %v1725
      %v1727 = vsel %vm1182, %v1717, %v1726
      %v1729 = vshrl.u32 %v1573, 16
      %v1731 = vrot.slane %v1729, 1
      %v1732 = vshll.u32 %v1573, 16
      %v1734 = vrot.slane %v1732, 2
      %v1735 = vor.u32 %v1731, %v1734
      %v1736 = vsel %vm1182, %v1726, %v1735
      %v1738 = vshrl.u32 %v1574, 16
      %v1740 = vrot.slane %v1738, 1
      %v1741 = vshll.u32 %v1574, 16
      %v1743 = vrot.slane %v1741, 2
      %v1744 = vor.u32 %v1740, %v1743
      %v1745 = vsel %vm1182, %v1735, %v1744
      %v1747 = vshrl.u32 %v1575, 16
      %v1749 = vrot.slane %v1747, 1
      %v1750 = vshll.u32 %v1575, 16
      %v1752 = vrot.slane %v1750, 2
      %v1753 = vor.u32 %v1749, %v1752
      %v1754 = vsel %vm1182, %v1744, %v1753
      %1755 = vrot.lane.b32.xlu0 %v1592, 64
      %v1756 = vpop.permute.xlu0 %1755
      %1757 = vrot.lane.b32.xlu0 %v1601, 64
      %v1758 = vpop.permute.xlu0 %1757
      %1759 = vrot.lane.b32.xlu0 %v1610, 64
      %v1760 = vpop.permute.xlu0 %1759
      %1761 = vrot.lane.b32.xlu0 %v1619, 64
      %v1762 = vpop.permute.xlu0 %1761
      %1763 = vrot.lane.b32.xlu0 %v1628, 64
      %v1764 = vpop.permute.xlu0 %1763
      %1765 = vrot.lane.b32.xlu0 %v1637, 64
      %v1766 = vpop.permute.xlu0 %1765
      %1767 = vrot.lane.b32.xlu0 %v1646, 64
      %v1768 = vpop.permute.xlu0 %1767
      %1769 = vrot.lane.b32.xlu0 %v1655, 64
      %v1770 = vpop.permute.xlu0 %1769
      %1771 = vrot.lane.b32.xlu0 %v1664, 64
      %v1772 = vpop.permute.xlu0 %1771
      %1773 = vrot.lane.b32.xlu0 %v1673, 64
      %v1774 = vpop.permute.xlu0 %1773
      %1775 = vrot.lane.b32.xlu0 %v1682, 64
      %v1776 = vpop.permute.xlu0 %1775
      %1777 = vrot.lane.b32.xlu0 %v1691, 64
      %v1778 = vpop.permute.xlu0 %1777
      %1779 = vrot.lane.b32.xlu0 %v1700, 64
      %v1780 = vpop.permute.xlu0 %1779
      %1781 = vrot.lane.b32.xlu0 %v1709, 64
      %v1782 = vpop.permute.xlu0 %1781
      %1783 = vrot.lane.b32.xlu0 %v1718, 64
      %v1784 = vpop.permute.xlu0 %1783
      %1785 = vrot.lane.b32.xlu0 %v1727, 64
      %v1786 = vpop.permute.xlu0 %1785
      %1787 = vrot.lane.b32.xlu0 %v1736, 64
      %v1788 = vpop.permute.xlu0 %1787
      %1789 = vrot.lane.b32.xlu0 %v1745, 64
      %v1790 = vpop.permute.xlu0 %1789
      %1791 = vrot.lane.b32.xlu0 %v1754, 64
      %v1792 = vpop.permute.xlu0 %1791
      %vm1812 = vcmask 654848
      %1813 = vst.msk [vmem:[#allocation2] sm:$0xff] %vm1812, %v1756
      %1814 = vst.msk [vmem:[#allocation2 + $0x10] sm:$0xff] %vm1812, %v1758
      %1815 = vst.msk [vmem:[#allocation2 + $0x20] sm:$0xff] %vm1812, %v1760
      %1816 = vst.msk [vmem:[#allocation2 + $0x30] sm:$0xff] %vm1812, %v1762
      %1817 = vst.msk [vmem:[#allocation2 + $0x40] sm:$0xff] %vm1812, %v1764
      %1818 = vst.msk [vmem:[#allocation2 + $0x50] sm:$0xff] %vm1812, %v1766
      %1819 = vst.msk [vmem:[#allocation2 + $0x60] sm:$0xff] %vm1812, %v1768
      %1820 = vst.msk [vmem:[#allocation2 + $0x70] sm:$0xff] %vm1812, %v1770
      %1821 = vst.msk [vmem:[#allocation2 + $0x80] sm:$0xff] %vm1812, %v1772
      %1822 = vst.msk [vmem:[#allocation2 + $0x90] sm:$0xff] %vm1812, %v1774
      %1823 = vst.msk [vmem:[#allocation2 + $0xa0] sm:$0xff] %vm1812, %v1776
      %1824 = vst.msk [vmem:[#allocation2 + $0xb0] sm:$0xff] %vm1812, %v1778
      %1825 = vst.msk [vmem:[#allocation2 + $0xc0] sm:$0xff] %vm1812, %v1780
      %1826 = vst.msk [vmem:[#allocation2 + $0xd0] sm:$0xff] %vm1812, %v1782
      %1827 = vst.msk [vmem:[#allocation2 + $0xe0] sm:$0xff] %vm1812, %v1784
      %1828 = vst.msk [vmem:[#allocation2 + $0xf0] sm:$0xff] %vm1812, %v1786
      %1829 = vst.msk [vmem:[#allocation2 + $0x100] sm:$0xff] %vm1812, %v1788
      %1830 = vst.msk [vmem:[#allocation2 + $0x110] sm:$0xff] %vm1812, %v1790
      %1831 = vst.msk [vmem:[#allocation2 + $0x120] sm:$0xff] %vm1812, %v1792
      %v1832 = vld [vmem:[%s199 + $0x8] sm:$0xc]
      %v1833 = vld [vmem:[%s199 + $0xc] sm:$0xf]
      %v1834 = vld [vmem:[%s199 + $0x10] sm:$0xf]
      %v1835 = vld [vmem:[%s199 + $0x14] sm:$0xf]
      %v1836 = vld [vmem:[%s199 + $0x18] sm:$0xf]
      %v1837 = vld [vmem:[%s199 + $0x1c] sm:$0xf]
      %v1838 = vld [vmem:[%s199 + $0x20] sm:$0xf]
      %v1839 = vld [vmem:[%s199 + $0x24] sm:$0xf]
      %v1840 = vld [vmem:[%s199 + $0x28] sm:$0xf]
      %v1841 = vld [vmem:[%s199 + $0x2c] sm:$0xf]
      %v1842 = vld [vmem:[%s199 + $0x30] sm:$0xf]
      %v1843 = vld [vmem:[%s199 + $0x34] sm:$0xf]
      %v1844 = vld [vmem:[%s199 + $0x38] sm:$0xf]
      %v1845 = vld [vmem:[%s199 + $0x3c] sm:$0xf]
      %v1846 = vld [vmem:[%s199 + $0x40] sm:$0xf]
      %v1847 = vld [vmem:[%s199 + $0x44] sm:$0xf]
      %v1848 = vld [vmem:[%s199 + $0x48] sm:$0xf]
      %v1849 = vld [vmem:[%s199 + $0x4c] sm:$0xf]
      %v1850 = vld [vmem:[%s199 + $0x50] sm:$0xf]
      %v1851 = vld [vmem:[%s199 + $0x54] sm:$0xf]
      %v1852 = vld [vmem:[%s199 + $0x58] sm:$0xf]
      %v1853 = vld [vmem:[%s199 + $0x5c] sm:$0xf]
      %v1854 = vld [vmem:[%s199 + $0x60] sm:$0xf]
      %v1855 = vld [vmem:[%s199 + $0x64] sm:$0xf]
      %v1856 = vld [vmem:[%s199 + $0x68] sm:$0xf]
      %v1857 = vld [vmem:[%s199 + $0x6c] sm:$0xf]
      %v1858 = vld [vmem:[%s199 + $0x70] sm:$0xf]
      %v1859 = vld [vmem:[%s199 + $0x74] sm:$0xf]
      %v1860 = vld [vmem:[%s199 + $0x78] sm:$0xf]
      %v1861 = vld [vmem:[%s199 + $0x7c] sm:$0xf]
      %v1862 = vld [vmem:[%s199 + $0x80] sm:$0xf]
      %v1863 = vld [vmem:[%s199 + $0x84] sm:$0xf]
      %v1864 = vld [vmem:[%s199 + $0x88] sm:$0xf]
      %v1865 = vld [vmem:[%s199 + $0x8c] sm:$0xf]
      %v1866 = vld [vmem:[%s199 + $0x90] sm:$0xf]
      %v1867 = vld [vmem:[%s199 + $0x94] sm:$0xf]
      %v1868 = vld [vmem:[%s199 + $0x98] sm:$0xf]
      %v1869 = vld [vmem:[%s199 + $0x9c] sm:$0xf]
      %v1870 = vld [vmem:[%s199 + $0xa0] sm:$0x3]
      %v1910 = vunpack.c.l.b16 %v1832
      %v1911 = vunpack.c.l.b16 %v1833
      %v1912 = vunpack.c.l.b16 %v1834
      %v1913 = vunpack.c.l.b16 %v1835
      %v1914 = vunpack.c.l.b16 %v1836
      %v1915 = vunpack.c.l.b16 %v1837
      %v1916 = vunpack.c.l.b16 %v1838
      %v1917 = vunpack.c.l.b16 %v1839
      %v1918 = vunpack.c.l.b16 %v1840
      %v1919 = vunpack.c.l.b16 %v1841
      %v1920 = vunpack.c.l.b16 %v1842
      %v1921 = vunpack.c.l.b16 %v1843
      %v1922 = vunpack.c.l.b16 %v1844
      %v1923 = vunpack.c.l.b16 %v1845
      %v1924 = vunpack.c.l.b16 %v1846
      %v1925 = vunpack.c.l.b16 %v1847
      %v1926 = vunpack.c.l.b16 %v1848
      %v1927 = vunpack.c.l.b16 %v1849
      %v1928 = vunpack.c.l.b16 %v1850
      %v1929 = vunpack.c.l.b16 %v1851
      %v1930 = vunpack.c.l.b16 %v1852
      %v1931 = vunpack.c.l.b16 %v1853
      %v1932 = vunpack.c.l.b16 %v1854
      %v1933 = vunpack.c.l.b16 %v1855
      %v1934 = vunpack.c.l.b16 %v1856
      %v1935 = vunpack.c.l.b16 %v1857
      %v1936 = vunpack.c.l.b16 %v1858
      %v1937 = vunpack.c.l.b16 %v1859
      %v1938 = vunpack.c.l.b16 %v1860
      %v1939 = vunpack.c.l.b16 %v1861
      %v1940 = vunpack.c.l.b16 %v1862
      %v1941 = vunpack.c.l.b16 %v1863
      %v1942 = vunpack.c.l.b16 %v1864
      %v1943 = vunpack.c.l.b16 %v1865
      %v1944 = vunpack.c.l.b16 %v1866
      %v1945 = vunpack.c.l.b16 %v1867
      %v1946 = vunpack.c.l.b16 %v1868
      %v1947 = vunpack.c.l.b16 %v1869
      %v1948 = vunpack.c.l.b16 %v1870
      %v1949 = vpack.c.b16 %v1911, %v1910
      %v1950 = vpack.c.b16 %v1913, %v1912
      %v1951 = vpack.c.b16 %v1915, %v1914
      %v1952 = vpack.c.b16 %v1917, %v1916
      %v1953 = vpack.c.b16 %v1919, %v1918
      %v1954 = vpack.c.b16 %v1921, %v1920
      %v1955 = vpack.c.b16 %v1923, %v1922
      %v1956 = vpack.c.b16 %v1925, %v1924
      %v1957 = vpack.c.b16 %v1927, %v1926
      %v1958 = vpack.c.b16 %v1929, %v1928
      %v1959 = vpack.c.b16 %v1931, %v1930
      %v1960 = vpack.c.b16 %v1933, %v1932
      %v1961 = vpack.c.b16 %v1935, %v1934
      %v1962 = vpack.c.b16 %v1937, %v1936
      %v1963 = vpack.c.b16 %v1939, %v1938
      %v1964 = vpack.c.b16 %v1941, %v1940
      %v1965 = vpack.c.b16 %v1943, %v1942
      %v1966 = vpack.c.b16 %v1945, %v1944
      %v1967 = vpack.c.b16 %v1947, %v1946
      %v1968 = vpack.c.b16 %v1948, %v1948
      %vm1969 = vcmask 1045504
      %v1970 = vrot.slane %v1949, 2
      %v1971 = vrot.slane %v1950, 2
      %v1972 = vsel %vm1969, %v1970, %v1971
      %v1973 = vrot.slane %v1951, 2
      %v1974 = vsel %vm1969, %v1971, %v1973
      %v1975 = vrot.slane %v1952, 2
      %v1976 = vsel %vm1969, %v1973, %v1975
      %v1977 = vrot.slane %v1953, 2
      %v1978 = vsel %vm1969, %v1975, %v1977
      %v1979 = vrot.slane %v1954, 2
      %v1980 = vsel %vm1969, %v1977, %v1979
      %v1981 = vrot.slane %v1955, 2
      %v1982 = vsel %vm1969, %v1979, %v1981
      %v1983 = vrot.slane %v1956, 2
      %v1984 = vsel %vm1969, %v1981, %v1983
      %v1985 = vrot.slane %v1957, 2
      %v1986 = vsel %vm1969, %v1983, %v1985
      %v1987 = vrot.slane %v1958, 2
      %v1988 = vsel %vm1969, %v1985, %v1987
      %v1989 = vrot.slane %v1959, 2
      %v1990 = vsel %vm1969, %v1987, %v1989
      %v1991 = vrot.slane %v1960, 2
      %v1992 = vsel %vm1969, %v1989, %v1991
      %v1993 = vrot.slane %v1961, 2
      %v1994 = vsel %vm1969, %v1991, %v1993
      %v1995 = vrot.slane %v1962, 2
      %v1996 = vsel %vm1969, %v1993, %v1995
      %v1997 = vrot.slane %v1963, 2
      %v1998 = vsel %vm1969, %v1995, %v1997
      %v1999 = vrot.slane %v1964, 2
      %v2000 = vsel %vm1969, %v1997, %v1999
      %v2001 = vrot.slane %v1965, 2
      %v2002 = vsel %vm1969, %v1999, %v2001
      %v2003 = vrot.slane %v1966, 2
      %v2004 = vsel %vm1969, %v2001, %v2003
      %v2005 = vrot.slane %v1967, 2
      %v2006 = vsel %vm1969, %v2003, %v2005
      %v2007 = vrot.slane %v1968, 2
      %v2008 = vsel %vm1969, %v2005, %v2007
      %2009 = vrot.lane.b32.xlu0 %v1972, 80
      %v2010 = vpop.permute.xlu0 %2009
      %2011 = vrot.lane.b32.xlu0 %v1974, 80
      %v2012 = vpop.permute.xlu0 %2011
      %2013 = vrot.lane.b32.xlu0 %v1976, 80
      %v2014 = vpop.permute.xlu0 %2013
      %2015 = vrot.lane.b32.xlu0 %v1978, 80
      %v2016 = vpop.permute.xlu0 %2015
      %2017 = vrot.lane.b32.xlu0 %v1980, 80
      %v2018 = vpop.permute.xlu0 %2017
      %2019 = vrot.lane.b32.xlu0 %v1982, 80
      %v2020 = vpop.permute.xlu0 %2019
      %2021 = vrot.lane.b32.xlu0 %v1984, 80
      %v2022 = vpop.permute.xlu0 %2021
      %2023 = vrot.lane.b32.xlu0 %v1986, 80
      %v2024 = vpop.permute.xlu0 %2023
      %2025 = vrot.lane.b32.xlu0 %v1988, 80
      %v2026 = vpop.permute.xlu0 %2025
      %2027 = vrot.lane.b32.xlu0 %v1990, 80
      %v2028 = vpop.permute.xlu0 %2027
      %2029 = vrot.lane.b32.xlu0 %v1992, 80
      %v2030 = vpop.permute.xlu0 %2029
      %2031 = vrot.lane.b32.xlu0 %v1994, 80
      %v2032 = vpop.permute.xlu0 %2031
      %2033 = vrot.lane.b32.xlu0 %v1996, 80
      %v2034 = vpop.permute.xlu0 %2033
      %2035 = vrot.lane.b32.xlu0 %v1998, 80
      %v2036 = vpop.permute.xlu0 %2035
      %2037 = vrot.lane.b32.xlu0 %v2000, 80
      %v2038 = vpop.permute.xlu0 %2037
      %2039 = vrot.lane.b32.xlu0 %v2002, 80
      %v2040 = vpop.permute.xlu0 %2039
      %2041 = vrot.lane.b32.xlu0 %v2004, 80
      %v2042 = vpop.permute.xlu0 %2041
      %2043 = vrot.lane.b32.xlu0 %v2006, 80
      %v2044 = vpop.permute.xlu0 %2043
      %2045 = vrot.lane.b32.xlu0 %v2008, 80
      %v2046 = vpop.permute.xlu0 %2045
      %vm2066 = vcmask 786048
      %2067 = vst.msk [vmem:[#allocation2] sm:$0xff] %vm2066, %v2010
      %2068 = vst.msk [vmem:[#allocation2 + $0x10] sm:$0xff] %vm2066, %v2012
      %2069 = vst.msk [vmem:[#allocation2 + $0x20] sm:$0xff] %vm2066, %v2014
      %2070 = vst.msk [vmem:[#allocation2 + $0x30] sm:$0xff] %vm2066, %v2016
      %2071 = vst.msk [vmem:[#allocation2 + $0x40] sm:$0xff] %vm2066, %v2018
      %2072 = vst.msk [vmem:[#allocation2 + $0x50] sm:$0xff] %vm2066, %v2020
      %2073 = vst.msk [vmem:[#allocation2 + $0x60] sm:$0xff] %vm2066, %v2022
      %2074 = vst.msk [vmem:[#allocation2 + $0x70] sm:$0xff] %vm2066, %v2024
      %2075 = vst.msk [vmem:[#allocation2 + $0x80] sm:$0xff] %vm2066, %v2026
      %2076 = vst.msk [vmem:[#allocation2 + $0x90] sm:$0xff] %vm2066, %v2028
      %2077 = vst.msk [vmem:[#allocation2 + $0xa0] sm:$0xff] %vm2066, %v2030
      %2078 = vst.msk [vmem:[#allocation2 + $0xb0] sm:$0xff] %vm2066, %v2032
      %2079 = vst.msk [vmem:[#allocation2 + $0xc0] sm:$0xff] %vm2066, %v2034
      %2080 = vst.msk [vmem:[#allocation2 + $0xd0] sm:$0xff] %vm2066, %v2036
      %2081 = vst.msk [vmem:[#allocation2 + $0xe0] sm:$0xff] %vm2066, %v2038
      %2082 = vst.msk [vmem:[#allocation2 + $0xf0] sm:$0xff] %vm2066, %v2040
      %2083 = vst.msk [vmem:[#allocation2 + $0x100] sm:$0xff] %vm2066, %v2042
      %2084 = vst.msk [vmem:[#allocation2 + $0x110] sm:$0xff] %vm2066, %v2044
      %2085 = vst.msk [vmem:[#allocation2 + $0x120] sm:$0xff] %vm2066, %v2046
      %v2086 = vld [vmem:[%s199 + $0x8] sm:$0xc]
      %v2087 = vld [vmem:[%s199 + $0xc] sm:$0xf]
      %v2088 = vld [vmem:[%s199 + $0x10] sm:$0xf]
      %v2089 = vld [vmem:[%s199 + $0x14] sm:$0xf]
      %v2090 = vld [vmem:[%s199 + $0x18] sm:$0xf]
      %v2091 = vld [vmem:[%s199 + $0x1c] sm:$0xf]
      %v2092 = vld [vmem:[%s199 + $0x20] sm:$0xf]
      %v2093 = vld [vmem:[%s199 + $0x24] sm:$0xf]
      %v2094 = vld [vmem:[%s199 + $0x28] sm:$0xf]
      %v2095 = vld [vmem:[%s199 + $0x2c] sm:$0xf]
      %v2096 = vld [vmem:[%s199 + $0x30] sm:$0xf]
      %v2097 = vld [vmem:[%s199 + $0x34] sm:$0xf]
      %v2098 = vld [vmem:[%s199 + $0x38] sm:$0xf]
      %v2099 = vld [vmem:[%s199 + $0x3c] sm:$0xf]
      %v2100 = vld [vmem:[%s199 + $0x40] sm:$0xf]
      %v2101 = vld [vmem:[%s199 + $0x44] sm:$0xf]
      %v2102 = vld [vmem:[%s199 + $0x48] sm:$0xf]
      %v2103 = vld [vmem:[%s199 + $0x4c] sm:$0xf]
      %v2104 = vld [vmem:[%s199 + $0x50] sm:$0xf]
      %v2105 = vld [vmem:[%s199 + $0x54] sm:$0xf]
      %v2106 = vld [vmem:[%s199 + $0x58] sm:$0xf]
      %v2107 = vld [vmem:[%s199 + $0x5c] sm:$0xf]
      %v2108 = vld [vmem:[%s199 + $0x60] sm:$0xf]
      %v2109 = vld [vmem:[%s199 + $0x64] sm:$0xf]
      %v2110 = vld [vmem:[%s199 + $0x68] sm:$0xf]
      %v2111 = vld [vmem:[%s199 + $0x6c] sm:$0xf]
      %v2112 = vld [vmem:[%s199 + $0x70] sm:$0xf]
      %v2113 = vld [vmem:[%s199 + $0x74] sm:$0xf]
      %v2114 = vld [vmem:[%s199 + $0x78] sm:$0xf]
      %v2115 = vld [vmem:[%s199 + $0x7c] sm:$0xf]
      %v2116 = vld [vmem:[%s199 + $0x80] sm:$0xf]
      %v2117 = vld [vmem:[%s199 + $0x84] sm:$0xf]
      %v2118 = vld [vmem:[%s199 + $0x88] sm:$0xf]
      %v2119 = vld [vmem:[%s199 + $0x8c] sm:$0xf]
      %v2120 = vld [vmem:[%s199 + $0x90] sm:$0xf]
      %v2121 = vld [vmem:[%s199 + $0x94] sm:$0xf]
      %v2122 = vld [vmem:[%s199 + $0x98] sm:$0xf]
      %v2123 = vld [vmem:[%s199 + $0x9c] sm:$0xf]
      %v2124 = vld [vmem:[%s199 + $0xa0] sm:$0x7]
      %v2164 = vunpack.c.l.b16 %v2086
      %v2165 = vunpack.c.l.b16 %v2087
      %v2166 = vunpack.c.l.b16 %v2088
      %v2167 = vunpack.c.l.b16 %v2089
      %v2168 = vunpack.c.l.b16 %v2090
      %v2169 = vunpack.c.l.b16 %v2091
      %v2170 = vunpack.c.l.b16 %v2092
      %v2171 = vunpack.c.l.b16 %v2093
      %v2172 = vunpack.c.l.b16 %v2094
      %v2173 = vunpack.c.l.b16 %v2095
      %v2174 = vunpack.c.l.b16 %v2096
      %v2175 = vunpack.c.l.b16 %v2097
      %v2176 = vunpack.c.l.b16 %v2098
      %v2177 = vunpack.c.l.b16 %v2099
      %v2178 = vunpack.c.l.b16 %v2100
      %v2179 = vunpack.c.l.b16 %v2101
      %v2180 = vunpack.c.l.b16 %v2102
      %v2181 = vunpack.c.l.b16 %v2103
      %v2182 = vunpack.c.l.b16 %v2104
      %v2183 = vunpack.c.l.b16 %v2105
      %v2184 = vunpack.c.l.b16 %v2106
      %v2185 = vunpack.c.l.b16 %v2107
      %v2186 = vunpack.c.l.b16 %v2108
      %v2187 = vunpack.c.l.b16 %v2109
      %v2188 = vunpack.c.l.b16 %v2110
      %v2189 = vunpack.c.l.b16 %v2111
      %v2190 = vunpack.c.l.b16 %v2112
      %v2191 = vunpack.c.l.b16 %v2113
      %v2192 = vunpack.c.l.b16 %v2114
      %v2193 = vunpack.c.l.b16 %v2115
      %v2194 = vunpack.c.l.b16 %v2116
      %v2195 = vunpack.c.l.b16 %v2117
      %v2196 = vunpack.c.l.b16 %v2118
      %v2197 = vunpack.c.l.b16 %v2119
      %v2198 = vunpack.c.l.b16 %v2120
      %v2199 = vunpack.c.l.b16 %v2121
      %v2200 = vunpack.c.l.b16 %v2122
      %v2201 = vunpack.c.l.b16 %v2123
      %v2202 = vunpack.c.l.b16 %v2124
      %v2203 = vpack.c.b16 %v2165, %v2164
      %v2204 = vpack.c.b16 %v2167, %v2166
      %v2205 = vpack.c.b16 %v2169, %v2168
      %v2206 = vpack.c.b16 %v2171, %v2170
      %v2207 = vpack.c.b16 %v2173, %v2172
      %v2208 = vpack.c.b16 %v2175, %v2174
      %v2209 = vpack.c.b16 %v2177, %v2176
      %v2210 = vpack.c.b16 %v2179, %v2178
      %v2211 = vpack.c.b16 %v2181, %v2180
      %v2212 = vpack.c.b16 %v2183, %v2182
      %v2213 = vpack.c.b16 %v2185, %v2184
      %v2214 = vpack.c.b16 %v2187, %v2186
      %v2215 = vpack.c.b16 %v2189, %v2188
      %v2216 = vpack.c.b16 %v2191, %v2190
      %v2217 = vpack.c.b16 %v2193, %v2192
      %v2218 = vpack.c.b16 %v2195, %v2194
      %v2219 = vpack.c.b16 %v2197, %v2196
      %v2220 = vpack.c.b16 %v2199, %v2198
      %v2221 = vpack.c.b16 %v2201, %v2200
      %v2222 = vpack.c.b16 %v2202, %v2202
      %vm2223 = vsmask.f32 5376
      %v2225 = vshrl.u32 %v2203, 16
      %v2227 = vrot.slane %v2225, 2
      %v2228 = vshll.u32 %v2203, 16
      %v2230 = vrot.slane %v2228, 3
      %v2231 = vor.u32 %v2227, %v2230
      %v2233 = vshrl.u32 %v2204, 16
      %v2235 = vrot.slane %v2233, 2
      %v2236 = vshll.u32 %v2204, 16
      %v2238 = vrot.slane %v2236, 3
      %v2239 = vor.u32 %v2235, %v2238
      %v2240 = vsel %vm2223, %v2231, %v2239
      %v2242 = vshrl.u32 %v2205, 16
      %v2244 = vrot.slane %v2242, 2
      %v2245 = vshll.u32 %v2205, 16
      %v2247 = vrot.slane %v2245, 3
      %v2248 = vor.u32 %v2244, %v2247
      %v2249 = vsel %vm2223, %v2239, %v2248
      %v2251 = vshrl.u32 %v2206, 16
      %v2253 = vrot.slane %v2251, 2
      %v2254 = vshll.u32 %v2206, 16
      %v2256 = vrot.slane %v2254, 3
      %v2257 = vor.u32 %v2253, %v2256
      %v2258 = vsel %vm2223, %v2248, %v2257
      %v2260 = vshrl.u32 %v2207, 16
      %v2262 = vrot.slane %v2260, 2
      %v2263 = vshll.u32 %v2207, 16
      %v2265 = vrot.slane %v2263, 3
      %v2266 = vor.u32 %v2262, %v2265
      %v2267 = vsel %vm2223, %v2257, %v2266
      %v2269 = vshrl.u32 %v2208, 16
      %v2271 = vrot.slane %v2269, 2
      %v2272 = vshll.u32 %v2208, 16
      %v2274 = vrot.slane %v2272, 3
      %v2275 = vor.u32 %v2271, %v2274
      %v2276 = vsel %vm2223, %v2266, %v2275
      %v2278 = vshrl.u32 %v2209, 16
      %v2280 = vrot.slane %v2278, 2
      %v2281 = vshll.u32 %v2209, 16
      %v2283 = vrot.slane %v2281, 3
      %v2284 = vor.u32 %v2280, %v2283
      %v2285 = vsel %vm2223, %v2275, %v2284
      %v2287 = vshrl.u32 %v2210, 16
      %v2289 = vrot.slane %v2287, 2
      %v2290 = vshll.u32 %v2210, 16
      %v2292 = vrot.slane %v2290, 3
      %v2293 = vor.u32 %v2289, %v2292
      %v2294 = vsel %vm2223, %v2284, %v2293
      %v2296 = vshrl.u32 %v2211, 16
      %v2298 = vrot.slane %v2296, 2
      %v2299 = vshll.u32 %v2211, 16
      %v2301 = vrot.slane %v2299, 3
      %v2302 = vor.u32 %v2298, %v2301
      %v2303 = vsel %vm2223, %v2293, %v2302
      %v2305 = vshrl.u32 %v2212, 16
      %v2307 = vrot.slane %v2305, 2
      %v2308 = vshll.u32 %v2212, 16
      %v2310 = vrot.slane %v2308, 3
      %v2311 = vor.u32 %v2307, %v2310
      %v2312 = vsel %vm2223, %v2302, %v2311
      %v2314 = vshrl.u32 %v2213, 16
      %v2316 = vrot.slane %v2314, 2
      %v2317 = vshll.u32 %v2213, 16
      %v2319 = vrot.slane %v2317, 3
      %v2320 = vor.u32 %v2316, %v2319
      %v2321 = vsel %vm2223, %v2311, %v2320
      %v2323 = vshrl.u32 %v2214, 16
      %v2325 = vrot.slane %v2323, 2
      %v2326 = vshll.u32 %v2214, 16
      %v2328 = vrot.slane %v2326, 3
      %v2329 = vor.u32 %v2325, %v2328
      %v2330 = vsel %vm2223, %v2320, %v2329
      %v2332 = vshrl.u32 %v2215, 16
      %v2334 = vrot.slane %v2332, 2
      %v2335 = vshll.u32 %v2215, 16
      %v2337 = vrot.slane %v2335, 3
      %v2338 = vor.u32 %v2334, %v2337
      %v2339 = vsel %vm2223, %v2329, %v2338
      %v2341 = vshrl.u32 %v2216, 16
      %v2343 = vrot.slane %v2341, 2
      %v2344 = vshll.u32 %v2216, 16
      %v2346 = vrot.slane %v2344, 3
      %v2347 = vor.u32 %v2343, %v2346
      %v2348 = vsel %vm2223, %v2338, %v2347
      %v2350 = vshrl.u32 %v2217, 16
      %v2352 = vrot.slane %v2350, 2
      %v2353 = vshll.u32 %v2217, 16
      %v2355 = vrot.slane %v2353, 3
      %v2356 = vor.u32 %v2352, %v2355
      %v2357 = vsel %vm2223, %v2347, %v2356
      %v2359 = vshrl.u32 %v2218, 16
      %v2361 = vrot.slane %v2359, 2
      %v2362 = vshll.u32 %v2218, 16
      %v2364 = vrot.slane %v2362, 3
      %v2365 = vor.u32 %v2361, %v2364
      %v2366 = vsel %vm2223, %v2356, %v2365
      %v2368 = vshrl.u32 %v2219, 16
      %v2370 = vrot.slane %v2368, 2
      %v2371 = vshll.u32 %v2219, 16
      %v2373 = vrot.slane %v2371, 3
      %v2374 = vor.u32 %v2370, %v2373
      %v2375 = vsel %vm2223, %v2365, %v2374
      %v2377 = vshrl.u32 %v2220, 16
      %v2379 = vrot.slane %v2377, 2
      %v2380 = vshll.u32 %v2220, 16
      %v2382 = vrot.slane %v2380, 3
      %v2383 = vor.u32 %v2379, %v2382
      %v2384 = vsel %vm2223, %v2374, %v2383
      %v2386 = vshrl.u32 %v2221, 16
      %v2388 = vrot.slane %v2386, 2
      %v2389 = vshll.u32 %v2221, 16
      %v2391 = vrot.slane %v2389, 3
      %v2392 = vor.u32 %v2388, %v2391
      %v2393 = vsel %vm2223, %v2383, %v2392
      %v2395 = vshrl.u32 %v2222, 16
      %v2397 = vrot.slane %v2395, 2
      %v2398 = vshll.u32 %v2222, 16
      %v2400 = vrot.slane %v2398, 3
      %v2401 = vor.u32 %v2397, %v2400
      %v2402 = vsel %vm2223, %v2392, %v2401
      %2403 = vrot.lane.b32.xlu0 %v2240, 96
      %v2404 = vpop.permute.xlu0 %2403
      %2405 = vrot.lane.b32.xlu0 %v2249, 96
      %v2406 = vpop.permute.xlu0 %2405
      %2407 = vrot.lane.b32.xlu0 %v2258, 96
      %v2408 = vpop.permute.xlu0 %2407
      %2409 = vrot.lane.b32.xlu0 %v2267, 96
      %v2410 = vpop.permute.xlu0 %2409
      %2411 = vrot.lane.b32.xlu0 %v2276, 96
      %v2412 = vpop.permute.xlu0 %2411
      %2413 = vrot.lane.b32.xlu0 %v2285, 96
      %v2414 = vpop.permute.xlu0 %2413
      %2415 = vrot.lane.b32.xlu0 %v2294, 96
      %v2416 = vpop.permute.xlu0 %2415
      %2417 = vrot.lane.b32.xlu0 %v2303, 96
      %v2418 = vpop.permute.xlu0 %2417
      %2419 = vrot.lane.b32.xlu0 %v2312, 96
      %v2420 = vpop.permute.xlu0 %2419
      %2421 = vrot.lane.b32.xlu0 %v2321, 96
      %v2422 = vpop.permute.xlu0 %2421
      %2423 = vrot.lane.b32.xlu0 %v2330, 96
      %v2424 = vpop.permute.xlu0 %2423
      %2425 = vrot.lane.b32.xlu0 %v2339, 96
      %v2426 = vpop.permute.xlu0 %2425
      %2427 = vrot.lane.b32.xlu0 %v2348, 96
      %v2428 = vpop.permute.xlu0 %2427
      %2429 = vrot.lane.b32.xlu0 %v2357, 96
      %v2430 = vpop.permute.xlu0 %2429
      %2431 = vrot.lane.b32.xlu0 %v2366, 96
      %v2432 = vpop.permute.xlu0 %2431
      %2433 = vrot.lane.b32.xlu0 %v2375, 96
      %v2434 = vpop.permute.xlu0 %2433
      %2435 = vrot.lane.b32.xlu0 %v2384, 96
      %v2436 = vpop.permute.xlu0 %2435
      %2437 = vrot.lane.b32.xlu0 %v2393, 96
      %v2438 = vpop.permute.xlu0 %2437
      %2439 = vrot.lane.b32.xlu0 %v2402, 96
      %v2440 = vpop.permute.xlu0 %2439
      %vm2460 = vcmask 917248
      %2461 = vst.msk [vmem:[#allocation2] sm:$0xff] %vm2460, %v2404
      %2462 = vst.msk [vmem:[#allocation2 + $0x10] sm:$0xff] %vm2460, %v2406
      %2463 = vst.msk [vmem:[#allocation2 + $0x20] sm:$0xff] %vm2460, %v2408
      %2464 = vst.msk [vmem:[#allocation2 + $0x30] sm:$0xff] %vm2460, %v2410
      %2465 = vst.msk [vmem:[#allocation2 + $0x40] sm:$0xff] %vm2460, %v2412
      %2466 = vst.msk [vmem:[#allocation2 + $0x50] sm:$0xff] %vm2460, %v2414
      %2467 = vst.msk [vmem:[#allocation2 + $0x60] sm:$0xff] %vm2460, %v2416
      %2468 = vst.msk [vmem:[#allocation2 + $0x70] sm:$0xff] %vm2460, %v2418
      %2469 = vst.msk [vmem:[#allocation2 + $0x80] sm:$0xff] %vm2460, %v2420
      %2470 = vst.msk [vmem:[#allocation2 + $0x90] sm:$0xff] %vm2460, %v2422
      %2471 = vst.msk [vmem:[#allocation2 + $0xa0] sm:$0xff] %vm2460, %v2424
      %2472 = vst.msk [vmem:[#allocation2 + $0xb0] sm:$0xff] %vm2460, %v2426
      %2473 = vst.msk [vmem:[#allocation2 + $0xc0] sm:$0xff] %vm2460, %v2428
      %2474 = vst.msk [vmem:[#allocation2 + $0xd0] sm:$0xff] %vm2460, %v2430
      %2475 = vst.msk [vmem:[#allocation2 + $0xe0] sm:$0xff] %vm2460, %v2432
      %2476 = vst.msk [vmem:[#allocation2 + $0xf0] sm:$0xff] %vm2460, %v2434
      %2477 = vst.msk [vmem:[#allocation2 + $0x100] sm:$0xff] %vm2460, %v2436
      %2478 = vst.msk [vmem:[#allocation2 + $0x110] sm:$0xff] %vm2460, %v2438
      %2479 = vst.msk [vmem:[#allocation2 + $0x120] sm:$0xff] %vm2460, %v2440
      %v2480 = vld [vmem:[%s199 + $0x8] sm:$0x8]
      %v2481 = vld [vmem:[%s199 + $0xc] sm:$0xf]
      %v2482 = vld [vmem:[%s199 + $0x10] sm:$0xf]
      %v2483 = vld [vmem:[%s199 + $0x14] sm:$0xf]
      %v2484 = vld [vmem:[%s199 + $0x18] sm:$0xf]
      %v2485 = vld [vmem:[%s199 + $0x1c] sm:$0xf]
      %v2486 = vld [vmem:[%s199 + $0x20] sm:$0xf]
      %v2487 = vld [vmem:[%s199 + $0x24] sm:$0xf]
      %v2488 = vld [vmem:[%s199 + $0x28] sm:$0xf]
      %v2489 = vld [vmem:[%s199 + $0x2c] sm:$0xf]
      %v2490 = vld [vmem:[%s199 + $0x30] sm:$0xf]
      %v2491 = vld [vmem:[%s199 + $0x34] sm:$0xf]
      %v2492 = vld [vmem:[%s199 + $0x38] sm:$0xf]
      %v2493 = vld [vmem:[%s199 + $0x3c] sm:$0xf]
      %v2494 = vld [vmem:[%s199 + $0x40] sm:$0xf]
      %v2495 = vld [vmem:[%s199 + $0x44] sm:$0xf]
      %v2496 = vld [vmem:[%s199 + $0x48] sm:$0xf]
      %v2497 = vld [vmem:[%s199 + $0x4c] sm:$0xf]
      %v2498 = vld [vmem:[%s199 + $0x50] sm:$0xf]
      %v2499 = vld [vmem:[%s199 + $0x54] sm:$0xf]
      %v2500 = vld [vmem:[%s199 + $0x58] sm:$0xf]
      %v2501 = vld [vmem:[%s199 + $0x5c] sm:$0xf]
      %v2502 = vld [vmem:[%s199 + $0x60] sm:$0xf]
      %v2503 = vld [vmem:[%s199 + $0x64] sm:$0xf]
      %v2504 = vld [vmem:[%s199 + $0x68] sm:$0xf]
      %v2505 = vld [vmem:[%s199 + $0x6c] sm:$0xf]
      %v2506 = vld [vmem:[%s199 + $0x70] sm:$0xf]
      %v2507 = vld [vmem:[%s199 + $0x74] sm:$0xf]
      %v2508 = vld [vmem:[%s199 + $0x78] sm:$0xf]
      %v2509 = vld [vmem:[%s199 + $0x7c] sm:$0xf]
      %v2510 = vld [vmem:[%s199 + $0x80] sm:$0xf]
      %v2511 = vld [vmem:[%s199 + $0x84] sm:$0xf]
      %v2512 = vld [vmem:[%s199 + $0x88] sm:$0xf]
      %v2513 = vld [vmem:[%s199 + $0x8c] sm:$0xf]
      %v2514 = vld [vmem:[%s199 + $0x90] sm:$0xf]
      %v2515 = vld [vmem:[%s199 + $0x94] sm:$0xf]
      %v2516 = vld [vmem:[%s199 + $0x98] sm:$0xf]
      %v2517 = vld [vmem:[%s199 + $0x9c] sm:$0xf]
      %v2518 = vld [vmem:[%s199 + $0xa0] sm:$0x7]
      %v2558 = vunpack.c.l.b16 %v2480
      %v2559 = vunpack.c.l.b16 %v2481
      %v2560 = vunpack.c.l.b16 %v2482
      %v2561 = vunpack.c.l.b16 %v2483
      %v2562 = vunpack.c.l.b16 %v2484
      %v2563 = vunpack.c.l.b16 %v2485
      %v2564 = vunpack.c.l.b16 %v2486
      %v2565 = vunpack.c.l.b16 %v2487
      %v2566 = vunpack.c.l.b16 %v2488
      %v2567 = vunpack.c.l.b16 %v2489
      %v2568 = vunpack.c.l.b16 %v2490
      %v2569 = vunpack.c.l.b16 %v2491
      %v2570 = vunpack.c.l.b16 %v2492
      %v2571 = vunpack.c.l.b16 %v2493
      %v2572 = vunpack.c.l.b16 %v2494
      %v2573 = vunpack.c.l.b16 %v2495
      %v2574 = vunpack.c.l.b16 %v2496
      %v2575 = vunpack.c.l.b16 %v2497
      %v2576 = vunpack.c.l.b16 %v2498
      %v2577 = vunpack.c.l.b16 %v2499
      %v2578 = vunpack.c.l.b16 %v2500
      %v2579 = vunpack.c.l.b16 %v2501
      %v2580 = vunpack.c.l.b16 %v2502
      %v2581 = vunpack.c.l.b16 %v2503
      %v2582 = vunpack.c.l.b16 %v2504
      %v2583 = vunpack.c.l.b16 %v2505
      %v2584 = vunpack.c.l.b16 %v2506
      %v2585 = vunpack.c.l.b16 %v2507
      %v2586 = vunpack.c.l.b16 %v2508
      %v2587 = vunpack.c.l.b16 %v2509
      %v2588 = vunpack.c.l.b16 %v2510
      %v2589 = vunpack.c.l.b16 %v2511
      %v2590 = vunpack.c.l.b16 %v2512
      %v2591 = vunpack.c.l.b16 %v2513
      %v2592 = vunpack.c.l.b16 %v2514
      %v2593 = vunpack.c.l.b16 %v2515
      %v2594 = vunpack.c.l.b16 %v2516
      %v2595 = vunpack.c.l.b16 %v2517
      %v2596 = vunpack.c.l.b16 %v2518
      %v2597 = vpack.c.b16 %v2559, %v2558
      %v2598 = vpack.c.b16 %v2561, %v2560
      %v2599 = vpack.c.b16 %v2563, %v2562
      %v2600 = vpack.c.b16 %v2565, %v2564
      %v2601 = vpack.c.b16 %v2567, %v2566
      %v2602 = vpack.c.b16 %v2569, %v2568
      %v2603 = vpack.c.b16 %v2571, %v2570
      %v2604 = vpack.c.b16 %v2573, %v2572
      %v2605 = vpack.c.b16 %v2575, %v2574
      %v2606 = vpack.c.b16 %v2577, %v2576
      %v2607 = vpack.c.b16 %v2579, %v2578
      %v2608 = vpack.c.b16 %v2581, %v2580
      %v2609 = vpack.c.b16 %v2583, %v2582
      %v2610 = vpack.c.b16 %v2585, %v2584
      %v2611 = vpack.c.b16 %v2587, %v2586
      %v2612 = vpack.c.b16 %v2589, %v2588
      %v2613 = vpack.c.b16 %v2591, %v2590
      %v2614 = vpack.c.b16 %v2593, %v2592
      %v2615 = vpack.c.b16 %v2595, %v2594
      %v2616 = vpack.c.b16 %v2596, %v2596
      %vm2617 = vcmask 1044480
      %v2618 = vrot.slane %v2597, 3
      %v2619 = vrot.slane %v2598, 3
      %v2620 = vsel %vm2617, %v2618, %v2619
      %v2621 = vrot.slane %v2599, 3
      %v2622 = vsel %vm2617, %v2619, %v2621
      %v2623 = vrot.slane %v2600, 3
      %v2624 = vsel %vm2617, %v2621, %v2623
      %v2625 = vrot.slane %v2601, 3
      %v2626 = vsel %vm2617, %v2623, %v2625
      %v2627 = vrot.slane %v2602, 3
      %v2628 = vsel %vm2617, %v2625, %v2627
      %v2629 = vrot.slane %v2603, 3
      %v2630 = vsel %vm2617, %v2627, %v2629
      %v2631 = vrot.slane %v2604, 3
      %v2632 = vsel %vm2617, %v2629, %v2631
      %v2633 = vrot.slane %v2605, 3
      %v2634 = vsel %vm2617, %v2631, %v2633
      %v2635 = vrot.slane %v2606, 3
      %v2636 = vsel %vm2617, %v2633, %v2635
      %v2637 = vrot.slane %v2607, 3
      %v2638 = vsel %vm2617, %v2635, %v2637
      %v2639 = vrot.slane %v2608, 3
      %v2640 = vsel %vm2617, %v2637, %v2639
      %v2641 = vrot.slane %v2609, 3
      %v2642 = vsel %vm2617, %v2639, %v2641
      %v2643 = vrot.slane %v2610, 3
      %v2644 = vsel %vm2617, %v2641, %v2643
      %v2645 = vrot.slane %v2611, 3
      %v2646 = vsel %vm2617, %v2643, %v2645
      %v2647 = vrot.slane %v2612, 3
      %v2648 = vsel %vm2617, %v2645, %v2647
      %v2649 = vrot.slane %v2613, 3
      %v2650 = vsel %vm2617, %v2647, %v2649
      %v2651 = vrot.slane %v2614, 3
      %v2652 = vsel %vm2617, %v2649, %v2651
      %v2653 = vrot.slane %v2615, 3
      %v2654 = vsel %vm2617, %v2651, %v2653
      %v2655 = vrot.slane %v2616, 3
      %v2656 = vsel %vm2617, %v2653, %v2655
      %2657 = vrot.lane.b32.xlu0 %v2620, 112
      %v2658 = vpop.permute.xlu0 %2657
      %2659 = vrot.lane.b32.xlu0 %v2622, 112
      %v2660 = vpop.permute.xlu0 %2659
      %2661 = vrot.lane.b32.xlu0 %v2624, 112
      %v2662 = vpop.permute.xlu0 %2661
      %2663 = vrot.lane.b32.xlu0 %v2626, 112
      %v2664 = vpop.permute.xlu0 %2663
      %2665 = vrot.lane.b32.xlu0 %v2628, 112
      %v2666 = vpop.permute.xlu0 %2665
      %2667 = vrot.lane.b32.xlu0 %v2630, 112
      %v2668 = vpop.permute.xlu0 %2667
      %2669 = vrot.lane.b32.xlu0 %v2632, 112
      %v2670 = vpop.permute.xlu0 %2669
      %2671 = vrot.lane.b32.xlu0 %v2634, 112
      %v2672 = vpop.permute.xlu0 %2671
      %2673 = vrot.lane.b32.xlu0 %v2636, 112
      %v2674 = vpop.permute.xlu0 %2673
      %2675 = vrot.lane.b32.xlu0 %v2638, 112
      %v2676 = vpop.permute.xlu0 %2675
      %2677 = vrot.lane.b32.xlu0 %v2640, 112
      %v2678 = vpop.permute.xlu0 %2677
      %2679 = vrot.lane.b32.xlu0 %v2642, 112
      %v2680 = vpop.permute.xlu0 %2679
      %2681 = vrot.lane.b32.xlu0 %v2644, 112
      %v2682 = vpop.permute.xlu0 %2681
      %2683 = vrot.lane.b32.xlu0 %v2646, 112
      %v2684 = vpop.permute.xlu0 %2683
      %2685 = vrot.lane.b32.xlu0 %v2648, 112
      %v2686 = vpop.permute.xlu0 %2685
      %2687 = vrot.lane.b32.xlu0 %v2650, 112
      %v2688 = vpop.permute.xlu0 %2687
      %2689 = vrot.lane.b32.xlu0 %v2652, 112
      %v2690 = vpop.permute.xlu0 %2689
      %2691 = vrot.lane.b32.xlu0 %v2654, 112
      %v2692 = vpop.permute.xlu0 %2691
      %2693 = vrot.lane.b32.xlu0 %v2656, 112
      %v2694 = vpop.permute.xlu0 %2693
      %vm2714 = vcmask 1048448
      %2715 = vst.msk [vmem:[#allocation2] sm:$0xff] %vm2714, %v2658
      %2716 = vst.msk [vmem:[#allocation2 + $0x10] sm:$0xff] %vm2714, %v2660
      %2717 = vst.msk [vmem:[#allocation2 + $0x20] sm:$0xff] %vm2714, %v2662
      %2718 = vst.msk [vmem:[#allocation2 + $0x30] sm:$0xff] %vm2714, %v2664
      %2719 = vst.msk [vmem:[#allocation2 + $0x40] sm:$0xff] %vm2714, %v2666
      %2720 = vst.msk [vmem:[#allocation2 + $0x50] sm:$0xff] %vm2714, %v2668
      %2721 = vst.msk [vmem:[#allocation2 + $0x60] sm:$0xff] %vm2714, %v2670
      %2722 = vst.msk [vmem:[#allocation2 + $0x70] sm:$0xff] %vm2714, %v2672
      %2723 = vst.msk [vmem:[#allocation2 + $0x80] sm:$0xff] %vm2714, %v2674
      %2724 = vst.msk [vmem:[#allocation2 + $0x90] sm:$0xff] %vm2714, %v2676
      %2725 = vst.msk [vmem:[#allocation2 + $0xa0] sm:$0xff] %vm2714, %v2678
      %2726 = vst.msk [vmem:[#allocation2 + $0xb0] sm:$0xff] %vm2714, %v2680
      %2727 = vst.msk [vmem:[#allocation2 + $0xc0] sm:$0xff] %vm2714, %v2682
      %2728 = vst.msk [vmem:[#allocation2 + $0xd0] sm:$0xff] %vm2714, %v2684
      %2729 = vst.msk [vmem:[#allocation2 + $0xe0] sm:$0xff] %vm2714, %v2686
      %2730 = vst.msk [vmem:[#allocation2 + $0xf0] sm:$0xff] %vm2714, %v2688
      %2731 = vst.msk [vmem:[#allocation2 + $0x100] sm:$0xff] %vm2714, %v2690
      %2732 = vst.msk [vmem:[#allocation2 + $0x110] sm:$0xff] %vm2714, %v2692
      %2733 = vst.msk [vmem:[#allocation2 + $0x120] sm:$0xff] %vm2714, %v2694
      %v2734 = vld [vmem:[%s199 + $0x10] sm:$0x8]
      %v2735 = vld [vmem:[%s199 + $0x14] sm:$0xf]
      %v2736 = vld [vmem:[%s199 + $0x18] sm:$0xf]
      %v2737 = vld [vmem:[%s199 + $0x1c] sm:$0xf]
      %v2738 = vld [vmem:[%s199 + $0x20] sm:$0xf]
      %v2739 = vld [vmem:[%s199 + $0x24] sm:$0xf]
      %v2740 = vld [vmem:[%s199 + $0x28] sm:$0xf]
      %v2741 = vld [vmem:[%s199 + $0x2c] sm:$0xf]
      %v2742 = vld [vmem:[%s199 + $0x30] sm:$0xf]
      %v2743 = vld [vmem:[%s199 + $0x34] sm:$0xf]
      %v2744 = vld [vmem:[%s199 + $0x38] sm:$0xf]
      %v2745 = vld [vmem:[%s199 + $0x3c] sm:$0xf]
      %v2746 = vld [vmem:[%s199 + $0x40] sm:$0xf]
      %v2747 = vld [vmem:[%s199 + $0x44] sm:$0xf]
      %v2748 = vld [vmem:[%s199 + $0x48] sm:$0xf]
      %v2749 = vld [vmem:[%s199 + $0x4c] sm:$0xf]
      %v2750 = vld [vmem:[%s199 + $0x50] sm:$0xf]
      %v2751 = vld [vmem:[%s199 + $0x54] sm:$0xf]
      %v2752 = vld [vmem:[%s199 + $0x58] sm:$0xf]
      %v2753 = vld [vmem:[%s199 + $0x5c] sm:$0xf]
      %v2754 = vld [vmem:[%s199 + $0x60] sm:$0xf]
      %v2755 = vld [vmem:[%s199 + $0x64] sm:$0xf]
      %v2756 = vld [vmem:[%s199 + $0x68] sm:$0xf]
      %v2757 = vld [vmem:[%s199 + $0x6c] sm:$0xf]
      %v2758 = vld [vmem:[%s199 + $0x70] sm:$0xf]
      %v2759 = vld [vmem:[%s199 + $0x74] sm:$0xf]
      %v2760 = vld [vmem:[%s199 + $0x78] sm:$0xf]
      %v2761 = vld [vmem:[%s199 + $0x7c] sm:$0xf]
      %v2762 = vld [vmem:[%s199 + $0x80] sm:$0xf]
      %v2763 = vld [vmem:[%s199 + $0x84] sm:$0xf]
      %v2764 = vld [vmem:[%s199 + $0x88] sm:$0xf]
      %v2765 = vld [vmem:[%s199 + $0x8c] sm:$0xf]
      %v2766 = vld [vmem:[%s199 + $0x90] sm:$0xf]
      %v2767 = vld [vmem:[%s199 + $0x94] sm:$0xf]
      %v2768 = vld [vmem:[%s199 + $0x98] sm:$0xf]
      %v2769 = vld [vmem:[%s199 + $0x9c] sm:$0xf]
      %v2770 = vld [vmem:[%s199 + $0xa0] sm:$0xf]
      %v2771 = vld [vmem:[%s199 + $0xa4] sm:$0xf]
      %v2772 = vld [vmem:[%s199 + $0xa8] sm:$0x7]
      %v2812 = vunpack.c.l.b16 %v2734
      %v2813 = vunpack.c.l.b16 %v2735
      %v2814 = vunpack.c.l.b16 %v2736
      %v2815 = vunpack.c.l.b16 %v2737
      %v2816 = vunpack.c.l.b16 %v2738
      %v2817 = vunpack.c.l.b16 %v2739
      %v2818 = vunpack.c.l.b16 %v2740
      %v2819 = vunpack.c.l.b16 %v2741
      %v2820 = vunpack.c.l.b16 %v2742
      %v2821 = vunpack.c.l.b16 %v2743
      %v2822 = vunpack.c.l.b16 %v2744
      %v2823 = vunpack.c.l.b16 %v2745
      %v2824 = vunpack.c.l.b16 %v2746
      %v2825 = vunpack.c.l.b16 %v2747
      %v2826 = vunpack.c.l.b16 %v2748
      %v2827 = vunpack.c.l.b16 %v2749
      %v2828 = vunpack.c.l.b16 %v2750
      %v2829 = vunpack.c.l.b16 %v2751
      %v2830 = vunpack.c.l.b16 %v2752
      %v2831 = vunpack.c.l.b16 %v2753
      %v2832 = vunpack.c.l.b16 %v2754
      %v2833 = vunpack.c.l.b16 %v2755
      %v2834 = vunpack.c.l.b16 %v2756
      %v2835 = vunpack.c.l.b16 %v2757
      %v2836 = vunpack.c.l.b16 %v2758
      %v2837 = vunpack.c.l.b16 %v2759
      %v2838 = vunpack.c.l.b16 %v2760
      %v2839 = vunpack.c.l.b16 %v2761
      %v2840 = vunpack.c.l.b16 %v2762
      %v2841 = vunpack.c.l.b16 %v2763
      %v2842 = vunpack.c.l.b16 %v2764
      %v2843 = vunpack.c.l.b16 %v2765
      %v2844 = vunpack.c.l.b16 %v2766
      %v2845 = vunpack.c.l.b16 %v2767
      %v2846 = vunpack.c.l.b16 %v2768
      %v2847 = vunpack.c.l.b16 %v2769
      %v2848 = vunpack.c.l.b16 %v2770
      %v2849 = vunpack.c.l.b16 %v2771
      %v2850 = vunpack.c.l.b16 %v2772
      %v2851 = vpack.c.b16 %v2813, %v2812
      %v2852 = vpack.c.b16 %v2815, %v2814
      %v2853 = vpack.c.b16 %v2817, %v2816
      %v2854 = vpack.c.b16 %v2819, %v2818
      %v2855 = vpack.c.b16 %v2821, %v2820
      %v2856 = vpack.c.b16 %v2823, %v2822
      %v2857 = vpack.c.b16 %v2825, %v2824
      %v2858 = vpack.c.b16 %v2827, %v2826
      %v2859 = vpack.c.b16 %v2829, %v2828
      %v2860 = vpack.c.b16 %v2831, %v2830
      %v2861 = vpack.c.b16 %v2833, %v2832
      %v2862 = vpack.c.b16 %v2835, %v2834
      %v2863 = vpack.c.b16 %v2837, %v2836
      %v2864 = vpack.c.b16 %v2839, %v2838
      %v2865 = vpack.c.b16 %v2841, %v2840
      %v2866 = vpack.c.b16 %v2843, %v2842
      %v2867 = vpack.c.b16 %v2845, %v2844
      %v2868 = vpack.c.b16 %v2847, %v2846
      %v2869 = vpack.c.b16 %v2849, %v2848
      %v2870 = vpack.c.b16 %v2850, %v2850
      %v2871 = vrot.slane %v2851, 3
      %v2872 = vrot.slane %v2852, 3
      %v2873 = vsel %vm2617, %v2871, %v2872
      %v2874 = vrot.slane %v2853, 3
      %v2875 = vsel %vm2617, %v2872, %v2874
      %v2876 = vrot.slane %v2854, 3
      %v2877 = vsel %vm2617, %v2874, %v2876
      %v2878 = vrot.slane %v2855, 3
      %v2879 = vsel %vm2617, %v2876, %v2878
      %v2880 = vrot.slane %v2856, 3
      %v2881 = vsel %vm2617, %v2878, %v2880
      %v2882 = vrot.slane %v2857, 3
      %v2883 = vsel %vm2617, %v2880, %v2882
      %v2884 = vrot.slane %v2858, 3
      %v2885 = vsel %vm2617, %v2882, %v2884
      %v2886 = vrot.slane %v2859, 3
      %v2887 = vsel %vm2617, %v2884, %v2886
      %v2888 = vrot.slane %v2860, 3
      %v2889 = vsel %vm2617, %v2886, %v2888
      %v2890 = vrot.slane %v2861, 3
      %v2891 = vsel %vm2617, %v2888, %v2890
      %v2892 = vrot.slane %v2862, 3
      %v2893 = vsel %vm2617, %v2890, %v2892
      %v2894 = vrot.slane %v2863, 3
      %v2895 = vsel %vm2617, %v2892, %v2894
      %v2896 = vrot.slane %v2864, 3
      %v2897 = vsel %vm2617, %v2894, %v2896
      %v2898 = vrot.slane %v2865, 3
      %v2899 = vsel %vm2617, %v2896, %v2898
      %v2900 = vrot.slane %v2866, 3
      %v2901 = vsel %vm2617, %v2898, %v2900
      %v2902 = vrot.slane %v2867, 3
      %v2903 = vsel %vm2617, %v2900, %v2902
      %v2904 = vrot.slane %v2868, 3
      %v2905 = vsel %vm2617, %v2902, %v2904
      %v2906 = vrot.slane %v2869, 3
      %v2907 = vsel %vm2617, %v2904, %v2906
      %v2908 = vrot.slane %v2870, 3
      %v2909 = vsel %vm2617, %v2906, %v2908
      %2929 = vst.msk [vmem:[#allocation2 + $0x8] sm:$0xff] %vm400, %v2873
      %2930 = vst.msk [vmem:[#allocation2 + $0x18] sm:$0xff] %vm400, %v2875
      %2931 = vst.msk [vmem:[#allocation2 + $0x28] sm:$0xff] %vm400, %v2877
      %2932 = vst.msk [vmem:[#allocation2 + $0x38] sm:$0xff] %vm400, %v2879
      %2933 = vst.msk [vmem:[#allocation2 + $0x48] sm:$0xff] %vm400, %v2881
      %2934 = vst.msk [vmem:[#allocation2 + $0x58] sm:$0xff] %vm400, %v2883
      %2935 = vst.msk [vmem:[#allocation2 + $0x68] sm:$0xff] %vm400, %v2885
      %2936 = vst.msk [vmem:[#allocation2 + $0x78] sm:$0xff] %vm400, %v2887
      %2937 = vst.msk [vmem:[#allocation2 + $0x88] sm:$0xff] %vm400, %v2889
      %2938 = vst.msk [vmem:[#allocation2 + $0x98] sm:$0xff] %vm400, %v2891
      %2939 = vst.msk [vmem:[#allocation2 + $0xa8] sm:$0xff] %vm400, %v2893
      %2940 = vst.msk [vmem:[#allocation2 + $0xb8] sm:$0xff] %vm400, %v2895
      %2941 = vst.msk [vmem:[#allocation2 + $0xc8] sm:$0xff] %vm400, %v2897
      %2942 = vst.msk [vmem:[#allocation2 + $0xd8] sm:$0xff] %vm400, %v2899
      %2943 = vst.msk [vmem:[#allocation2 + $0xe8] sm:$0xff] %vm400, %v2901
      %2944 = vst.msk [vmem:[#allocation2 + $0xf8] sm:$0xff] %vm400, %v2903
      %2945 = vst.msk [vmem:[#allocation2 + $0x108] sm:$0xff] %vm400, %v2905
      %2946 = vst.msk [vmem:[#allocation2 + $0x118] sm:$0xff] %vm400, %v2907
      %2947 = vst.msk [vmem:[#allocation2 + $0x128] sm:$0xff] %vm400, %v2909
      %v2948 = vld [vmem:[%s199 + $0x10] sm:$0x8]
      %v2949 = vld [vmem:[%s199 + $0x14] sm:$0xf]
      %v2950 = vld [vmem:[%s199 + $0x18] sm:$0xf]
      %v2951 = vld [vmem:[%s199 + $0x1c] sm:$0xf]
      %v2952 = vld [vmem:[%s199 + $0x20] sm:$0xf]
      %v2953 = vld [vmem:[%s199 + $0x24] sm:$0xf]
      %v2954 = vld [vmem:[%s199 + $0x28] sm:$0xf]
      %v2955 = vld [vmem:[%s199 + $0x2c] sm:$0xf]
      %v2956 = vld [vmem:[%s199 + $0x30] sm:$0xf]
      %v2957 = vld [vmem:[%s199 + $0x34] sm:$0xf]
      %v2958 = vld [vmem:[%s199 + $0x38] sm:$0xf]
      %v2959 = vld [vmem:[%s199 + $0x3c] sm:$0xf]
      %v2960 = vld [vmem:[%s199 + $0x40] sm:$0xf]
      %v2961 = vld [vmem:[%s199 + $0x44] sm:$0xf]
      %v2962 = vld [vmem:[%s199 + $0x48] sm:$0xf]
      %v2963 = vld [vmem:[%s199 + $0x4c] sm:$0xf]
      %v2964 = vld [vmem:[%s199 + $0x50] sm:$0xf]
      %v2965 = vld [vmem:[%s199 + $0x54] sm:$0xf]
      %v2966 = vld [vmem:[%s199 + $0x58] sm:$0xf]
      %v2967 = vld [vmem:[%s199 + $0x5c] sm:$0xf]
      %v2968 = vld [vmem:[%s199 + $0x60] sm:$0xf]
      %v2969 = vld [vmem:[%s199 + $0x64] sm:$0xf]
      %v2970 = vld [vmem:[%s199 + $0x68] sm:$0xf]
      %v2971 = vld [vmem:[%s199 + $0x6c] sm:$0xf]
      %v2972 = vld [vmem:[%s199 + $0x70] sm:$0xf]
      %v2973 = vld [vmem:[%s199 + $0x74] sm:$0xf]
      %v2974 = vld [vmem:[%s199 + $0x78] sm:$0xf]
      %v2975 = vld [vmem:[%s199 + $0x7c] sm:$0xf]
      %v2976 = vld [vmem:[%s199 + $0x80] sm:$0xf]
      %v2977 = vld [vmem:[%s199 + $0x84] sm:$0xf]
      %v2978 = vld [vmem:[%s199 + $0x88] sm:$0xf]
      %v2979 = vld [vmem:[%s199 + $0x8c] sm:$0xf]
      %v2980 = vld [vmem:[%s199 + $0x90] sm:$0xf]
      %v2981 = vld [vmem:[%s199 + $0x94] sm:$0xf]
      %v2982 = vld [vmem:[%s199 + $0x98] sm:$0xf]
      %v2983 = vld [vmem:[%s199 + $0x9c] sm:$0xf]
      %v2984 = vld [vmem:[%s199 + $0xa0] sm:$0xf]
      %v2985 = vld [vmem:[%s199 + $0xa4] sm:$0xf]
      %v2986 = vld [vmem:[%s199 + $0xa8] sm:$0xf]
      %v3026 = vunpack.c.l.b16 %v2948
      %v3027 = vunpack.c.l.b16 %v2949
      %v3028 = vunpack.c.l.b16 %v2950
      %v3029 = vunpack.c.l.b16 %v2951
      %v3030 = vunpack.c.l.b16 %v2952
      %v3031 = vunpack.c.l.b16 %v2953
      %v3032 = vunpack.c.l.b16 %v2954
      %v3033 = vunpack.c.l.b16 %v2955
      %v3034 = vunpack.c.l.b16 %v2956
      %v3035 = vunpack.c.l.b16 %v2957
      %v3036 = vunpack.c.l.b16 %v2958
      %v3037 = vunpack.c.l.b16 %v2959
      %v3038 = vunpack.c.l.b16 %v2960
      %v3039 = vunpack.c.l.b16 %v2961
      %v3040 = vunpack.c.l.b16 %v2962
      %v3041 = vunpack.c.l.b16 %v2963
      %v3042 = vunpack.c.l.b16 %v2964
      %v3043 = vunpack.c.l.b16 %v2965
      %v3044 = vunpack.c.l.b16 %v2966
      %v3045 = vunpack.c.l.b16 %v2967
      %v3046 = vunpack.c.l.b16 %v2968
      %v3047 = vunpack.c.l.b16 %v2969
      %v3048 = vunpack.c.l.b16 %v2970
      %v3049 = vunpack.c.l.b16 %v2971
      %v3050 = vunpack.c.l.b16 %v2972
      %v3051 = vunpack.c.l.b16 %v2973
      %v3052 = vunpack.c.l.b16 %v2974
      %v3053 = vunpack.c.l.b16 %v2975
      %v3054 = vunpack.c.l.b16 %v2976
      %v3055 = vunpack.c.l.b16 %v2977
      %v3056 = vunpack.c.l.b16 %v2978
      %v3057 = vunpack.c.l.b16 %v2979
      %v3058 = vunpack.c.l.b16 %v2980
      %v3059 = vunpack.c.l.b16 %v2981
      %v3060 = vunpack.c.l.b16 %v2982
      %v3061 = vunpack.c.l.b16 %v2983
      %v3062 = vunpack.c.l.b16 %v2984
      %v3063 = vunpack.c.l.b16 %v2985
      %v3064 = vunpack.c.l.b16 %v2986
      %v3065 = vpack.c.b16 %v3027, %v3026
      %v3066 = vpack.c.b16 %v3029, %v3028
      %v3067 = vpack.c.b16 %v3031, %v3030
      %v3068 = vpack.c.b16 %v3033, %v3032
      %v3069 = vpack.c.b16 %v3035, %v3034
      %v3070 = vpack.c.b16 %v3037, %v3036
      %v3071 = vpack.c.b16 %v3039, %v3038
      %v3072 = vpack.c.b16 %v3041, %v3040
      %v3073 = vpack.c.b16 %v3043, %v3042
      %v3074 = vpack.c.b16 %v3045, %v3044
      %v3075 = vpack.c.b16 %v3047, %v3046
      %v3076 = vpack.c.b16 %v3049, %v3048
      %v3077 = vpack.c.b16 %v3051, %v3050
      %v3078 = vpack.c.b16 %v3053, %v3052
      %v3079 = vpack.c.b16 %v3055, %v3054
      %v3080 = vpack.c.b16 %v3057, %v3056
      %v3081 = vpack.c.b16 %v3059, %v3058
      %v3082 = vpack.c.b16 %v3061, %v3060
      %v3083 = vpack.c.b16 %v3063, %v3062
      %v3084 = vpack.c.b16 %v3064, %v3064
      %vm3085 = vsmask.f32 4352
      %v3087 = vshrl.u32 %v3065, 16
      %v3089 = vrot.slane %v3087, 3
      %v3090 = vshll.u32 %v3065, 16
      %v3092 = vrot.slane %v3090, 4
      %v3093 = vor.u32 %v3089, %v3092
      %v3095 = vshrl.u32 %v3066, 16
      %v3097 = vrot.slane %v3095, 3
      %v3098 = vshll.u32 %v3066, 16
      %v3100 = vrot.slane %v3098, 4
      %v3101 = vor.u32 %v3097, %v3100
      %v3102 = vsel %vm3085, %v3093, %v3101
      %v3104 = vshrl.u32 %v3067, 16
      %v3106 = vrot.slane %v3104, 3
      %v3107 = vshll.u32 %v3067, 16
      %v3109 = vrot.slane %v3107, 4
      %v3110 = vor.u32 %v3106, %v3109
      %v3111 = vsel %vm3085, %v3101, %v3110
      %v3113 = vshrl.u32 %v3068, 16
      %v3115 = vrot.slane %v3113, 3
      %v3116 = vshll.u32 %v3068, 16
      %v3118 = vrot.slane %v3116, 4
      %v3119 = vor.u32 %v3115, %v3118
      %v3120 = vsel %vm3085, %v3110, %v3119
      %v3122 = vshrl.u32 %v3069, 16
      %v3124 = vrot.slane %v3122, 3
      %v3125 = vshll.u32 %v3069, 16
      %v3127 = vrot.slane %v3125, 4
      %v3128 = vor.u32 %v3124, %v3127
      %v3129 = vsel %vm3085, %v3119, %v3128
      %v3131 = vshrl.u32 %v3070, 16
      %v3133 = vrot.slane %v3131, 3
      %v3134 = vshll.u32 %v3070, 16
      %v3136 = vrot.slane %v3134, 4
      %v3137 = vor.u32 %v3133, %v3136
      %v3138 = vsel %vm3085, %v3128, %v3137
      %v3140 = vshrl.u32 %v3071, 16
      %v3142 = vrot.slane %v3140, 3
      %v3143 = vshll.u32 %v3071, 16
      %v3145 = vrot.slane %v3143, 4
      %v3146 = vor.u32 %v3142, %v3145
      %v3147 = vsel %vm3085, %v3137, %v3146
      %v3149 = vshrl.u32 %v3072, 16
      %v3151 = vrot.slane %v3149, 3
      %v3152 = vshll.u32 %v3072, 16
      %v3154 = vrot.slane %v3152, 4
      %v3155 = vor.u32 %v3151, %v3154
      %v3156 = vsel %vm3085, %v3146, %v3155
      %v3158 = vshrl.u32 %v3073, 16
      %v3160 = vrot.slane %v3158, 3
      %v3161 = vshll.u32 %v3073, 16
      %v3163 = vrot.slane %v3161, 4
      %v3164 = vor.u32 %v3160, %v3163
      %v3165 = vsel %vm3085, %v3155, %v3164
      %v3167 = vshrl.u32 %v3074, 16
      %v3169 = vrot.slane %v3167, 3
      %v3170 = vshll.u32 %v3074, 16
      %v3172 = vrot.slane %v3170, 4
      %v3173 = vor.u32 %v3169, %v3172
      %v3174 = vsel %vm3085, %v3164, %v3173
      %v3176 = vshrl.u32 %v3075, 16
      %v3178 = vrot.slane %v3176, 3
      %v3179 = vshll.u32 %v3075, 16
      %v3181 = vrot.slane %v3179, 4
      %v3182 = vor.u32 %v3178, %v3181
      %v3183 = vsel %vm3085, %v3173, %v3182
      %v3185 = vshrl.u32 %v3076, 16
      %v3187 = vrot.slane %v3185, 3
      %v3188 = vshll.u32 %v3076, 16
      %v3190 = vrot.slane %v3188, 4
      %v3191 = vor.u32 %v3187, %v3190
      %v3192 = vsel %vm3085, %v3182, %v3191
      %v3194 = vshrl.u32 %v3077, 16
      %v3196 = vrot.slane %v3194, 3
      %v3197 = vshll.u32 %v3077, 16
      %v3199 = vrot.slane %v3197, 4
      %v3200 = vor.u32 %v3196, %v3199
      %v3201 = vsel %vm3085, %v3191, %v3200
      %v3203 = vshrl.u32 %v3078, 16
      %v3205 = vrot.slane %v3203, 3
      %v3206 = vshll.u32 %v3078, 16
      %v3208 = vrot.slane %v3206, 4
      %v3209 = vor.u32 %v3205, %v3208
      %v3210 = vsel %vm3085, %v3200, %v3209
      %v3212 = vshrl.u32 %v3079, 16
      %v3214 = vrot.slane %v3212, 3
      %v3215 = vshll.u32 %v3079, 16
      %v3217 = vrot.slane %v3215, 4
      %v3218 = vor.u32 %v3214, %v3217
      %v3219 = vsel %vm3085, %v3209, %v3218
      %v3221 = vshrl.u32 %v3080, 16
      %v3223 = vrot.slane %v3221, 3
      %v3224 = vshll.u32 %v3080, 16
      %v3226 = vrot.slane %v3224, 4
      %v3227 = vor.u32 %v3223, %v3226
      %v3228 = vsel %vm3085, %v3218, %v3227
      %v3230 = vshrl.u32 %v3081, 16
      %v3232 = vrot.slane %v3230, 3
      %v3233 = vshll.u32 %v3081, 16
      %v3235 = vrot.slane %v3233, 4
      %v3236 = vor.u32 %v3232, %v3235
      %v3237 = vsel %vm3085, %v3227, %v3236
      %v3239 = vshrl.u32 %v3082, 16
      %v3241 = vrot.slane %v3239, 3
      %v3242 = vshll.u32 %v3082, 16
      %v3244 = vrot.slane %v3242, 4
      %v3245 = vor.u32 %v3241, %v3244
      %v3246 = vsel %vm3085, %v3236, %v3245
      %v3248 = vshrl.u32 %v3083, 16
      %v3250 = vrot.slane %v3248, 3
      %v3251 = vshll.u32 %v3083, 16
      %v3253 = vrot.slane %v3251, 4
      %v3254 = vor.u32 %v3250, %v3253
      %v3255 = vsel %vm3085, %v3245, %v3254
      %v3257 = vshrl.u32 %v3084, 16
      %v3259 = vrot.slane %v3257, 3
      %v3260 = vshll.u32 %v3084, 16
      %v3262 = vrot.slane %v3260, 4
      %v3263 = vor.u32 %v3259, %v3262
      %v3264 = vsel %vm3085, %v3254, %v3263
      %3265 = vrot.lane.b32.xlu0 %v3102, 16
      %v3266 = vpop.permute.xlu0 %3265
      %3267 = vrot.lane.b32.xlu0 %v3111, 16
      %v3268 = vpop.permute.xlu0 %3267
      %3269 = vrot.lane.b32.xlu0 %v3120, 16
      %v3270 = vpop.permute.xlu0 %3269
      %3271 = vrot.lane.b32.xlu0 %v3129, 16
      %v3272 = vpop.permute.xlu0 %3271
      %3273 = vrot.lane.b32.xlu0 %v3138, 16
      %v3274 = vpop.permute.xlu0 %3273
      %3275 = vrot.lane.b32.xlu0 %v3147, 16
      %v3276 = vpop.permute.xlu0 %3275
      %3277 = vrot.lane.b32.xlu0 %v3156, 16
      %v3278 = vpop.permute.xlu0 %3277
      %3279 = vrot.lane.b32.xlu0 %v3165, 16
      %v3280 = vpop.permute.xlu0 %3279
      %3281 = vrot.lane.b32.xlu0 %v3174, 16
      %v3282 = vpop.permute.xlu0 %3281
      %3283 = vrot.lane.b32.xlu0 %v3183, 16
      %v3284 = vpop.permute.xlu0 %3283
      %3285 = vrot.lane.b32.xlu0 %v3192, 16
      %v3286 = vpop.permute.xlu0 %3285
      %3287 = vrot.lane.b32.xlu0 %v3201, 16
      %v3288 = vpop.permute.xlu0 %3287
      %3289 = vrot.lane.b32.xlu0 %v3210, 16
      %v3290 = vpop.permute.xlu0 %3289
      %3291 = vrot.lane.b32.xlu0 %v3219, 16
      %v3292 = vpop.permute.xlu0 %3291
      %3293 = vrot.lane.b32.xlu0 %v3228, 16
      %v3294 = vpop.permute.xlu0 %3293
      %3295 = vrot.lane.b32.xlu0 %v3237, 16
      %v3296 = vpop.permute.xlu0 %3295
      %3297 = vrot.lane.b32.xlu0 %v3246, 16
      %v3298 = vpop.permute.xlu0 %3297
      %3299 = vrot.lane.b32.xlu0 %v3255, 16
      %v3300 = vpop.permute.xlu0 %3299
      %3301 = vrot.lane.b32.xlu0 %v3264, 16
      %v3302 = vpop.permute.xlu0 %3301
      %3322 = vst.msk [vmem:[#allocation2 + $0x8] sm:$0xff] %vm771, %v3266
      %3323 = vst.msk [vmem:[#allocation2 + $0x18] sm:$0xff] %vm771, %v3268
      %3324 = vst.msk [vmem:[#allocation2 + $0x28] sm:$0xff] %vm771, %v3270
      %3325 = vst.msk [vmem:[#allocation2 + $0x38] sm:$0xff] %vm771, %v3272
      %3326 = vst.msk [vmem:[#allocation2 + $0x48] sm:$0xff] %vm771, %v3274
      %3327 = vst.msk [vmem:[#allocation2 + $0x58] sm:$0xff] %vm771, %v3276
      %3328 = vst.msk [vmem:[#allocation2 + $0x68] sm:$0xff] %vm771, %v3278
      %3329 = vst.msk [vmem:[#allocation2 + $0x78] sm:$0xff] %vm771, %v3280
      %3330 = vst.msk [vmem:[#allocation2 + $0x88] sm:$0xff] %vm771, %v3282
      %3331 = vst.msk [vmem:[#allocation2 + $0x98] sm:$0xff] %vm771, %v3284
      %3332 = vst.msk [vmem:[#allocation2 + $0xa8] sm:$0xff] %vm771, %v3286
      %3333 = vst.msk [vmem:[#allocation2 + $0xb8] sm:$0xff] %vm771, %v3288
      %3334 = vst.msk [vmem:[#allocation2 + $0xc8] sm:$0xff] %vm771, %v3290
      %3335 = vst.msk [vmem:[#allocation2 + $0xd8] sm:$0xff] %vm771, %v3292
      %3336 = vst.msk [vmem:[#allocation2 + $0xe8] sm:$0xff] %vm771, %v3294
      %3337 = vst.msk [vmem:[#allocation2 + $0xf8] sm:$0xff] %vm771, %v3296
      %3338 = vst.msk [vmem:[#allocation2 + $0x108] sm:$0xff] %vm771, %v3298
      %3339 = vst.msk [vmem:[#allocation2 + $0x118] sm:$0xff] %vm771, %v3300
      %3340 = vst.msk [vmem:[#allocation2 + $0x128] sm:$0xff] %vm771, %v3302
      %v3341 = vld [vmem:[%s199 + $0x14] sm:$0xf]
      %v3342 = vld [vmem:[%s199 + $0x18] sm:$0xf]
      %v3343 = vld [vmem:[%s199 + $0x1c] sm:$0xf]
      %v3344 = vld [vmem:[%s199 + $0x20] sm:$0xf]
      %v3345 = vld [vmem:[%s199 + $0x24] sm:$0xf]
      %v3346 = vld [vmem:[%s199 + $0x28] sm:$0xf]
      %v3347 = vld [vmem:[%s199 + $0x2c] sm:$0xf]
      %v3348 = vld [vmem:[%s199 + $0x30] sm:$0xf]
      %v3349 = vld [vmem:[%s199 + $0x34] sm:$0xf]
      %v3350 = vld [vmem:[%s199 + $0x38] sm:$0xf]
      %v3351 = vld [vmem:[%s199 + $0x3c] sm:$0xf]
      %v3352 = vld [vmem:[%s199 + $0x40] sm:$0xf]
      %v3353 = vld [vmem:[%s199 + $0x44] sm:$0xf]
      %v3354 = vld [vmem:[%s199 + $0x48] sm:$0xf]
      %v3355 = vld [vmem:[%s199 + $0x4c] sm:$0xf]
      %v3356 = vld [vmem:[%s199 + $0x50] sm:$0xf]
      %v3357 = vld [vmem:[%s199 + $0x54] sm:$0xf]
      %v3358 = vld [vmem:[%s199 + $0x58] sm:$0xf]
      %v3359 = vld [vmem:[%s199 + $0x5c] sm:$0xf]
      %v3360 = vld [vmem:[%s199 + $0x60] sm:$0xf]
      %v3361 = vld [vmem:[%s199 + $0x64] sm:$0xf]
      %v3362 = vld [vmem:[%s199 + $0x68] sm:$0xf]
      %v3363 = vld [vmem:[%s199 + $0x6c] sm:$0xf]
      %v3364 = vld [vmem:[%s199 + $0x70] sm:$0xf]
      %v3365 = vld [vmem:[%s199 + $0x74] sm:$0xf]
      %v3366 = vld [vmem:[%s199 + $0x78] sm:$0xf]
      %v3367 = vld [vmem:[%s199 + $0x7c] sm:$0xf]
      %v3368 = vld [vmem:[%s199 + $0x80] sm:$0xf]
      %v3369 = vld [vmem:[%s199 + $0x84] sm:$0xf]
      %v3370 = vld [vmem:[%s199 + $0x88] sm:$0xf]
      %v3371 = vld [vmem:[%s199 + $0x8c] sm:$0xf]
      %v3372 = vld [vmem:[%s199 + $0x90] sm:$0xf]
      %v3373 = vld [vmem:[%s199 + $0x94] sm:$0xf]
      %v3374 = vld [vmem:[%s199 + $0x98] sm:$0xf]
      %v3375 = vld [vmem:[%s199 + $0x9c] sm:$0xf]
      %v3376 = vld [vmem:[%s199 + $0xa0] sm:$0xf]
      %v3377 = vld [vmem:[%s199 + $0xa4] sm:$0xf]
      %v3378 = vld [vmem:[%s199 + $0xa8] sm:$0xf]
      %v3417 = vunpack.c.l.b16 %v3341
      %v3418 = vunpack.c.l.b16 %v3342
      %v3419 = vunpack.c.l.b16 %v3343
      %v3420 = vunpack.c.l.b16 %v3344
      %v3421 = vunpack.c.l.b16 %v3345
      %v3422 = vunpack.c.l.b16 %v3346
      %v3423 = vunpack.c.l.b16 %v3347
      %v3424 = vunpack.c.l.b16 %v3348
      %v3425 = vunpack.c.l.b16 %v3349
      %v3426 = vunpack.c.l.b16 %v3350
      %v3427 = vunpack.c.l.b16 %v3351
      %v3428 = vunpack.c.l.b16 %v3352
      %v3429 = vunpack.c.l.b16 %v3353
      %v3430 = vunpack.c.l.b16 %v3354
      %v3431 = vunpack.c.l.b16 %v3355
      %v3432 = vunpack.c.l.b16 %v3356
      %v3433 = vunpack.c.l.b16 %v3357
      %v3434 = vunpack.c.l.b16 %v3358
      %v3435 = vunpack.c.l.b16 %v3359
      %v3436 = vunpack.c.l.b16 %v3360
      %v3437 = vunpack.c.l.b16 %v3361
      %v3438 = vunpack.c.l.b16 %v3362
      %v3439 = vunpack.c.l.b16 %v3363
      %v3440 = vunpack.c.l.b16 %v3364
      %v3441 = vunpack.c.l.b16 %v3365
      %v3442 = vunpack.c.l.b16 %v3366
      %v3443 = vunpack.c.l.b16 %v3367
      %v3444 = vunpack.c.l.b16 %v3368
      %v3445 = vunpack.c.l.b16 %v3369
      %v3446 = vunpack.c.l.b16 %v3370
      %v3447 = vunpack.c.l.b16 %v3371
      %v3448 = vunpack.c.l.b16 %v3372
      %v3449 = vunpack.c.l.b16 %v3373
      %v3450 = vunpack.c.l.b16 %v3374
      %v3451 = vunpack.c.l.b16 %v3375
      %v3452 = vunpack.c.l.b16 %v3376
      %v3453 = vunpack.c.l.b16 %v3377
      %v3454 = vunpack.c.l.b16 %v3378
      %v3455 = vpack.c.b16 %v3418, %v3417
      %v3456 = vpack.c.b16 %v3420, %v3419
      %v3457 = vpack.c.b16 %v3422, %v3421
      %v3458 = vpack.c.b16 %v3424, %v3423
      %v3459 = vpack.c.b16 %v3426, %v3425
      %v3460 = vpack.c.b16 %v3428, %v3427
      %v3461 = vpack.c.b16 %v3430, %v3429
      %v3462 = vpack.c.b16 %v3432, %v3431
      %v3463 = vpack.c.b16 %v3434, %v3433
      %v3464 = vpack.c.b16 %v3436, %v3435
      %v3465 = vpack.c.b16 %v3438, %v3437
      %v3466 = vpack.c.b16 %v3440, %v3439
      %v3467 = vpack.c.b16 %v3442, %v3441
      %v3468 = vpack.c.b16 %v3444, %v3443
      %v3469 = vpack.c.b16 %v3446, %v3445
      %v3470 = vpack.c.b16 %v3448, %v3447
      %v3471 = vpack.c.b16 %v3450, %v3449
      %v3472 = vpack.c.b16 %v3452, %v3451
      %v3473 = vpack.c.b16 %v3454, %v3453
      %3474 = vrot.lane.b32.xlu0 %v3455, 32
      %v3475 = vpop.permute.xlu0 %3474
      %3476 = vrot.lane.b32.xlu0 %v3456, 32
      %v3477 = vpop.permute.xlu0 %3476
      %3478 = vrot.lane.b32.xlu0 %v3457, 32
      %v3479 = vpop.permute.xlu0 %3478
      %3480 = vrot.lane.b32.xlu0 %v3458, 32
      %v3481 = vpop.permute.xlu0 %3480
      %3482 = vrot.lane.b32.xlu0 %v3459, 32
      %v3483 = vpop.permute.xlu0 %3482
      %3484 = vrot.lane.b32.xlu0 %v3460, 32
      %v3485 = vpop.permute.xlu0 %3484
      %3486 = vrot.lane.b32.xlu0 %v3461, 32
      %v3487 = vpop.permute.xlu0 %3486
      %3488 = vrot.lane.b32.xlu0 %v3462, 32
      %v3489 = vpop.permute.xlu0 %3488
      %3490 = vrot.lane.b32.xlu0 %v3463, 32
      %v3491 = vpop.permute.xlu0 %3490
      %3492 = vrot.lane.b32.xlu0 %v3464, 32
      %v3493 = vpop.permute.xlu0 %3492
      %3494 = vrot.lane.b32.xlu0 %v3465, 32
      %v3495 = vpop.permute.xlu0 %3494
      %3496 = vrot.lane.b32.xlu0 %v3466, 32
      %v3497 = vpop.permute.xlu0 %3496
      %3498 = vrot.lane.b32.xlu0 %v3467, 32
      %v3499 = vpop.permute.xlu0 %3498
      %3500 = vrot.lane.b32.xlu0 %v3468, 32
      %v3501 = vpop.permute.xlu0 %3500
      %3502 = vrot.lane.b32.xlu0 %v3469, 32
      %v3503 = vpop.permute.xlu0 %3502
      %3504 = vrot.lane.b32.xlu0 %v3470, 32
      %v3505 = vpop.permute.xlu0 %3504
      %3506 = vrot.lane.b32.xlu0 %v3471, 32
      %v3507 = vpop.permute.xlu0 %3506
      %3508 = vrot.lane.b32.xlu0 %v3472, 32
      %v3509 = vpop.permute.xlu0 %3508
      %3510 = vrot.lane.b32.xlu0 %v3473, 32
      %v3511 = vpop.permute.xlu0 %3510
      %3531 = vst.msk [vmem:[#allocation2 + $0x8] sm:$0xff] %vm1025, %v3475
      %3532 = vst.msk [vmem:[#allocation2 + $0x18] sm:$0xff] %vm1025, %v3477
      %3533 = vst.msk [vmem:[#allocation2 + $0x28] sm:$0xff] %vm1025, %v3479
      %3534 = vst.msk [vmem:[#allocation2 + $0x38] sm:$0xff] %vm1025, %v3481
      %3535 = vst.msk [vmem:[#allocation2 + $0x48] sm:$0xff] %vm1025, %v3483
      %3536 = vst.msk [vmem:[#allocation2 + $0x58] sm:$0xff] %vm1025, %v3485
      %3537 = vst.msk [vmem:[#allocation2 + $0x68] sm:$0xff] %vm1025, %v3487
      %3538 = vst.msk [vmem:[#allocation2 + $0x78] sm:$0xff] %vm1025, %v3489
      %3539 = vst.msk [vmem:[#allocation2 + $0x88] sm:$0xff] %vm1025, %v3491
      %3540 = vst.msk [vmem:[#allocation2 + $0x98] sm:$0xff] %vm1025, %v3493
      %3541 = vst.msk [vmem:[#allocation2 + $0xa8] sm:$0xff] %vm1025, %v3495
      %3542 = vst.msk [vmem:[#allocation2 + $0xb8] sm:$0xff] %vm1025, %v3497
      %3543 = vst.msk [vmem:[#allocation2 + $0xc8] sm:$0xff] %vm1025, %v3499
      %3544 = vst.msk [vmem:[#allocation2 + $0xd8] sm:$0xff] %vm1025, %v3501
      %3545 = vst.msk [vmem:[#allocation2 + $0xe8] sm:$0xff] %vm1025, %v3503
      %3546 = vst.msk [vmem:[#allocation2 + $0xf8] sm:$0xff] %vm1025, %v3505
      %3547 = vst.msk [vmem:[#allocation2 + $0x108] sm:$0xff] %vm1025, %v3507
      %3548 = vst.msk [vmem:[#allocation2 + $0x118] sm:$0xff] %vm1025, %v3509
      %3549 = vst.msk [vmem:[#allocation2 + $0x128] sm:$0xff] %vm1025, %v3511
      %v3550 = vld [vmem:[%s199 + $0x14] sm:$0xf]
      %v3551 = vld [vmem:[%s199 + $0x18] sm:$0xf]
      %v3552 = vld [vmem:[%s199 + $0x1c] sm:$0xf]
      %v3553 = vld [vmem:[%s199 + $0x20] sm:$0xf]
      %v3554 = vld [vmem:[%s199 + $0x24] sm:$0xf]
      %v3555 = vld [vmem:[%s199 + $0x28] sm:$0xf]
      %v3556 = vld [vmem:[%s199 + $0x2c] sm:$0xf]
      %v3557 = vld [vmem:[%s199 + $0x30] sm:$0xf]
      %v3558 = vld [vmem:[%s199 + $0x34] sm:$0xf]
      %v3559 = vld [vmem:[%s199 + $0x38] sm:$0xf]
      %v3560 = vld [vmem:[%s199 + $0x3c] sm:$0xf]
      %v3561 = vld [vmem:[%s199 + $0x40] sm:$0xf]
      %v3562 = vld [vmem:[%s199 + $0x44] sm:$0xf]
      %v3563 = vld [vmem:[%s199 + $0x48] sm:$0xf]
      %v3564 = vld [vmem:[%s199 + $0x4c] sm:$0xf]
      %v3565 = vld [vmem:[%s199 + $0x50] sm:$0xf]
      %v3566 = vld [vmem:[%s199 + $0x54] sm:$0xf]
      %v3567 = vld [vmem:[%s199 + $0x58] sm:$0xf]
      %v3568 = vld [vmem:[%s199 + $0x5c] sm:$0xf]
      %v3569 = vld [vmem:[%s199 + $0x60] sm:$0xf]
      %v3570 = vld [vmem:[%s199 + $0x64] sm:$0xf]
      %v3571 = vld [vmem:[%s199 + $0x68] sm:$0xf]
      %v3572 = vld [vmem:[%s199 + $0x6c] sm:$0xf]
      %v3573 = vld [vmem:[%s199 + $0x70] sm:$0xf]
      %v3574 = vld [vmem:[%s199 + $0x74] sm:$0xf]
      %v3575 = vld [vmem:[%s199 + $0x78] sm:$0xf]
      %v3576 = vld [vmem:[%s199 + $0x7c] sm:$0xf]
      %v3577 = vld [vmem:[%s199 + $0x80] sm:$0xf]
      %v3578 = vld [vmem:[%s199 + $0x84] sm:$0xf]
      %v3579 = vld [vmem:[%s199 + $0x88] sm:$0xf]
      %v3580 = vld [vmem:[%s199 + $0x8c] sm:$0xf]
      %v3581 = vld [vmem:[%s199 + $0x90] sm:$0xf]
      %v3582 = vld [vmem:[%s199 + $0x94] sm:$0xf]
      %v3583 = vld [vmem:[%s199 + $0x98] sm:$0xf]
      %v3584 = vld [vmem:[%s199 + $0x9c] sm:$0xf]
      %v3585 = vld [vmem:[%s199 + $0xa0] sm:$0xf]
      %v3586 = vld [vmem:[%s199 + $0xa4] sm:$0xf]
      %v3587 = vld [vmem:[%s199 + $0xa8] sm:$0xf]
      %v3588 = vld [vmem:[%s199 + $0xac] sm:$0x1]
      %v3628 = vunpack.c.l.b16 %v3550
      %v3629 = vunpack.c.l.b16 %v3551
      %v3630 = vunpack.c.l.b16 %v3552
      %v3631 = vunpack.c.l.b16 %v3553
      %v3632 = vunpack.c.l.b16 %v3554
      %v3633 = vunpack.c.l.b16 %v3555
      %v3634 = vunpack.c.l.b16 %v3556
      %v3635 = vunpack.c.l.b16 %v3557
      %v3636 = vunpack.c.l.b16 %v3558
      %v3637 = vunpack.c.l.b16 %v3559
      %v3638 = vunpack.c.l.b16 %v3560
      %v3639 = vunpack.c.l.b16 %v3561
      %v3640 = vunpack.c.l.b16 %v3562
      %v3641 = vunpack.c.l.b16 %v3563
      %v3642 = vunpack.c.l.b16 %v3564
      %v3643 = vunpack.c.l.b16 %v3565
      %v3644 = vunpack.c.l.b16 %v3566
      %v3645 = vunpack.c.l.b16 %v3567
      %v3646 = vunpack.c.l.b16 %v3568
      %v3647 = vunpack.c.l.b16 %v3569
      %v3648 = vunpack.c.l.b16 %v3570
      %v3649 = vunpack.c.l.b16 %v3571
      %v3650 = vunpack.c.l.b16 %v3572
      %v3651 = vunpack.c.l.b16 %v3573
      %v3652 = vunpack.c.l.b16 %v3574
      %v3653 = vunpack.c.l.b16 %v3575
      %v3654 = vunpack.c.l.b16 %v3576
      %v3655 = vunpack.c.l.b16 %v3577
      %v3656 = vunpack.c.l.b16 %v3578
      %v3657 = vunpack.c.l.b16 %v3579
      %v3658 = vunpack.c.l.b16 %v3580
      %v3659 = vunpack.c.l.b16 %v3581
      %v3660 = vunpack.c.l.b16 %v3582
      %v3661 = vunpack.c.l.b16 %v3583
      %v3662 = vunpack.c.l.b16 %v3584
      %v3663 = vunpack.c.l.b16 %v3585
      %v3664 = vunpack.c.l.b16 %v3586
      %v3665 = vunpack.c.l.b16 %v3587
      %v3666 = vunpack.c.l.b16 %v3588
      %v3667 = vpack.c.b16 %v3629, %v3628
      %v3668 = vpack.c.b16 %v3631, %v3630
      %v3669 = vpack.c.b16 %v3633, %v3632
      %v3670 = vpack.c.b16 %v3635, %v3634
      %v3671 = vpack.c.b16 %v3637, %v3636
      %v3672 = vpack.c.b16 %v3639, %v3638
      %v3673 = vpack.c.b16 %v3641, %v3640
      %v3674 = vpack.c.b16 %v3643, %v3642
      %v3675 = vpack.c.b16 %v3645, %v3644
      %v3676 = vpack.c.b16 %v3647, %v3646
      %v3677 = vpack.c.b16 %v3649, %v3648
      %v3678 = vpack.c.b16 %v3651, %v3650
      %v3679 = vpack.c.b16 %v3653, %v3652
      %v3680 = vpack.c.b16 %v3655, %v3654
      %v3681 = vpack.c.b16 %v3657, %v3656
      %v3682 = vpack.c.b16 %v3659, %v3658
      %v3683 = vpack.c.b16 %v3661, %v3660
      %v3684 = vpack.c.b16 %v3663, %v3662
      %v3685 = vpack.c.b16 %v3665, %v3664
      %v3686 = vpack.c.b16 %v3666, %v3666
      %v3688 = vshrl.u32 %v3667, 16
      %v3690 = vshll.u32 %v3667, 16
      %v3692 = vrot.slane %v3690, 1
      %v3693 = vor.u32 %v3688, %v3692
      %v3695 = vshll.u32 %v3668, 16
      %v3697 = vrot.slane %v3695, 1
      %v3698 = vsel %vm557, %v3693, %v3697
      %v3699 = vshrl.u32 %v3668, 16
      %v3701 = vor.u32 %v3699, %v3697
      %v3703 = vshll.u32 %v3669, 16
      %v3705 = vrot.slane %v3703, 1
      %v3706 = vsel %vm557, %v3701, %v3705
      %v3707 = vshrl.u32 %v3669, 16
      %v3709 = vor.u32 %v3707, %v3705
      %v3711 = vshll.u32 %v3670, 16
      %v3713 = vrot.slane %v3711, 1
      %v3714 = vsel %vm557, %v3709, %v3713
      %v3715 = vshrl.u32 %v3670, 16
      %v3717 = vor.u32 %v3715, %v3713
      %v3719 = vshll.u32 %v3671, 16
      %v3721 = vrot.slane %v3719, 1
      %v3722 = vsel %vm557, %v3717, %v3721
      %v3723 = vshrl.u32 %v3671, 16
      %v3725 = vor.u32 %v3723, %v3721
      %v3727 = vshll.u32 %v3672, 16
      %v3729 = vrot.slane %v3727, 1
      %v3730 = vsel %vm557, %v3725, %v3729
      %v3731 = vshrl.u32 %v3672, 16
      %v3733 = vor.u32 %v3731, %v3729
      %v3735 = vshll.u32 %v3673, 16
      %v3737 = vrot.slane %v3735, 1
      %v3738 = vsel %vm557, %v3733, %v3737
      %v3739 = vshrl.u32 %v3673, 16
      %v3741 = vor.u32 %v3739, %v3737
      %v3743 = vshll.u32 %v3674, 16
      %v3745 = vrot.slane %v3743, 1
      %v3746 = vsel %vm557, %v3741, %v3745
      %v3747 = vshrl.u32 %v3674, 16
      %v3749 = vor.u32 %v3747, %v3745
      %v3751 = vshll.u32 %v3675, 16
      %v3753 = vrot.slane %v3751, 1
      %v3754 = vsel %vm557, %v3749, %v3753
      %v3755 = vshrl.u32 %v3675, 16
      %v3757 = vor.u32 %v3755, %v3753
      %v3759 = vshll.u32 %v3676, 16
      %v3761 = vrot.slane %v3759, 1
      %v3762 = vsel %vm557, %v3757, %v3761
      %v3763 = vshrl.u32 %v3676, 16
      %v3765 = vor.u32 %v3763, %v3761
      %v3767 = vshll.u32 %v3677, 16
      %v3769 = vrot.slane %v3767, 1
      %v3770 = vsel %vm557, %v3765, %v3769
      %v3771 = vshrl.u32 %v3677, 16
      %v3773 = vor.u32 %v3771, %v3769
      %v3775 = vshll.u32 %v3678, 16
      %v3777 = vrot.slane %v3775, 1
      %v3778 = vsel %vm557, %v3773, %v3777
      %v3779 = vshrl.u32 %v3678, 16
      %v3781 = vor.u32 %v3779, %v3777
      %v3783 = vshll.u32 %v3679, 16
      %v3785 = vrot.slane %v3783, 1
      %v3786 = vsel %vm557, %v3781, %v3785
      %v3787 = vshrl.u32 %v3679, 16
      %v3789 = vor.u32 %v3787, %v3785
      %v3791 = vshll.u32 %v3680, 16
      %v3793 = vrot.slane %v3791, 1
      %v3794 = vsel %vm557, %v3789, %v3793
      %v3795 = vshrl.u32 %v3680, 16
      %v3797 = vor.u32 %v3795, %v3793
      %v3799 = vshll.u32 %v3681, 16
      %v3801 = vrot.slane %v3799, 1
      %v3802 = vsel %vm557, %v3797, %v3801
      %v3803 = vshrl.u32 %v3681, 16
      %v3805 = vor.u32 %v3803, %v3801
      %v3807 = vshll.u32 %v3682, 16
      %v3809 = vrot.slane %v3807, 1
      %v3810 = vsel %vm557, %v3805, %v3809
      %v3811 = vshrl.u32 %v3682, 16
      %v3813 = vor.u32 %v3811, %v3809
      %v3815 = vshll.u32 %v3683, 16
      %v3817 = vrot.slane %v3815, 1
      %v3818 = vsel %vm557, %v3813, %v3817
      %v3819 = vshrl.u32 %v3683, 16
      %v3821 = vor.u32 %v3819, %v3817
      %v3823 = vshll.u32 %v3684, 16
      %v3825 = vrot.slane %v3823, 1
      %v3826 = vsel %vm557, %v3821, %v3825
      %v3827 = vshrl.u32 %v3684, 16
      %v3829 = vor.u32 %v3827, %v3825
      %v3831 = vshll.u32 %v3685, 16
      %v3833 = vrot.slane %v3831, 1
      %v3834 = vsel %vm557, %v3829, %v3833
      %v3835 = vshrl.u32 %v3685, 16
      %v3837 = vor.u32 %v3835, %v3833
      %v3839 = vshll.u32 %v3686, 16
      %v3841 = vrot.slane %v3839, 1
      %v3842 = vsel %vm557, %v3837, %v3841
      %3843 = vrot.lane.b32.xlu0 %v3698, 48
      %v3844 = vpop.permute.xlu0 %3843
      %3845 = vrot.lane.b32.xlu0 %v3706, 48
      %v3846 = vpop.permute.xlu0 %3845
      %3847 = vrot.lane.b32.xlu0 %v3714, 48
      %v3848 = vpop.permute.xlu0 %3847
      %3849 = vrot.lane.b32.xlu0 %v3722, 48
      %v3850 = vpop.permute.xlu0 %3849
      %3851 = vrot.lane.b32.xlu0 %v3730, 48
      %v3852 = vpop.permute.xlu0 %3851
      %3853 = vrot.lane.b32.xlu0 %v3738, 48
      %v3854 = vpop.permute.xlu0 %3853
      %3855 = vrot.lane.b32.xlu0 %v3746, 48
      %v3856 = vpop.permute.xlu0 %3855
      %3857 = vrot.lane.b32.xlu0 %v3754, 48
      %v3858 = vpop.permute.xlu0 %3857
      %3859 = vrot.lane.b32.xlu0 %v3762, 48
      %v3860 = vpop.permute.xlu0 %3859
      %3861 = vrot.lane.b32.xlu0 %v3770, 48
      %v3862 = vpop.permute.xlu0 %3861
      %3863 = vrot.lane.b32.xlu0 %v3778, 48
      %v3864 = vpop.permute.xlu0 %3863
      %3865 = vrot.lane.b32.xlu0 %v3786, 48
      %v3866 = vpop.permute.xlu0 %3865
      %3867 = vrot.lane.b32.xlu0 %v3794, 48
      %v3868 = vpop.permute.xlu0 %3867
      %3869 = vrot.lane.b32.xlu0 %v3802, 48
      %v3870 = vpop.permute.xlu0 %3869
      %3871 = vrot.lane.b32.xlu0 %v3810, 48
      %v3872 = vpop.permute.xlu0 %3871
      %3873 = vrot.lane.b32.xlu0 %v3818, 48
      %v3874 = vpop.permute.xlu0 %3873
      %3875 = vrot.lane.b32.xlu0 %v3826, 48
      %v3876 = vpop.permute.xlu0 %3875
      %3877 = vrot.lane.b32.xlu0 %v3834, 48
      %v3878 = vpop.permute.xlu0 %3877
      %3879 = vrot.lane.b32.xlu0 %v3842, 48
      %v3880 = vpop.permute.xlu0 %3879
      %3900 = vst.msk [vmem:[#allocation2 + $0x8] sm:$0xff] %vm1419, %v3844
      %3901 = vst.msk [vmem:[#allocation2 + $0x18] sm:$0xff] %vm1419, %v3846
      %3902 = vst.msk [vmem:[#allocation2 + $0x28] sm:$0xff] %vm1419, %v3848
      %3903 = vst.msk [vmem:[#allocation2 + $0x38] sm:$0xff] %vm1419, %v3850
      %3904 = vst.msk [vmem:[#allocation2 + $0x48] sm:$0xff] %vm1419, %v3852
      %3905 = vst.msk [vmem:[#allocation2 + $0x58] sm:$0xff] %vm1419, %v3854
      %3906 = vst.msk [vmem:[#allocation2 + $0x68] sm:$0xff] %vm1419, %v3856
      %3907 = vst.msk [vmem:[#allocation2 + $0x78] sm:$0xff] %vm1419, %v3858
      %3908 = vst.msk [vmem:[#allocation2 + $0x88] sm:$0xff] %vm1419, %v3860
      %3909 = vst.msk [vmem:[#allocation2 + $0x98] sm:$0xff] %vm1419, %v3862
      %3910 = vst.msk [vmem:[#allocation2 + $0xa8] sm:$0xff] %vm1419, %v3864
      %3911 = vst.msk [vmem:[#allocation2 + $0xb8] sm:$0xff] %vm1419, %v3866
      %3912 = vst.msk [vmem:[#allocation2 + $0xc8] sm:$0xff] %vm1419, %v3868
      %3913 = vst.msk [vmem:[#allocation2 + $0xd8] sm:$0xff] %vm1419, %v3870
      %3914 = vst.msk [vmem:[#allocation2 + $0xe8] sm:$0xff] %vm1419, %v3872
      %3915 = vst.msk [vmem:[#allocation2 + $0xf8] sm:$0xff] %vm1419, %v3874
      %3916 = vst.msk [vmem:[#allocation2 + $0x108] sm:$0xff] %vm1419, %v3876
      %3917 = vst.msk [vmem:[#allocation2 + $0x118] sm:$0xff] %vm1419, %v3878
      %3918 = vst.msk [vmem:[#allocation2 + $0x128] sm:$0xff] %vm1419, %v3880
      %v3919 = vld [vmem:[%s199 + $0x1c] sm:$0xf]
      %v3920 = vld [vmem:[%s199 + $0x20] sm:$0xf]
      %v3921 = vld [vmem:[%s199 + $0x24] sm:$0xf]
      %v3922 = vld [vmem:[%s199 + $0x28] sm:$0xf]
      %v3923 = vld [vmem:[%s199 + $0x2c] sm:$0xf]
      %v3924 = vld [vmem:[%s199 + $0x30] sm:$0xf]
      %v3925 = vld [vmem:[%s199 + $0x34] sm:$0xf]
      %v3926 = vld [vmem:[%s199 + $0x38] sm:$0xf]
      %v3927 = vld [vmem:[%s199 + $0x3c] sm:$0xf]
      %v3928 = vld [vmem:[%s199 + $0x40] sm:$0xf]
      %v3929 = vld [vmem:[%s199 + $0x44] sm:$0xf]
      %v3930 = vld [vmem:[%s199 + $0x48] sm:$0xf]
      %v3931 = vld [vmem:[%s199 + $0x4c] sm:$0xf]
      %v3932 = vld [vmem:[%s199 + $0x50] sm:$0xf]
      %v3933 = vld [vmem:[%s199 + $0x54] sm:$0xf]
      %v3934 = vld [vmem:[%s199 + $0x58] sm:$0xf]
      %v3935 = vld [vmem:[%s199 + $0x5c] sm:$0xf]
      %v3936 = vld [vmem:[%s199 + $0x60] sm:$0xf]
      %v3937 = vld [vmem:[%s199 + $0x64] sm:$0xf]
      %v3938 = vld [vmem:[%s199 + $0x68] sm:$0xf]
      %v3939 = vld [vmem:[%s199 + $0x6c] sm:$0xf]
      %v3940 = vld [vmem:[%s199 + $0x70] sm:$0xf]
      %v3941 = vld [vmem:[%s199 + $0x74] sm:$0xf]
      %v3942 = vld [vmem:[%s199 + $0x78] sm:$0xf]
      %v3943 = vld [vmem:[%s199 + $0x7c] sm:$0xf]
      %v3944 = vld [vmem:[%s199 + $0x80] sm:$0xf]
      %v3945 = vld [vmem:[%s199 + $0x84] sm:$0xf]
      %v3946 = vld [vmem:[%s199 + $0x88] sm:$0xf]
      %v3947 = vld [vmem:[%s199 + $0x8c] sm:$0xf]
      %v3948 = vld [vmem:[%s199 + $0x90] sm:$0xf]
      %v3949 = vld [vmem:[%s199 + $0x94] sm:$0xf]
      %v3950 = vld [vmem:[%s199 + $0x98] sm:$0xf]
      %v3951 = vld [vmem:[%s199 + $0x9c] sm:$0xf]
      %v3952 = vld [vmem:[%s199 + $0xa0] sm:$0xf]
      %v3953 = vld [vmem:[%s199 + $0xa4] sm:$0xf]
      %v3954 = vld [vmem:[%s199 + $0xa8] sm:$0xf]
      %v3955 = vld [vmem:[%s199 + $0xac] sm:$0xf]
      %v3956 = vld [vmem:[%s199 + $0xb0] sm:$0xf]
      %v3957 = vld [vmem:[%s199 + $0xb4] sm:$0x1]
      %v3997 = vunpack.c.l.b16 %v3919
      %v3998 = vunpack.c.l.b16 %v3920
      %v3999 = vunpack.c.l.b16 %v3921
      %v4000 = vunpack.c.l.b16 %v3922
      %v4001 = vunpack.c.l.b16 %v3923
      %v4002 = vunpack.c.l.b16 %v3924
      %v4003 = vunpack.c.l.b16 %v3925
      %v4004 = vunpack.c.l.b16 %v3926
      %v4005 = vunpack.c.l.b16 %v3927
      %v4006 = vunpack.c.l.b16 %v3928
      %v4007 = vunpack.c.l.b16 %v3929
      %v4008 = vunpack.c.l.b16 %v3930
      %v4009 = vunpack.c.l.b16 %v3931
      %v4010 = vunpack.c.l.b16 %v3932
      %v4011 = vunpack.c.l.b16 %v3933
      %v4012 = vunpack.c.l.b16 %v3934
      %v4013 = vunpack.c.l.b16 %v3935
      %v4014 = vunpack.c.l.b16 %v3936
      %v4015 = vunpack.c.l.b16 %v3937
      %v4016 = vunpack.c.l.b16 %v3938
      %v4017 = vunpack.c.l.b16 %v3939
      %v4018 = vunpack.c.l.b16 %v3940
      %v4019 = vunpack.c.l.b16 %v3941
      %v4020 = vunpack.c.l.b16 %v3942
      %v4021 = vunpack.c.l.b16 %v3943
      %v4022 = vunpack.c.l.b16 %v3944
      %v4023 = vunpack.c.l.b16 %v3945
      %v4024 = vunpack.c.l.b16 %v3946
      %v4025 = vunpack.c.l.b16 %v3947
      %v4026 = vunpack.c.l.b16 %v3948
      %v4027 = vunpack.c.l.b16 %v3949
      %v4028 = vunpack.c.l.b16 %v3950
      %v4029 = vunpack.c.l.b16 %v3951
      %v4030 = vunpack.c.l.b16 %v3952
      %v4031 = vunpack.c.l.b16 %v3953
      %v4032 = vunpack.c.l.b16 %v3954
      %v4033 = vunpack.c.l.b16 %v3955
      %v4034 = vunpack.c.l.b16 %v3956
      %v4035 = vunpack.c.l.b16 %v3957
      %v4036 = vpack.c.b16 %v3998, %v3997
      %v4037 = vpack.c.b16 %v4000, %v3999
      %v4038 = vpack.c.b16 %v4002, %v4001
      %v4039 = vpack.c.b16 %v4004, %v4003
      %v4040 = vpack.c.b16 %v4006, %v4005
      %v4041 = vpack.c.b16 %v4008, %v4007
      %v4042 = vpack.c.b16 %v4010, %v4009
      %v4043 = vpack.c.b16 %v4012, %v4011
      %v4044 = vpack.c.b16 %v4014, %v4013
      %v4045 = vpack.c.b16 %v4016, %v4015
      %v4046 = vpack.c.b16 %v4018, %v4017
      %v4047 = vpack.c.b16 %v4020, %v4019
      %v4048 = vpack.c.b16 %v4022, %v4021
      %v4049 = vpack.c.b16 %v4024, %v4023
      %v4050 = vpack.c.b16 %v4026, %v4025
      %v4051 = vpack.c.b16 %v4028, %v4027
      %v4052 = vpack.c.b16 %v4030, %v4029
      %v4053 = vpack.c.b16 %v4032, %v4031
      %v4054 = vpack.c.b16 %v4034, %v4033
      %v4055 = vpack.c.b16 %v4035, %v4035
      %v4057 = vshrl.u32 %v4036, 16
      %v4059 = vshll.u32 %v4036, 16
      %v4061 = vrot.slane %v4059, 1
      %v4062 = vor.u32 %v4057, %v4061
      %v4064 = vshll.u32 %v4037, 16
      %v4066 = vrot.slane %v4064, 1
      %v4067 = vsel %vm557, %v4062, %v4066
      %v4068 = vshrl.u32 %v4037, 16
      %v4070 = vor.u32 %v4068, %v4066
      %v4072 = vshll.u32 %v4038, 16
      %v4074 = vrot.slane %v4072, 1
      %v4075 = vsel %vm557, %v4070, %v4074
      %v4076 = vshrl.u32 %v4038, 16
      %v4078 = vor.u32 %v4076, %v4074
      %v4080 = vshll.u32 %v4039, 16
      %v4082 = vrot.slane %v4080, 1
      %v4083 = vsel %vm557, %v4078, %v4082
      %v4084 = vshrl.u32 %v4039, 16
      %v4086 = vor.u32 %v4084, %v4082
      %v4088 = vshll.u32 %v4040, 16
      %v4090 = vrot.slane %v4088, 1
      %v4091 = vsel %vm557, %v4086, %v4090
      %v4092 = vshrl.u32 %v4040, 16
      %v4094 = vor.u32 %v4092, %v4090
      %v4096 = vshll.u32 %v4041, 16
      %v4098 = vrot.slane %v4096, 1
      %v4099 = vsel %vm557, %v4094, %v4098
      %v4100 = vshrl.u32 %v4041, 16
      %v4102 = vor.u32 %v4100, %v4098
      %v4104 = vshll.u32 %v4042, 16
      %v4106 = vrot.slane %v4104, 1
      %v4107 = vsel %vm557, %v4102, %v4106
      %v4108 = vshrl.u32 %v4042, 16
      %v4110 = vor.u32 %v4108, %v4106
      %v4112 = vshll.u32 %v4043, 16
      %v4114 = vrot.slane %v4112, 1
      %v4115 = vsel %vm557, %v4110, %v4114
      %v4116 = vshrl.u32 %v4043, 16
      %v4118 = vor.u32 %v4116, %v4114
      %v4120 = vshll.u32 %v4044, 16
      %v4122 = vrot.slane %v4120, 1
      %v4123 = vsel %vm557, %v4118, %v4122
      %v4124 = vshrl.u32 %v4044, 16
      %v4126 = vor.u32 %v4124, %v4122
      %v4128 = vshll.u32 %v4045, 16
      %v4130 = vrot.slane %v4128, 1
      %v4131 = vsel %vm557, %v4126, %v4130
      %v4132 = vshrl.u32 %v4045, 16
      %v4134 = vor.u32 %v4132, %v4130
      %v4136 = vshll.u32 %v4046, 16
      %v4138 = vrot.slane %v4136, 1
      %v4139 = vsel %vm557, %v4134, %v4138
      %v4140 = vshrl.u32 %v4046, 16
      %v4142 = vor.u32 %v4140, %v4138
      %v4144 = vshll.u32 %v4047, 16
      %v4146 = vrot.slane %v4144, 1
      %v4147 = vsel %vm557, %v4142, %v4146
      %v4148 = vshrl.u32 %v4047, 16
      %v4150 = vor.u32 %v4148, %v4146
      %v4152 = vshll.u32 %v4048, 16
      %v4154 = vrot.slane %v4152, 1
      %v4155 = vsel %vm557, %v4150, %v4154
      %v4156 = vshrl.u32 %v4048, 16
      %v4158 = vor.u32 %v4156, %v4154
      %v4160 = vshll.u32 %v4049, 16
      %v4162 = vrot.slane %v4160, 1
      %v4163 = vsel %vm557, %v4158, %v4162
      %v4164 = vshrl.u32 %v4049, 16
      %v4166 = vor.u32 %v4164, %v4162
      %v4168 = vshll.u32 %v4050, 16
      %v4170 = vrot.slane %v4168, 1
      %v4171 = vsel %vm557, %v4166, %v4170
      %v4172 = vshrl.u32 %v4050, 16
      %v4174 = vor.u32 %v4172, %v4170
      %v4176 = vshll.u32 %v4051, 16
      %v4178 = vrot.slane %v4176, 1
      %v4179 = vsel %vm557, %v4174, %v4178
      %v4180 = vshrl.u32 %v4051, 16
      %v4182 = vor.u32 %v4180, %v4178
      %v4184 = vshll.u32 %v4052, 16
      %v4186 = vrot.slane %v4184, 1
      %v4187 = vsel %vm557, %v4182, %v4186
      %v4188 = vshrl.u32 %v4052, 16
      %v4190 = vor.u32 %v4188, %v4186
      %v4192 = vshll.u32 %v4053, 16
      %v4194 = vrot.slane %v4192, 1
      %v4195 = vsel %vm557, %v4190, %v4194
      %v4196 = vshrl.u32 %v4053, 16
      %v4198 = vor.u32 %v4196, %v4194
      %v4200 = vshll.u32 %v4054, 16
      %v4202 = vrot.slane %v4200, 1
      %v4203 = vsel %vm557, %v4198, %v4202
      %v4204 = vshrl.u32 %v4054, 16
      %v4206 = vor.u32 %v4204, %v4202
      %v4208 = vshll.u32 %v4055, 16
      %v4210 = vrot.slane %v4208, 1
      %v4211 = vsel %vm557, %v4206, %v4210
      %4212 = vrot.lane.b32.xlu0 %v4067, 64
      %v4213 = vpop.permute.xlu0 %4212
      %4214 = vrot.lane.b32.xlu0 %v4075, 64
      %v4215 = vpop.permute.xlu0 %4214
      %4216 = vrot.lane.b32.xlu0 %v4083, 64
      %v4217 = vpop.permute.xlu0 %4216
      %4218 = vrot.lane.b32.xlu0 %v4091, 64
      %v4219 = vpop.permute.xlu0 %4218
      %4220 = vrot.lane.b32.xlu0 %v4099, 64
      %v4221 = vpop.permute.xlu0 %4220
      %4222 = vrot.lane.b32.xlu0 %v4107, 64
      %v4223 = vpop.permute.xlu0 %4222
      %4224 = vrot.lane.b32.xlu0 %v4115, 64
      %v4225 = vpop.permute.xlu0 %4224
      %4226 = vrot.lane.b32.xlu0 %v4123, 64
      %v4227 = vpop.permute.xlu0 %4226
      %4228 = vrot.lane.b32.xlu0 %v4131, 64
      %v4229 = vpop.permute.xlu0 %4228
      %4230 = vrot.lane.b32.xlu0 %v4139, 64
      %v4231 = vpop.permute.xlu0 %4230
      %4232 = vrot.lane.b32.xlu0 %v4147, 64
      %v4233 = vpop.permute.xlu0 %4232
      %4234 = vrot.lane.b32.xlu0 %v4155, 64
      %v4235 = vpop.permute.xlu0 %4234
      %4236 = vrot.lane.b32.xlu0 %v4163, 64
      %v4237 = vpop.permute.xlu0 %4236
      %4238 = vrot.lane.b32.xlu0 %v4171, 64
      %v4239 = vpop.permute.xlu0 %4238
      %4240 = vrot.lane.b32.xlu0 %v4179, 64
      %v4241 = vpop.permute.xlu0 %4240
      %4242 = vrot.lane.b32.xlu0 %v4187, 64
      %v4243 = vpop.permute.xlu0 %4242
      %4244 = vrot.lane.b32.xlu0 %v4195, 64
      %v4245 = vpop.permute.xlu0 %4244
      %4246 = vrot.lane.b32.xlu0 %v4203, 64
      %v4247 = vpop.permute.xlu0 %4246
      %4248 = vrot.lane.b32.xlu0 %v4211, 64
      %v4249 = vpop.permute.xlu0 %4248
      %4269 = vst.msk [vmem:[#allocation2 + $0x8] sm:$0xff] %vm1812, %v4213
      %4270 = vst.msk [vmem:[#allocation2 + $0x18] sm:$0xff] %vm1812, %v4215
      %4271 = vst.msk [vmem:[#allocation2 + $0x28] sm:$0xff] %vm1812, %v4217
      %4272 = vst.msk [vmem:[#allocation2 + $0x38] sm:$0xff] %vm1812, %v4219
      %4273 = vst.msk [vmem:[#allocation2 + $0x48] sm:$0xff] %vm1812, %v4221
      %4274 = vst.msk [vmem:[#allocation2 + $0x58] sm:$0xff] %vm1812, %v4223
      %4275 = vst.msk [vmem:[#allocation2 + $0x68] sm:$0xff] %vm1812, %v4225
      %4276 = vst.msk [vmem:[#allocation2 + $0x78] sm:$0xff] %vm1812, %v4227
      %4277 = vst.msk [vmem:[#allocation2 + $0x88] sm:$0xff] %vm1812, %v4229
      %4278 = vst.msk [vmem:[#allocation2 + $0x98] sm:$0xff] %vm1812, %v4231
      %4279 = vst.msk [vmem:[#allocation2 + $0xa8] sm:$0xff] %vm1812, %v4233
      %4280 = vst.msk [vmem:[#allocation2 + $0xb8] sm:$0xff] %vm1812, %v4235
      %4281 = vst.msk [vmem:[#allocation2 + $0xc8] sm:$0xff] %vm1812, %v4237
      %4282 = vst.msk [vmem:[#allocation2 + $0xd8] sm:$0xff] %vm1812, %v4239
      %4283 = vst.msk [vmem:[#allocation2 + $0xe8] sm:$0xff] %vm1812, %v4241
      %4284 = vst.msk [vmem:[#allocation2 + $0xf8] sm:$0xff] %vm1812, %v4243
      %4285 = vst.msk [vmem:[#allocation2 + $0x108] sm:$0xff] %vm1812, %v4245
      %4286 = vst.msk [vmem:[#allocation2 + $0x118] sm:$0xff] %vm1812, %v4247
      %4287 = vst.msk [vmem:[#allocation2 + $0x128] sm:$0xff] %vm1812, %v4249
      %v4288 = vld [vmem:[%s199 + $0x1c] sm:$0xe]
      %v4289 = vld [vmem:[%s199 + $0x20] sm:$0xf]
      %v4290 = vld [vmem:[%s199 + $0x24] sm:$0xf]
      %v4291 = vld [vmem:[%s199 + $0x28] sm:$0xf]
      %v4292 = vld [vmem:[%s199 + $0x2c] sm:$0xf]
      %v4293 = vld [vmem:[%s199 + $0x30] sm:$0xf]
      %v4294 = vld [vmem:[%s199 + $0x34] sm:$0xf]
      %v4295 = vld [vmem:[%s199 + $0x38] sm:$0xf]
      %v4296 = vld [vmem:[%s199 + $0x3c] sm:$0xf]
      %v4297 = vld [vmem:[%s199 + $0x40] sm:$0xf]
      %v4298 = vld [vmem:[%s199 + $0x44] sm:$0xf]
      %v4299 = vld [vmem:[%s199 + $0x48] sm:$0xf]
      %v4300 = vld [vmem:[%s199 + $0x4c] sm:$0xf]
      %v4301 = vld [vmem:[%s199 + $0x50] sm:$0xf]
      %v4302 = vld [vmem:[%s199 + $0x54] sm:$0xf]
      %v4303 = vld [vmem:[%s199 + $0x58] sm:$0xf]
      %v4304 = vld [vmem:[%s199 + $0x5c] sm:$0xf]
      %v4305 = vld [vmem:[%s199 + $0x60] sm:$0xf]
      %v4306 = vld [vmem:[%s199 + $0x64] sm:$0xf]
      %v4307 = vld [vmem:[%s199 + $0x68] sm:$0xf]
      %v4308 = vld [vmem:[%s199 + $0x6c] sm:$0xf]
      %v4309 = vld [vmem:[%s199 + $0x70] sm:$0xf]
      %v4310 = vld [vmem:[%s199 + $0x74] sm:$0xf]
      %v4311 = vld [vmem:[%s199 + $0x78] sm:$0xf]
      %v4312 = vld [vmem:[%s199 + $0x7c] sm:$0xf]
      %v4313 = vld [vmem:[%s199 + $0x80] sm:$0xf]
      %v4314 = vld [vmem:[%s199 + $0x84] sm:$0xf]
      %v4315 = vld [vmem:[%s199 + $0x88] sm:$0xf]
      %v4316 = vld [vmem:[%s199 + $0x8c] sm:$0xf]
      %v4317 = vld [vmem:[%s199 + $0x90] sm:$0xf]
      %v4318 = vld [vmem:[%s199 + $0x94] sm:$0xf]
      %v4319 = vld [vmem:[%s199 + $0x98] sm:$0xf]
      %v4320 = vld [vmem:[%s199 + $0x9c] sm:$0xf]
      %v4321 = vld [vmem:[%s199 + $0xa0] sm:$0xf]
      %v4322 = vld [vmem:[%s199 + $0xa4] sm:$0xf]
      %v4323 = vld [vmem:[%s199 + $0xa8] sm:$0xf]
      %v4324 = vld [vmem:[%s199 + $0xac] sm:$0xf]
      %v4325 = vld [vmem:[%s199 + $0xb0] sm:$0xf]
      %v4326 = vld [vmem:[%s199 + $0xb4] sm:$0x1]
      %v4366 = vunpack.c.l.b16 %v4288
      %v4367 = vunpack.c.l.b16 %v4289
      %v4368 = vunpack.c.l.b16 %v4290
      %v4369 = vunpack.c.l.b16 %v4291
      %v4370 = vunpack.c.l.b16 %v4292
      %v4371 = vunpack.c.l.b16 %v4293
      %v4372 = vunpack.c.l.b16 %v4294
      %v4373 = vunpack.c.l.b16 %v4295
      %v4374 = vunpack.c.l.b16 %v4296
      %v4375 = vunpack.c.l.b16 %v4297
      %v4376 = vunpack.c.l.b16 %v4298
      %v4377 = vunpack.c.l.b16 %v4299
      %v4378 = vunpack.c.l.b16 %v4300
      %v4379 = vunpack.c.l.b16 %v4301
      %v4380 = vunpack.c.l.b16 %v4302
      %v4381 = vunpack.c.l.b16 %v4303
      %v4382 = vunpack.c.l.b16 %v4304
      %v4383 = vunpack.c.l.b16 %v4305
      %v4384 = vunpack.c.l.b16 %v4306
      %v4385 = vunpack.c.l.b16 %v4307
      %v4386 = vunpack.c.l.b16 %v4308
      %v4387 = vunpack.c.l.b16 %v4309
      %v4388 = vunpack.c.l.b16 %v4310
      %v4389 = vunpack.c.l.b16 %v4311
      %v4390 = vunpack.c.l.b16 %v4312
      %v4391 = vunpack.c.l.b16 %v4313
      %v4392 = vunpack.c.l.b16 %v4314
      %v4393 = vunpack.c.l.b16 %v4315
      %v4394 = vunpack.c.l.b16 %v4316
      %v4395 = vunpack.c.l.b16 %v4317
      %v4396 = vunpack.c.l.b16 %v4318
      %v4397 = vunpack.c.l.b16 %v4319
      %v4398 = vunpack.c.l.b16 %v4320
      %v4399 = vunpack.c.l.b16 %v4321
      %v4400 = vunpack.c.l.b16 %v4322
      %v4401 = vunpack.c.l.b16 %v4323
      %v4402 = vunpack.c.l.b16 %v4324
      %v4403 = vunpack.c.l.b16 %v4325
      %v4404 = vunpack.c.l.b16 %v4326
      %v4405 = vpack.c.b16 %v4367, %v4366
      %v4406 = vpack.c.b16 %v4369, %v4368
      %v4407 = vpack.c.b16 %v4371, %v4370
      %v4408 = vpack.c.b16 %v4373, %v4372
      %v4409 = vpack.c.b16 %v4375, %v4374
      %v4410 = vpack.c.b16 %v4377, %v4376
      %v4411 = vpack.c.b16 %v4379, %v4378
      %v4412 = vpack.c.b16 %v4381, %v4380
      %v4413 = vpack.c.b16 %v4383, %v4382
      %v4414 = vpack.c.b16 %v4385, %v4384
      %v4415 = vpack.c.b16 %v4387, %v4386
      %v4416 = vpack.c.b16 %v4389, %v4388
      %v4417 = vpack.c.b16 %v4391, %v4390
      %v4418 = vpack.c.b16 %v4393, %v4392
      %v4419 = vpack.c.b16 %v4395, %v4394
      %v4420 = vpack.c.b16 %v4397, %v4396
      %v4421 = vpack.c.b16 %v4399, %v4398
      %v4422 = vpack.c.b16 %v4401, %v4400
      %v4423 = vpack.c.b16 %v4403, %v4402
      %v4424 = vpack.c.b16 %v4404, %v4404
      %v4425 = vrot.slane %v4405, 1
      %v4426 = vrot.slane %v4406, 1
      %v4427 = vsel %vm928, %v4425, %v4426
      %v4428 = vrot.slane %v4407, 1
      %v4429 = vsel %vm928, %v4426, %v4428
      %v4430 = vrot.slane %v4408, 1
      %v4431 = vsel %vm928, %v4428, %v4430
      %v4432 = vrot.slane %v4409, 1
      %v4433 = vsel %vm928, %v4430, %v4432
      %v4434 = vrot.slane %v4410, 1
      %v4435 = vsel %vm928, %v4432, %v4434
      %v4436 = vrot.slane %v4411, 1
      %v4437 = vsel %vm928, %v4434, %v4436
      %v4438 = vrot.slane %v4412, 1
      %v4439 = vsel %vm928, %v4436, %v4438
      %v4440 = vrot.slane %v4413, 1
      %v4441 = vsel %vm928, %v4438, %v4440
      %v4442 = vrot.slane %v4414, 1
      %v4443 = vsel %vm928, %v4440, %v4442
      %v4444 = vrot.slane %v4415, 1
      %v4445 = vsel %vm928, %v4442, %v4444
      %v4446 = vrot.slane %v4416, 1
      %v4447 = vsel %vm928, %v4444, %v4446
      %v4448 = vrot.slane %v4417, 1
      %v4449 = vsel %vm928, %v4446, %v4448
      %v4450 = vrot.slane %v4418, 1
      %v4451 = vsel %vm928, %v4448, %v4450
      %v4452 = vrot.slane %v4419, 1
      %v4453 = vsel %vm928, %v4450, %v4452
      %v4454 = vrot.slane %v4420, 1
      %v4455 = vsel %vm928, %v4452, %v4454
      %v4456 = vrot.slane %v4421, 1
      %v4457 = vsel %vm928, %v4454, %v4456
      %v4458 = vrot.slane %v4422, 1
      %v4459 = vsel %vm928, %v4456, %v4458
      %v4460 = vrot.slane %v4423, 1
      %v4461 = vsel %vm928, %v4458, %v4460
      %v4462 = vrot.slane %v4424, 1
      %v4463 = vsel %vm928, %v4460, %v4462
      %4464 = vrot.lane.b32.xlu0 %v4427, 80
      %v4465 = vpop.permute.xlu0 %4464
      %4466 = vrot.lane.b32.xlu0 %v4429, 80
      %v4467 = vpop.permute.xlu0 %4466
      %4468 = vrot.lane.b32.xlu0 %v4431, 80
      %v4469 = vpop.permute.xlu0 %4468
      %4470 = vrot.lane.b32.xlu0 %v4433, 80
      %v4471 = vpop.permute.xlu0 %4470
      %4472 = vrot.lane.b32.xlu0 %v4435, 80
      %v4473 = vpop.permute.xlu0 %4472
      %4474 = vrot.lane.b32.xlu0 %v4437, 80
      %v4475 = vpop.permute.xlu0 %4474
      %4476 = vrot.lane.b32.xlu0 %v4439, 80
      %v4477 = vpop.permute.xlu0 %4476
      %4478 = vrot.lane.b32.xlu0 %v4441, 80
      %v4479 = vpop.permute.xlu0 %4478
      %4480 = vrot.lane.b32.xlu0 %v4443, 80
      %v4481 = vpop.permute.xlu0 %4480
      %4482 = vrot.lane.b32.xlu0 %v4445, 80
      %v4483 = vpop.permute.xlu0 %4482
      %4484 = vrot.lane.b32.xlu0 %v4447, 80
      %v4485 = vpop.permute.xlu0 %4484
      %4486 = vrot.lane.b32.xlu0 %v4449, 80
      %v4487 = vpop.permute.xlu0 %4486
      %4488 = vrot.lane.b32.xlu0 %v4451, 80
      %v4489 = vpop.permute.xlu0 %4488
      %4490 = vrot.lane.b32.xlu0 %v4453, 80
      %v4491 = vpop.permute.xlu0 %4490
      %4492 = vrot.lane.b32.xlu0 %v4455, 80
      %v4493 = vpop.permute.xlu0 %4492
      %4494 = vrot.lane.b32.xlu0 %v4457, 80
      %v4495 = vpop.permute.xlu0 %4494
      %4496 = vrot.lane.b32.xlu0 %v4459, 80
      %v4497 = vpop.permute.xlu0 %4496
      %4498 = vrot.lane.b32.xlu0 %v4461, 80
      %v4499 = vpop.permute.xlu0 %4498
      %4500 = vrot.lane.b32.xlu0 %v4463, 80
      %v4501 = vpop.permute.xlu0 %4500
      %4521 = vst.msk [vmem:[#allocation2 + $0x8] sm:$0xff] %vm2066, %v4465
      %4522 = vst.msk [vmem:[#allocation2 + $0x18] sm:$0xff] %vm2066, %v4467
      %4523 = vst.msk [vmem:[#allocation2 + $0x28] sm:$0xff] %vm2066, %v4469
      %4524 = vst.msk [vmem:[#allocation2 + $0x38] sm:$0xff] %vm2066, %v4471
      %4525 = vst.msk [vmem:[#allocation2 + $0x48] sm:$0xff] %vm2066, %v4473
      %4526 = vst.msk [vmem:[#allocation2 + $0x58] sm:$0xff] %vm2066, %v4475
      %4527 = vst.msk [vmem:[#allocation2 + $0x68] sm:$0xff] %vm2066, %v4477
      %4528 = vst.msk [vmem:[#allocation2 + $0x78] sm:$0xff] %vm2066, %v4479
      %4529 = vst.msk [vmem:[#allocation2 + $0x88] sm:$0xff] %vm2066, %v4481
      %4530 = vst.msk [vmem:[#allocation2 + $0x98] sm:$0xff] %vm2066, %v4483
      %4531 = vst.msk [vmem:[#allocation2 + $0xa8] sm:$0xff] %vm2066, %v4485
      %4532 = vst.msk [vmem:[#allocation2 + $0xb8] sm:$0xff] %vm2066, %v4487
      %4533 = vst.msk [vmem:[#allocation2 + $0xc8] sm:$0xff] %vm2066, %v4489
      %4534 = vst.msk [vmem:[#allocation2 + $0xd8] sm:$0xff] %vm2066, %v4491
      %4535 = vst.msk [vmem:[#allocation2 + $0xe8] sm:$0xff] %vm2066, %v4493
      %4536 = vst.msk [vmem:[#allocation2 + $0xf8] sm:$0xff] %vm2066, %v4495
      %4537 = vst.msk [vmem:[#allocation2 + $0x108] sm:$0xff] %vm2066, %v4497
      %4538 = vst.msk [vmem:[#allocation2 + $0x118] sm:$0xff] %vm2066, %v4499
      %4539 = vst.msk [vmem:[#allocation2 + $0x128] sm:$0xff] %vm2066, %v4501
      %v4540 = vld [vmem:[%s199 + $0x1c] sm:$0xe]
      %v4541 = vld [vmem:[%s199 + $0x20] sm:$0xf]
      %v4542 = vld [vmem:[%s199 + $0x24] sm:$0xf]
      %v4543 = vld [vmem:[%s199 + $0x28] sm:$0xf]
      %v4544 = vld [vmem:[%s199 + $0x2c] sm:$0xf]
      %v4545 = vld [vmem:[%s199 + $0x30] sm:$0xf]
      %v4546 = vld [vmem:[%s199 + $0x34] sm:$0xf]
      %v4547 = vld [vmem:[%s199 + $0x38] sm:$0xf]
      %v4548 = vld [vmem:[%s199 + $0x3c] sm:$0xf]
      %v4549 = vld [vmem:[%s199 + $0x40] sm:$0xf]
      %v4550 = vld [vmem:[%s199 + $0x44] sm:$0xf]
      %v4551 = vld [vmem:[%s199 + $0x48] sm:$0xf]
      %v4552 = vld [vmem:[%s199 + $0x4c] sm:$0xf]
      %v4553 = vld [vmem:[%s199 + $0x50] sm:$0xf]
      %v4554 = vld [vmem:[%s199 + $0x54] sm:$0xf]
      %v4555 = vld [vmem:[%s199 + $0x58] sm:$0xf]
      %v4556 = vld [vmem:[%s199 + $0x5c] sm:$0xf]
      %v4557 = vld [vmem:[%s199 + $0x60] sm:$0xf]
      %v4558 = vld [vmem:[%s199 + $0x64] sm:$0xf]
      %v4559 = vld [vmem:[%s199 + $0x68] sm:$0xf]
      %v4560 = vld [vmem:[%s199 + $0x6c] sm:$0xf]
      %v4561 = vld [vmem:[%s199 + $0x70] sm:$0xf]
      %v4562 = vld [vmem:[%s199 + $0x74] sm:$0xf]
      %v4563 = vld [vmem:[%s199 + $0x78] sm:$0xf]
      %v4564 = vld [vmem:[%s199 + $0x7c] sm:$0xf]
      %v4565 = vld [vmem:[%s199 + $0x80] sm:$0xf]
      %v4566 = vld [vmem:[%s199 + $0x84] sm:$0xf]
      %v4567 = vld [vmem:[%s199 + $0x88] sm:$0xf]
      %v4568 = vld [vmem:[%s199 + $0x8c] sm:$0xf]
      %v4569 = vld [vmem:[%s199 + $0x90] sm:$0xf]
      %v4570 = vld [vmem:[%s199 + $0x94] sm:$0xf]
      %v4571 = vld [vmem:[%s199 + $0x98] sm:$0xf]
      %v4572 = vld [vmem:[%s199 + $0x9c] sm:$0xf]
      %v4573 = vld [vmem:[%s199 + $0xa0] sm:$0xf]
      %v4574 = vld [vmem:[%s199 + $0xa4] sm:$0xf]
      %v4575 = vld [vmem:[%s199 + $0xa8] sm:$0xf]
      %v4576 = vld [vmem:[%s199 + $0xac] sm:$0xf]
      %v4577 = vld [vmem:[%s199 + $0xb0] sm:$0xf]
      %v4578 = vld [vmem:[%s199 + $0xb4] sm:$0x3]
      %v4618 = vunpack.c.l.b16 %v4540
      %v4619 = vunpack.c.l.b16 %v4541
      %v4620 = vunpack.c.l.b16 %v4542
      %v4621 = vunpack.c.l.b16 %v4543
      %v4622 = vunpack.c.l.b16 %v4544
      %v4623 = vunpack.c.l.b16 %v4545
      %v4624 = vunpack.c.l.b16 %v4546
      %v4625 = vunpack.c.l.b16 %v4547
      %v4626 = vunpack.c.l.b16 %v4548
      %v4627 = vunpack.c.l.b16 %v4549
      %v4628 = vunpack.c.l.b16 %v4550
      %v4629 = vunpack.c.l.b16 %v4551
      %v4630 = vunpack.c.l.b16 %v4552
      %v4631 = vunpack.c.l.b16 %v4553
      %v4632 = vunpack.c.l.b16 %v4554
      %v4633 = vunpack.c.l.b16 %v4555
      %v4634 = vunpack.c.l.b16 %v4556
      %v4635 = vunpack.c.l.b16 %v4557
      %v4636 = vunpack.c.l.b16 %v4558
      %v4637 = vunpack.c.l.b16 %v4559
      %v4638 = vunpack.c.l.b16 %v4560
      %v4639 = vunpack.c.l.b16 %v4561
      %v4640 = vunpack.c.l.b16 %v4562
      %v4641 = vunpack.c.l.b16 %v4563
      %v4642 = vunpack.c.l.b16 %v4564
      %v4643 = vunpack.c.l.b16 %v4565
      %v4644 = vunpack.c.l.b16 %v4566
      %v4645 = vunpack.c.l.b16 %v4567
      %v4646 = vunpack.c.l.b16 %v4568
      %v4647 = vunpack.c.l.b16 %v4569
      %v4648 = vunpack.c.l.b16 %v4570
      %v4649 = vunpack.c.l.b16 %v4571
      %v4650 = vunpack.c.l.b16 %v4572
      %v4651 = vunpack.c.l.b16 %v4573
      %v4652 = vunpack.c.l.b16 %v4574
      %v4653 = vunpack.c.l.b16 %v4575
      %v4654 = vunpack.c.l.b16 %v4576
      %v4655 = vunpack.c.l.b16 %v4577
      %v4656 = vunpack.c.l.b16 %v4578
      %v4657 = vpack.c.b16 %v4619, %v4618
      %v4658 = vpack.c.b16 %v4621, %v4620
      %v4659 = vpack.c.b16 %v4623, %v4622
      %v4660 = vpack.c.b16 %v4625, %v4624
      %v4661 = vpack.c.b16 %v4627, %v4626
      %v4662 = vpack.c.b16 %v4629, %v4628
      %v4663 = vpack.c.b16 %v4631, %v4630
      %v4664 = vpack.c.b16 %v4633, %v4632
      %v4665 = vpack.c.b16 %v4635, %v4634
      %v4666 = vpack.c.b16 %v4637, %v4636
      %v4667 = vpack.c.b16 %v4639, %v4638
      %v4668 = vpack.c.b16 %v4641, %v4640
      %v4669 = vpack.c.b16 %v4643, %v4642
      %v4670 = vpack.c.b16 %v4645, %v4644
      %v4671 = vpack.c.b16 %v4647, %v4646
      %v4672 = vpack.c.b16 %v4649, %v4648
      %v4673 = vpack.c.b16 %v4651, %v4650
      %v4674 = vpack.c.b16 %v4653, %v4652
      %v4675 = vpack.c.b16 %v4655, %v4654
      %v4676 = vpack.c.b16 %v4656, %v4656
      %v4678 = vshrl.u32 %v4657, 16
      %v4680 = vrot.slane %v4678, 1
      %v4681 = vshll.u32 %v4657, 16
      %v4683 = vrot.slane %v4681, 2
      %v4684 = vor.u32 %v4680, %v4683
      %v4686 = vshrl.u32 %v4658, 16
      %v4688 = vrot.slane %v4686, 1
      %v4689 = vshll.u32 %v4658, 16
      %v4691 = vrot.slane %v4689, 2
      %v4692 = vor.u32 %v4688, %v4691
      %v4693 = vsel %vm1182, %v4684, %v4692
      %v4695 = vshrl.u32 %v4659, 16
      %v4697 = vrot.slane %v4695, 1
      %v4698 = vshll.u32 %v4659, 16
      %v4700 = vrot.slane %v4698, 2
      %v4701 = vor.u32 %v4697, %v4700
      %v4702 = vsel %vm1182, %v4692, %v4701
      %v4704 = vshrl.u32 %v4660, 16
      %v4706 = vrot.slane %v4704, 1
      %v4707 = vshll.u32 %v4660, 16
      %v4709 = vrot.slane %v4707, 2
      %v4710 = vor.u32 %v4706, %v4709
      %v4711 = vsel %vm1182, %v4701, %v4710
      %v4713 = vshrl.u32 %v4661, 16
      %v4715 = vrot.slane %v4713, 1
      %v4716 = vshll.u32 %v4661, 16
      %v4718 = vrot.slane %v4716, 2
      %v4719 = vor.u32 %v4715, %v4718
      %v4720 = vsel %vm1182, %v4710, %v4719
      %v4722 = vshrl.u32 %v4662, 16
      %v4724 = vrot.slane %v4722, 1
      %v4725 = vshll.u32 %v4662, 16
      %v4727 = vrot.slane %v4725, 2
      %v4728 = vor.u32 %v4724, %v4727
      %v4729 = vsel %vm1182, %v4719, %v4728
      %v4731 = vshrl.u32 %v4663, 16
      %v4733 = vrot.slane %v4731, 1
      %v4734 = vshll.u32 %v4663, 16
      %v4736 = vrot.slane %v4734, 2
      %v4737 = vor.u32 %v4733, %v4736
      %v4738 = vsel %vm1182, %v4728, %v4737
      %v4740 = vshrl.u32 %v4664, 16
      %v4742 = vrot.slane %v4740, 1
      %v4743 = vshll.u32 %v4664, 16
      %v4745 = vrot.slane %v4743, 2
      %v4746 = vor.u32 %v4742, %v4745
      %v4747 = vsel %vm1182, %v4737, %v4746
      %v4749 = vshrl.u32 %v4665, 16
      %v4751 = vrot.slane %v4749, 1
      %v4752 = vshll.u32 %v4665, 16
      %v4754 = vrot.slane %v4752, 2
      %v4755 = vor.u32 %v4751, %v4754
      %v4756 = vsel %vm1182, %v4746, %v4755
      %v4758 = vshrl.u32 %v4666, 16
      %v4760 = vrot.slane %v4758, 1
      %v4761 = vshll.u32 %v4666, 16
      %v4763 = vrot.slane %v4761, 2
      %v4764 = vor.u32 %v4760, %v4763
      %v4765 = vsel %vm1182, %v4755, %v4764
      %v4767 = vshrl.u32 %v4667, 16
      %v4769 = vrot.slane %v4767, 1
      %v4770 = vshll.u32 %v4667, 16
      %v4772 = vrot.slane %v4770, 2
      %v4773 = vor.u32 %v4769, %v4772
      %v4774 = vsel %vm1182, %v4764, %v4773
      %v4776 = vshrl.u32 %v4668, 16
      %v4778 = vrot.slane %v4776, 1
      %v4779 = vshll.u32 %v4668, 16
      %v4781 = vrot.slane %v4779, 2
      %v4782 = vor.u32 %v4778, %v4781
      %v4783 = vsel %vm1182, %v4773, %v4782
      %v4785 = vshrl.u32 %v4669, 16
      %v4787 = vrot.slane %v4785, 1
      %v4788 = vshll.u32 %v4669, 16
      %v4790 = vrot.slane %v4788, 2
      %v4791 = vor.u32 %v4787, %v4790
      %v4792 = vsel %vm1182, %v4782, %v4791
      %v4794 = vshrl.u32 %v4670, 16
      %v4796 = vrot.slane %v4794, 1
      %v4797 = vshll.u32 %v4670, 16
      %v4799 = vrot.slane %v4797, 2
      %v4800 = vor.u32 %v4796, %v4799
      %v4801 = vsel %vm1182, %v4791, %v4800
      %v4803 = vshrl.u32 %v4671, 16
      %v4805 = vrot.slane %v4803, 1
      %v4806 = vshll.u32 %v4671, 16
      %v4808 = vrot.slane %v4806, 2
      %v4809 = vor.u32 %v4805, %v4808
      %v4810 = vsel %vm1182, %v4800, %v4809
      %v4812 = vshrl.u32 %v4672, 16
      %v4814 = vrot.slane %v4812, 1
      %v4815 = vshll.u32 %v4672, 16
      %v4817 = vrot.slane %v4815, 2
      %v4818 = vor.u32 %v4814, %v4817
      %v4819 = vsel %vm1182, %v4809, %v4818
      %v4821 = vshrl.u32 %v4673, 16
      %v4823 = vrot.slane %v4821, 1
      %v4824 = vshll.u32 %v4673, 16
      %v4826 = vrot.slane %v4824, 2
      %v4827 = vor.u32 %v4823, %v4826
      %v4828 = vsel %vm1182, %v4818, %v4827
      %v4830 = vshrl.u32 %v4674, 16
      %v4832 = vrot.slane %v4830, 1
      %v4833 = vshll.u32 %v4674, 16
      %v4835 = vrot.slane %v4833, 2
      %v4836 = vor.u32 %v4832, %v4835
      %v4837 = vsel %vm1182, %v4827, %v4836
      %v4839 = vshrl.u32 %v4675, 16
      %v4841 = vrot.slane %v4839, 1
      %v4842 = vshll.u32 %v4675, 16
      %v4844 = vrot.slane %v4842, 2
      %v4845 = vor.u32 %v4841, %v4844
      %v4846 = vsel %vm1182, %v4836, %v4845
      %v4848 = vshrl.u32 %v4676, 16
      %v4850 = vrot.slane %v4848, 1
      %v4851 = vshll.u32 %v4676, 16
      %v4853 = vrot.slane %v4851, 2
      %v4854 = vor.u32 %v4850, %v4853
      %v4855 = vsel %vm1182, %v4845, %v4854
      %4856 = vrot.lane.b32.xlu0 %v4693, 96
      %v4857 = vpop.permute.xlu0 %4856
      %4858 = vrot.lane.b32.xlu0 %v4702, 96
      %v4859 = vpop.permute.xlu0 %4858
      %4860 = vrot.lane.b32.xlu0 %v4711, 96
      %v4861 = vpop.permute.xlu0 %4860
      %4862 = vrot.lane.b32.xlu0 %v4720, 96
      %v4863 = vpop.permute.xlu0 %4862
      %4864 = vrot.lane.b32.xlu0 %v4729, 96
      %v4865 = vpop.permute.xlu0 %4864
      %4866 = vrot.lane.b32.xlu0 %v4738, 96
      %v4867 = vpop.permute.xlu0 %4866
      %4868 = vrot.lane.b32.xlu0 %v4747, 96
      %v4869 = vpop.permute.xlu0 %4868
      %4870 = vrot.lane.b32.xlu0 %v4756, 96
      %v4871 = vpop.permute.xlu0 %4870
      %4872 = vrot.lane.b32.xlu0 %v4765, 96
      %v4873 = vpop.permute.xlu0 %4872
      %4874 = vrot.lane.b32.xlu0 %v4774, 96
      %v4875 = vpop.permute.xlu0 %4874
      %4876 = vrot.lane.b32.xlu0 %v4783, 96
      %v4877 = vpop.permute.xlu0 %4876
      %4878 = vrot.lane.b32.xlu0 %v4792, 96
      %v4879 = vpop.permute.xlu0 %4878
      %4880 = vrot.lane.b32.xlu0 %v4801, 96
      %v4881 = vpop.permute.xlu0 %4880
      %4882 = vrot.lane.b32.xlu0 %v4810, 96
      %v4883 = vpop.permute.xlu0 %4882
      %4884 = vrot.lane.b32.xlu0 %v4819, 96
      %v4885 = vpop.permute.xlu0 %4884
      %4886 = vrot.lane.b32.xlu0 %v4828, 96
      %v4887 = vpop.permute.xlu0 %4886
      %4888 = vrot.lane.b32.xlu0 %v4837, 96
      %v4889 = vpop.permute.xlu0 %4888
      %4890 = vrot.lane.b32.xlu0 %v4846, 96
      %v4891 = vpop.permute.xlu0 %4890
      %4892 = vrot.lane.b32.xlu0 %v4855, 96
      %v4893 = vpop.permute.xlu0 %4892
      %4913 = vst.msk [vmem:[#allocation2 + $0x8] sm:$0xff] %vm2460, %v4857
      %4914 = vst.msk [vmem:[#allocation2 + $0x18] sm:$0xff] %vm2460, %v4859
      %4915 = vst.msk [vmem:[#allocation2 + $0x28] sm:$0xff] %vm2460, %v4861
      %4916 = vst.msk [vmem:[#allocation2 + $0x38] sm:$0xff] %vm2460, %v4863
      %4917 = vst.msk [vmem:[#allocation2 + $0x48] sm:$0xff] %vm2460, %v4865
      %4918 = vst.msk [vmem:[#allocation2 + $0x58] sm:$0xff] %vm2460, %v4867
      %4919 = vst.msk [vmem:[#allocation2 + $0x68] sm:$0xff] %vm2460, %v4869
      %4920 = vst.msk [vmem:[#allocation2 + $0x78] sm:$0xff] %vm2460, %v4871
      %4921 = vst.msk [vmem:[#allocation2 + $0x88] sm:$0xff] %vm2460, %v4873
      %4922 = vst.msk [vmem:[#allocation2 + $0x98] sm:$0xff] %vm2460, %v4875
      %4923 = vst.msk [vmem:[#allocation2 + $0xa8] sm:$0xff] %vm2460, %v4877
      %4924 = vst.msk [vmem:[#allocation2 + $0xb8] sm:$0xff] %vm2460, %v4879
      %4925 = vst.msk [vmem:[#allocation2 + $0xc8] sm:$0xff] %vm2460, %v4881
      %4926 = vst.msk [vmem:[#allocation2 + $0xd8] sm:$0xff] %vm2460, %v4883
      %4927 = vst.msk [vmem:[#allocation2 + $0xe8] sm:$0xff] %vm2460, %v4885
      %4928 = vst.msk [vmem:[#allocation2 + $0xf8] sm:$0xff] %vm2460, %v4887
      %4929 = vst.msk [vmem:[#allocation2 + $0x108] sm:$0xff] %vm2460, %v4889
      %4930 = vst.msk [vmem:[#allocation2 + $0x118] sm:$0xff] %vm2460, %v4891
      %4931 = vst.msk [vmem:[#allocation2 + $0x128] sm:$0xff] %vm2460, %v4893
      %v4932 = vld [vmem:[%s199 + $0x1c] sm:$0xc]
      %v4933 = vld [vmem:[%s199 + $0x20] sm:$0xf]
      %v4934 = vld [vmem:[%s199 + $0x24] sm:$0xf]
      %v4935 = vld [vmem:[%s199 + $0x28] sm:$0xf]
      %v4936 = vld [vmem:[%s199 + $0x2c] sm:$0xf]
      %v4937 = vld [vmem:[%s199 + $0x30] sm:$0xf]
      %v4938 = vld [vmem:[%s199 + $0x34] sm:$0xf]
      %v4939 = vld [vmem:[%s199 + $0x38] sm:$0xf]
      %v4940 = vld [vmem:[%s199 + $0x3c] sm:$0xf]
      %v4941 = vld [vmem:[%s199 + $0x40] sm:$0xf]
      %v4942 = vld [vmem:[%s199 + $0x44] sm:$0xf]
      %v4943 = vld [vmem:[%s199 + $0x48] sm:$0xf]
      %v4944 = vld [vmem:[%s199 + $0x4c] sm:$0xf]
      %v4945 = vld [vmem:[%s199 + $0x50] sm:$0xf]
      %v4946 = vld [vmem:[%s199 + $0x54] sm:$0xf]
      %v4947 = vld [vmem:[%s199 + $0x58] sm:$0xf]
      %v4948 = vld [vmem:[%s199 + $0x5c] sm:$0xf]
      %v4949 = vld [vmem:[%s199 + $0x60] sm:$0xf]
      %v4950 = vld [vmem:[%s199 + $0x64] sm:$0xf]
      %v4951 = vld [vmem:[%s199 + $0x68] sm:$0xf]
      %v4952 = vld [vmem:[%s199 + $0x6c] sm:$0xf]
      %v4953 = vld [vmem:[%s199 + $0x70] sm:$0xf]
      %v4954 = vld [vmem:[%s199 + $0x74] sm:$0xf]
      %v4955 = vld [vmem:[%s199 + $0x78] sm:$0xf]
      %v4956 = vld [vmem:[%s199 + $0x7c] sm:$0xf]
      %v4957 = vld [vmem:[%s199 + $0x80] sm:$0xf]
      %v4958 = vld [vmem:[%s199 + $0x84] sm:$0xf]
      %v4959 = vld [vmem:[%s199 + $0x88] sm:$0xf]
      %v4960 = vld [vmem:[%s199 + $0x8c] sm:$0xf]
      %v4961 = vld [vmem:[%s199 + $0x90] sm:$0xf]
      %v4962 = vld [vmem:[%s199 + $0x94] sm:$0xf]
      %v4963 = vld [vmem:[%s199 + $0x98] sm:$0xf]
      %v4964 = vld [vmem:[%s199 + $0x9c] sm:$0xf]
      %v4965 = vld [vmem:[%s199 + $0xa0] sm:$0xf]
      %v4966 = vld [vmem:[%s199 + $0xa4] sm:$0xf]
      %v4967 = vld [vmem:[%s199 + $0xa8] sm:$0xf]
      %v4968 = vld [vmem:[%s199 + $0xac] sm:$0xf]
      %v4969 = vld [vmem:[%s199 + $0xb0] sm:$0xf]
      %v4970 = vld [vmem:[%s199 + $0xb4] sm:$0x3]
      %v5010 = vunpack.c.l.b16 %v4932
      %v5011 = vunpack.c.l.b16 %v4933
      %v5012 = vunpack.c.l.b16 %v4934
      %v5013 = vunpack.c.l.b16 %v4935
      %v5014 = vunpack.c.l.b16 %v4936
      %v5015 = vunpack.c.l.b16 %v4937
      %v5016 = vunpack.c.l.b16 %v4938
      %v5017 = vunpack.c.l.b16 %v4939
      %v5018 = vunpack.c.l.b16 %v4940
      %v5019 = vunpack.c.l.b16 %v4941
      %v5020 = vunpack.c.l.b16 %v4942
      %v5021 = vunpack.c.l.b16 %v4943
      %v5022 = vunpack.c.l.b16 %v4944
      %v5023 = vunpack.c.l.b16 %v4945
      %v5024 = vunpack.c.l.b16 %v4946
      %v5025 = vunpack.c.l.b16 %v4947
      %v5026 = vunpack.c.l.b16 %v4948
      %v5027 = vunpack.c.l.b16 %v4949
      %v5028 = vunpack.c.l.b16 %v4950
      %v5029 = vunpack.c.l.b16 %v4951
      %v5030 = vunpack.c.l.b16 %v4952
      %v5031 = vunpack.c.l.b16 %v4953
      %v5032 = vunpack.c.l.b16 %v4954
      %v5033 = vunpack.c.l.b16 %v4955
      %v5034 = vunpack.c.l.b16 %v4956
      %v5035 = vunpack.c.l.b16 %v4957
      %v5036 = vunpack.c.l.b16 %v4958
      %v5037 = vunpack.c.l.b16 %v4959
      %v5038 = vunpack.c.l.b16 %v4960
      %v5039 = vunpack.c.l.b16 %v4961
      %v5040 = vunpack.c.l.b16 %v4962
      %v5041 = vunpack.c.l.b16 %v4963
      %v5042 = vunpack.c.l.b16 %v4964
      %v5043 = vunpack.c.l.b16 %v4965
      %v5044 = vunpack.c.l.b16 %v4966
      %v5045 = vunpack.c.l.b16 %v4967
      %v5046 = vunpack.c.l.b16 %v4968
      %v5047 = vunpack.c.l.b16 %v4969
      %v5048 = vunpack.c.l.b16 %v4970
      %v5049 = vpack.c.b16 %v5011, %v5010
      %v5050 = vpack.c.b16 %v5013, %v5012
      %v5051 = vpack.c.b16 %v5015, %v5014
      %v5052 = vpack.c.b16 %v5017, %v5016
      %v5053 = vpack.c.b16 %v5019, %v5018
      %v5054 = vpack.c.b16 %v5021, %v5020
      %v5055 = vpack.c.b16 %v5023, %v5022
      %v5056 = vpack.c.b16 %v5025, %v5024
      %v5057 = vpack.c.b16 %v5027, %v5026
      %v5058 = vpack.c.b16 %v5029, %v5028
      %v5059 = vpack.c.b16 %v5031, %v5030
      %v5060 = vpack.c.b16 %v5033, %v5032
      %v5061 = vpack.c.b16 %v5035, %v5034
      %v5062 = vpack.c.b16 %v5037, %v5036
      %v5063 = vpack.c.b16 %v5039, %v5038
      %v5064 = vpack.c.b16 %v5041, %v5040
      %v5065 = vpack.c.b16 %v5043, %v5042
      %v5066 = vpack.c.b16 %v5045, %v5044
      %v5067 = vpack.c.b16 %v5047, %v5046
      %v5068 = vpack.c.b16 %v5048, %v5048
      %v5069 = vrot.slane %v5049, 2
      %v5070 = vrot.slane %v5050, 2
      %v5071 = vsel %vm1969, %v5069, %v5070
      %v5072 = vrot.slane %v5051, 2
      %v5073 = vsel %vm1969, %v5070, %v5072
      %v5074 = vrot.slane %v5052, 2
      %v5075 = vsel %vm1969, %v5072, %v5074
      %v5076 = vrot.slane %v5053, 2
      %v5077 = vsel %vm1969, %v5074, %v5076
      %v5078 = vrot.slane %v5054, 2
      %v5079 = vsel %vm1969, %v5076, %v5078
      %v5080 = vrot.slane %v5055, 2
      %v5081 = vsel %vm1969, %v5078, %v5080
      %v5082 = vrot.slane %v5056, 2
      %v5083 = vsel %vm1969, %v5080, %v5082
      %v5084 = vrot.slane %v5057, 2
      %v5085 = vsel %vm1969, %v5082, %v5084
      %v5086 = vrot.slane %v5058, 2
      %v5087 = vsel %vm1969, %v5084, %v5086
      %v5088 = vrot.slane %v5059, 2
      %v5089 = vsel %vm1969, %v5086, %v5088
      %v5090 = vrot.slane %v5060, 2
      %v5091 = vsel %vm1969, %v5088, %v5090
      %v5092 = vrot.slane %v5061, 2
      %v5093 = vsel %vm1969, %v5090, %v5092
      %v5094 = vrot.slane %v5062, 2
      %v5095 = vsel %vm1969, %v5092, %v5094
      %v5096 = vrot.slane %v5063, 2
      %v5097 = vsel %vm1969, %v5094, %v5096
      %v5098 = vrot.slane %v5064, 2
      %v5099 = vsel %vm1969, %v5096, %v5098
      %v5100 = vrot.slane %v5065, 2
      %v5101 = vsel %vm1969, %v5098, %v5100
      %v5102 = vrot.slane %v5066, 2
      %v5103 = vsel %vm1969, %v5100, %v5102
      %v5104 = vrot.slane %v5067, 2
      %v5105 = vsel %vm1969, %v5102, %v5104
      %v5106 = vrot.slane %v5068, 2
      %v5107 = vsel %vm1969, %v5104, %v5106
      %5108 = vrot.lane.b32.xlu0 %v5071, 112
      %v5109 = vpop.permute.xlu0 %5108
      %5110 = vrot.lane.b32.xlu0 %v5073, 112
      %v5111 = vpop.permute.xlu0 %5110
      %5112 = vrot.lane.b32.xlu0 %v5075, 112
      %v5113 = vpop.permute.xlu0 %5112
      %5114 = vrot.lane.b32.xlu0 %v5077, 112
      %v5115 = vpop.permute.xlu0 %5114
      %5116 = vrot.lane.b32.xlu0 %v5079, 112
      %v5117 = vpop.permute.xlu0 %5116
      %5118 = vrot.lane.b32.xlu0 %v5081, 112
      %v5119 = vpop.permute.xlu0 %5118
      %5120 = vrot.lane.b32.xlu0 %v5083, 112
      %v5121 = vpop.permute.xlu0 %5120
      %5122 = vrot.lane.b32.xlu0 %v5085, 112
      %v5123 = vpop.permute.xlu0 %5122
      %5124 = vrot.lane.b32.xlu0 %v5087, 112
      %v5125 = vpop.permute.xlu0 %5124
      %5126 = vrot.lane.b32.xlu0 %v5089, 112
      %v5127 = vpop.permute.xlu0 %5126
      %5128 = vrot.lane.b32.xlu0 %v5091, 112
      %v5129 = vpop.permute.xlu0 %5128
      %5130 = vrot.lane.b32.xlu0 %v5093, 112
      %v5131 = vpop.permute.xlu0 %5130
      %5132 = vrot.lane.b32.xlu0 %v5095, 112
      %v5133 = vpop.permute.xlu0 %5132
      %5134 = vrot.lane.b32.xlu0 %v5097, 112
      %v5135 = vpop.permute.xlu0 %5134
      %5136 = vrot.lane.b32.xlu0 %v5099, 112
      %v5137 = vpop.permute.xlu0 %5136
      %5138 = vrot.lane.b32.xlu0 %v5101, 112
      %v5139 = vpop.permute.xlu0 %5138
      %5140 = vrot.lane.b32.xlu0 %v5103, 112
      %v5141 = vpop.permute.xlu0 %5140
      %5142 = vrot.lane.b32.xlu0 %v5105, 112
      %v5143 = vpop.permute.xlu0 %5142
      %5144 = vrot.lane.b32.xlu0 %v5107, 112
      %v5145 = vpop.permute.xlu0 %5144
      %5165 = vst.msk [vmem:[#allocation2 + $0x8] sm:$0xff] %vm2714, %v5109
      %5166 = vst.msk [vmem:[#allocation2 + $0x18] sm:$0xff] %vm2714, %v5111
      %5167 = vst.msk [vmem:[#allocation2 + $0x28] sm:$0xff] %vm2714, %v5113
      %5168 = vst.msk [vmem:[#allocation2 + $0x38] sm:$0xff] %vm2714, %v5115
      %5169 = vst.msk [vmem:[#allocation2 + $0x48] sm:$0xff] %vm2714, %v5117
      %5170 = vst.msk [vmem:[#allocation2 + $0x58] sm:$0xff] %vm2714, %v5119
      %5171 = vst.msk [vmem:[#allocation2 + $0x68] sm:$0xff] %vm2714, %v5121
      %5172 = vst.msk [vmem:[#allocation2 + $0x78] sm:$0xff] %vm2714, %v5123
      %5173 = vst.msk [vmem:[#allocation2 + $0x88] sm:$0xff] %vm2714, %v5125
      %5174 = vst.msk [vmem:[#allocation2 + $0x98] sm:$0xff] %vm2714, %v5127
      %5175 = vst.msk [vmem:[#allocation2 + $0xa8] sm:$0xff] %vm2714, %v5129
      %5176 = vst.msk [vmem:[#allocation2 + $0xb8] sm:$0xff] %vm2714, %v5131
      %5177 = vst.msk [vmem:[#allocation2 + $0xc8] sm:$0xff] %vm2714, %v5133
      %5178 = vst.msk [vmem:[#allocation2 + $0xd8] sm:$0xff] %vm2714, %v5135
      %5179 = vst.msk [vmem:[#allocation2 + $0xe8] sm:$0xff] %vm2714, %v5137
      %5180 = vst.msk [vmem:[#allocation2 + $0xf8] sm:$0xff] %vm2714, %v5139
      %5181 = vst.msk [vmem:[#allocation2 + $0x108] sm:$0xff] %vm2714, %v5141
      %5182 = vst.msk [vmem:[#allocation2 + $0x118] sm:$0xff] %vm2714, %v5143
      %5183 = vst.msk [vmem:[#allocation2 + $0x128] sm:$0xff] %vm2714, %v5145
      %v5184 = vld [vmem:[#allocation2] sm:$0xff]
      %v5185 = vld [vmem:[#allocation2 + $0x8] sm:$0xff]
      %v5186 = vld [vmem:[#allocation2 + $0x10] sm:$0xff]
      %v5187 = vld [vmem:[#allocation2 + $0x18] sm:$0xff]
      %v5188 = vld [vmem:[#allocation2 + $0x20] sm:$0xff]
      %v5189 = vld [vmem:[#allocation2 + $0x28] sm:$0xff]
      %v5190 = vld [vmem:[#allocation2 + $0x30] sm:$0xff]
      %v5191 = vld [vmem:[#allocation2 + $0x38] sm:$0xff]
      %v5192 = vld [vmem:[#allocation2 + $0x40] sm:$0xff]
      %v5193 = vld [vmem:[#allocation2 + $0x48] sm:$0xff]
      %v5194 = vld [vmem:[#allocation2 + $0x50] sm:$0xff]
      %v5195 = vld [vmem:[#allocation2 + $0x58] sm:$0xff]
      %v5196 = vld [vmem:[#allocation2 + $0x60] sm:$0xff]
      %v5197 = vld [vmem:[#allocation2 + $0x68] sm:$0xff]
      %v5198 = vld [vmem:[#allocation2 + $0x70] sm:$0xff]
      %v5199 = vld [vmem:[#allocation2 + $0x78] sm:$0xff]
      %v5200 = vld [vmem:[#allocation2 + $0x80] sm:$0xff]
      %v5201 = vld [vmem:[#allocation2 + $0x88] sm:$0xff]
      %v5202 = vld [vmem:[#allocation2 + $0x90] sm:$0xff]
      %v5203 = vld [vmem:[#allocation2 + $0x98] sm:$0xff]
      %v5204 = vld [vmem:[#allocation2 + $0xa0] sm:$0xff]
      %v5205 = vld [vmem:[#allocation2 + $0xa8] sm:$0xff]
      %v5206 = vld [vmem:[#allocation2 + $0xb0] sm:$0xff]
      %v5207 = vld [vmem:[#allocation2 + $0xb8] sm:$0xff]
      %v5208 = vld [vmem:[#allocation2 + $0xc0] sm:$0xff]
      %v5209 = vld [vmem:[#allocation2 + $0xc8] sm:$0xff]
      %v5210 = vld [vmem:[#allocation2 + $0xd0] sm:$0xff]
      %v5211 = vld [vmem:[#allocation2 + $0xd8] sm:$0xff]
      %v5212 = vld [vmem:[#allocation2 + $0xe0] sm:$0xff]
      %v5213 = vld [vmem:[#allocation2 + $0xe8] sm:$0xff]
      %v5214 = vld [vmem:[#allocation2 + $0xf0] sm:$0xff]
      %v5215 = vld [vmem:[#allocation2 + $0xf8] sm:$0xff]
      %v5216 = vld [vmem:[#allocation2 + $0x100] sm:$0xff]
      %v5217 = vld [vmem:[#allocation2 + $0x108] sm:$0xff]
      %v5218 = vld [vmem:[#allocation2 + $0x110] sm:$0xff]
      %v5219 = vld [vmem:[#allocation2 + $0x118] sm:$0xff]
      %v5220 = vld [vmem:[#allocation2 + $0x120] sm:$0xff]
      %v5221 = vld [vmem:[#allocation2 + $0x128] sm:$0xff]
      %v5222 = vld [vmem:[%s1] sm:$0xf]
      %v5223 = vld [vmem:[%s1 + $0x4] sm:$0xf]
      %v5224 = vld [vmem:[%s1 + $0x8] sm:$0xf]
      %v5225 = vld [vmem:[%s1 + $0xc] sm:$0xf]
      %v5226 = vld [vmem:[%s1 + $0x10] sm:$0xf]
      %v5227 = vld [vmem:[%s1 + $0x14] sm:$0xf]
      %v5228 = vld [vmem:[%s1 + $0x18] sm:$0xf]
      %v5229 = vld [vmem:[%s1 + $0x1c] sm:$0xf]
      %v5230 = vld [vmem:[%s1 + $0x20] sm:$0xf]
      %v5231 = vld [vmem:[%s1 + $0x24] sm:$0xf]
      %v5232 = vld [vmem:[%s1 + $0x28] sm:$0xf]
      %v5233 = vld [vmem:[%s1 + $0x2c] sm:$0xf]
      %v5234 = vld [vmem:[%s1 + $0x30] sm:$0xf]
      %v5235 = vld [vmem:[%s1 + $0x34] sm:$0xf]
      %v5236 = vld [vmem:[%s1 + $0x38] sm:$0xf]
      %v5237 = vld [vmem:[%s1 + $0x3c] sm:$0xf]
      %v5238 = vld [vmem:[%s1 + $0x40] sm:$0xf]
      %v5239 = vld [vmem:[%s1 + $0x44] sm:$0xf]
      %v5240 = vld [vmem:[%s1 + $0x48] sm:$0xf]
      %v5241 = vld [vmem:[%s1 + $0x4c] sm:$0xf]
      %v5242 = vld [vmem:[%s1 + $0x50] sm:$0xf]
      %v5243 = vld [vmem:[%s1 + $0x54] sm:$0xf]
      %v5244 = vld [vmem:[%s1 + $0x58] sm:$0xf]
      %v5245 = vld [vmem:[%s1 + $0x5c] sm:$0xf]
      %v5246 = vld [vmem:[%s1 + $0x60] sm:$0xf]
      %v5247 = vld [vmem:[%s1 + $0x64] sm:$0xf]
      %v5248 = vld [vmem:[%s1 + $0x68] sm:$0xf]
      %v5249 = vld [vmem:[%s1 + $0x6c] sm:$0xf]
      %v5250 = vld [vmem:[%s1 + $0x70] sm:$0xf]
      %v5251 = vld [vmem:[%s1 + $0x74] sm:$0xf]
      %v5252 = vld [vmem:[%s1 + $0x78] sm:$0xf]
      %v5253 = vld [vmem:[%s1 + $0x7c] sm:$0xf]
      %v5286 = vunpack.c.l.b16 %v5222
      %v5287 = vunpack.c.l.b16 %v5223
      %v5288 = vunpack.c.l.b16 %v5224
      %v5289 = vunpack.c.l.b16 %v5225
      %v5290 = vunpack.c.l.b16 %v5226
      %v5291 = vunpack.c.l.b16 %v5227
      %v5292 = vunpack.c.l.b16 %v5228
      %v5293 = vunpack.c.l.b16 %v5229
      %v5294 = vunpack.c.l.b16 %v5230
      %v5295 = vunpack.c.l.b16 %v5231
      %v5296 = vunpack.c.l.b16 %v5232
      %v5297 = vunpack.c.l.b16 %v5233
      %v5298 = vunpack.c.l.b16 %v5234
      %v5299 = vunpack.c.l.b16 %v5235
      %v5300 = vunpack.c.l.b16 %v5236
      %v5301 = vunpack.c.l.b16 %v5237
      %v5302 = vunpack.c.l.b16 %v5238
      %v5303 = vunpack.c.l.b16 %v5239
      %v5304 = vunpack.c.l.b16 %v5240
      %v5305 = vunpack.c.l.b16 %v5241
      %v5306 = vunpack.c.l.b16 %v5242
      %v5307 = vunpack.c.l.b16 %v5243
      %v5308 = vunpack.c.l.b16 %v5244
      %v5309 = vunpack.c.l.b16 %v5245
      %v5310 = vunpack.c.l.b16 %v5246
      %v5311 = vunpack.c.l.b16 %v5247
      %v5312 = vunpack.c.l.b16 %v5248
      %v5313 = vunpack.c.l.b16 %v5249
      %v5314 = vunpack.c.l.b16 %v5250
      %v5315 = vunpack.c.l.b16 %v5251
      %v5316 = vunpack.c.l.b16 %v5252
      %v5317 = vunpack.c.l.b16 %v5253
      %v5318 = vpack.c.b16 %v5287, %v5286
      %v5319 = vpack.c.b16 %v5289, %v5288
      %v5320 = vpack.c.b16 %v5291, %v5290
      %v5321 = vpack.c.b16 %v5293, %v5292
      %v5322 = vpack.c.b16 %v5295, %v5294
      %v5323 = vpack.c.b16 %v5297, %v5296
      %v5324 = vpack.c.b16 %v5299, %v5298
      %v5325 = vpack.c.b16 %v5301, %v5300
      %v5326 = vpack.c.b16 %v5303, %v5302
      %v5327 = vpack.c.b16 %v5305, %v5304
      %v5328 = vpack.c.b16 %v5307, %v5306
      %v5329 = vpack.c.b16 %v5309, %v5308
      %v5330 = vpack.c.b16 %v5311, %v5310
      %v5331 = vpack.c.b16 %v5313, %v5312
      %v5332 = vpack.c.b16 %v5315, %v5314
      %v5333 = vpack.c.b16 %v5317, %v5316
      %5350 = vmatprep.subr.bf16.mxu0 0
      %5351 = vmatpush1.bf16.msra.mxu0 %v5318
      %5352 = vmatprep.subr.bf16.mxu0 0
      %5353 = vmatpush1.bf16.msra.mxu0 %v5319
      %5354 = vmatprep.subr.bf16.mxu0 0
      %5355 = vmatpush1.bf16.msra.mxu0 %v5320
      %5356 = vmatprep.subr.bf16.mxu0 0
      %5357 = vmatpush1.bf16.msra.mxu0 %v5321
      %5358 = vmatprep.subr.bf16.mxu0 0
      %5359 = vmatpush1.bf16.msra.mxu0 %v5322
      %5360 = vmatprep.subr.bf16.mxu0 0
      %5361 = vmatpush1.bf16.msra.mxu0 %v5323
      %5362 = vmatprep.subr.bf16.mxu0 0
      %5363 = vmatpush1.bf16.msra.mxu0 %v5324
      %5364 = vmatprep.subr.bf16.mxu0 0
      %5365 = vmatpush1.bf16.msra.mxu0 %v5325
      %5366 = vmatprep.subr.bf16.mxu0 0
      %5367 = vmatpush1.bf16.msra.mxu0 %v5326
      %5368 = vmatprep.subr.bf16.mxu0 0
      %5369 = vmatpush1.bf16.msra.mxu0 %v5327
      %5370 = vmatprep.subr.bf16.mxu0 0
      %5371 = vmatpush1.bf16.msra.mxu0 %v5328
      %5372 = vmatprep.subr.bf16.mxu0 0
      %5373 = vmatpush1.bf16.msra.mxu0 %v5329
      %5374 = vmatprep.subr.bf16.mxu0 0
      %5375 = vmatpush1.bf16.msra.mxu0 %v5330
      %5376 = vmatprep.subr.bf16.mxu0 0
      %5377 = vmatpush1.bf16.msra.mxu0 %v5331
      %5378 = vmatprep.subr.bf16.mxu0 0
      %5379 = vmatpush1.bf16.msra.mxu0 %v5332
      %5380 = vmatprep.subr.bf16.mxu0 0
      %5381 = vmatpush1.bf16.msra.mxu0 %v5333
      %5382 = vmatprep.mubr.bf16.mxu0 %v5185
      %5383 = vmatmul.mubr.bf16.gmra.mrb[0].mxu0 %v5184
      %v5384 = vpop.f32.mrb[0].mxu0
      %v5385 = vadd.f32 0.0, %v5384
      %v5386 = vpop.f32.mrb[0].mxu0
      %v5387 = vpop.f32.mrb[0].mxu0
      %v5388 = vadd.f32 0.0, %v5387
      %v5389 = vpop.f32.mrb[0].mxu0
      %5390 = vmatprep.mubr.bf16.mxu0 %v5187
      %5391 = vmatmul.mubr.bf16.gmra.mrb[0].mxu0 %v5186
      %v5392 = vpop.f32.mrb[0].mxu0
      %v5393 = vadd.f32 0.0, %v5392
      %v5394 = vpop.f32.mrb[0].mxu0
      %v5395 = vpop.f32.mrb[0].mxu0
      %v5396 = vadd.f32 0.0, %v5395
      %v5397 = vpop.f32.mrb[0].mxu0
      %5398 = vmatprep.mubr.bf16.mxu0 %v5189
      %5399 = vmatmul.mubr.bf16.gmra.mrb[0].mxu0 %v5188
      %v5400 = vpop.f32.mrb[0].mxu0
      %v5401 = vadd.f32 0.0, %v5400
      %v5402 = vpop.f32.mrb[0].mxu0
      %v5403 = vpop.f32.mrb[0].mxu0
      %v5404 = vadd.f32 0.0, %v5403
      %v5405 = vpop.f32.mrb[0].mxu0
      %5406 = vmatprep.mubr.bf16.mxu0 %v5191
      %5407 = vmatmul.mubr.bf16.gmra.mrb[0].mxu0 %v5190
      %v5408 = vpop.f32.mrb[0].mxu0
      %v5409 = vadd.f32 0.0, %v5408
      %v5410 = vpop.f32.mrb[0].mxu0
      %v5411 = vpop.f32.mrb[0].mxu0
      %v5412 = vadd.f32 0.0, %v5411
      %v5413 = vpop.f32.mrb[0].mxu0
      %5414 = vmatprep.mubr.bf16.mxu0 %v5193
      %5415 = vmatmul.mubr.bf16.gmra.mrb[0].mxu0 %v5192
      %v5416 = vpop.f32.mrb[0].mxu0
      %v5417 = vadd.f32 0.0, %v5416
      %v5418 = vpop.f32.mrb[0].mxu0
      %v5419 = vpop.f32.mrb[0].mxu0
      %v5420 = vadd.f32 0.0, %v5419
      %v5421 = vpop.f32.mrb[0].mxu0
      %5422 = vmatprep.mubr.bf16.mxu0 %v5195
      %5423 = vmatmul.mubr.bf16.gmra.mrb[0].mxu0 %v5194
      %v5424 = vpop.f32.mrb[0].mxu0
      %v5425 = vadd.f32 0.0, %v5424
      %v5426 = vpop.f32.mrb[0].mxu0
      %v5427 = vpop.f32.mrb[0].mxu0
      %v5428 = vadd.f32 0.0, %v5427
      %v5429 = vpop.f32.mrb[0].mxu0
      %5430 = vmatprep.mubr.bf16.mxu0 %v5197
      %5431 = vmatmul.mubr.bf16.gmra.mrb[0].mxu0 %v5196
      %v5432 = vpop.f32.mrb[0].mxu0
      %v5433 = vadd.f32 0.0, %v5432
      %v5434 = vpop.f32.mrb[0].mxu0
      %v5435 = vpop.f32.mrb[0].mxu0
      %v5436 = vadd.f32 0.0, %v5435
      %v5437 = vpop.f32.mrb[0].mxu0
      %5438 = vmatprep.mubr.bf16.mxu0 %v5199
      %5439 = vmatmul.mubr.bf16.gmra.mrb[0].mxu0 %v5198
      %v5440 = vpop.f32.mrb[0].mxu0
      %v5441 = vadd.f32 0.0, %v5440
      %v5442 = vpop.f32.mrb[0].mxu0
      %v5443 = vpop.f32.mrb[0].mxu0
      %v5444 = vadd.f32 0.0, %v5443
      %v5445 = vpop.f32.mrb[0].mxu0
      %5446 = vmatprep.mubr.bf16.mxu0 %v5201
      %5447 = vmatmul.mubr.bf16.gmra.mrb[0].mxu0 %v5200
      %v5448 = vpop.f32.mrb[0].mxu0
      %v5449 = vadd.f32 0.0, %v5448
      %v5450 = vpop.f32.mrb[0].mxu0
      %v5451 = vpop.f32.mrb[0].mxu0
      %v5452 = vadd.f32 0.0, %v5451
      %v5453 = vpop.f32.mrb[0].mxu0
      %5454 = vmatprep.mubr.bf16.mxu0 %v5203
      %5455 = vmatmul.mubr.bf16.gmra.mrb[0].mxu0 %v5202
      %v5456 = vpop.f32.mrb[0].mxu0
      %v5457 = vadd.f32 0.0, %v5456
      %v5458 = vpop.f32.mrb[0].mxu0
      %v5459 = vpop.f32.mrb[0].mxu0
      %v5460 = vadd.f32 0.0, %v5459
      %v5461 = vpop.f32.mrb[0].mxu0
      %5462 = vmatprep.mubr.bf16.mxu0 %v5205
      %5463 = vmatmul.mubr.bf16.gmra.mrb[0].mxu0 %v5204
      %v5464 = vpop.f32.mrb[0].mxu0
      %v5465 = vadd.f32 0.0, %v5464
      %v5466 = vpop.f32.mrb[0].mxu0
      %v5467 = vpop.f32.mrb[0].mxu0
      %v5468 = vadd.f32 0.0, %v5467
      %v5469 = vpop.f32.mrb[0].mxu0
      %5470 = vmatprep.mubr.bf16.mxu0 %v5207
      %5471 = vmatmul.mubr.bf16.gmra.mrb[0].mxu0 %v5206
      %v5472 = vpop.f32.mrb[0].mxu0
      %v5473 = vadd.f32 0.0, %v5472
      %v5474 = vpop.f32.mrb[0].mxu0
      %v5475 = vpop.f32.mrb[0].mxu0
      %v5476 = vadd.f32 0.0, %v5475
      %v5477 = vpop.f32.mrb[0].mxu0
      %5478 = vmatprep.mubr.bf16.mxu0 %v5209
      %5479 = vmatmul.mubr.bf16.gmra.mrb[0].mxu0 %v5208
      %v5480 = vpop.f32.mrb[0].mxu0
      %v5481 = vadd.f32 0.0, %v5480
      %v5482 = vpop.f32.mrb[0].mxu0
      %v5483 = vpop.f32.mrb[0].mxu0
      %v5484 = vadd.f32 0.0, %v5483
      %v5485 = vpop.f32.mrb[0].mxu0
      %5486 = vmatprep.mubr.bf16.mxu0 %v5211
      %5487 = vmatmul.mubr.bf16.gmra.mrb[0].mxu0 %v5210
      %v5488 = vpop.f32.mrb[0].mxu0
      %v5489 = vadd.f32 0.0, %v5488
      %v5490 = vpop.f32.mrb[0].mxu0
      %v5491 = vpop.f32.mrb[0].mxu0
      %v5492 = vadd.f32 0.0, %v5491
      %v5493 = vpop.f32.mrb[0].mxu0
      %5494 = vmatprep.mubr.bf16.mxu0 %v5213
      %5495 = vmatmul.mubr.bf16.gmra.mrb[0].mxu0 %v5212
      %v5496 = vpop.f32.mrb[0].mxu0
      %v5497 = vadd.f32 0.0, %v5496
      %v5498 = vpop.f32.mrb[0].mxu0
      %v5499 = vpop.f32.mrb[0].mxu0
      %v5500 = vadd.f32 0.0, %v5499
      %v5501 = vpop.f32.mrb[0].mxu0
      %5502 = vmatprep.mubr.bf16.mxu0 %v5215
      %5503 = vmatmul.mubr.bf16.gmra.mrb[0].mxu0 %v5214
      %v5504 = vpop.f32.mrb[0].mxu0
      %v5505 = vadd.f32 0.0, %v5504
      %v5506 = vpop.f32.mrb[0].mxu0
      %v5507 = vpop.f32.mrb[0].mxu0
      %v5508 = vadd.f32 0.0, %v5507
      %v5509 = vpop.f32.mrb[0].mxu0
      %5510 = vmatprep.mubr.bf16.mxu0 %v5217
      %5511 = vmatmul.mubr.bf16.gmra.mrb[0].mxu0 %v5216
      %v5512 = vpop.f32.mrb[0].mxu0
      %v5513 = vadd.f32 0.0, %v5512
      %v5514 = vpop.f32.mrb[0].mxu0
      %v5515 = vpop.f32.mrb[0].mxu0
      %v5516 = vadd.f32 0.0, %v5515
      %v5517 = vpop.f32.mrb[0].mxu0
      %5518 = vmatprep.mubr.bf16.mxu0 %v5219
      %5519 = vmatmul.mubr.bf16.gmra.mrb[0].mxu0 %v5218
      %v5520 = vpop.f32.mrb[0].mxu0
      %v5521 = vadd.f32 0.0, %v5520
      %v5522 = vpop.f32.mrb[0].mxu0
      %v5523 = vpop.f32.mrb[0].mxu0
      %v5524 = vadd.f32 0.0, %v5523
      %v5525 = vpop.f32.mrb[0].mxu0
      %5526 = vmatprep.mubr.bf16.mxu0 %v5221
      %5527 = vmatmul.mubr.bf16.gmra.mrb[0].mxu0 %v5220
      %v5528 = vpop.f32.mrb[0].mxu0
      %v5529 = vadd.f32 0.0, %v5528
      %v5530 = vpop.f32.mrb[0].mxu0
      %v5531 = vpop.f32.mrb[0].mxu0
      %v5532 = vadd.f32 0.0, %v5531
      %v5533 = vpop.f32.mrb[0].mxu0
      %5534 = vdwg.mxu0
      %v5535 = vpack.c.bf16 %v5388, %v5385
      %v5536 = vpack.c.bf16 %v5396, %v5393
      %v5537 = vpack.c.bf16 %v5404, %v5401
      %v5538 = vpack.c.bf16 %v5412, %v5409
      %v5539 = vpack.c.bf16 %v5420, %v5417
      %v5540 = vpack.c.bf16 %v5428, %v5425
      %v5541 = vpack.c.bf16 %v5436, %v5433
      %v5542 = vpack.c.bf16 %v5444, %v5441
      %v5543 = vpack.c.bf16 %v5452, %v5449
      %v5544 = vpack.c.bf16 %v5460, %v5457
      %v5545 = vpack.c.bf16 %v5468, %v5465
      %v5546 = vpack.c.bf16 %v5476, %v5473
      %v5547 = vpack.c.bf16 %v5484, %v5481
      %v5548 = vpack.c.bf16 %v5492, %v5489
      %v5549 = vpack.c.bf16 %v5500, %v5497
      %v5550 = vpack.c.bf16 %v5508, %v5505
      %v5551 = vpack.c.bf16 %v5516, %v5513
      %v5552 = vpack.c.bf16 %v5524, %v5521
      %v5553 = vpack.c.bf16 %v5532, %v5529
      %v5573 = vunpack.c.l.b16 %v5535
      %v5574 = vunpack.c.h.b16 %v5535
      %v5575 = vunpack.c.l.b16 %v5536
      %v5576 = vunpack.c.h.b16 %v5536
      %v5577 = vunpack.c.l.b16 %v5537
      %v5578 = vunpack.c.h.b16 %v5537
      %v5579 = vunpack.c.l.b16 %v5538
      %v5580 = vunpack.c.h.b16 %v5538
      %v5581 = vunpack.c.l.b16 %v5539
      %v5582 = vunpack.c.h.b16 %v5539
      %v5583 = vunpack.c.l.b16 %v5540
      %v5584 = vunpack.c.h.b16 %v5540
      %v5585 = vunpack.c.l.b16 %v5541
      %v5586 = vunpack.c.h.b16 %v5541
      %v5587 = vunpack.c.l.b16 %v5542
      %v5588 = vunpack.c.h.b16 %v5542
      %v5589 = vunpack.c.l.b16 %v5543
      %v5590 = vunpack.c.h.b16 %v5543
      %v5591 = vunpack.c.l.b16 %v5544
      %v5592 = vunpack.c.h.b16 %v5544
      %v5593 = vunpack.c.l.b16 %v5545
      %v5594 = vunpack.c.h.b16 %v5545
      %v5595 = vunpack.c.l.b16 %v5546
      %v5596 = vunpack.c.h.b16 %v5546
      %v5597 = vunpack.c.l.b16 %v5547
      %v5598 = vunpack.c.h.b16 %v5547
      %v5599 = vunpack.c.l.b16 %v5548
      %v5600 = vunpack.c.h.b16 %v5548
      %v5601 = vunpack.c.l.b16 %v5549
      %v5602 = vunpack.c.h.b16 %v5549
      %v5603 = vunpack.c.l.b16 %v5550
      %v5604 = vunpack.c.h.b16 %v5550
      %v5605 = vunpack.c.l.b16 %v5551
      %v5606 = vunpack.c.h.b16 %v5551
      %v5607 = vunpack.c.l.b16 %v5552
      %v5608 = vunpack.c.h.b16 %v5552
      %v5609 = vunpack.c.l.b16 %v5553
      %v5610 = vunpack.c.h.b16 %v5553
      %v5611 = vpack.c.b16 %v5573, %v5573
      %v5612 = vpack.c.b16 %v5574, %v5574
      %v5613 = vpack.c.b16 %v5575, %v5575
      %v5614 = vpack.c.b16 %v5576, %v5576
      %v5615 = vpack.c.b16 %v5577, %v5577
      %v5616 = vpack.c.b16 %v5578, %v5578
      %v5617 = vpack.c.b16 %v5579, %v5579
      %v5618 = vpack.c.b16 %v5580, %v5580
      %v5619 = vpack.c.b16 %v5581, %v5581
      %v5620 = vpack.c.b16 %v5582, %v5582
      %v5621 = vpack.c.b16 %v5583, %v5583
      %v5622 = vpack.c.b16 %v5584, %v5584
      %v5623 = vpack.c.b16 %v5585, %v5585
      %v5624 = vpack.c.b16 %v5586, %v5586
      %v5625 = vpack.c.b16 %v5587, %v5587
      %v5626 = vpack.c.b16 %v5588, %v5588
      %v5627 = vpack.c.b16 %v5589, %v5589
      %v5628 = vpack.c.b16 %v5590, %v5590
      %v5629 = vpack.c.b16 %v5591, %v5591
      %v5630 = vpack.c.b16 %v5592, %v5592
      %v5631 = vpack.c.b16 %v5593, %v5593
      %v5632 = vpack.c.b16 %v5594, %v5594
      %v5633 = vpack.c.b16 %v5595, %v5595
      %v5634 = vpack.c.b16 %v5596, %v5596
      %v5635 = vpack.c.b16 %v5597, %v5597
      %v5636 = vpack.c.b16 %v5598, %v5598
      %v5637 = vpack.c.b16 %v5599, %v5599
      %v5638 = vpack.c.b16 %v5600, %v5600
      %v5639 = vpack.c.b16 %v5601, %v5601
      %v5640 = vpack.c.b16 %v5602, %v5602
      %v5641 = vpack.c.b16 %v5603, %v5603
      %v5642 = vpack.c.b16 %v5604, %v5604
      %v5643 = vpack.c.b16 %v5605, %v5605
      %v5644 = vpack.c.b16 %v5606, %v5606
      %v5645 = vpack.c.b16 %v5607, %v5607
      %v5646 = vpack.c.b16 %v5608, %v5608
      %v5647 = vpack.c.b16 %v5609, %v5609
      %v5648 = vpack.c.b16 %v5610, %v5610
      %vm5687 = vcmask 60416
      %5688 = vst.msk [vmem:[%s204] sm:$0xf] %vm5687, %v5611
      %5689 = vst.msk [vmem:[%s204 + $0x4] sm:$0xf] %vm5687, %v5612
      %5690 = vst.msk [vmem:[%s204 + $0x8] sm:$0xf] %vm5687, %v5613
      %5691 = vst.msk [vmem:[%s204 + $0xc] sm:$0xf] %vm5687, %v5614
      %5692 = vst.msk [vmem:[%s204 + $0x10] sm:$0xf] %vm5687, %v5615
      %5693 = vst.msk [vmem:[%s204 + $0x14] sm:$0xf] %vm5687, %v5616
      %5694 = vst.msk [vmem:[%s204 + $0x18] sm:$0xf] %vm5687, %v5617
      %5695 = vst.msk [vmem:[%s204 + $0x1c] sm:$0xf] %vm5687, %v5618
      %5696 = vst.msk [vmem:[%s204 + $0x20] sm:$0xf] %vm5687, %v5619
      %5697 = vst.msk [vmem:[%s204 + $0x24] sm:$0xf] %vm5687, %v5620
      %5698 = vst.msk [vmem:[%s204 + $0x28] sm:$0xf] %vm5687, %v5621
      %5699 = vst.msk [vmem:[%s204 + $0x2c] sm:$0xf] %vm5687, %v5622
      %5700 = vst.msk [vmem:[%s204 + $0x30] sm:$0xf] %vm5687, %v5623
      %5701 = vst.msk [vmem:[%s204 + $0x34] sm:$0xf] %vm5687, %v5624
      %5702 = vst.msk [vmem:[%s204 + $0x38] sm:$0xf] %vm5687, %v5625
      %5703 = vst.msk [vmem:[%s204 + $0x3c] sm:$0xf] %vm5687, %v5626
      %5704 = vst.msk [vmem:[%s204 + $0x40] sm:$0xf] %vm5687, %v5627
      %5705 = vst.msk [vmem:[%s204 + $0x44] sm:$0xf] %vm5687, %v5628
      %5706 = vst.msk [vmem:[%s204 + $0x48] sm:$0xf] %vm5687, %v5629
      %5707 = vst.msk [vmem:[%s204 + $0x4c] sm:$0xf] %vm5687, %v5630
      %5708 = vst.msk [vmem:[%s204 + $0x50] sm:$0xf] %vm5687, %v5631
      %5709 = vst.msk [vmem:[%s204 + $0x54] sm:$0xf] %vm5687, %v5632
      %5710 = vst.msk [vmem:[%s204 + $0x58] sm:$0xf] %vm5687, %v5633
      %5711 = vst.msk [vmem:[%s204 + $0x5c] sm:$0xf] %vm5687, %v5634
      %5712 = vst.msk [vmem:[%s204 + $0x60] sm:$0xf] %vm5687, %v5635
      %5713 = vst.msk [vmem:[%s204 + $0x64] sm:$0xf] %vm5687, %v5636
      %5714 = vst.msk [vmem:[%s204 + $0x68] sm:$0xf] %vm5687, %v5637
      %5715 = vst.msk [vmem:[%s204 + $0x6c] sm:$0xf] %vm5687, %v5638
      %5716 = vst.msk [vmem:[%s204 + $0x70] sm:$0xf] %vm5687, %v5639
      %5717 = vst.msk [vmem:[%s204 + $0x74] sm:$0xf] %vm5687, %v5640
      %5718 = vst.msk [vmem:[%s204 + $0x78] sm:$0xf] %vm5687, %v5641
      %5719 = vst.msk [vmem:[%s204 + $0x7c] sm:$0xf] %vm5687, %v5642
      %5720 = vst.msk [vmem:[%s204 + $0x80] sm:$0xf] %vm5687, %v5643
      %5721 = vst.msk [vmem:[%s204 + $0x84] sm:$0xf] %vm5687, %v5644
      %5722 = vst.msk [vmem:[%s204 + $0x88] sm:$0xf] %vm5687, %v5645
      %5723 = vst.msk [vmem:[%s204 + $0x8c] sm:$0xf] %vm5687, %v5646
      %5724 = vst.msk [vmem:[%s204 + $0x90] sm:$0xf] %vm5687, %v5647
      %5725 = vst.msk [vmem:[%s204 + $0x94] sm:$0xf] %vm5687, %v5648
      %5727 = vset.pattern.permute.xlu0 0
      %5728 = vperm.xlu0 %5727, %v210
      %v5729 = vpop.permute.xlu0 %5728
      %5732 = vset.pattern.permute.xlu0 0
      %5733 = vperm.xlu0 %5732, %v211
      %v5734 = vpop.permute.xlu0 %5733
      %5737 = vset.pattern.permute.xlu0 0
      %5738 = vperm.xlu0 %5737, %v212
      %v5739 = vpop.permute.xlu0 %5738
      %5742 = vset.pattern.permute.xlu0 0
      %5743 = vperm.xlu0 %5742, %v213
      %v5744 = vpop.permute.xlu0 %5743
      %5747 = vset.pattern.permute.xlu0 0
      %5748 = vperm.xlu0 %5747, %v214
      %v5749 = vpop.permute.xlu0 %5748
      %5752 = vset.pattern.permute.xlu0 0
      %5753 = vperm.xlu0 %5752, %v215
      %v5754 = vpop.permute.xlu0 %5753
      %5757 = vset.pattern.permute.xlu0 0
      %5758 = vperm.xlu0 %5757, %v216
      %v5759 = vpop.permute.xlu0 %5758
      %5762 = vset.pattern.permute.xlu0 0
      %5763 = vperm.xlu0 %5762, %v217
      %v5764 = vpop.permute.xlu0 %5763
      %5767 = vset.pattern.permute.xlu0 0
      %5768 = vperm.xlu0 %5767, %v218
      %v5769 = vpop.permute.xlu0 %5768
      %5772 = vset.pattern.permute.xlu0 0
      %5773 = vperm.xlu0 %5772, %v219
      %v5774 = vpop.permute.xlu0 %5773
      %5777 = vset.pattern.permute.xlu0 0
      %5778 = vperm.xlu0 %5777, %v220
      %v5779 = vpop.permute.xlu0 %5778
      %5782 = vset.pattern.permute.xlu0 0
      %5783 = vperm.xlu0 %5782, %v221
      %v5784 = vpop.permute.xlu0 %5783
      %5787 = vset.pattern.permute.xlu0 0
      %5788 = vperm.xlu0 %5787, %v222
      %v5789 = vpop.permute.xlu0 %5788
      %5792 = vset.pattern.permute.xlu0 0
      %5793 = vperm.xlu0 %5792, %v223
      %v5794 = vpop.permute.xlu0 %5793
      %5797 = vset.pattern.permute.xlu0 0
      %5798 = vperm.xlu0 %5797, %v224
      %v5799 = vpop.permute.xlu0 %5798
      %5802 = vset.pattern.permute.xlu0 0
      %5803 = vperm.xlu0 %5802, %v225
      %v5804 = vpop.permute.xlu0 %5803
      %5807 = vset.pattern.permute.xlu0 0
      %5808 = vperm.xlu0 %5807, %v226
      %v5809 = vpop.permute.xlu0 %5808
      %5812 = vset.pattern.permute.xlu0 0
      %5813 = vperm.xlu0 %5812, %v227
      %v5814 = vpop.permute.xlu0 %5813
      %5817 = vset.pattern.permute.xlu0 0
      %5818 = vperm.xlu0 %5817, %v228
      %v5819 = vpop.permute.xlu0 %5818
      %5822 = vset.pattern.permute.xlu0 0
      %5823 = vperm.xlu0 %5822, %v229
      %v5824 = vpop.permute.xlu0 %5823
      %5827 = vset.pattern.permute.xlu0 0
      %5828 = vperm.xlu0 %5827, %v230
      %v5829 = vpop.permute.xlu0 %5828
      %5832 = vset.pattern.permute.xlu0 0
      %5833 = vperm.xlu0 %5832, %v231
      %v5834 = vpop.permute.xlu0 %5833
      %5837 = vset.pattern.permute.xlu0 0
      %5838 = vperm.xlu0 %5837, %v232
      %v5839 = vpop.permute.xlu0 %5838
      %5842 = vset.pattern.permute.xlu0 0
      %5843 = vperm.xlu0 %5842, %v233
      %v5844 = vpop.permute.xlu0 %5843
      %5847 = vset.pattern.permute.xlu0 0
      %5848 = vperm.xlu0 %5847, %v234
      %v5849 = vpop.permute.xlu0 %5848
      %5852 = vset.pattern.permute.xlu0 0
      %5853 = vperm.xlu0 %5852, %v235
      %v5854 = vpop.permute.xlu0 %5853
      %5857 = vset.pattern.permute.xlu0 0
      %5858 = vperm.xlu0 %5857, %v236
      %v5859 = vpop.permute.xlu0 %5858
      %5862 = vset.pattern.permute.xlu0 0
      %5863 = vperm.xlu0 %5862, %v237
      %v5864 = vpop.permute.xlu0 %5863
      %5867 = vset.pattern.permute.xlu0 0
      %5868 = vperm.xlu0 %5867, %v238
      %v5869 = vpop.permute.xlu0 %5868
      %5872 = vset.pattern.permute.xlu0 0
      %5873 = vperm.xlu0 %5872, %v239
      %v5874 = vpop.permute.xlu0 %5873
      %5877 = vset.pattern.permute.xlu0 0
      %5878 = vperm.xlu0 %5877, %v240
      %v5879 = vpop.permute.xlu0 %5878
      %5882 = vset.pattern.permute.xlu0 0
      %5883 = vperm.xlu0 %5882, %v241
      %v5884 = vpop.permute.xlu0 %5883
      %5887 = vset.pattern.permute.xlu0 0
      %5888 = vperm.xlu0 %5887, %v242
      %v5889 = vpop.permute.xlu0 %5888
      %5892 = vset.pattern.permute.xlu0 0
      %5893 = vperm.xlu0 %5892, %v243
      %v5894 = vpop.permute.xlu0 %5893
      %5897 = vset.pattern.permute.xlu0 0
      %5898 = vperm.xlu0 %5897, %v244
      %v5899 = vpop.permute.xlu0 %5898
      %5902 = vset.pattern.permute.xlu0 0
      %5903 = vperm.xlu0 %5902, %v245
      %v5904 = vpop.permute.xlu0 %5903
      %5907 = vset.pattern.permute.xlu0 0
      %5908 = vperm.xlu0 %5907, %v246
      %v5909 = vpop.permute.xlu0 %5908
      %5912 = vset.pattern.permute.xlu0 0
      %5913 = vperm.xlu0 %5912, %v247
      %v5914 = vpop.permute.xlu0 %5913
      %v5916 = vmul.f32 %v5385, %v5729
      %v5917 = vmul.f32 %v5388, %v5734
      %v5918 = vmul.f32 %v5393, %v5739
      %v5919 = vmul.f32 %v5396, %v5744
      %v5920 = vmul.f32 %v5401, %v5749
      %v5921 = vmul.f32 %v5404, %v5754
      %v5922 = vmul.f32 %v5409, %v5759
      %v5923 = vmul.f32 %v5412, %v5764
      %v5924 = vmul.f32 %v5417, %v5769
      %v5925 = vmul.f32 %v5420, %v5774
      %v5926 = vmul.f32 %v5425, %v5779
      %v5927 = vmul.f32 %v5428, %v5784
      %v5928 = vmul.f32 %v5433, %v5789
      %v5929 = vmul.f32 %v5436, %v5794
      %v5930 = vmul.f32 %v5441, %v5799
      %v5931 = vmul.f32 %v5444, %v5804
      %v5932 = vmul.f32 %v5449, %v5809
      %v5933 = vmul.f32 %v5452, %v5814
      %v5934 = vmul.f32 %v5457, %v5819
      %v5935 = vmul.f32 %v5460, %v5824
      %v5936 = vmul.f32 %v5465, %v5829
      %v5937 = vmul.f32 %v5468, %v5834
      %v5938 = vmul.f32 %v5473, %v5839
      %v5939 = vmul.f32 %v5476, %v5844
      %v5940 = vmul.f32 %v5481, %v5849
      %v5941 = vmul.f32 %v5484, %v5854
      %v5942 = vmul.f32 %v5489, %v5859
      %v5943 = vmul.f32 %v5492, %v5864
      %v5944 = vmul.f32 %v5497, %v5869
      %v5945 = vmul.f32 %v5500, %v5874
      %v5946 = vmul.f32 %v5505, %v5879
      %v5947 = vmul.f32 %v5508, %v5884
      %v5948 = vmul.f32 %v5513, %v5889
      %v5949 = vmul.f32 %v5516, %v5894
      %v5950 = vmul.f32 %v5521, %v5899
      %v5951 = vmul.f32 %v5524, %v5904
      %v5952 = vmul.f32 %v5529, %v5909
      %v5953 = vmul.f32 %v5532, %v5914
      %vm5954 = vcmask 64512
      %v5955 = vsel %vm5954, %v5916, 0.0
      %v5956 = vsel %vm5954, %v5917, 0.0
      %v5957 = vadd.f32 %v5955, %v5956
      %v5958 = vsel %vm5954, %v5918, 0.0
      %v5959 = vadd.f32 %v5957, %v5958
      %v5960 = vsel %vm5954, %v5919, 0.0
      %v5961 = vadd.f32 %v5959, %v5960
      %v5962 = vsel %vm5954, %v5920, 0.0
      %v5963 = vadd.f32 %v5961, %v5962
      %v5964 = vsel %vm5954, %v5921, 0.0
      %v5965 = vadd.f32 %v5963, %v5964
      %v5966 = vsel %vm5954, %v5922, 0.0
      %v5967 = vadd.f32 %v5965, %v5966
      %v5968 = vsel %vm5954, %v5923, 0.0
      %v5969 = vadd.f32 %v5967, %v5968
      %v5970 = vsel %vm5954, %v5924, 0.0
      %v5971 = vadd.f32 %v5969, %v5970
      %v5972 = vsel %vm5954, %v5925, 0.0
      %v5973 = vadd.f32 %v5971, %v5972
      %v5974 = vsel %vm5954, %v5926, 0.0
      %v5975 = vadd.f32 %v5973, %v5974
      %v5976 = vsel %vm5954, %v5927, 0.0
      %v5977 = vadd.f32 %v5975, %v5976
      %v5978 = vsel %vm5954, %v5928, 0.0
      %v5979 = vadd.f32 %v5977, %v5978
      %v5980 = vsel %vm5954, %v5929, 0.0
      %v5981 = vadd.f32 %v5979, %v5980
      %v5982 = vsel %vm5954, %v5930, 0.0
      %v5983 = vadd.f32 %v5981, %v5982
      %v5984 = vsel %vm5954, %v5931, 0.0
      %v5985 = vadd.f32 %v5983, %v5984
      %v5986 = vsel %vm5954, %v5932, 0.0
      %v5987 = vadd.f32 %v5985, %v5986
      %v5988 = vsel %vm5954, %v5933, 0.0
      %v5989 = vadd.f32 %v5987, %v5988
      %v5990 = vsel %vm5954, %v5934, 0.0
      %v5991 = vadd.f32 %v5989, %v5990
      %v5992 = vsel %vm5954, %v5935, 0.0
      %v5993 = vadd.f32 %v5991, %v5992
      %v5994 = vsel %vm5954, %v5936, 0.0
      %v5995 = vadd.f32 %v5993, %v5994
      %v5996 = vsel %vm5954, %v5937, 0.0
      %v5997 = vadd.f32 %v5995, %v5996
      %v5998 = vsel %vm5954, %v5938, 0.0
      %v5999 = vadd.f32 %v5997, %v5998
      %v6000 = vsel %vm5954, %v5939, 0.0
      %v6001 = vadd.f32 %v5999, %v6000
      %v6002 = vsel %vm5954, %v5940, 0.0
      %v6003 = vadd.f32 %v6001, %v6002
      %v6004 = vsel %vm5954, %v5941, 0.0
      %v6005 = vadd.f32 %v6003, %v6004
      %v6006 = vsel %vm5954, %v5942, 0.0
      %v6007 = vadd.f32 %v6005, %v6006
      %v6008 = vsel %vm5954, %v5943, 0.0
      %v6009 = vadd.f32 %v6007, %v6008
      %v6010 = vsel %vm5954, %v5944, 0.0
      %v6011 = vadd.f32 %v6009, %v6010
      %v6012 = vsel %vm5954, %v5945, 0.0
      %v6013 = vadd.f32 %v6011, %v6012
      %v6014 = vsel %vm5954, %v5946, 0.0
      %v6015 = vadd.f32 %v6013, %v6014
      %v6016 = vsel %vm5954, %v5947, 0.0
      %v6017 = vadd.f32 %v6015, %v6016
      %v6018 = vsel %vm5954, %v5948, 0.0
      %v6019 = vadd.f32 %v6017, %v6018
      %v6020 = vsel %vm5954, %v5949, 0.0
      %v6021 = vadd.f32 %v6019, %v6020
      %v6022 = vsel %vm5954, %v5950, 0.0
      %v6023 = vadd.f32 %v6021, %v6022
      %v6024 = vsel %vm5954, %v5951, 0.0
      %v6025 = vadd.f32 %v6023, %v6024
      %v6026 = vsel %vm5954, %v5952, 0.0
      %v6027 = vadd.f32 %v6025, %v6026
      %v6028 = vsel %vm5954, %v5953, 0.0
      %v6029 = vadd.f32 %v6027, %v6028
      %v6030 = vrot.slane %v6029, 4
      %v6031 = vadd.f32 %v6029, %v6030
      %v6032 = vrot.slane %v6031, 2
      %v6033 = vadd.f32 %v6031, %v6032
      %v6034 = vrot.slane %v6033, 1
      %v6035 = vadd.f32 %v6033, %v6034
      %v6036 = vadd.f32 %v6035, 0.0
      %v6037 = vmul.f32 %v5385, %v5385
      %v6038 = vmul.f32 %v5388, %v5388
      %v6039 = vmul.f32 %v5393, %v5393
      %v6040 = vmul.f32 %v5396, %v5396
      %v6041 = vmul.f32 %v5401, %v5401
      %v6042 = vmul.f32 %v5404, %v5404
      %v6043 = vmul.f32 %v5409, %v5409
      %v6044 = vmul.f32 %v5412, %v5412
      %v6045 = vmul.f32 %v5417, %v5417
      %v6046 = vmul.f32 %v5420, %v5420
      %v6047 = vmul.f32 %v5425, %v5425
      %v6048 = vmul.f32 %v5428, %v5428
      %v6049 = vmul.f32 %v5433, %v5433
      %v6050 = vmul.f32 %v5436, %v5436
      %v6051 = vmul.f32 %v5441, %v5441
      %v6052 = vmul.f32 %v5444, %v5444
      %v6053 = vmul.f32 %v5449, %v5449
      %v6054 = vmul.f32 %v5452, %v5452
      %v6055 = vmul.f32 %v5457, %v5457
      %v6056 = vmul.f32 %v5460, %v5460
      %v6057 = vmul.f32 %v5465, %v5465
      %v6058 = vmul.f32 %v5468, %v5468
      %v6059 = vmul.f32 %v5473, %v5473
      %v6060 = vmul.f32 %v5476, %v5476
      %v6061 = vmul.f32 %v5481, %v5481
      %v6062 = vmul.f32 %v5484, %v5484
      %v6063 = vmul.f32 %v5489, %v5489
      %v6064 = vmul.f32 %v5492, %v5492
      %v6065 = vmul.f32 %v5497, %v5497
      %v6066 = vmul.f32 %v5500, %v5500
      %v6067 = vmul.f32 %v5505, %v5505
      %v6068 = vmul.f32 %v5508, %v5508
      %v6069 = vmul.f32 %v5513, %v5513
      %v6070 = vmul.f32 %v5516, %v5516
      %v6071 = vmul.f32 %v5521, %v5521
      %v6072 = vmul.f32 %v5524, %v5524
      %v6073 = vmul.f32 %v5529, %v5529
      %v6074 = vmul.f32 %v5532, %v5532
      %v6075 = vmul.f32 %v6037, %v5729
      %v6076 = vmul.f32 %v6038, %v5734
      %v6077 = vmul.f32 %v6039, %v5739
      %v6078 = vmul.f32 %v6040, %v5744
      %v6079 = vmul.f32 %v6041, %v5749
      %v6080 = vmul.f32 %v6042, %v5754
      %v6081 = vmul.f32 %v6043, %v5759
      %v6082 = vmul.f32 %v6044, %v5764
      %v6083 = vmul.f32 %v6045, %v5769
      %v6084 = vmul.f32 %v6046, %v5774
      %v6085 = vmul.f32 %v6047, %v5779
      %v6086 = vmul.f32 %v6048, %v5784
      %v6087 = vmul.f32 %v6049, %v5789
      %v6088 = vmul.f32 %v6050, %v5794
      %v6089 = vmul.f32 %v6051, %v5799
      %v6090 = vmul.f32 %v6052, %v5804
      %v6091 = vmul.f32 %v6053, %v5809
      %v6092 = vmul.f32 %v6054, %v5814
      %v6093 = vmul.f32 %v6055, %v5819
      %v6094 = vmul.f32 %v6056, %v5824
      %v6095 = vmul.f32 %v6057, %v5829
      %v6096 = vmul.f32 %v6058, %v5834
      %v6097 = vmul.f32 %v6059, %v5839
      %v6098 = vmul.f32 %v6060, %v5844
      %v6099 = vmul.f32 %v6061, %v5849
      %v6100 = vmul.f32 %v6062, %v5854
      %v6101 = vmul.f32 %v6063, %v5859
      %v6102 = vmul.f32 %v6064, %v5864
      %v6103 = vmul.f32 %v6065, %v5869
      %v6104 = vmul.f32 %v6066, %v5874
      %v6105 = vmul.f32 %v6067, %v5879
      %v6106 = vmul.f32 %v6068, %v5884
      %v6107 = vmul.f32 %v6069, %v5889
      %v6108 = vmul.f32 %v6070, %v5894
      %v6109 = vmul.f32 %v6071, %v5899
      %v6110 = vmul.f32 %v6072, %v5904
      %v6111 = vmul.f32 %v6073, %v5909
      %v6112 = vmul.f32 %v6074, %v5914
      %v6113 = vsel %vm5954, %v6075, 0.0
      %v6114 = vsel %vm5954, %v6076, 0.0
      %v6115 = vadd.f32 %v6113, %v6114
      %v6116 = vsel %vm5954, %v6077, 0.0
      %v6117 = vadd.f32 %v6115, %v6116
      %v6118 = vsel %vm5954, %v6078, 0.0
      %v6119 = vadd.f32 %v6117, %v6118
      %v6120 = vsel %vm5954, %v6079, 0.0
      %v6121 = vadd.f32 %v6119, %v6120
      %v6122 = vsel %vm5954, %v6080, 0.0
      %v6123 = vadd.f32 %v6121, %v6122
      %v6124 = vsel %vm5954, %v6081, 0.0
      %v6125 = vadd.f32 %v6123, %v6124
      %v6126 = vsel %vm5954, %v6082, 0.0
      %v6127 = vadd.f32 %v6125, %v6126
      %v6128 = vsel %vm5954, %v6083, 0.0
      %v6129 = vadd.f32 %v6127, %v6128
      %v6130 = vsel %vm5954, %v6084, 0.0
      %v6131 = vadd.f32 %v6129, %v6130
      %v6132 = vsel %vm5954, %v6085, 0.0
      %v6133 = vadd.f32 %v6131, %v6132
      %v6134 = vsel %vm5954, %v6086, 0.0
      %v6135 = vadd.f32 %v6133, %v6134
      %v6136 = vsel %vm5954, %v6087, 0.0
      %v6137 = vadd.f32 %v6135, %v6136
      %v6138 = vsel %vm5954, %v6088, 0.0
      %v6139 = vadd.f32 %v6137, %v6138
      %v6140 = vsel %vm5954, %v6089, 0.0
      %v6141 = vadd.f32 %v6139, %v6140
      %v6142 = vsel %vm5954, %v6090, 0.0
      %v6143 = vadd.f32 %v6141, %v6142
      %v6144 = vsel %vm5954, %v6091, 0.0
      %v6145 = vadd.f32 %v6143, %v6144
      %v6146 = vsel %vm5954, %v6092, 0.0
      %v6147 = vadd.f32 %v6145, %v6146
      %v6148 = vsel %vm5954, %v6093, 0.0
      %v6149 = vadd.f32 %v6147, %v6148
      %v6150 = vsel %vm5954, %v6094, 0.0
      %v6151 = vadd.f32 %v6149, %v6150
      %v6152 = vsel %vm5954, %v6095, 0.0
      %v6153 = vadd.f32 %v6151, %v6152
      %v6154 = vsel %vm5954, %v6096, 0.0
      %v6155 = vadd.f32 %v6153, %v6154
      %v6156 = vsel %vm5954, %v6097, 0.0
      %v6157 = vadd.f32 %v6155, %v6156
      %v6158 = vsel %vm5954, %v6098, 0.0
      %v6159 = vadd.f32 %v6157, %v6158
      %v6160 = vsel %vm5954, %v6099, 0.0
      %v6161 = vadd.f32 %v6159, %v6160
      %v6162 = vsel %vm5954, %v6100, 0.0
      %v6163 = vadd.f32 %v6161, %v6162
      %v6164 = vsel %vm5954, %v6101, 0.0
      %v6165 = vadd.f32 %v6163, %v6164
      %v6166 = vsel %vm5954, %v6102, 0.0
      %v6167 = vadd.f32 %v6165, %v6166
      %v6168 = vsel %vm5954, %v6103, 0.0
      %v6169 = vadd.f32 %v6167, %v6168
      %v6170 = vsel %vm5954, %v6104, 0.0
      %v6171 = vadd.f32 %v6169, %v6170
      %v6172 = vsel %vm5954, %v6105, 0.0
      %v6173 = vadd.f32 %v6171, %v6172
      %v6174 = vsel %vm5954, %v6106, 0.0
      %v6175 = vadd.f32 %v6173, %v6174
      %v6176 = vsel %vm5954, %v6107, 0.0
      %v6177 = vadd.f32 %v6175, %v6176
      %v6178 = vsel %vm5954, %v6108, 0.0
      %v6179 = vadd.f32 %v6177, %v6178
      %v6180 = vsel %vm5954, %v6109, 0.0
      %v6181 = vadd.f32 %v6179, %v6180
      %v6182 = vsel %vm5954, %v6110, 0.0
      %v6183 = vadd.f32 %v6181, %v6182
      %v6184 = vsel %vm5954, %v6111, 0.0
      %v6185 = vadd.f32 %v6183, %v6184
      %v6186 = vsel %vm5954, %v6112, 0.0
      %v6187 = vadd.f32 %v6185, %v6186
      %v6188 = vrot.slane %v6187, 4
      %v6189 = vadd.f32 %v6187, %v6188
      %v6190 = vrot.slane %v6189, 2
      %v6191 = vadd.f32 %v6189, %v6190
      %v6192 = vrot.slane %v6191, 1
      %v6193 = vadd.f32 %v6191, %v6192
      %v6194 = vadd.f32 %v6193, 0.0
      %vm6195 = vcmask 57344
      %6196 = vst.msk [vmem:[%s208] sm:$0x1] %vm6195, %v6036
      %6197 = vst.msk [vmem:[%s208 + $0x1] sm:$0x1] %vm6195, %v6194
      %p6198 = scmp.lt.s32.totalorder %s16, 1
      %s6199 = scalar_select %p6198, %s16, 1
      %s6200 = smul.addr %s6199, 38
      %s6201 = smul.addr %s6200, 4
      %s6202 = scalar_lea.vmem %s3, %s6201
      %p6203 = scmp.lt.s32.totalorder %s16, 1
      %s6204 = scalar_select %p6203, %s16, 1
      %s6205 = smul.addr %s6204, 2
      %s6206 = scalar_lea.vmem %s4, %s6205
      // Predicated region
      $region33: #{conv_generator_forward.11} parent=31 // pred_check
        %p6207 = pneg %p102
      $region34: #{conv_generator_forward.11} parent=31 // pred_check_branch
        %6209 = sbr.rel (%p6207) target = $region36
      $region35: #{conv_generator_forward.11} parent=31 // pred_region
        _
      $region36: #{conv_generator_forward.11} parent=31 // pred_fallthru
        _
      // Predicated region
      $region37: #{conv_generator_forward.11} parent=31 // pred_check
        %p6210 = pneg %p128
      $region38: #{conv_generator_forward.11} parent=31 // pred_check_branch
        %6212 = sbr.rel (%p6210) target = $region40
      $region39: #{conv_generator_forward.11} parent=31 // pred_region
        _
      $region40: #{conv_generator_forward.11} parent=31 // pred_fallthru
        _
    $region32: #{conv_generator_forward.11} parent=5 // pred_fallthru
      _
    %p6213 = scmp.le.s32.totalorder 2, %s11
    // Predicated region
    $region41: #{conv_generator_forward.11} parent=5 // pred_check
      %p6214 = pneg %p6213
    $region42: #{conv_generator_forward.11} parent=5 // pred_check_branch
      %6216 = sbr.rel (%p6214) target = $region44
    $region43: #{conv_generator_forward.11} parent=5 // pred_region
      %s6217 = ssub.s32 %s11, 2
      // Predicated region
      $region45: #{conv_generator_forward.11} parent=43 // pred_check
        %p6218 = pneg %p108
      $region46: #{conv_generator_forward.11} parent=43 // pred_check_branch
        %6220 = sbr.rel (%p6218) target = $region48
      $region47: #{conv_generator_forward.11} parent=43 // pred_region
        %p6221 = scmp.lt.s32.totalorder %s17, 1
        %s6222 = scalar_select %p6221, %s17, 1
        %s6223 = smul.addr %s6222, 38
        %s6224 = smul.addr %s6223, 4
        %s6225 = scalar_lea.vmem %s3, %s6224
      $region48: #{conv_generator_forward.11} parent=43 // pred_fallthru
        _
      // Predicated region
      $region49: #{conv_generator_forward.11} parent=43 // pred_check
        %p6226 = pneg %p134
      $region50: #{conv_generator_forward.11} parent=43 // pred_check_branch
        %6228 = sbr.rel (%p6226) target = $region52
      $region51: #{conv_generator_forward.11} parent=43 // pred_region
        %p6229 = scmp.lt.s32.totalorder %s17, 1
        %s6230 = scalar_select %p6229, %s17, 1
        %s6231 = smul.addr %s6230, 2
        %s6232 = scalar_lea.vmem %s4, %s6231
      $region52: #{conv_generator_forward.11} parent=43 // pred_fallthru
        _
    $region44: #{conv_generator_forward.11} parent=5 // pred_fallthru
      _
  $region6: #{conv_generator_forward.11} parent=0 // loop_footer
    %s15 = sadd.s32 1, %s11
  $region7: #{conv_generator_forward.11} parent=0 // loop_footer_branch
    %10 = sbr.rel target = $region3
  $region8: #{conv_generator_forward.11} parent=0 // loop_exit
    _

</llo_original>
